<compile_context>
chip_gen: v7x
topology: tpu7x:2x2x1
jax: 0.10.0
libtpu: 0.0.40
codegen_flags: <defaults>
</compile_context>

<pallas_src>
import jax
import jax.numpy as jnp
from jax.experimental import pallas as pl
from jax.experimental.pallas import tpu as pltpu

_EPS = 1e-5
_K = 5  # conv kernel width everywhere


# --------------------------------------------------------------------------
# Fused kernel: conv1(BN,ReLU,pool) -> conv2(...) -> conv3(...) -> conv4(...) -> FC
# Activations are channels-last (L, C); conv2-4 weights are (K, Cin, Cout);
# layer-1 weight is im2col-stacked (K*Cin, Cout); FC weight is (11, 70, 4).
# --------------------------------------------------------------------------
def _wvcnn4_kernel(
    xcols_ref,                       # (L1, 10)  layer-1 im2col input (per batch)
    w1_ref, sc1_ref, sh1_ref,        # (10, 10), (1, 10), (1, 10)
    w2_ref, sc2_ref, sh2_ref,        # (5, 10, 24), (1, 24), (1, 24)
    w3_ref, sc3_ref, sh3_ref,        # (5, 24, 50), (1, 50), (1, 50)
    w4_ref, sc4_ref, sh4_ref,        # (5, 50, 70), (1, 70), (1, 70)
    wf_ref, bf_ref,                  # (11, 70, 4), (1, 4)
    o_ref,                           # (1, 4)
    c1_ref, p1_ref, c2_ref, p2_ref,  # VMEM scratch: conv out / pooled out per stage
    c3_ref, p3_ref, c4_ref, p4_ref,
):
    def bn_relu_pool(y, sc_ref, sh_ref, conv_ref, pool_ref):
        # folded BN (+ conv bias) and ReLU, result kept in VMEM scratch
        conv_ref[...] = jnp.maximum(y * sc_ref[...] + sh_ref[...], 0.0)
        # fused MaxPool1d(kernel=3, stride=3): three stride-3 reads + elementwise max
        lp = pool_ref.shape[0]
        pool_ref[...] = jnp.maximum(
            jnp.maximum(
                conv_ref[pl.ds(0, lp, stride=3), :],
                conv_ref[pl.ds(1, lp, stride=3), :],
            ),
            conv_ref[pl.ds(2, lp, stride=3), :],
        )

    def conv_taps(in_ref, w_ref, lout):
        # K shifted (Lout, Cin) @ (Cin, Cout) MXU matmuls, accumulated in values.
        y = jnp.dot(in_ref[pl.ds(0, lout), :], w_ref[0],
                    preferred_element_type=jnp.float32)
        for j in range(1, _K):
            y = y + jnp.dot(in_ref[pl.ds(j, lout), :], w_ref[j],
                            preferred_element_type=jnp.float32)
        return y

    # ---- layer 1: input already im2col'ed -> a single matmul ----
    y1 = jnp.dot(xcols_ref[...], w1_ref[...], preferred_element_type=jnp.float32)
    bn_relu_pool(y1, sc1_ref, sh1_ref, c1_ref, p1_ref)

    # ---- layers 2-4 ----
    bn_relu_pool(conv_taps(p1_ref, w2_ref, c2_ref.shape[0]), sc2_ref, sh2_ref, c2_ref, p2_ref)
    bn_relu_pool(conv_taps(p2_ref, w3_ref, c3_ref.shape[0]), sc3_ref, sh3_ref, c3_ref, p3_ref)
    bn_relu_pool(conv_taps(p3_ref, w4_ref, c4_ref.shape[0]), sc4_ref, sh4_ref, c4_ref, p4_ref)

    # ---- FC: PyTorch flattens (C, L); wf was reshaped offline to (L, C, 4) so we
    #      contract the pooled (11, 70) tile row-by-row, no transpose/flatten needed.
    lfin = p4_ref.shape[0]
    logits = jnp.dot(p4_ref[pl.ds(0, 1), :], wf_ref[0],
                     preferred_element_type=jnp.float32)
    for l in range(1, lfin):
        logits = logits + jnp.dot(p4_ref[pl.ds(l, 1), :], wf_ref[l],
                                  preferred_element_type=jnp.float32)
    o_ref[...] = logits + bf_ref[...]


# --------------------------------------------------------------------------
# Wrapper: layout glue (transpose, layer-1 im2col) + the single pallas_call.
# --------------------------------------------------------------------------
def wvcnn4_forward(x_nchw, kp):
    # x_nchw: (B, 1, 2, W) float32, W = 1051 is implied by fc = Linear(11*70, 4).
    b, _, _, w = x_nchw.shape
    x = jnp.transpose(x_nchw[:, 0, :, :], (0, 2, 1))          # (B, W, 2) channels-last

    l1 = w - (_K - 1)                                          # 1047
    # Layer-1 im2col in the wrapper (input is the only HBM-resident activation).
    xcols = jnp.concatenate([x[:, j:j + l1, :] for j in range(_K)], axis=-1)  # (B, l1, 10)

    lp1 = l1 // 3                                              # 349
    l2 = lp1 - (_K - 1); lp2 = l2 // 3                         # 345, 115
    l3 = lp2 - (_K - 1); lp3 = l3 // 3                         # 111, 37
    l4 = lp3 - (_K - 1); lp4 = l4 // 3                         # 33, 11
    c1, c2, c3, c4 = 10, 24, 50, 70

    out = pl.pallas_call(
        _wvcnn4_kernel,
        out_shape=jax.ShapeDtypeStruct((b, 1, 4), jnp.float32),
        grid=(b,),
        in_specs=[
            pl.BlockSpec((None, l1, _K * 2), lambda i: (i, 0, 0)),
            pl.BlockSpec((_K * 2, c1), lambda i: (0, 0)),
            pl.BlockSpec((1, c1), lambda i: (0, 0)),
            pl.BlockSpec((1, c1), lambda i: (0, 0)),
            pl.BlockSpec((_K, c1, c2), lambda i: (0, 0, 0)),
            pl.BlockSpec((1, c2), lambda i: (0, 0)),
            pl.BlockSpec((1, c2), lambda i: (0, 0)),
            pl.BlockSpec((_K, c2, c3), lambda i: (0, 0, 0)),
            pl.BlockSpec((1, c3), lambda i: (0, 0)),
            pl.BlockSpec((1, c3), lambda i: (0, 0)),
            pl.BlockSpec((_K, c3, c4), lambda i: (0, 0, 0)),
            pl.BlockSpec((1, c4), lambda i: (0, 0)),
            pl.BlockSpec((1, c4), lambda i: (0, 0)),
            pl.BlockSpec((lp4, c4, 4), lambda i: (0, 0, 0)),
            pl.BlockSpec((1, 4), lambda i: (0, 0)),
        ],
        out_specs=pl.BlockSpec((None, 1, 4), lambda i: (i, 0, 0)),
        scratch_shapes=[
            pltpu.VMEM((l1, c1), jnp.float32), pltpu.VMEM((lp1, c1), jnp.float32),
            pltpu.VMEM((l2, c2), jnp.float32), pltpu.VMEM((lp2, c2), jnp.float32),
            pltpu.VMEM((l3, c3), jnp.float32), pltpu.VMEM((lp3, c3), jnp.float32),
            pltpu.VMEM((l4, c4), jnp.float32), pltpu.VMEM((lp4, c4), jnp.float32),
        ],
        compiler_params=pltpu.CompilerParams(dimension_semantics=("parallel",)),
    )(
        xcols,
        kp["w1"], kp["sc1"], kp["sh1"],
        kp["w2"], kp["sc2"], kp["sh2"],
        kp["w3"], kp["sc3"], kp["sh3"],
        kp["w4"], kp["sc4"], kp["sh4"],
        kp["wf"], kp["bf"],
    )
    return out[:, 0, :]                                        # (B, 4)


# --------------------------------------------------------------------------
# Deterministic PyTorch-shaped parameters + offline folding / permutation.
# --------------------------------------------------------------------------
def init_torch_params(key):
    keys = iter(jax.random.split(key, 32))

    def nrm(shape, s=0.1):
        return s * jax.random.normal(next(keys), shape, dtype=jnp.float32)

    def bn_stats(c):
        return (1.0 + nrm((c,)), nrm((c,)), nrm((c,)), 0.5 + jnp.abs(nrm((c,))))

    tp = {}
    tp["w1"] = nrm((10, 1, 2, 5)); tp["b1"] = nrm((10,)); tp["bn1"] = bn_stats(10)
    tp["w2"] = nrm((24, 10, 5));   tp["b2"] = nrm((24,)); tp["bn2"] = bn_stats(24)
    tp["w3"] = nrm((50, 24, 5));   tp["b3"] = nrm((50,)); tp["bn3"] = bn_stats(50)
    tp["w4"] = nrm((70, 50, 5));   tp["b4"] = nrm((70,)); tp["bn4"] = bn_stats(70)
    tp["wf"] = nrm((4, 11 * 70));  tp["bf"] = nrm((4,))
    return tp


def prepare_params(tp):
    """PyTorch-shaped params -> kernel layout (BN folded, weights stacked/permuted)."""
    def fold(bias, bn):
        g, beta, mean, var = bn
        scale = g / jnp.sqrt(var + _EPS)
        shift = (bias - mean) * scale + beta
        return scale.reshape(1, -1), shift.reshape(1, -1)

    kp = {}
    # conv1: Conv2d weight (10, 1, 2, 5) -> tap (K=5, H=2, Cout=10) -> stacked (10, 10)
    kp["w1"] = jnp.transpose(tp["w1"][:, 0], (2, 1, 0)).reshape(_K * 2, 10)
    kp["sc1"], kp["sh1"] = fold(tp["b1"], tp["bn1"])
    # conv2-4: Conv1d weight (Cout, Cin, K) -> (K, Cin, Cout)
    kp["w2"] = jnp.transpose(tp["w2"], (2, 1, 0))
    kp["sc2"], kp["sh2"] = fold(tp["b2"], tp["bn2"])
    kp["w3"] = jnp.transpose(tp["w3"], (2, 1, 0))
    kp["sc3"], kp["sh3"] = fold(tp["b3"], tp["bn3"])
    kp["w4"] = jnp.transpose(tp["w4"], (2, 1, 0))
    kp["sc4"], kp["sh4"] = fold(tp["b4"], tp["bn4"])
    # fc: PyTorch weight (4, 770) over flat index c*11 + l  ->  (L=11, C=70, 4)
    kp["wf"] = jnp.transpose(tp["wf"].reshape(4, 70, 11), (2, 1, 0))
    kp["bf"] = tp["bf"].reshape(1, 4)
    return kp


# --------------------------------------------------------------------------
# Independent plain-JAX reference, op-by-op like the PyTorch module.
# --------------------------------------------------------------------------
def reference_forward(x_nchw, tp):
    def conv1d(y, w, b):  # y (B,Cin,L), w (Cout,Cin,K)
        out = jax.lax.conv_general_dilated(
            y[..., None], w[..., None], (1, 1), "VALID",
            dimension_numbers=("NCHW", "OIHW", "NCHW"))[..., 0]
        return out + b[None, :, None]

    def bn1d(y, bn):  # y (B,C,L)
        g, b_, m, v = bn
        return (y - m[None, :, None]) * (g / jnp.sqrt(v + _EPS))[None, :, None] + b_[None, :, None]

    def pool3(y):  # MaxPool1d(3)
        b, c, l = y.shape
        lp = l // 3
        return y[:, :, : lp * 3].reshape(b, c, lp, 3).max(axis=-1)

    # conv1 (Conv2d) + BN2d + ReLU + squeeze(2) + pool
    y = jax.lax.conv_general_dilated(
        x_nchw, tp["w1"], (1, 1), "VALID",
        dimension_numbers=("NCHW", "OIHW", "NCHW"))
    y = y + tp["b1"][None, :, None, None]
    g, b_, m, v = tp["bn1"]
    y = (y - m[None, :, None, None]) * (g / jnp.sqrt(v + _EPS))[None, :, None, None] + b_[None, :, None, None]
    y = jnp.maximum(y, 0.0)[:, :, 0, :]
    y = pool3(y)

    for wk, bk, bnk in (("w2", "b2", "bn2"), ("w3", "b3", "bn3"), ("w4", "b4", "bn4")):
        y = pool3(jnp.maximum(bn1d(conv1d(y, tp[wk], tp[bk]), tp[bnk]), 0.0))

    flat = y.reshape(y.shape[0], -1)                   # PyTorch view: (B, C*L), index = c*11 + l
    return flat @ tp["wf"].T + tp["bf"][None, :]


if __name__ == "__main__":
    key = jax.random.PRNGKey(0)
    kx, kp_key = jax.random.split(key)

    B, W = 2, 1051  # W = 1051 is forced by fc = Linear(11*35*2, 4)
    x = jax.random.normal(kx, (B, 1, 2, W), dtype=jnp.float32)

    torch_params = init_torch_params(kp_key)
    kernel_params = prepare_params(torch_params)

    out = jax.block_until_ready(jax.jit(wvcnn4_forward)(x, kernel_params))
    assert out.shape == (B, 4), out.shape

    ref = jax.block_until_ready(reference_forward(x, torch_params))
    assert jnp.allclose(out, ref, atol=1e-3, rtol=1e-3), (out, ref)

    print("KERNEL_OK")
</pallas_src>

<mosaic_0001>
module attributes {stable_mosaic.version = 11 : i64} {
  func.func @_wvcnn4_kernel(%arg0: i32, %arg1: memref<1x1047x10xf32, #tpu.memory_space<vmem>>, %arg2: memref<10x10xf32, #tpu.memory_space<vmem>>, %arg3: memref<1x10xf32, #tpu.memory_space<vmem>>, %arg4: memref<1x10xf32, #tpu.memory_space<vmem>>, %arg5: memref<5x10x24xf32, #tpu.memory_space<vmem>>, %arg6: memref<1x24xf32, #tpu.memory_space<vmem>>, %arg7: memref<1x24xf32, #tpu.memory_space<vmem>>, %arg8: memref<5x24x50xf32, #tpu.memory_space<vmem>>, %arg9: memref<1x50xf32, #tpu.memory_space<vmem>>, %arg10: memref<1x50xf32, #tpu.memory_space<vmem>>, %arg11: memref<5x50x70xf32, #tpu.memory_space<vmem>>, %arg12: memref<1x70xf32, #tpu.memory_space<vmem>>, %arg13: memref<1x70xf32, #tpu.memory_space<vmem>>, %arg14: memref<11x70x4xf32, #tpu.memory_space<vmem>>, %arg15: memref<1x4xf32, #tpu.memory_space<vmem>>, %arg16: memref<1x1x4xf32, #tpu.memory_space<vmem>>, %arg17: memref<1047x10xf32, #tpu.memory_space<vmem>>, %arg18: memref<349x10xf32, #tpu.memory_space<vmem>>, %arg19: memref<345x24xf32, #tpu.memory_space<vmem>>, %arg20: memref<115x24xf32, #tpu.memory_space<vmem>>, %arg21: memref<111x50xf32, #tpu.memory_space<vmem>>, %arg22: memref<37x50xf32, #tpu.memory_space<vmem>>, %arg23: memref<33x70xf32, #tpu.memory_space<vmem>>, %arg24: memref<11x70xf32, #tpu.memory_space<vmem>>) attributes {dimension_semantics = [#tpu.dimension_semantics<parallel>], iteration_bounds = array<i64: 2>, scalar_prefetch = 0 : i64, scratch_operands = 8 : i64, tpu.core_type = #tpu.core_type<tc>, window_params = [{transform_indices = @transform_0, window_bounds = array<i64: 1, 1047, 10>}, {pipeline_mode = #tpu.pipeline_mode<synchronous>, transform_indices = @transform_1, window_bounds = array<i64: 10, 10>}, {pipeline_mode = #tpu.pipeline_mode<synchronous>, transform_indices = @transform_2, window_bounds = array<i64: 1, 10>}, {pipeline_mode = #tpu.pipeline_mode<synchronous>, transform_indices = @transform_3, window_bounds = array<i64: 1, 10>}, {pipeline_mode = #tpu.pipeline_mode<synchronous>, transform_indices = @transform_4, window_bounds = array<i64: 5, 10, 24>}, {pipeline_mode = #tpu.pipeline_mode<synchronous>, transform_indices = @transform_5, window_bounds = array<i64: 1, 24>}, {pipeline_mode = #tpu.pipeline_mode<synchronous>, transform_indices = @transform_6, window_bounds = array<i64: 1, 24>}, {pipeline_mode = #tpu.pipeline_mode<synchronous>, transform_indices = @transform_7, window_bounds = array<i64: 5, 24, 50>}, {pipeline_mode = #tpu.pipeline_mode<synchronous>, transform_indices = @transform_8, window_bounds = array<i64: 1, 50>}, {pipeline_mode = #tpu.pipeline_mode<synchronous>, transform_indices = @transform_9, window_bounds = array<i64: 1, 50>}, {pipeline_mode = #tpu.pipeline_mode<synchronous>, transform_indices = @transform_10, window_bounds = array<i64: 5, 50, 70>}, {pipeline_mode = #tpu.pipeline_mode<synchronous>, transform_indices = @transform_11, window_bounds = array<i64: 1, 70>}, {pipeline_mode = #tpu.pipeline_mode<synchronous>, transform_indices = @transform_12, window_bounds = array<i64: 1, 70>}, {pipeline_mode = #tpu.pipeline_mode<synchronous>, transform_indices = @transform_13, window_bounds = array<i64: 11, 70, 4>}, {pipeline_mode = #tpu.pipeline_mode<synchronous>, transform_indices = @transform_14, window_bounds = array<i64: 1, 4>}, {transform_indices = @transform_15, window_bounds = array<i64: 1, 1, 4>}]} {
    %c0 = arith.constant 0 : index
    %c0_0 = arith.constant 0 : index
    %c0_1 = arith.constant 0 : index
    %0 = vector.load %arg1[%c0, %c0_0, %c0_1] : memref<1x1047x10xf32, #tpu.memory_space<vmem>>, vector<1x1047x10xf32>
    %1 = vector.shape_cast %0 : vector<1x1047x10xf32> to vector<1047x10xf32>
    %c0_2 = arith.constant 0 : index
    %c0_3 = arith.constant 0 : index
    %2 = vector.load %arg2[%c0_2, %c0_3] : memref<10x10xf32, #tpu.memory_space<vmem>>, vector<10x10xf32>
    %cst = arith.constant dense<0.000000e+00> : vector<1047x10xf32>
    %3 = tpu.matmul %1, %2, %cst {dimension_numbers = #tpu.dot_dimension_numbers<[1], [0], [0], [1], [0, 0, 1, 1], [], []>} : vector<1047x10xf32>, vector<10x10xf32>, vector<1047x10xf32> -> vector<1047x10xf32>
    %c0_4 = arith.constant 0 : index
    %c0_5 = arith.constant 0 : index
    %4 = vector.load %arg3[%c0_4, %c0_5] : memref<1x10xf32, #tpu.memory_space<vmem>>, vector<1x10xf32>
    %5 = vector.broadcast %4 : vector<1x10xf32> to vector<1047x10xf32>
    %6 = arith.mulf %3, %5 : vector<1047x10xf32>
    %c0_6 = arith.constant 0 : index
    %c0_7 = arith.constant 0 : index
    %7 = vector.load %arg4[%c0_6, %c0_7] : memref<1x10xf32, #tpu.memory_space<vmem>>, vector<1x10xf32>
    %8 = vector.broadcast %7 : vector<1x10xf32> to vector<1047x10xf32>
    %9 = arith.addf %6, %8 : vector<1047x10xf32>
    %cst_8 = arith.constant 0.000000e+00 : f32
    %10 = vector.broadcast %cst_8 : f32 to vector<1047x10xf32>
    %11 = arith.maximumf %9, %10 : vector<1047x10xf32>
    %c0_9 = arith.constant 0 : index
    %c0_10 = arith.constant 0 : index
    %12 = vector.load %arg17[%c0_9, %c0_10] : memref<1047x10xf32, #tpu.memory_space<vmem>>, vector<1047x10xf32>
    tpu.vector_store %arg17[%c0_9, %c0_10], %11 {strides = array<i32>} : memref<1047x10xf32, #tpu.memory_space<vmem>>, vector<1047x10xf32>,
    %c0_11 = arith.constant 0 : index
    %c0_12 = arith.constant 0 : index
    %13 = tpu.strided_load %arg17[%c0_11, %c0_12] {strides = array<i32: 3, 1>} : memref<1047x10xf32, #tpu.memory_space<vmem>>, vector<349x10xf32>
    %c1 = arith.constant 1 : index
    %c0_13 = arith.constant 0 : index
    %14 = tpu.strided_load %arg17[%c1, %c0_13] {strides = array<i32: 3, 1>} : memref<1047x10xf32, #tpu.memory_space<vmem>>, vector<349x10xf32>
    %15 = arith.maximumf %13, %14 : vector<349x10xf32>
    %c2 = arith.constant 2 : index
    %c0_14 = arith.constant 0 : index
    %16 = tpu.strided_load %arg17[%c2, %c0_14] {strides = array<i32: 3, 1>} : memref<1047x10xf32, #tpu.memory_space<vmem>>, vector<349x10xf32>
    %17 = arith.maximumf %15, %16 : vector<349x10xf32>
    %c0_15 = arith.constant 0 : index
    %c0_16 = arith.constant 0 : index
    %18 = vector.load %arg18[%c0_15, %c0_16] : memref<349x10xf32, #tpu.memory_space<vmem>>, vector<349x10xf32>
    tpu.vector_store %arg18[%c0_15, %c0_16], %17 {strides = array<i32>} : memref<349x10xf32, #tpu.memory_space<vmem>>, vector<349x10xf32>,
    %c0_17 = arith.constant 0 : index
    %c0_18 = arith.constant 0 : index
    %19 = vector.load %arg18[%c0_17, %c0_18] : memref<349x10xf32, #tpu.memory_space<vmem>>, vector<345x10xf32>
    %c0_19 = arith.constant 0 : index
    %c0_20 = arith.constant 0 : index
    %c0_21 = arith.constant 0 : index
    %20 = vector.load %arg5[%c0_19, %c0_20, %c0_21] : memref<5x10x24xf32, #tpu.memory_space<vmem>>, vector<1x10x24xf32>
    %21 = vector.shape_cast %20 : vector<1x10x24xf32> to vector<10x24xf32>
    %cst_22 = arith.constant dense<0.000000e+00> : vector<345x24xf32>
    %22 = tpu.matmul %19, %21, %cst_22 {dimension_numbers = #tpu.dot_dimension_numbers<[1], [0], [0], [1], [0, 0, 1, 1], [], []>} : vector<345x10xf32>, vector<10x24xf32>, vector<345x24xf32> -> vector<345x24xf32>
    %c1_23 = arith.constant 1 : index
    %c0_24 = arith.constant 0 : index
    %23 = vector.load %arg18[%c1_23, %c0_24] : memref<349x10xf32, #tpu.memory_space<vmem>>, vector<345x10xf32>
    %c1_25 = arith.constant 1 : index
    %c0_26 = arith.constant 0 : index
    %c0_27 = arith.constant 0 : index
    %24 = vector.load %arg5[%c1_25, %c0_26, %c0_27] : memref<5x10x24xf32, #tpu.memory_space<vmem>>, vector<1x10x24xf32>
    %25 = vector.shape_cast %24 : vector<1x10x24xf32> to vector<10x24xf32>
    %cst_28 = arith.constant dense<0.000000e+00> : vector<345x24xf32>
    %26 = tpu.matmul %23, %25, %cst_28 {dimension_numbers = #tpu.dot_dimension_numbers<[1], [0], [0], [1], [0, 0, 1, 1], [], []>} : vector<345x10xf32>, vector<10x24xf32>, vector<345x24xf32> -> vector<345x24xf32>
    %27 = arith.addf %22, %26 : vector<345x24xf32>
    %c2_29 = arith.constant 2 : index
    %c0_30 = arith.constant 0 : index
    %28 = vector.load %arg18[%c2_29, %c0_30] : memref<349x10xf32, #tpu.memory_space<vmem>>, vector<345x10xf32>
    %c2_31 = arith.constant 2 : index
    %c0_32 = arith.constant 0 : index
    %c0_33 = arith.constant 0 : index
    %29 = vector.load %arg5[%c2_31, %c0_32, %c0_33] : memref<5x10x24xf32, #tpu.memory_space<vmem>>, vector<1x10x24xf32>
    %30 = vector.shape_cast %29 : vector<1x10x24xf32> to vector<10x24xf32>
    %cst_34 = arith.constant dense<0.000000e+00> : vector<345x24xf32>
    %31 = tpu.matmul %28, %30, %cst_34 {dimension_numbers = #tpu.dot_dimension_numbers<[1], [0], [0], [1], [0, 0, 1, 1], [], []>} : vector<345x10xf32>, vector<10x24xf32>, vector<345x24xf32> -> vector<345x24xf32>
    %32 = arith.addf %27, %31 : vector<345x24xf32>
    %c3 = arith.constant 3 : index
    %c0_35 = arith.constant 0 : index
    %33 = vector.load %arg18[%c3, %c0_35] : memref<349x10xf32, #tpu.memory_space<vmem>>, vector<345x10xf32>
    %c3_36 = arith.constant 3 : index
    %c0_37 = arith.constant 0 : index
    %c0_38 = arith.constant 0 : index
    %34 = vector.load %arg5[%c3_36, %c0_37, %c0_38] : memref<5x10x24xf32, #tpu.memory_space<vmem>>, vector<1x10x24xf32>
    %35 = vector.shape_cast %34 : vector<1x10x24xf32> to vector<10x24xf32>
    %cst_39 = arith.constant dense<0.000000e+00> : vector<345x24xf32>
    %36 = tpu.matmul %33, %35, %cst_39 {dimension_numbers = #tpu.dot_dimension_numbers<[1], [0], [0], [1], [0, 0, 1, 1], [], []>} : vector<345x10xf32>, vector<10x24xf32>, vector<345x24xf32> -> vector<345x24xf32>
    %37 = arith.addf %32, %36 : vector<345x24xf32>
    %c4 = arith.constant 4 : index
    %c0_40 = arith.constant 0 : index
    %38 = vector.load %arg18[%c4, %c0_40] : memref<349x10xf32, #tpu.memory_space<vmem>>, vector<345x10xf32>
    %c4_41 = arith.constant 4 : index
    %c0_42 = arith.constant 0 : index
    %c0_43 = arith.constant 0 : index
    %39 = vector.load %arg5[%c4_41, %c0_42, %c0_43] : memref<5x10x24xf32, #tpu.memory_space<vmem>>, vector<1x10x24xf32>
    %40 = vector.shape_cast %39 : vector<1x10x24xf32> to vector<10x24xf32>
    %cst_44 = arith.constant dense<0.000000e+00> : vector<345x24xf32>
    %41 = tpu.matmul %38, %40, %cst_44 {dimension_numbers = #tpu.dot_dimension_numbers<[1], [0], [0], [1], [0, 0, 1, 1], [], []>} : vector<345x10xf32>, vector<10x24xf32>, vector<345x24xf32> -> vector<345x24xf32>
    %42 = arith.addf %37, %41 : vector<345x24xf32>
    %c0_45 = arith.constant 0 : index
    %c0_46 = arith.constant 0 : index
    %43 = vector.load %arg6[%c0_45, %c0_46] : memref<1x24xf32, #tpu.memory_space<vmem>>, vector<1x24xf32>
    %44 = vector.broadcast %43 : vector<1x24xf32> to vector<345x24xf32>
    %45 = arith.mulf %42, %44 : vector<345x24xf32>
    %c0_47 = arith.constant 0 : index
    %c0_48 = arith.constant 0 : index
    %46 = vector.load %arg7[%c0_47, %c0_48] : memref<1x24xf32, #tpu.memory_space<vmem>>, vector<1x24xf32>
    %47 = vector.broadcast %46 : vector<1x24xf32> to vector<345x24xf32>
    %48 = arith.addf %45, %47 : vector<345x24xf32>
    %cst_49 = arith.constant 0.000000e+00 : f32
    %49 = vector.broadcast %cst_49 : f32 to vector<345x24xf32>
    %50 = arith.maximumf %48, %49 : vector<345x24xf32>
    %c0_50 = arith.constant 0 : index
    %c0_51 = arith.constant 0 : index
    %51 = vector.load %arg19[%c0_50, %c0_51] : memref<345x24xf32, #tpu.memory_space<vmem>>, vector<345x24xf32>
    tpu.vector_store %arg19[%c0_50, %c0_51], %50 {strides = array<i32>} : memref<345x24xf32, #tpu.memory_space<vmem>>, vector<345x24xf32>,
    %c0_52 = arith.constant 0 : index
    %c0_53 = arith.constant 0 : index
    %52 = tpu.strided_load %arg19[%c0_52, %c0_53] {strides = array<i32: 3, 1>} : memref<345x24xf32, #tpu.memory_space<vmem>>, vector<115x24xf32>
    %c1_54 = arith.constant 1 : index
    %c0_55 = arith.constant 0 : index
    %53 = tpu.strided_load %arg19[%c1_54, %c0_55] {strides = array<i32: 3, 1>} : memref<345x24xf32, #tpu.memory_space<vmem>>, vector<115x24xf32>
    %54 = arith.maximumf %52, %53 : vector<115x24xf32>
    %c2_56 = arith.constant 2 : index
    %c0_57 = arith.constant 0 : index
    %55 = tpu.strided_load %arg19[%c2_56, %c0_57] {strides = array<i32: 3, 1>} : memref<345x24xf32, #tpu.memory_space<vmem>>, vector<115x24xf32>
    %56 = arith.maximumf %54, %55 : vector<115x24xf32>
    %c0_58 = arith.constant 0 : index
    %c0_59 = arith.constant 0 : index
    %57 = vector.load %arg20[%c0_58, %c0_59] : memref<115x24xf32, #tpu.memory_space<vmem>>, vector<115x24xf32>
    tpu.vector_store %arg20[%c0_58, %c0_59], %56 {strides = array<i32>} : memref<115x24xf32, #tpu.memory_space<vmem>>, vector<115x24xf32>,
    %c0_60 = arith.constant 0 : index
    %c0_61 = arith.constant 0 : index
    %58 = vector.load %arg20[%c0_60, %c0_61] : memref<115x24xf32, #tpu.memory_space<vmem>>, vector<111x24xf32>
    %c0_62 = arith.constant 0 : index
    %c0_63 = arith.constant 0 : index
    %c0_64 = arith.constant 0 : index
    %59 = vector.load %arg8[%c0_62, %c0_63, %c0_64] : memref<5x24x50xf32, #tpu.memory_space<vmem>>, vector<1x24x50xf32>
    %60 = vector.shape_cast %59 : vector<1x24x50xf32> to vector<24x50xf32>
    %cst_65 = arith.constant dense<0.000000e+00> : vector<111x50xf32>
    %61 = tpu.matmul %58, %60, %cst_65 {dimension_numbers = #tpu.dot_dimension_numbers<[1], [0], [0], [1], [0, 0, 1, 1], [], []>} : vector<111x24xf32>, vector<24x50xf32>, vector<111x50xf32> -> vector<111x50xf32>
    %c1_66 = arith.constant 1 : index
    %c0_67 = arith.constant 0 : index
    %62 = vector.load %arg20[%c1_66, %c0_67] : memref<115x24xf32, #tpu.memory_space<vmem>>, vector<111x24xf32>
    %c1_68 = arith.constant 1 : index
    %c0_69 = arith.constant 0 : index
    %c0_70 = arith.constant 0 : index
    %63 = vector.load %arg8[%c1_68, %c0_69, %c0_70] : memref<5x24x50xf32, #tpu.memory_space<vmem>>, vector<1x24x50xf32>
    %64 = vector.shape_cast %63 : vector<1x24x50xf32> to vector<24x50xf32>
    %cst_71 = arith.constant dense<0.000000e+00> : vector<111x50xf32>
    %65 = tpu.matmul %62, %64, %cst_71 {dimension_numbers = #tpu.dot_dimension_numbers<[1], [0], [0], [1], [0, 0, 1, 1], [], []>} : vector<111x24xf32>, vector<24x50xf32>, vector<111x50xf32> -> vector<111x50xf32>
    %66 = arith.addf %61, %65 : vector<111x50xf32>
    %c2_72 = arith.constant 2 : index
    %c0_73 = arith.constant 0 : index
    %67 = vector.load %arg20[%c2_72, %c0_73] : memref<115x24xf32, #tpu.memory_space<vmem>>, vector<111x24xf32>
    %c2_74 = arith.constant 2 : index
    %c0_75 = arith.constant 0 : index
    %c0_76 = arith.constant 0 : index
    %68 = vector.load %arg8[%c2_74, %c0_75, %c0_76] : memref<5x24x50xf32, #tpu.memory_space<vmem>>, vector<1x24x50xf32>
    %69 = vector.shape_cast %68 : vector<1x24x50xf32> to vector<24x50xf32>
    %cst_77 = arith.constant dense<0.000000e+00> : vector<111x50xf32>
    %70 = tpu.matmul %67, %69, %cst_77 {dimension_numbers = #tpu.dot_dimension_numbers<[1], [0], [0], [1], [0, 0, 1, 1], [], []>} : vector<111x24xf32>, vector<24x50xf32>, vector<111x50xf32> -> vector<111x50xf32>
    %71 = arith.addf %66, %70 : vector<111x50xf32>
    %c3_78 = arith.constant 3 : index
    %c0_79 = arith.constant 0 : index
    %72 = vector.load %arg20[%c3_78, %c0_79] : memref<115x24xf32, #tpu.memory_space<vmem>>, vector<111x24xf32>
    %c3_80 = arith.constant 3 : index
    %c0_81 = arith.constant 0 : index
    %c0_82 = arith.constant 0 : index
    %73 = vector.load %arg8[%c3_80, %c0_81, %c0_82] : memref<5x24x50xf32, #tpu.memory_space<vmem>>, vector<1x24x50xf32>
    %74 = vector.shape_cast %73 : vector<1x24x50xf32> to vector<24x50xf32>
    %cst_83 = arith.constant dense<0.000000e+00> : vector<111x50xf32>
    %75 = tpu.matmul %72, %74, %cst_83 {dimension_numbers = #tpu.dot_dimension_numbers<[1], [0], [0], [1], [0, 0, 1, 1], [], []>} : vector<111x24xf32>, vector<24x50xf32>, vector<111x50xf32> -> vector<111x50xf32>
    %76 = arith.addf %71, %75 : vector<111x50xf32>
    %c4_84 = arith.constant 4 : index
    %c0_85 = arith.constant 0 : index
    %77 = vector.load %arg20[%c4_84, %c0_85] : memref<115x24xf32, #tpu.memory_space<vmem>>, vector<111x24xf32>
    %c4_86 = arith.constant 4 : index
    %c0_87 = arith.constant 0 : index
    %c0_88 = arith.constant 0 : index
    %78 = vector.load %arg8[%c4_86, %c0_87, %c0_88] : memref<5x24x50xf32, #tpu.memory_space<vmem>>, vector<1x24x50xf32>
    %79 = vector.shape_cast %78 : vector<1x24x50xf32> to vector<24x50xf32>
    %cst_89 = arith.constant dense<0.000000e+00> : vector<111x50xf32>
    %80 = tpu.matmul %77, %79, %cst_89 {dimension_numbers = #tpu.dot_dimension_numbers<[1], [0], [0], [1], [0, 0, 1, 1], [], []>} : vector<111x24xf32>, vector<24x50xf32>, vector<111x50xf32> -> vector<111x50xf32>
    %81 = arith.addf %76, %80 : vector<111x50xf32>
    %c0_90 = arith.constant 0 : index
    %c0_91 = arith.constant 0 : index
    %82 = vector.load %arg9[%c0_90, %c0_91] : memref<1x50xf32, #tpu.memory_space<vmem>>, vector<1x50xf32>
    %83 = vector.broadcast %82 : vector<1x50xf32> to vector<111x50xf32>
    %84 = arith.mulf %81, %83 : vector<111x50xf32>
    %c0_92 = arith.constant 0 : index
    %c0_93 = arith.constant 0 : index
    %85 = vector.load %arg10[%c0_92, %c0_93] : memref<1x50xf32, #tpu.memory_space<vmem>>, vector<1x50xf32>
    %86 = vector.broadcast %85 : vector<1x50xf32> to vector<111x50xf32>
    %87 = arith.addf %84, %86 : vector<111x50xf32>
    %cst_94 = arith.constant 0.000000e+00 : f32
    %88 = vector.broadcast %cst_94 : f32 to vector<111x50xf32>
    %89 = arith.maximumf %87, %88 : vector<111x50xf32>
    %c0_95 = arith.constant 0 : index
    %c0_96 = arith.constant 0 : index
    %90 = vector.load %arg21[%c0_95, %c0_96] : memref<111x50xf32, #tpu.memory_space<vmem>>, vector<111x50xf32>
    tpu.vector_store %arg21[%c0_95, %c0_96], %89 {strides = array<i32>} : memref<111x50xf32, #tpu.memory_space<vmem>>, vector<111x50xf32>,
    %c0_97 = arith.constant 0 : index
    %c0_98 = arith.constant 0 : index
    %91 = tpu.strided_load %arg21[%c0_97, %c0_98] {strides = array<i32: 3, 1>} : memref<111x50xf32, #tpu.memory_space<vmem>>, vector<37x50xf32>
    %c1_99 = arith.constant 1 : index
    %c0_100 = arith.constant 0 : index
    %92 = tpu.strided_load %arg21[%c1_99, %c0_100] {strides = array<i32: 3, 1>} : memref<111x50xf32, #tpu.memory_space<vmem>>, vector<37x50xf32>
    %93 = arith.maximumf %91, %92 : vector<37x50xf32>
    %c2_101 = arith.constant 2 : index
    %c0_102 = arith.constant 0 : index
    %94 = tpu.strided_load %arg21[%c2_101, %c0_102] {strides = array<i32: 3, 1>} : memref<111x50xf32, #tpu.memory_space<vmem>>, vector<37x50xf32>
    %95 = arith.maximumf %93, %94 : vector<37x50xf32>
    %c0_103 = arith.constant 0 : index
    %c0_104 = arith.constant 0 : index
    %96 = vector.load %arg22[%c0_103, %c0_104] : memref<37x50xf32, #tpu.memory_space<vmem>>, vector<37x50xf32>
    tpu.vector_store %arg22[%c0_103, %c0_104], %95 {strides = array<i32>} : memref<37x50xf32, #tpu.memory_space<vmem>>, vector<37x50xf32>,
    %c0_105 = arith.constant 0 : index
    %c0_106 = arith.constant 0 : index
    %97 = vector.load %arg22[%c0_105, %c0_106] : memref<37x50xf32, #tpu.memory_space<vmem>>, vector<33x50xf32>
    %c0_107 = arith.constant 0 : index
    %c0_108 = arith.constant 0 : index
    %c0_109 = arith.constant 0 : index
    %98 = vector.load %arg11[%c0_107, %c0_108, %c0_109] : memref<5x50x70xf32, #tpu.memory_space<vmem>>, vector<1x50x70xf32>
    %99 = vector.shape_cast %98 : vector<1x50x70xf32> to vector<50x70xf32>
    %cst_110 = arith.constant dense<0.000000e+00> : vector<33x70xf32>
    %100 = tpu.matmul %97, %99, %cst_110 {dimension_numbers = #tpu.dot_dimension_numbers<[1], [0], [0], [1], [0, 0, 1, 1], [], []>} : vector<33x50xf32>, vector<50x70xf32>, vector<33x70xf32> -> vector<33x70xf32>
    %c1_111 = arith.constant 1 : index
    %c0_112 = arith.constant 0 : index
    %101 = vector.load %arg22[%c1_111, %c0_112] : memref<37x50xf32, #tpu.memory_space<vmem>>, vector<33x50xf32>
    %c1_113 = arith.constant 1 : index
    %c0_114 = arith.constant 0 : index
    %c0_115 = arith.constant 0 : index
    %102 = vector.load %arg11[%c1_113, %c0_114, %c0_115] : memref<5x50x70xf32, #tpu.memory_space<vmem>>, vector<1x50x70xf32>
    %103 = vector.shape_cast %102 : vector<1x50x70xf32> to vector<50x70xf32>
    %cst_116 = arith.constant dense<0.000000e+00> : vector<33x70xf32>
    %104 = tpu.matmul %101, %103, %cst_116 {dimension_numbers = #tpu.dot_dimension_numbers<[1], [0], [0], [1], [0, 0, 1, 1], [], []>} : vector<33x50xf32>, vector<50x70xf32>, vector<33x70xf32> -> vector<33x70xf32>
    %105 = arith.addf %100, %104 : vector<33x70xf32>
    %c2_117 = arith.constant 2 : index
    %c0_118 = arith.constant 0 : index
    %106 = vector.load %arg22[%c2_117, %c0_118] : memref<37x50xf32, #tpu.memory_space<vmem>>, vector<33x50xf32>
    %c2_119 = arith.constant 2 : index
    %c0_120 = arith.constant 0 : index
    %c0_121 = arith.constant 0 : index
    %107 = vector.load %arg11[%c2_119, %c0_120, %c0_121] : memref<5x50x70xf32, #tpu.memory_space<vmem>>, vector<1x50x70xf32>
    %108 = vector.shape_cast %107 : vector<1x50x70xf32> to vector<50x70xf32>
    %cst_122 = arith.constant dense<0.000000e+00> : vector<33x70xf32>
    %109 = tpu.matmul %106, %108, %cst_122 {dimension_numbers = #tpu.dot_dimension_numbers<[1], [0], [0], [1], [0, 0, 1, 1], [], []>} : vector<33x50xf32>, vector<50x70xf32>, vector<33x70xf32> -> vector<33x70xf32>
    %110 = arith.addf %105, %109 : vector<33x70xf32>
    %c3_123 = arith.constant 3 : index
    %c0_124 = arith.constant 0 : index
    %111 = vector.load %arg22[%c3_123, %c0_124] : memref<37x50xf32, #tpu.memory_space<vmem>>, vector<33x50xf32>
    %c3_125 = arith.constant 3 : index
    %c0_126 = arith.constant 0 : index
    %c0_127 = arith.constant 0 : index
    %112 = vector.load %arg11[%c3_125, %c0_126, %c0_127] : memref<5x50x70xf32, #tpu.memory_space<vmem>>, vector<1x50x70xf32>
    %113 = vector.shape_cast %112 : vector<1x50x70xf32> to vector<50x70xf32>
    %cst_128 = arith.constant dense<0.000000e+00> : vector<33x70xf32>
    %114 = tpu.matmul %111, %113, %cst_128 {dimension_numbers = #tpu.dot_dimension_numbers<[1], [0], [0], [1], [0, 0, 1, 1], [], []>} : vector<33x50xf32>, vector<50x70xf32>, vector<33x70xf32> -> vector<33x70xf32>
    %115 = arith.addf %110, %114 : vector<33x70xf32>
    %c4_129 = arith.constant 4 : index
    %c0_130 = arith.constant 0 : index
    %116 = vector.load %arg22[%c4_129, %c0_130] : memref<37x50xf32, #tpu.memory_space<vmem>>, vector<33x50xf32>
    %c4_131 = arith.constant 4 : index
    %c0_132 = arith.constant 0 : index
    %c0_133 = arith.constant 0 : index
    %117 = vector.load %arg11[%c4_131, %c0_132, %c0_133] : memref<5x50x70xf32, #tpu.memory_space<vmem>>, vector<1x50x70xf32>
    %118 = vector.shape_cast %117 : vector<1x50x70xf32> to vector<50x70xf32>
    %cst_134 = arith.constant dense<0.000000e+00> : vector<33x70xf32>
    %119 = tpu.matmul %116, %118, %cst_134 {dimension_numbers = #tpu.dot_dimension_numbers<[1], [0], [0], [1], [0, 0, 1, 1], [], []>} : vector<33x50xf32>, vector<50x70xf32>, vector<33x70xf32> -> vector<33x70xf32>
    %120 = arith.addf %115, %119 : vector<33x70xf32>
    %c0_135 = arith.constant 0 : index
    %c0_136 = arith.constant 0 : index
    %121 = vector.load %arg12[%c0_135, %c0_136] : memref<1x70xf32, #tpu.memory_space<vmem>>, vector<1x70xf32>
    %122 = vector.broadcast %121 : vector<1x70xf32> to vector<33x70xf32>
    %123 = arith.mulf %120, %122 : vector<33x70xf32>
    %c0_137 = arith.constant 0 : index
    %c0_138 = arith.constant 0 : index
    %124 = vector.load %arg13[%c0_137, %c0_138] : memref<1x70xf32, #tpu.memory_space<vmem>>, vector<1x70xf32>
    %125 = vector.broadcast %124 : vector<1x70xf32> to vector<33x70xf32>
    %126 = arith.addf %123, %125 : vector<33x70xf32>
    %cst_139 = arith.constant 0.000000e+00 : f32
    %127 = vector.broadcast %cst_139 : f32 to vector<33x70xf32>
    %128 = arith.maximumf %126, %127 : vector<33x70xf32>
    %c0_140 = arith.constant 0 : index
    %c0_141 = arith.constant 0 : index
    %129 = vector.load %arg23[%c0_140, %c0_141] : memref<33x70xf32, #tpu.memory_space<vmem>>, vector<33x70xf32>
    tpu.vector_store %arg23[%c0_140, %c0_141], %128 {strides = array<i32>} : memref<33x70xf32, #tpu.memory_space<vmem>>, vector<33x70xf32>,
    %c0_142 = arith.constant 0 : index
    %c0_143 = arith.constant 0 : index
    %130 = tpu.strided_load %arg23[%c0_142, %c0_143] {strides = array<i32: 3, 1>} : memref<33x70xf32, #tpu.memory_space<vmem>>, vector<11x70xf32>
    %c1_144 = arith.constant 1 : index
    %c0_145 = arith.constant 0 : index
    %131 = tpu.strided_load %arg23[%c1_144, %c0_145] {strides = array<i32: 3, 1>} : memref<33x70xf32, #tpu.memory_space<vmem>>, vector<11x70xf32>
    %132 = arith.maximumf %130, %131 : vector<11x70xf32>
    %c2_146 = arith.constant 2 : index
    %c0_147 = arith.constant 0 : index
    %133 = tpu.strided_load %arg23[%c2_146, %c0_147] {strides = array<i32: 3, 1>} : memref<33x70xf32, #tpu.memory_space<vmem>>, vector<11x70xf32>
    %134 = arith.maximumf %132, %133 : vector<11x70xf32>
    %c0_148 = arith.constant 0 : index
    %c0_149 = arith.constant 0 : index
    %135 = vector.load %arg24[%c0_148, %c0_149] : memref<11x70xf32, #tpu.memory_space<vmem>>, vector<11x70xf32>
    tpu.vector_store %arg24[%c0_148, %c0_149], %134 {strides = array<i32>} : memref<11x70xf32, #tpu.memory_space<vmem>>, vector<11x70xf32>,
    %c0_150 = arith.constant 0 : index
    %c0_151 = arith.constant 0 : index
    %136 = vector.load %arg24[%c0_150, %c0_151] : memref<11x70xf32, #tpu.memory_space<vmem>>, vector<1x70xf32>
    %c0_152 = arith.constant 0 : index
    %c0_153 = arith.constant 0 : index
    %c0_154 = arith.constant 0 : index
    %137 = vector.load %arg14[%c0_152, %c0_153, %c0_154] : memref<11x70x4xf32, #tpu.memory_space<vmem>>, vector<1x70x4xf32>
    %138 = vector.shape_cast %137 : vector<1x70x4xf32> to vector<70x4xf32>
    %cst_155 = arith.constant dense<0.000000e+00> : vector<1x4xf32>
    %139 = tpu.matmul %136, %138, %cst_155 {dimension_numbers = #tpu.dot_dimension_numbers<[1], [0], [0], [1], [0, 0, 1, 1], [], []>} : vector<1x70xf32>, vector<70x4xf32>, vector<1x4xf32> -> vector<1x4xf32>
    %c1_156 = arith.constant 1 : index
    %c0_157 = arith.constant 0 : index
    %140 = vector.load %arg24[%c1_156, %c0_157] : memref<11x70xf32, #tpu.memory_space<vmem>>, vector<1x70xf32>
    %c1_158 = arith.constant 1 : index
    %c0_159 = arith.constant 0 : index
    %c0_160 = arith.constant 0 : index
    %141 = vector.load %arg14[%c1_158, %c0_159, %c0_160] : memref<11x70x4xf32, #tpu.memory_space<vmem>>, vector<1x70x4xf32>
    %142 = vector.shape_cast %141 : vector<1x70x4xf32> to vector<70x4xf32>
    %cst_161 = arith.constant dense<0.000000e+00> : vector<1x4xf32>
    %143 = tpu.matmul %140, %142, %cst_161 {dimension_numbers = #tpu.dot_dimension_numbers<[1], [0], [0], [1], [0, 0, 1, 1], [], []>} : vector<1x70xf32>, vector<70x4xf32>, vector<1x4xf32> -> vector<1x4xf32>
    %144 = arith.addf %139, %143 : vector<1x4xf32>
    %c2_162 = arith.constant 2 : index
    %c0_163 = arith.constant 0 : index
    %145 = vector.load %arg24[%c2_162, %c0_163] : memref<11x70xf32, #tpu.memory_space<vmem>>, vector<1x70xf32>
    %c2_164 = arith.constant 2 : index
    %c0_165 = arith.constant 0 : index
    %c0_166 = arith.constant 0 : index
    %146 = vector.load %arg14[%c2_164, %c0_165, %c0_166] : memref<11x70x4xf32, #tpu.memory_space<vmem>>, vector<1x70x4xf32>
    %147 = vector.shape_cast %146 : vector<1x70x4xf32> to vector<70x4xf32>
    %cst_167 = arith.constant dense<0.000000e+00> : vector<1x4xf32>
    %148 = tpu.matmul %145, %147, %cst_167 {dimension_numbers = #tpu.dot_dimension_numbers<[1], [0], [0], [1], [0, 0, 1, 1], [], []>} : vector<1x70xf32>, vector<70x4xf32>, vector<1x4xf32> -> vector<1x4xf32>
    %149 = arith.addf %144, %148 : vector<1x4xf32>
    %c3_168 = arith.constant 3 : index
    %c0_169 = arith.constant 0 : index
    %150 = vector.load %arg24[%c3_168, %c0_169] : memref<11x70xf32, #tpu.memory_space<vmem>>, vector<1x70xf32>
    %c3_170 = arith.constant 3 : index
    %c0_171 = arith.constant 0 : index
    %c0_172 = arith.constant 0 : index
    %151 = vector.load %arg14[%c3_170, %c0_171, %c0_172] : memref<11x70x4xf32, #tpu.memory_space<vmem>>, vector<1x70x4xf32>
    %152 = vector.shape_cast %151 : vector<1x70x4xf32> to vector<70x4xf32>
    %cst_173 = arith.constant dense<0.000000e+00> : vector<1x4xf32>
    %153 = tpu.matmul %150, %152, %cst_173 {dimension_numbers = #tpu.dot_dimension_numbers<[1], [0], [0], [1], [0, 0, 1, 1], [], []>} : vector<1x70xf32>, vector<70x4xf32>, vector<1x4xf32> -> vector<1x4xf32>
    %154 = arith.addf %149, %153 : vector<1x4xf32>
    %c4_174 = arith.constant 4 : index
    %c0_175 = arith.constant 0 : index
    %155 = vector.load %arg24[%c4_174, %c0_175] : memref<11x70xf32, #tpu.memory_space<vmem>>, vector<1x70xf32>
    %c4_176 = arith.constant 4 : index
    %c0_177 = arith.constant 0 : index
    %c0_178 = arith.constant 0 : index
    %156 = vector.load %arg14[%c4_176, %c0_177, %c0_178] : memref<11x70x4xf32, #tpu.memory_space<vmem>>, vector<1x70x4xf32>
    %157 = vector.shape_cast %156 : vector<1x70x4xf32> to vector<70x4xf32>
    %cst_179 = arith.constant dense<0.000000e+00> : vector<1x4xf32>
    %158 = tpu.matmul %155, %157, %cst_179 {dimension_numbers = #tpu.dot_dimension_numbers<[1], [0], [0], [1], [0, 0, 1, 1], [], []>} : vector<1x70xf32>, vector<70x4xf32>, vector<1x4xf32> -> vector<1x4xf32>
    %159 = arith.addf %154, %158 : vector<1x4xf32>
    %c5 = arith.constant 5 : index
    %c0_180 = arith.constant 0 : index
    %160 = vector.load %arg24[%c5, %c0_180] : memref<11x70xf32, #tpu.memory_space<vmem>>, vector<1x70xf32>
    %c5_181 = arith.constant 5 : index
    %c0_182 = arith.constant 0 : index
    %c0_183 = arith.constant 0 : index
    %161 = vector.load %arg14[%c5_181, %c0_182, %c0_183] : memref<11x70x4xf32, #tpu.memory_space<vmem>>, vector<1x70x4xf32>
    %162 = vector.shape_cast %161 : vector<1x70x4xf32> to vector<70x4xf32>
    %cst_184 = arith.constant dense<0.000000e+00> : vector<1x4xf32>
    %163 = tpu.matmul %160, %162, %cst_184 {dimension_numbers = #tpu.dot_dimension_numbers<[1], [0], [0], [1], [0, 0, 1, 1], [], []>} : vector<1x70xf32>, vector<70x4xf32>, vector<1x4xf32> -> vector<1x4xf32>
    %164 = arith.addf %159, %163 : vector<1x4xf32>
    %c6 = arith.constant 6 : index
    %c0_185 = arith.constant 0 : index
    %165 = vector.load %arg24[%c6, %c0_185] : memref<11x70xf32, #tpu.memory_space<vmem>>, vector<1x70xf32>
    %c6_186 = arith.constant 6 : index
    %c0_187 = arith.constant 0 : index
    %c0_188 = arith.constant 0 : index
    %166 = vector.load %arg14[%c6_186, %c0_187, %c0_188] : memref<11x70x4xf32, #tpu.memory_space<vmem>>, vector<1x70x4xf32>
    %167 = vector.shape_cast %166 : vector<1x70x4xf32> to vector<70x4xf32>
    %cst_189 = arith.constant dense<0.000000e+00> : vector<1x4xf32>
    %168 = tpu.matmul %165, %167, %cst_189 {dimension_numbers = #tpu.dot_dimension_numbers<[1], [0], [0], [1], [0, 0, 1, 1], [], []>} : vector<1x70xf32>, vector<70x4xf32>, vector<1x4xf32> -> vector<1x4xf32>
    %169 = arith.addf %164, %168 : vector<1x4xf32>
    %c7 = arith.constant 7 : index
    %c0_190 = arith.constant 0 : index
    %170 = vector.load %arg24[%c7, %c0_190] : memref<11x70xf32, #tpu.memory_space<vmem>>, vector<1x70xf32>
    %c7_191 = arith.constant 7 : index
    %c0_192 = arith.constant 0 : index
    %c0_193 = arith.constant 0 : index
    %171 = vector.load %arg14[%c7_191, %c0_192, %c0_193] : memref<11x70x4xf32, #tpu.memory_space<vmem>>, vector<1x70x4xf32>
    %172 = vector.shape_cast %171 : vector<1x70x4xf32> to vector<70x4xf32>
    %cst_194 = arith.constant dense<0.000000e+00> : vector<1x4xf32>
    %173 = tpu.matmul %170, %172, %cst_194 {dimension_numbers = #tpu.dot_dimension_numbers<[1], [0], [0], [1], [0, 0, 1, 1], [], []>} : vector<1x70xf32>, vector<70x4xf32>, vector<1x4xf32> -> vector<1x4xf32>
    %174 = arith.addf %169, %173 : vector<1x4xf32>
    %c8 = arith.constant 8 : index
    %c0_195 = arith.constant 0 : index
    %175 = vector.load %arg24[%c8, %c0_195] : memref<11x70xf32, #tpu.memory_space<vmem>>, vector<1x70xf32>
    %c8_196 = arith.constant 8 : index
    %c0_197 = arith.constant 0 : index
    %c0_198 = arith.constant 0 : index
    %176 = vector.load %arg14[%c8_196, %c0_197, %c0_198] : memref<11x70x4xf32, #tpu.memory_space<vmem>>, vector<1x70x4xf32>
    %177 = vector.shape_cast %176 : vector<1x70x4xf32> to vector<70x4xf32>
    %cst_199 = arith.constant dense<0.000000e+00> : vector<1x4xf32>
    %178 = tpu.matmul %175, %177, %cst_199 {dimension_numbers = #tpu.dot_dimension_numbers<[1], [0], [0], [1], [0, 0, 1, 1], [], []>} : vector<1x70xf32>, vector<70x4xf32>, vector<1x4xf32> -> vector<1x4xf32>
    %179 = arith.addf %174, %178 : vector<1x4xf32>
    %c9 = arith.constant 9 : index
    %c0_200 = arith.constant 0 : index
    %180 = vector.load %arg24[%c9, %c0_200] : memref<11x70xf32, #tpu.memory_space<vmem>>, vector<1x70xf32>
    %c9_201 = arith.constant 9 : index
    %c0_202 = arith.constant 0 : index
    %c0_203 = arith.constant 0 : index
    %181 = vector.load %arg14[%c9_201, %c0_202, %c0_203] : memref<11x70x4xf32, #tpu.memory_space<vmem>>, vector<1x70x4xf32>
    %182 = vector.shape_cast %181 : vector<1x70x4xf32> to vector<70x4xf32>
    %cst_204 = arith.constant dense<0.000000e+00> : vector<1x4xf32>
    %183 = tpu.matmul %180, %182, %cst_204 {dimension_numbers = #tpu.dot_dimension_numbers<[1], [0], [0], [1], [0, 0, 1, 1], [], []>} : vector<1x70xf32>, vector<70x4xf32>, vector<1x4xf32> -> vector<1x4xf32>
    %184 = arith.addf %179, %183 : vector<1x4xf32>
    %c10 = arith.constant 10 : index
    %c0_205 = arith.constant 0 : index
    %185 = vector.load %arg24[%c10, %c0_205] : memref<11x70xf32, #tpu.memory_space<vmem>>, vector<1x70xf32>
    %c10_206 = arith.constant 10 : index
    %c0_207 = arith.constant 0 : index
    %c0_208 = arith.constant 0 : index
    %186 = vector.load %arg14[%c10_206, %c0_207, %c0_208] : memref<11x70x4xf32, #tpu.memory_space<vmem>>, vector<1x70x4xf32>
    %187 = vector.shape_cast %186 : vector<1x70x4xf32> to vector<70x4xf32>
    %cst_209 = arith.constant dense<0.000000e+00> : vector<1x4xf32>
    %188 = tpu.matmul %185, %187, %cst_209 {dimension_numbers = #tpu.dot_dimension_numbers<[1], [0], [0], [1], [0, 0, 1, 1], [], []>} : vector<1x70xf32>, vector<70x4xf32>, vector<1x4xf32> -> vector<1x4xf32>
    %189 = arith.addf %184, %188 : vector<1x4xf32>
    %c0_210 = arith.constant 0 : index
    %c0_211 = arith.constant 0 : index
    %190 = vector.load %arg15[%c0_210, %c0_211] : memref<1x4xf32, #tpu.memory_space<vmem>>, vector<1x4xf32>
    %191 = arith.addf %189, %190 : vector<1x4xf32>
    %c0_212 = arith.constant 0 : index
    %c0_213 = arith.constant 0 : index
    %c0_214 = arith.constant 0 : index
    %192 = vector.load %arg16[%c0_212, %c0_213, %c0_214] : memref<1x1x4xf32, #tpu.memory_space<vmem>>, vector<1x1x4xf32>
    %193 = vector.shape_cast %192 : vector<1x1x4xf32> to vector<1x4xf32>
    %194 = vector.shape_cast %191 : vector<1x4xf32> to vector<1x1x4xf32>
    tpu.vector_store %arg16[%c0_212, %c0_213, %c0_214], %194 {strides = array<i32>} : memref<1x1x4xf32, #tpu.memory_space<vmem>>, vector<1x1x4xf32>,
    return
  }
  func.func @transform_0(%arg0: i32) -> (i32, i32, i32) {
    %c0_i32 = arith.constant 0 : i32
    %c0_i32_0 = arith.constant 0 : i32
    %c0_i32_1 = arith.constant 0 : i32
    return %arg0, %c0_i32, %c0_i32_0 : i32, i32, i32
  }
  func.func @transform_1(%arg0: i32) -> (i32, i32) {
    %c0_i32 = arith.constant 0 : i32
    %c0_i32_0 = arith.constant 0 : i32
    %c0_i32_1 = arith.constant 0 : i32
    return %c0_i32, %c0_i32_0 : i32, i32
  }
  func.func @transform_2(%arg0: i32) -> (i32, i32) {
    %c0_i32 = arith.constant 0 : i32
    %c0_i32_0 = arith.constant 0 : i32
    %c0_i32_1 = arith.constant 0 : i32
    return %c0_i32, %c0_i32_0 : i32, i32
  }
  func.func @transform_3(%arg0: i32) -> (i32, i32) {
    %c0_i32 = arith.constant 0 : i32
    %c0_i32_0 = arith.constant 0 : i32
    %c0_i32_1 = arith.constant 0 : i32
    return %c0_i32, %c0_i32_0 : i32, i32
  }
  func.func @transform_4(%arg0: i32) -> (i32, i32, i32) {
    %c0_i32 = arith.constant 0 : i32
    %c0_i32_0 = arith.constant 0 : i32
    %c0_i32_1 = arith.constant 0 : i32
    %c0_i32_2 = arith.constant 0 : i32
    return %c0_i32, %c0_i32_0, %c0_i32_1 : i32, i32, i32
  }
  func.func @transform_5(%arg0: i32) -> (i32, i32) {
    %c0_i32 = arith.constant 0 : i32
    %c0_i32_0 = arith.constant 0 : i32
    %c0_i32_1 = arith.constant 0 : i32
    return %c0_i32, %c0_i32_0 : i32, i32
  }
  func.func @transform_6(%arg0: i32) -> (i32, i32) {
    %c0_i32 = arith.constant 0 : i32
    %c0_i32_0 = arith.constant 0 : i32
    %c0_i32_1 = arith.constant 0 : i32
    return %c0_i32, %c0_i32_0 : i32, i32
  }
  func.func @transform_7(%arg0: i32) -> (i32, i32, i32) {
    %c0_i32 = arith.constant 0 : i32
    %c0_i32_0 = arith.constant 0 : i32
    %c0_i32_1 = arith.constant 0 : i32
    %c0_i32_2 = arith.constant 0 : i32
    return %c0_i32, %c0_i32_0, %c0_i32_1 : i32, i32, i32
  }
  func.func @transform_8(%arg0: i32) -> (i32, i32) {
    %c0_i32 = arith.constant 0 : i32
    %c0_i32_0 = arith.constant 0 : i32
    %c0_i32_1 = arith.constant 0 : i32
    return %c0_i32, %c0_i32_0 : i32, i32
  }
  func.func @transform_9(%arg0: i32) -> (i32, i32) {
    %c0_i32 = arith.constant 0 : i32
    %c0_i32_0 = arith.constant 0 : i32
    %c0_i32_1 = arith.constant 0 : i32
    return %c0_i32, %c0_i32_0 : i32, i32
  }
  func.func @transform_10(%arg0: i32) -> (i32, i32, i32) {
    %c0_i32 = arith.constant 0 : i32
    %c0_i32_0 = arith.constant 0 : i32
    %c0_i32_1 = arith.constant 0 : i32
    %c0_i32_2 = arith.constant 0 : i32
    return %c0_i32, %c0_i32_0, %c0_i32_1 : i32, i32, i32
  }
  func.func @transform_11(%arg0: i32) -> (i32, i32) {
    %c0_i32 = arith.constant 0 : i32
    %c0_i32_0 = arith.constant 0 : i32
    %c0_i32_1 = arith.constant 0 : i32
    return %c0_i32, %c0_i32_0 : i32, i32
  }
  func.func @transform_12(%arg0: i32) -> (i32, i32) {
    %c0_i32 = arith.constant 0 : i32
    %c0_i32_0 = arith.constant 0 : i32
    %c0_i32_1 = arith.constant 0 : i32
    return %c0_i32, %c0_i32_0 : i32, i32
  }
  func.func @transform_13(%arg0: i32) -> (i32, i32, i32) {
    %c0_i32 = arith.constant 0 : i32
    %c0_i32_0 = arith.constant 0 : i32
    %c0_i32_1 = arith.constant 0 : i32
    %c0_i32_2 = arith.constant 0 : i32
    return %c0_i32, %c0_i32_0, %c0_i32_1 : i32, i32, i32
  }
  func.func @transform_14(%arg0: i32) -> (i32, i32) {
    %c0_i32 = arith.constant 0 : i32
    %c0_i32_0 = arith.constant 0 : i32
    %c0_i32_1 = arith.constant 0 : i32
    return %c0_i32, %c0_i32_0 : i32, i32
  }
  func.func @transform_15(%arg0: i32) -> (i32, i32, i32) {
    %c0_i32 = arith.constant 0 : i32
    %c0_i32_0 = arith.constant 0 : i32
    %c0_i32_1 = arith.constant 0 : i32
    return %arg0, %c0_i32, %c0_i32_0 : i32, i32, i32
  }
}

</mosaic_0001>

<llo_original>
// kernel: wvcnn4_forward.1
$region0: #{wvcnn4_forward.1}
  #allocation0 [shape = 'u32[]', space=smem, size = 0x4, offset = 0x4, fixed_abs, tag = 'smem constant byte address 0x4 - core index']
  #allocation1 [shape = 'u32[144,128]{1,0:T(1,128)}', space=vmem, size = 0x12000, scoped, tag = 'internal scratch']
  #allocation2 [shape = 'f32[1047,10]{1,0:T(8,128)}', space=vmem, size = 0x83000, scoped, tag = 'scratch operand']
  #allocation3 [shape = 'f32[349,10]{1,0:T(8,128)}', space=vmem, size = 0x2c000, scoped, tag = 'scratch operand']
  #allocation4 [shape = 'f32[345,24]{1,0:T(8,128)}', space=vmem, size = 0x2c000, scoped, tag = 'scratch operand']
  #allocation5 [shape = 'f32[115,24]{1,0:T(8,128)}', space=vmem, size = 0xf000, scoped, tag = 'scratch operand']
  #allocation6 [shape = 'f32[111,50]{1,0:T(8,128)}', space=vmem, size = 0xe000, scoped, tag = 'scratch operand']
  #allocation7 [shape = 'f32[37,50]{1,0:T(8,128)}', space=vmem, size = 0x5000, scoped, tag = 'scratch operand']
  #allocation8 [shape = 'f32[33,70]{1,0:T(8,128)}', space=vmem, size = 0x5000, scoped, tag = 'scratch operand']
  #allocation9 [shape = 'f32[11,70]{1,0:T(8,128)}', space=vmem, size = 0x2000, scoped, tag = 'scratch operand']
  %s0 = inlined_call_operand.vmem [shape: f32[2,1047,10], index: 0, kind: input, shape index: {}]
  %s1 = inlined_call_operand.vmem [shape: f32[10,10], index: 1, kind: input, shape index: {}]
  %s2 = inlined_call_operand.vmem [shape: f32[1,10], index: 2, kind: input, shape index: {}]
  %s3 = inlined_call_operand.vmem [shape: f32[1,10], index: 3, kind: input, shape index: {}]
  %s4 = inlined_call_operand.vmem [shape: f32[5,10,24], index: 4, kind: input, shape index: {}]
  %s5 = inlined_call_operand.vmem [shape: f32[1,24], index: 5, kind: input, shape index: {}]
  %s6 = inlined_call_operand.vmem [shape: f32[1,24], index: 6, kind: input, shape index: {}]
  %s7 = inlined_call_operand.vmem [shape: f32[5,24,50], index: 7, kind: input, shape index: {}]
  %s8 = inlined_call_operand.vmem [shape: f32[1,50], index: 8, kind: input, shape index: {}]
  %s9 = inlined_call_operand.vmem [shape: f32[1,50], index: 9, kind: input, shape index: {}]
  %s10 = inlined_call_operand.vmem [shape: f32[5,50,70], index: 10, kind: input, shape index: {}]
  %s11 = inlined_call_operand.vmem [shape: f32[1,70], index: 11, kind: input, shape index: {}]
  %s12 = inlined_call_operand.vmem [shape: f32[1,70], index: 12, kind: input, shape index: {}]
  %s13 = inlined_call_operand.vmem [shape: f32[11,70,4], index: 13, kind: input, shape index: {}]
  %s14 = inlined_call_operand.vmem [shape: f32[1,4], index: 14, kind: input, shape index: {}]
  %s15 = inlined_call_operand.hbm [shape: f32[2,1,4], index: 15, kind: output, shape index: {}]
  %s16 = sld [smem:[#allocation0]]
  $region93: #{wvcnn4_forward.1} parent=0
    _
  %s18 = ssub.s32 1, %s16
  %s19 = scalar_select 0, %s18, %s16
  $region1: #{wvcnn4_forward.1} parent=0
    #allocation10 [shape = 'u8[1024]{0}', space=vmem, size = 0x400, scoped, tag = 'output window, operand 0']
    #allocation11 [shape = 's32[2]{0}', space=sflag, size = 0x8, scoped, tag = 'scoped memory for wvcnn4_forward.1']
    %20 = vsyncpa [#allocation11], 0
    %s21 = scalar_lea.sflag [#allocation11], 1
    %22 = vsyncpa %s21, 0
    loop: start=0, step=1, limit=4
    $region2: #{wvcnn4_forward.1} parent=1 // loop_pre_header
      _
    $region3: #{wvcnn4_forward.1} parent=1 // loop_header
      %s24 = sphi 0, %s28
      %p25 = scmp.ge.s32.totalorder %s24, 4
      %s34 = sphi 0, %s36
      %s37 = sphi 0, %s34
      %s38 = sphi 0, %s37
      %s54 = sphi 0, %s38
      %s58 = sphi 0, %s58
      %s60 = sphi 0, %s58
      %s61 = sphi 0, %s60
      %s75 = sphi 0, %s61
      %s79 = sphi 0, %s79
      %s81 = sphi 0, %s79
      %s82 = sphi 0, %s81
      %s96 = sphi 0, %s82
      %s100 = sphi 0, %s100
      %s102 = sphi 0, %s100
      %s103 = sphi 0, %s102
      %s117 = sphi 0, %s103
      %s121 = sphi 0, %s121
      %s123 = sphi 0, %s121
      %s124 = sphi 0, %s123
      %s138 = sphi 0, %s124
      %s142 = sphi 0, %s142
      %s144 = sphi 0, %s142
      %s145 = sphi 0, %s144
      %s159 = sphi 0, %s145
      %s163 = sphi 0, %s163
      %s165 = sphi 0, %s163
      %s166 = sphi 0, %s165
      %s180 = sphi 0, %s166
      %s184 = sphi 0, %s184
      %s186 = sphi 0, %s184
      %s187 = sphi 0, %s186
      %s201 = sphi 0, %s187
      %s205 = sphi 0, %s205
      %s207 = sphi 0, %s205
      %s208 = sphi 0, %s207
      %s222 = sphi 0, %s208
      %s226 = sphi 0, %s226
      %s228 = sphi 0, %s226
      %s229 = sphi 0, %s228
      %s243 = sphi 0, %s229
      %s247 = sphi 0, %s247
      %s249 = sphi 0, %s247
      %s250 = sphi 0, %s249
      %s264 = sphi 0, %s250
      %s268 = sphi 0, %s268
      %s270 = sphi 0, %s268
      %s271 = sphi 0, %s270
      %s285 = sphi 0, %s271
      %s289 = sphi 0, %s289
      %s291 = sphi 0, %s289
      %s292 = sphi 0, %s291
      %s306 = sphi 0, %s292
      %s310 = sphi 0, %s310
      %s312 = sphi 0, %s310
      %s313 = sphi 0, %s312
      %s327 = sphi 0, %s313
      %s331 = sphi 0, %s331
      %s333 = sphi 0, %s331
      %s334 = sphi 0, %s333
      %s348 = sphi 0, %s334
      %s354 = sphi 0, %s356
      %s357 = sphi 0, %s354
      %s358 = sphi 0, %s357
      %s374 = sphi 0, %s358
    $region4: #{wvcnn4_forward.1} parent=1 // loop_header_branch
      %27 = sbr.rel (%p25) target = $region8
    $region5: #{wvcnn4_forward.1} parent=1 // loop_body
      %s29 = ssub.s32 %s24, 1
      %s30 = ssub.s32 %s24, 2
      %s31 = sadd.s32 %s24, 1
      %s32 = ssub.s32 %s24, %s31
      %p33 = scmp.eq.s32.totalorder %s32, 0
      %s35 = sadd.s32 %s34, 1
      %s36 = scalar_select %p33, %s34, %s35
      %p39 = pneg %p33
      %p40 = scmp.eq.s32.totalorder %s24, 1
      %p41 = por %p39, %p40
      %p42 = scmp.ne.s32.totalorder %s34, %s37
      %p43 = scmp.eq.s32.totalorder %s24, 0
      %p44 = por %p42, %p43
      %p45 = scmp.ne.s32.totalorder %s34, %s37
      %p46 = scmp.eq.s32.totalorder %s29, 1
      %p47 = por %p45, %p46
      %p48 = scmp.ne.s32.totalorder %s37, %s38
      %p49 = scmp.eq.s32.totalorder %s29, 0
      %p50 = por %p48, %p49
      %p51 = scmp.ne.s32.totalorder %s37, %s38
      %p52 = scmp.eq.s32.totalorder %s30, 1
      %p53 = por %p51, %p52
      %p55 = scmp.ne.s32.totalorder %s38, %s54
      %p56 = scmp.eq.s32.totalorder %s30, 0
      %p57 = por %p55, %p56
      %s59 = sadd.s32 %s58, 1
      %p62 = scmp.eq.s32.totalorder %s24, 1
      %p63 = scmp.ne.s32.totalorder %s58, %s60
      %p64 = scmp.eq.s32.totalorder %s24, 0
      %p65 = por %p63, %p64
      %p66 = scmp.ne.s32.totalorder %s58, %s60
      %p67 = scmp.eq.s32.totalorder %s29, 1
      %p68 = por %p66, %p67
      %p69 = scmp.ne.s32.totalorder %s60, %s61
      %p70 = scmp.eq.s32.totalorder %s29, 0
      %p71 = por %p69, %p70
      %p72 = scmp.ne.s32.totalorder %s60, %s61
      %p73 = scmp.eq.s32.totalorder %s30, 1
      %p74 = por %p72, %p73
      %p76 = scmp.ne.s32.totalorder %s61, %s75
      %p77 = scmp.eq.s32.totalorder %s30, 0
      %p78 = por %p76, %p77
      %s80 = sadd.s32 %s79, 1
      %p83 = scmp.eq.s32.totalorder %s24, 1
      %p84 = scmp.ne.s32.totalorder %s79, %s81
      %p85 = scmp.eq.s32.totalorder %s24, 0
      %p86 = por %p84, %p85
      %p87 = scmp.ne.s32.totalorder %s79, %s81
      %p88 = scmp.eq.s32.totalorder %s29, 1
      %p89 = por %p87, %p88
      %p90 = scmp.ne.s32.totalorder %s81, %s82
      %p91 = scmp.eq.s32.totalorder %s29, 0
      %p92 = por %p90, %p91
      %p93 = scmp.ne.s32.totalorder %s81, %s82
      %p94 = scmp.eq.s32.totalorder %s30, 1
      %p95 = por %p93, %p94
      %p97 = scmp.ne.s32.totalorder %s82, %s96
      %p98 = scmp.eq.s32.totalorder %s30, 0
      %p99 = por %p97, %p98
      %s101 = sadd.s32 %s100, 1
      %p104 = scmp.eq.s32.totalorder %s24, 1
      %p105 = scmp.ne.s32.totalorder %s100, %s102
      %p106 = scmp.eq.s32.totalorder %s24, 0
      %p107 = por %p105, %p106
      %p108 = scmp.ne.s32.totalorder %s100, %s102
      %p109 = scmp.eq.s32.totalorder %s29, 1
      %p110 = por %p108, %p109
      %p111 = scmp.ne.s32.totalorder %s102, %s103
      %p112 = scmp.eq.s32.totalorder %s29, 0
      %p113 = por %p111, %p112
      %p114 = scmp.ne.s32.totalorder %s102, %s103
      %p115 = scmp.eq.s32.totalorder %s30, 1
      %p116 = por %p114, %p115
      %p118 = scmp.ne.s32.totalorder %s103, %s117
      %p119 = scmp.eq.s32.totalorder %s30, 0
      %p120 = por %p118, %p119
      %s122 = sadd.s32 %s121, 1
      %p125 = scmp.eq.s32.totalorder %s24, 1
      %p126 = scmp.ne.s32.totalorder %s121, %s123
      %p127 = scmp.eq.s32.totalorder %s24, 0
      %p128 = por %p126, %p127
      %p129 = scmp.ne.s32.totalorder %s121, %s123
      %p130 = scmp.eq.s32.totalorder %s29, 1
      %p131 = por %p129, %p130
      %p132 = scmp.ne.s32.totalorder %s123, %s124
      %p133 = scmp.eq.s32.totalorder %s29, 0
      %p134 = por %p132, %p133
      %p135 = scmp.ne.s32.totalorder %s123, %s124
      %p136 = scmp.eq.s32.totalorder %s30, 1
      %p137 = por %p135, %p136
      %p139 = scmp.ne.s32.totalorder %s124, %s138
      %p140 = scmp.eq.s32.totalorder %s30, 0
      %p141 = por %p139, %p140
      %s143 = sadd.s32 %s142, 1
      %p146 = scmp.eq.s32.totalorder %s24, 1
      %p147 = scmp.ne.s32.totalorder %s142, %s144
      %p148 = scmp.eq.s32.totalorder %s24, 0
      %p149 = por %p147, %p148
      %p150 = scmp.ne.s32.totalorder %s142, %s144
      %p151 = scmp.eq.s32.totalorder %s29, 1
      %p152 = por %p150, %p151
      %p153 = scmp.ne.s32.totalorder %s144, %s145
      %p154 = scmp.eq.s32.totalorder %s29, 0
      %p155 = por %p153, %p154
      %p156 = scmp.ne.s32.totalorder %s144, %s145
      %p157 = scmp.eq.s32.totalorder %s30, 1
      %p158 = por %p156, %p157
      %p160 = scmp.ne.s32.totalorder %s145, %s159
      %p161 = scmp.eq.s32.totalorder %s30, 0
      %p162 = por %p160, %p161
      %s164 = sadd.s32 %s163, 1
      %p167 = scmp.eq.s32.totalorder %s24, 1
      %p168 = scmp.ne.s32.totalorder %s163, %s165
      %p169 = scmp.eq.s32.totalorder %s24, 0
      %p170 = por %p168, %p169
      %p171 = scmp.ne.s32.totalorder %s163, %s165
      %p172 = scmp.eq.s32.totalorder %s29, 1
      %p173 = por %p171, %p172
      %p174 = scmp.ne.s32.totalorder %s165, %s166
      %p175 = scmp.eq.s32.totalorder %s29, 0
      %p176 = por %p174, %p175
      %p177 = scmp.ne.s32.totalorder %s165, %s166
      %p178 = scmp.eq.s32.totalorder %s30, 1
      %p179 = por %p177, %p178
      %p181 = scmp.ne.s32.totalorder %s166, %s180
      %p182 = scmp.eq.s32.totalorder %s30, 0
      %p183 = por %p181, %p182
      %s185 = sadd.s32 %s184, 1
      %p188 = scmp.eq.s32.totalorder %s24, 1
      %p189 = scmp.ne.s32.totalorder %s184, %s186
      %p190 = scmp.eq.s32.totalorder %s24, 0
      %p191 = por %p189, %p190
      %p192 = scmp.ne.s32.totalorder %s184, %s186
      %p193 = scmp.eq.s32.totalorder %s29, 1
      %p194 = por %p192, %p193
      %p195 = scmp.ne.s32.totalorder %s186, %s187
      %p196 = scmp.eq.s32.totalorder %s29, 0
      %p197 = por %p195, %p196
      %p198 = scmp.ne.s32.totalorder %s186, %s187
      %p199 = scmp.eq.s32.totalorder %s30, 1
      %p200 = por %p198, %p199
      %p202 = scmp.ne.s32.totalorder %s187, %s201
      %p203 = scmp.eq.s32.totalorder %s30, 0
      %p204 = por %p202, %p203
      %s206 = sadd.s32 %s205, 1
      %p209 = scmp.eq.s32.totalorder %s24, 1
      %p210 = scmp.ne.s32.totalorder %s205, %s207
      %p211 = scmp.eq.s32.totalorder %s24, 0
      %p212 = por %p210, %p211
      %p213 = scmp.ne.s32.totalorder %s205, %s207
      %p214 = scmp.eq.s32.totalorder %s29, 1
      %p215 = por %p213, %p214
      %p216 = scmp.ne.s32.totalorder %s207, %s208
      %p217 = scmp.eq.s32.totalorder %s29, 0
      %p218 = por %p216, %p217
      %p219 = scmp.ne.s32.totalorder %s207, %s208
      %p220 = scmp.eq.s32.totalorder %s30, 1
      %p221 = por %p219, %p220
      %p223 = scmp.ne.s32.totalorder %s208, %s222
      %p224 = scmp.eq.s32.totalorder %s30, 0
      %p225 = por %p223, %p224
      %s227 = sadd.s32 %s226, 1
      %p230 = scmp.eq.s32.totalorder %s24, 1
      %p231 = scmp.ne.s32.totalorder %s226, %s228
      %p232 = scmp.eq.s32.totalorder %s24, 0
      %p233 = por %p231, %p232
      %p234 = scmp.ne.s32.totalorder %s226, %s228
      %p235 = scmp.eq.s32.totalorder %s29, 1
      %p236 = por %p234, %p235
      %p237 = scmp.ne.s32.totalorder %s228, %s229
      %p238 = scmp.eq.s32.totalorder %s29, 0
      %p239 = por %p237, %p238
      %p240 = scmp.ne.s32.totalorder %s228, %s229
      %p241 = scmp.eq.s32.totalorder %s30, 1
      %p242 = por %p240, %p241
      %p244 = scmp.ne.s32.totalorder %s229, %s243
      %p245 = scmp.eq.s32.totalorder %s30, 0
      %p246 = por %p244, %p245
      %s248 = sadd.s32 %s247, 1
      %p251 = scmp.eq.s32.totalorder %s24, 1
      %p252 = scmp.ne.s32.totalorder %s247, %s249
      %p253 = scmp.eq.s32.totalorder %s24, 0
      %p254 = por %p252, %p253
      %p255 = scmp.ne.s32.totalorder %s247, %s249
      %p256 = scmp.eq.s32.totalorder %s29, 1
      %p257 = por %p255, %p256
      %p258 = scmp.ne.s32.totalorder %s249, %s250
      %p259 = scmp.eq.s32.totalorder %s29, 0
      %p260 = por %p258, %p259
      %p261 = scmp.ne.s32.totalorder %s249, %s250
      %p262 = scmp.eq.s32.totalorder %s30, 1
      %p263 = por %p261, %p262
      %p265 = scmp.ne.s32.totalorder %s250, %s264
      %p266 = scmp.eq.s32.totalorder %s30, 0
      %p267 = por %p265, %p266
      %s269 = sadd.s32 %s268, 1
      %p272 = scmp.eq.s32.totalorder %s24, 1
      %p273 = scmp.ne.s32.totalorder %s268, %s270
      %p274 = scmp.eq.s32.totalorder %s24, 0
      %p275 = por %p273, %p274
      %p276 = scmp.ne.s32.totalorder %s268, %s270
      %p277 = scmp.eq.s32.totalorder %s29, 1
      %p278 = por %p276, %p277
      %p279 = scmp.ne.s32.totalorder %s270, %s271
      %p280 = scmp.eq.s32.totalorder %s29, 0
      %p281 = por %p279, %p280
      %p282 = scmp.ne.s32.totalorder %s270, %s271
      %p283 = scmp.eq.s32.totalorder %s30, 1
      %p284 = por %p282, %p283
      %p286 = scmp.ne.s32.totalorder %s271, %s285
      %p287 = scmp.eq.s32.totalorder %s30, 0
      %p288 = por %p286, %p287
      %s290 = sadd.s32 %s289, 1
      %p293 = scmp.eq.s32.totalorder %s24, 1
      %p294 = scmp.ne.s32.totalorder %s289, %s291
      %p295 = scmp.eq.s32.totalorder %s24, 0
      %p296 = por %p294, %p295
      %p297 = scmp.ne.s32.totalorder %s289, %s291
      %p298 = scmp.eq.s32.totalorder %s29, 1
      %p299 = por %p297, %p298
      %p300 = scmp.ne.s32.totalorder %s291, %s292
      %p301 = scmp.eq.s32.totalorder %s29, 0
      %p302 = por %p300, %p301
      %p303 = scmp.ne.s32.totalorder %s291, %s292
      %p304 = scmp.eq.s32.totalorder %s30, 1
      %p305 = por %p303, %p304
      %p307 = scmp.ne.s32.totalorder %s292, %s306
      %p308 = scmp.eq.s32.totalorder %s30, 0
      %p309 = por %p307, %p308
      %s311 = sadd.s32 %s310, 1
      %p314 = scmp.eq.s32.totalorder %s24, 1
      %p315 = scmp.ne.s32.totalorder %s310, %s312
      %p316 = scmp.eq.s32.totalorder %s24, 0
      %p317 = por %p315, %p316
      %p318 = scmp.ne.s32.totalorder %s310, %s312
      %p319 = scmp.eq.s32.totalorder %s29, 1
      %p320 = por %p318, %p319
      %p321 = scmp.ne.s32.totalorder %s312, %s313
      %p322 = scmp.eq.s32.totalorder %s29, 0
      %p323 = por %p321, %p322
      %p324 = scmp.ne.s32.totalorder %s312, %s313
      %p325 = scmp.eq.s32.totalorder %s30, 1
      %p326 = por %p324, %p325
      %p328 = scmp.ne.s32.totalorder %s313, %s327
      %p329 = scmp.eq.s32.totalorder %s30, 0
      %p330 = por %p328, %p329
      %s332 = sadd.s32 %s331, 1
      %p335 = scmp.eq.s32.totalorder %s24, 1
      %p336 = scmp.ne.s32.totalorder %s331, %s333
      %p337 = scmp.eq.s32.totalorder %s24, 0
      %p338 = por %p336, %p337
      %p339 = scmp.ne.s32.totalorder %s331, %s333
      %p340 = scmp.eq.s32.totalorder %s29, 1
      %p341 = por %p339, %p340
      %p342 = scmp.ne.s32.totalorder %s333, %s334
      %p343 = scmp.eq.s32.totalorder %s29, 0
      %p344 = por %p342, %p343
      %p345 = scmp.ne.s32.totalorder %s333, %s334
      %p346 = scmp.eq.s32.totalorder %s30, 1
      %p347 = por %p345, %p346
      %p349 = scmp.ne.s32.totalorder %s334, %s348
      %p350 = scmp.eq.s32.totalorder %s30, 0
      %p351 = por %p349, %p350
      %s352 = ssub.s32 %s24, %s31
      %p353 = scmp.eq.s32.totalorder %s352, 0
      %s355 = sadd.s32 %s354, 1
      %s356 = scalar_select %p353, %s354, %s355
      %p359 = pneg %p353
      %p360 = scmp.eq.s32.totalorder %s24, 1
      %p361 = por %p359, %p360
      %p362 = scmp.ne.s32.totalorder %s354, %s357
      %p363 = scmp.eq.s32.totalorder %s24, 0
      %p364 = por %p362, %p363
      %p365 = scmp.ne.s32.totalorder %s354, %s357
      %p366 = scmp.eq.s32.totalorder %s29, 1
      %p367 = por %p365, %p366
      %p368 = scmp.ne.s32.totalorder %s357, %s358
      %p369 = scmp.eq.s32.totalorder %s29, 0
      %p370 = por %p368, %p369
      %p371 = scmp.ne.s32.totalorder %s357, %s358
      %p372 = scmp.eq.s32.totalorder %s30, 1
      %p373 = por %p371, %p372
      %p375 = scmp.ne.s32.totalorder %s358, %s374
      %p376 = scmp.eq.s32.totalorder %s30, 0
      %p377 = por %p375, %p376
      %p378 = scmp.le.s32.totalorder 1, %s24
      %p379 = scmp.lt.s32.totalorder %s24, 3
      %p380 = pnand %p378, %p379
      %p381 = pneg %p380
      // Predicated region
      $region9: #{wvcnn4_forward.1} parent=5 // pred_check
        _
      $region10: #{wvcnn4_forward.1} parent=5 // pred_check_branch
        %383 = sbr.rel (%p380) target = $region12
      $region11: #{wvcnn4_forward.1} parent=5 // pred_region
        %s384 = ssub.s32 %s24, 1
        // Predicated region
        $region13: #{wvcnn4_forward.1} parent=11 // pred_check
          %p385 = pneg %p71
        $region14: #{wvcnn4_forward.1} parent=11 // pred_check_branch
          %387 = sbr.rel (%p385) target = $region16
        $region15: #{wvcnn4_forward.1} parent=11 // pred_region
          _
        $region16: #{wvcnn4_forward.1} parent=11 // pred_fallthru
          _
        // Predicated region
        $region17: #{wvcnn4_forward.1} parent=11 // pred_check
          %p388 = pneg %p92
        $region18: #{wvcnn4_forward.1} parent=11 // pred_check_branch
          %390 = sbr.rel (%p388) target = $region20
        $region19: #{wvcnn4_forward.1} parent=11 // pred_region
          _
        $region20: #{wvcnn4_forward.1} parent=11 // pred_fallthru
          _
        // Predicated region
        $region21: #{wvcnn4_forward.1} parent=11 // pred_check
          %p391 = pneg %p113
        $region22: #{wvcnn4_forward.1} parent=11 // pred_check_branch
          %393 = sbr.rel (%p391) target = $region24
        $region23: #{wvcnn4_forward.1} parent=11 // pred_region
          _
        $region24: #{wvcnn4_forward.1} parent=11 // pred_fallthru
          _
        // Predicated region
        $region25: #{wvcnn4_forward.1} parent=11 // pred_check
          %p394 = pneg %p134
        $region26: #{wvcnn4_forward.1} parent=11 // pred_check_branch
          %396 = sbr.rel (%p394) target = $region28
        $region27: #{wvcnn4_forward.1} parent=11 // pred_region
          _
        $region28: #{wvcnn4_forward.1} parent=11 // pred_fallthru
          _
        // Predicated region
        $region29: #{wvcnn4_forward.1} parent=11 // pred_check
          %p397 = pneg %p155
        $region30: #{wvcnn4_forward.1} parent=11 // pred_check_branch
          %399 = sbr.rel (%p397) target = $region32
        $region31: #{wvcnn4_forward.1} parent=11 // pred_region
          _
        $region32: #{wvcnn4_forward.1} parent=11 // pred_fallthru
          _
        // Predicated region
        $region33: #{wvcnn4_forward.1} parent=11 // pred_check
          %p400 = pneg %p176
        $region34: #{wvcnn4_forward.1} parent=11 // pred_check_branch
          %402 = sbr.rel (%p400) target = $region36
        $region35: #{wvcnn4_forward.1} parent=11 // pred_region
          _
        $region36: #{wvcnn4_forward.1} parent=11 // pred_fallthru
          _
        // Predicated region
        $region37: #{wvcnn4_forward.1} parent=11 // pred_check
          %p403 = pneg %p197
        $region38: #{wvcnn4_forward.1} parent=11 // pred_check_branch
          %405 = sbr.rel (%p403) target = $region40
        $region39: #{wvcnn4_forward.1} parent=11 // pred_region
          _
        $region40: #{wvcnn4_forward.1} parent=11 // pred_fallthru
          _
        // Predicated region
        $region41: #{wvcnn4_forward.1} parent=11 // pred_check
          %p406 = pneg %p218
        $region42: #{wvcnn4_forward.1} parent=11 // pred_check_branch
          %408 = sbr.rel (%p406) target = $region44
        $region43: #{wvcnn4_forward.1} parent=11 // pred_region
          _
        $region44: #{wvcnn4_forward.1} parent=11 // pred_fallthru
          _
        // Predicated region
        $region45: #{wvcnn4_forward.1} parent=11 // pred_check
          %p409 = pneg %p239
        $region46: #{wvcnn4_forward.1} parent=11 // pred_check_branch
          %411 = sbr.rel (%p409) target = $region48
        $region47: #{wvcnn4_forward.1} parent=11 // pred_region
          _
        $region48: #{wvcnn4_forward.1} parent=11 // pred_fallthru
          _
        // Predicated region
        $region49: #{wvcnn4_forward.1} parent=11 // pred_check
          %p412 = pneg %p260
        $region50: #{wvcnn4_forward.1} parent=11 // pred_check_branch
          %414 = sbr.rel (%p412) target = $region52
        $region51: #{wvcnn4_forward.1} parent=11 // pred_region
          _
        $region52: #{wvcnn4_forward.1} parent=11 // pred_fallthru
          _
        // Predicated region
        $region53: #{wvcnn4_forward.1} parent=11 // pred_check
          %p415 = pneg %p281
        $region54: #{wvcnn4_forward.1} parent=11 // pred_check_branch
          %417 = sbr.rel (%p415) target = $region56
        $region55: #{wvcnn4_forward.1} parent=11 // pred_region
          _
        $region56: #{wvcnn4_forward.1} parent=11 // pred_fallthru
          _
        // Predicated region
        $region57: #{wvcnn4_forward.1} parent=11 // pred_check
          %p418 = pneg %p302
        $region58: #{wvcnn4_forward.1} parent=11 // pred_check_branch
          %420 = sbr.rel (%p418) target = $region60
        $region59: #{wvcnn4_forward.1} parent=11 // pred_region
          _
        $region60: #{wvcnn4_forward.1} parent=11 // pred_fallthru
          _
        // Predicated region
        $region61: #{wvcnn4_forward.1} parent=11 // pred_check
          %p421 = pneg %p323
        $region62: #{wvcnn4_forward.1} parent=11 // pred_check_branch
          %423 = sbr.rel (%p421) target = $region64
        $region63: #{wvcnn4_forward.1} parent=11 // pred_region
          _
        $region64: #{wvcnn4_forward.1} parent=11 // pred_fallthru
          _
        // Predicated region
        $region65: #{wvcnn4_forward.1} parent=11 // pred_check
          %p424 = pneg %p344
        $region66: #{wvcnn4_forward.1} parent=11 // pred_check_branch
          %426 = sbr.rel (%p424) target = $region68
        $region67: #{wvcnn4_forward.1} parent=11 // pred_region
          _
        $region68: #{wvcnn4_forward.1} parent=11 // pred_fallthru
          _
      $region12: #{wvcnn4_forward.1} parent=5 // pred_fallthru
        _
      %p427 = scmp.lt.s32.totalorder %s24, 2
      // Predicated region
      $region69: #{wvcnn4_forward.1} parent=5 // pred_check
        %p428 = pneg %p427
      $region70: #{wvcnn4_forward.1} parent=5 // pred_check_branch
        %430 = sbr.rel (%p428) target = $region72
      $region71: #{wvcnn4_forward.1} parent=5 // pred_region
        // Predicated region
        $region73: #{wvcnn4_forward.1} parent=71 // pred_check
          %p431 = pneg %p44
        $region74: #{wvcnn4_forward.1} parent=71 // pred_check_branch
          %433 = sbr.rel (%p431) target = $region76
        $region75: #{wvcnn4_forward.1} parent=71 // pred_region
          %p434 = scmp.lt.s32.totalorder %s24, 1
          %s435 = scalar_select %p434, %s24, 1
          %s436 = smul.addr %s435, 131
          %s437 = smul.addr %s436, 8
          %s438 = scalar_lea.vmem %s0, %s437
        $region76: #{wvcnn4_forward.1} parent=71 // pred_fallthru
          _
      $region72: #{wvcnn4_forward.1} parent=5 // pred_fallthru
        _
      %p439 = scmp.le.s32.totalorder 1, %s24
      %p440 = scmp.lt.s32.totalorder %s24, 3
      %p441 = pnand %p439, %p440
      %p442 = pneg %p441
      // Predicated region
      $region77: #{wvcnn4_forward.1} parent=5 // pred_check
        _
      $region78: #{wvcnn4_forward.1} parent=5 // pred_check_branch
        %444 = sbr.rel (%p441) target = $region80
      $region79: #{wvcnn4_forward.1} parent=5 // pred_region
        %s445 = ssub.s32 %s24, 1
        %p446 = scmp.lt.s32.totalorder %s29, 1
        %s447 = scalar_select %p446, %s29, 1
        %s448 = smul.addr %s447, 131
        %s449 = smul.addr %s448, 8
        %s450 = scalar_lea.vmem %s0, %s449
        %p451 = pneg %p50
        %p452 = pneg %p47
        %p453 = pneg %p71
        %p454 = pneg %p68
        %p455 = pneg %p92
        %p456 = pneg %p89
        %p457 = pneg %p113
        %p458 = pneg %p110
        %p459 = pneg %p134
        %p460 = pneg %p131
        %p461 = pneg %p155
        %p462 = pneg %p152
        %p463 = pneg %p176
        %p464 = pneg %p173
        %p465 = pneg %p197
        %p466 = pneg %p194
        %p467 = pneg %p218
        %p468 = pneg %p215
        %p469 = pneg %p239
        %p470 = pneg %p236
        %p471 = pneg %p260
        %p472 = pneg %p257
        %p473 = pneg %p281
        %p474 = pneg %p278
        %p475 = pneg %p302
        %p476 = pneg %p299
        %p477 = pneg %p323
        %p478 = pneg %p320
        %p479 = pneg %p344
        %p480 = pneg %p341
        %p481 = pneg %p370
        %p482 = pneg %p367
        %s483 = sand.u32 %s357, 1
        %s484 = scalar_lea.sflag [#allocation11], %s483
        %s485 = sand.u32 %s357, 1
        %s486 = scalar_lea.vmem [#allocation10], %s485
        %p487 = scmp.lt.s32.totalorder %s29, 1
        %s488 = scalar_select %p487, %s29, 1
        %s489 = smul.addr %s488, 131
        %s490 = smul.addr %s489, 8
        %s491 = scalar_lea.vmem %s0, %s490
        %v492 = vld [vmem:[%s491] sm:$0xff]
        %v493 = vld [vmem:[%s491 + $0x8] sm:$0xff]
        %v494 = vld [vmem:[%s491 + $0x10] sm:$0xff]
        %v495 = vld [vmem:[%s491 + $0x18] sm:$0xff]
        %v496 = vld [vmem:[%s491 + $0x20] sm:$0xff]
        %v497 = vld [vmem:[%s491 + $0x28] sm:$0xff]
        %v498 = vld [vmem:[%s491 + $0x30] sm:$0xff]
        %v499 = vld [vmem:[%s491 + $0x38] sm:$0xff]
        %v500 = vld [vmem:[%s491 + $0x40] sm:$0xff]
        %v501 = vld [vmem:[%s491 + $0x48] sm:$0xff]
        %v502 = vld [vmem:[%s491 + $0x50] sm:$0xff]
        %v503 = vld [vmem:[%s491 + $0x58] sm:$0xff]
        %v504 = vld [vmem:[%s491 + $0x60] sm:$0xff]
        %v505 = vld [vmem:[%s491 + $0x68] sm:$0xff]
        %v506 = vld [vmem:[%s491 + $0x70] sm:$0xff]
        %v507 = vld [vmem:[%s491 + $0x78] sm:$0xff]
        %v508 = vld [vmem:[%s491 + $0x80] sm:$0xff]
        %v509 = vld [vmem:[%s491 + $0x88] sm:$0xff]
        %v510 = vld [vmem:[%s491 + $0x90] sm:$0xff]
        %v511 = vld [vmem:[%s491 + $0x98] sm:$0xff]
        %v512 = vld [vmem:[%s491 + $0xa0] sm:$0xff]
        %v513 = vld [vmem:[%s491 + $0xa8] sm:$0xff]
        %v514 = vld [vmem:[%s491 + $0xb0] sm:$0xff]
        %v515 = vld [vmem:[%s491 + $0xb8] sm:$0xff]
        %v516 = vld [vmem:[%s491 + $0xc0] sm:$0xff]
        %v517 = vld [vmem:[%s491 + $0xc8] sm:$0xff]
        %v518 = vld [vmem:[%s491 + $0xd0] sm:$0xff]
        %v519 = vld [vmem:[%s491 + $0xd8] sm:$0xff]
        %v520 = vld [vmem:[%s491 + $0xe0] sm:$0xff]
        %v521 = vld [vmem:[%s491 + $0xe8] sm:$0xff]
        %v522 = vld [vmem:[%s491 + $0xf0] sm:$0xff]
        %v523 = vld [vmem:[%s491 + $0xf8] sm:$0xff]
        %v524 = vld [vmem:[%s491 + $0x100] sm:$0xff]
        %v525 = vld [vmem:[%s491 + $0x108] sm:$0xff]
        %v526 = vld [vmem:[%s491 + $0x110] sm:$0xff]
        %v527 = vld [vmem:[%s491 + $0x118] sm:$0xff]
        %v528 = vld [vmem:[%s491 + $0x120] sm:$0xff]
        %v529 = vld [vmem:[%s491 + $0x128] sm:$0xff]
        %v530 = vld [vmem:[%s491 + $0x130] sm:$0xff]
        %v531 = vld [vmem:[%s491 + $0x138] sm:$0xff]
        %v532 = vld [vmem:[%s491 + $0x140] sm:$0xff]
        %v533 = vld [vmem:[%s491 + $0x148] sm:$0xff]
        %v534 = vld [vmem:[%s491 + $0x150] sm:$0xff]
        %v535 = vld [vmem:[%s491 + $0x158] sm:$0xff]
        %v536 = vld [vmem:[%s491 + $0x160] sm:$0xff]
        %v537 = vld [vmem:[%s491 + $0x168] sm:$0xff]
        %v538 = vld [vmem:[%s491 + $0x170] sm:$0xff]
        %v539 = vld [vmem:[%s491 + $0x178] sm:$0xff]
        %v540 = vld [vmem:[%s491 + $0x180] sm:$0xff]
        %v541 = vld [vmem:[%s491 + $0x188] sm:$0xff]
        %v542 = vld [vmem:[%s491 + $0x190] sm:$0xff]
        %v543 = vld [vmem:[%s491 + $0x198] sm:$0xff]
        %v544 = vld [vmem:[%s491 + $0x1a0] sm:$0xff]
        %v545 = vld [vmem:[%s491 + $0x1a8] sm:$0xff]
        %v546 = vld [vmem:[%s491 + $0x1b0] sm:$0xff]
        %v547 = vld [vmem:[%s491 + $0x1b8] sm:$0xff]
        %v548 = vld [vmem:[%s491 + $0x1c0] sm:$0xff]
        %v549 = vld [vmem:[%s491 + $0x1c8] sm:$0xff]
        %v550 = vld [vmem:[%s491 + $0x1d0] sm:$0xff]
        %v551 = vld [vmem:[%s491 + $0x1d8] sm:$0xff]
        %v552 = vld [vmem:[%s491 + $0x1e0] sm:$0xff]
        %v553 = vld [vmem:[%s491 + $0x1e8] sm:$0xff]
        %v554 = vld [vmem:[%s491 + $0x1f0] sm:$0xff]
        %v555 = vld [vmem:[%s491 + $0x1f8] sm:$0xff]
        %v556 = vld [vmem:[%s491 + $0x200] sm:$0xff]
        %v557 = vld [vmem:[%s491 + $0x208] sm:$0xff]
        %v558 = vld [vmem:[%s491 + $0x210] sm:$0xff]
        %v559 = vld [vmem:[%s491 + $0x218] sm:$0xff]
        %v560 = vld [vmem:[%s491 + $0x220] sm:$0xff]
        %v561 = vld [vmem:[%s491 + $0x228] sm:$0xff]
        %v562 = vld [vmem:[%s491 + $0x230] sm:$0xff]
        %v563 = vld [vmem:[%s491 + $0x238] sm:$0xff]
        %v564 = vld [vmem:[%s491 + $0x240] sm:$0xff]
        %v565 = vld [vmem:[%s491 + $0x248] sm:$0xff]
        %v566 = vld [vmem:[%s491 + $0x250] sm:$0xff]
        %v567 = vld [vmem:[%s491 + $0x258] sm:$0xff]
        %v568 = vld [vmem:[%s491 + $0x260] sm:$0xff]
        %v569 = vld [vmem:[%s491 + $0x268] sm:$0xff]
        %v570 = vld [vmem:[%s491 + $0x270] sm:$0xff]
        %v571 = vld [vmem:[%s491 + $0x278] sm:$0xff]
        %v572 = vld [vmem:[%s491 + $0x280] sm:$0xff]
        %v573 = vld [vmem:[%s491 + $0x288] sm:$0xff]
        %v574 = vld [vmem:[%s491 + $0x290] sm:$0xff]
        %v575 = vld [vmem:[%s491 + $0x298] sm:$0xff]
        %v576 = vld [vmem:[%s491 + $0x2a0] sm:$0xff]
        %v577 = vld [vmem:[%s491 + $0x2a8] sm:$0xff]
        %v578 = vld [vmem:[%s491 + $0x2b0] sm:$0xff]
        %v579 = vld [vmem:[%s491 + $0x2b8] sm:$0xff]
        %v580 = vld [vmem:[%s491 + $0x2c0] sm:$0xff]
        %v581 = vld [vmem:[%s491 + $0x2c8] sm:$0xff]
        %v582 = vld [vmem:[%s491 + $0x2d0] sm:$0xff]
        %v583 = vld [vmem:[%s491 + $0x2d8] sm:$0xff]
        %v584 = vld [vmem:[%s491 + $0x2e0] sm:$0xff]
        %v585 = vld [vmem:[%s491 + $0x2e8] sm:$0xff]
        %v586 = vld [vmem:[%s491 + $0x2f0] sm:$0xff]
        %v587 = vld [vmem:[%s491 + $0x2f8] sm:$0xff]
        %v588 = vld [vmem:[%s491 + $0x300] sm:$0xff]
        %v589 = vld [vmem:[%s491 + $0x308] sm:$0xff]
        %v590 = vld [vmem:[%s491 + $0x310] sm:$0xff]
        %v591 = vld [vmem:[%s491 + $0x318] sm:$0xff]
        %v592 = vld [vmem:[%s491 + $0x320] sm:$0xff]
        %v593 = vld [vmem:[%s491 + $0x328] sm:$0xff]
        %v594 = vld [vmem:[%s491 + $0x330] sm:$0xff]
        %v595 = vld [vmem:[%s491 + $0x338] sm:$0xff]
        %v596 = vld [vmem:[%s491 + $0x340] sm:$0xff]
        %v597 = vld [vmem:[%s491 + $0x348] sm:$0xff]
        %v598 = vld [vmem:[%s491 + $0x350] sm:$0xff]
        %v599 = vld [vmem:[%s491 + $0x358] sm:$0xff]
        %v600 = vld [vmem:[%s491 + $0x360] sm:$0xff]
        %v601 = vld [vmem:[%s491 + $0x368] sm:$0xff]
        %v602 = vld [vmem:[%s491 + $0x370] sm:$0xff]
        %v603 = vld [vmem:[%s491 + $0x378] sm:$0xff]
        %v604 = vld [vmem:[%s491 + $0x380] sm:$0xff]
        %v605 = vld [vmem:[%s491 + $0x388] sm:$0xff]
        %v606 = vld [vmem:[%s491 + $0x390] sm:$0xff]
        %v607 = vld [vmem:[%s491 + $0x398] sm:$0xff]
        %v608 = vld [vmem:[%s491 + $0x3a0] sm:$0xff]
        %v609 = vld [vmem:[%s491 + $0x3a8] sm:$0xff]
        %v610 = vld [vmem:[%s491 + $0x3b0] sm:$0xff]
        %v611 = vld [vmem:[%s491 + $0x3b8] sm:$0xff]
        %v612 = vld [vmem:[%s491 + $0x3c0] sm:$0xff]
        %v613 = vld [vmem:[%s491 + $0x3c8] sm:$0xff]
        %v614 = vld [vmem:[%s491 + $0x3d0] sm:$0xff]
        %v615 = vld [vmem:[%s491 + $0x3d8] sm:$0xff]
        %v616 = vld [vmem:[%s491 + $0x3e0] sm:$0xff]
        %v617 = vld [vmem:[%s491 + $0x3e8] sm:$0xff]
        %v618 = vld [vmem:[%s491 + $0x3f0] sm:$0xff]
        %v619 = vld [vmem:[%s491 + $0x3f8] sm:$0xff]
        %v620 = vld [vmem:[%s491 + $0x400] sm:$0xff]
        %v621 = vld [vmem:[%s491 + $0x408] sm:$0xff]
        %v622 = vld [vmem:[%s491 + $0x410] sm:$0x7f]
        %v623 = vld [vmem:[%s1] sm:$0xff]
        %v624 = vld [vmem:[%s1 + $0x8] sm:$0x3]
        %vm625 = vcmask 80896
        %v627 = vsel %vm625, %v492, 0
        %v630 = vsel %vm625, %v493, 0
        %v633 = vsel %vm625, %v494, 0
        %v636 = vsel %vm625, %v495, 0
        %v639 = vsel %vm625, %v496, 0
        %v642 = vsel %vm625, %v497, 0
        %v645 = vsel %vm625, %v498, 0
        %v648 = vsel %vm625, %v499, 0
        %v651 = vsel %vm625, %v500, 0
        %v654 = vsel %vm625, %v501, 0
        %v657 = vsel %vm625, %v502, 0
        %v660 = vsel %vm625, %v503, 0
        %v663 = vsel %vm625, %v504, 0
        %v666 = vsel %vm625, %v505, 0
        %v669 = vsel %vm625, %v506, 0
        %v672 = vsel %vm625, %v507, 0
        %v675 = vsel %vm625, %v508, 0
        %v678 = vsel %vm625, %v509, 0
        %v681 = vsel %vm625, %v510, 0
        %v684 = vsel %vm625, %v511, 0
        %v687 = vsel %vm625, %v512, 0
        %v690 = vsel %vm625, %v513, 0
        %v693 = vsel %vm625, %v514, 0
        %v696 = vsel %vm625, %v515, 0
        %v699 = vsel %vm625, %v516, 0
        %v702 = vsel %vm625, %v517, 0
        %v705 = vsel %vm625, %v518, 0
        %v708 = vsel %vm625, %v519, 0
        %v711 = vsel %vm625, %v520, 0
        %v714 = vsel %vm625, %v521, 0
        %v717 = vsel %vm625, %v522, 0
        %v720 = vsel %vm625, %v523, 0
        %v723 = vsel %vm625, %v524, 0
        %v726 = vsel %vm625, %v525, 0
        %v729 = vsel %vm625, %v526, 0
        %v732 = vsel %vm625, %v527, 0
        %v735 = vsel %vm625, %v528, 0
        %v738 = vsel %vm625, %v529, 0
        %v741 = vsel %vm625, %v530, 0
        %v744 = vsel %vm625, %v531, 0
        %v747 = vsel %vm625, %v532, 0
        %v750 = vsel %vm625, %v533, 0
        %v753 = vsel %vm625, %v534, 0
        %v756 = vsel %vm625, %v535, 0
        %v759 = vsel %vm625, %v536, 0
        %v762 = vsel %vm625, %v537, 0
        %v765 = vsel %vm625, %v538, 0
        %v768 = vsel %vm625, %v539, 0
        %v771 = vsel %vm625, %v540, 0
        %v774 = vsel %vm625, %v541, 0
        %v777 = vsel %vm625, %v542, 0
        %v780 = vsel %vm625, %v543, 0
        %v783 = vsel %vm625, %v544, 0
        %v786 = vsel %vm625, %v545, 0
        %v789 = vsel %vm625, %v546, 0
        %v792 = vsel %vm625, %v547, 0
        %v795 = vsel %vm625, %v548, 0
        %v798 = vsel %vm625, %v549, 0
        %v801 = vsel %vm625, %v550, 0
        %v804 = vsel %vm625, %v551, 0
        %v807 = vsel %vm625, %v552, 0
        %v810 = vsel %vm625, %v553, 0
        %v813 = vsel %vm625, %v554, 0
        %v816 = vsel %vm625, %v555, 0
        %v819 = vsel %vm625, %v556, 0
        %v822 = vsel %vm625, %v557, 0
        %v825 = vsel %vm625, %v558, 0
        %v828 = vsel %vm625, %v559, 0
        %v831 = vsel %vm625, %v560, 0
        %v834 = vsel %vm625, %v561, 0
        %v837 = vsel %vm625, %v562, 0
        %v840 = vsel %vm625, %v563, 0
        %v843 = vsel %vm625, %v564, 0
        %v846 = vsel %vm625, %v565, 0
        %v849 = vsel %vm625, %v566, 0
        %v852 = vsel %vm625, %v567, 0
        %v855 = vsel %vm625, %v568, 0
        %v858 = vsel %vm625, %v569, 0
        %v861 = vsel %vm625, %v570, 0
        %v864 = vsel %vm625, %v571, 0
        %v867 = vsel %vm625, %v572, 0
        %v870 = vsel %vm625, %v573, 0
        %v873 = vsel %vm625, %v574, 0
        %v876 = vsel %vm625, %v575, 0
        %v879 = vsel %vm625, %v576, 0
        %v882 = vsel %vm625, %v577, 0
        %v885 = vsel %vm625, %v578, 0
        %v888 = vsel %vm625, %v579, 0
        %v891 = vsel %vm625, %v580, 0
        %v894 = vsel %vm625, %v581, 0
        %v897 = vsel %vm625, %v582, 0
        %v900 = vsel %vm625, %v583, 0
        %v903 = vsel %vm625, %v584, 0
        %v906 = vsel %vm625, %v585, 0
        %v909 = vsel %vm625, %v586, 0
        %v912 = vsel %vm625, %v587, 0
        %v915 = vsel %vm625, %v588, 0
        %v918 = vsel %vm625, %v589, 0
        %v921 = vsel %vm625, %v590, 0
        %v924 = vsel %vm625, %v591, 0
        %v927 = vsel %vm625, %v592, 0
        %v930 = vsel %vm625, %v593, 0
        %v933 = vsel %vm625, %v594, 0
        %v936 = vsel %vm625, %v595, 0
        %v939 = vsel %vm625, %v596, 0
        %v942 = vsel %vm625, %v597, 0
        %v945 = vsel %vm625, %v598, 0
        %v948 = vsel %vm625, %v599, 0
        %v951 = vsel %vm625, %v600, 0
        %v954 = vsel %vm625, %v601, 0
        %v957 = vsel %vm625, %v602, 0
        %v960 = vsel %vm625, %v603, 0
        %v963 = vsel %vm625, %v604, 0
        %v966 = vsel %vm625, %v605, 0
        %v969 = vsel %vm625, %v606, 0
        %v972 = vsel %vm625, %v607, 0
        %v975 = vsel %vm625, %v608, 0
        %v978 = vsel %vm625, %v609, 0
        %v981 = vsel %vm625, %v610, 0
        %v984 = vsel %vm625, %v611, 0
        %v987 = vsel %vm625, %v612, 0
        %v990 = vsel %vm625, %v613, 0
        %v993 = vsel %vm625, %v614, 0
        %v996 = vsel %vm625, %v615, 0
        %v999 = vsel %vm625, %v616, 0
        %v1002 = vsel %vm625, %v617, 0
        %v1005 = vsel %vm625, %v618, 0
        %v1008 = vsel %vm625, %v619, 0
        %v1011 = vsel %vm625, %v620, 0
        %v1014 = vsel %vm625, %v621, 0
        %v1017 = vsel %vm625, %v622, 0
        %vm1019 = vcmask 1041408
        %v1021 = vsel %vm1019, %v624, 0
        %1023 = vmatprep.subr.mxu0 0.0
        %1024 = vmatpush1.msra.mxu0 %v623
        %1025 = vmatprep.subr.mxu0 0.0
        %1026 = vmatpush1.msra.mxu0 %v1021
        %1027 = vmatprep.subr.mxu0 0.0
        %1028 = vmatpush1.msra.mxu0 0.0
        %1029 = vmatprep.subr.mxu0 0.0
        %1030 = vmatpush1.msra.mxu0 0.0
        %1031 = vmatprep.subr.mxu0 0.0
        %1032 = vmatpush1.msra.mxu0 0.0
        %1033 = vmatprep.subr.mxu0 0.0
        %1034 = vmatpush1.msra.mxu0 0.0
        %1035 = vmatprep.subr.mxu0 0.0
        %1036 = vmatpush1.msra.mxu0 0.0
        %1037 = vmatprep.subr.mxu0 0.0
        %1038 = vmatpush1.msra.mxu0 0.0
        %1039 = vmatprep.subr.mxu0 0.0
        %1040 = vmatpush1.msra.mxu0 0.0
        %1041 = vmatprep.subr.mxu0 0.0
        %1042 = vmatpush1.msra.mxu0 0.0
        %1043 = vmatprep.subr.mxu0 0.0
        %1044 = vmatpush1.msra.mxu0 0.0
        %1045 = vmatprep.subr.mxu0 0.0
        %1046 = vmatpush1.msra.mxu0 0.0
        %1047 = vmatprep.subr.mxu0 0.0
        %1048 = vmatpush1.msra.mxu0 0.0
        %1049 = vmatprep.subr.mxu0 0.0
        %1050 = vmatpush1.msra.mxu0 0.0
        %1051 = vmatprep.subr.mxu0 0.0
        %1052 = vmatpush1.msra.mxu0 0.0
        %1053 = vmatprep.subr.mxu0 0.0
        %1054 = vmatpush1.msra.mxu0 0.0
        %1055 = vmatprep.subr.mxu0 0.0
        %1056 = vmatpush1.msra.mxu0 0.0
        %1057 = vmatprep.subr.mxu0 0.0
        %1058 = vmatpush1.msra.mxu0 0.0
        %1059 = vmatprep.subr.mxu0 0.0
        %1060 = vmatpush1.msra.mxu0 0.0
        %1061 = vmatprep.subr.mxu0 0.0
        %1062 = vmatpush1.msra.mxu0 0.0
        %1063 = vmatprep.subr.mxu0 0.0
        %1064 = vmatpush1.msra.mxu0 0.0
        %1065 = vmatprep.subr.mxu0 0.0
        %1066 = vmatpush1.msra.mxu0 0.0
        %1067 = vmatprep.subr.mxu0 0.0
        %1068 = vmatpush1.msra.mxu0 0.0
        %1069 = vmatprep.subr.mxu0 0.0
        %1070 = vmatpush1.msra.mxu0 0.0
        %1071 = vmatprep.subr.mxu0 0.0
        %1072 = vmatpush1.msra.mxu0 0.0
        %1073 = vmatprep.subr.mxu0 0.0
        %1074 = vmatpush1.msra.mxu0 0.0
        %1075 = vmatprep.subr.mxu0 0.0
        %1076 = vmatpush1.msra.mxu0 0.0
        %1077 = vmatprep.subr.mxu0 0.0
        %1078 = vmatpush1.msra.mxu0 0.0
        %1079 = vmatprep.subr.mxu0 0.0
        %1080 = vmatpush1.msra.mxu0 0.0
        %1081 = vmatprep.subr.mxu0 0.0
        %1082 = vmatpush1.msra.mxu0 0.0
        %1083 = vmatprep.subr.mxu0 0.0
        %1084 = vmatpush1.msra.mxu0 0.0
        %1085 = vmatprep.subr.mxu0 0.0
        %1086 = vmatpush1.msra.mxu0 0.0
        %1087 = vmatprep.mubr.f32.mxu0 0.0
        %1088 = vmatmul.mubr.f32.gmra.mrb[0].mxu0 %v627
        %v1089 = vpop.f32.mrb[0].mxu0
        %v1090 = vadd.f32 0.0, %v1089
        %v1091 = vpop.f32.mrb[0].mxu0
        %1092 = vmatprep.mubr.f32.mxu0 0.0
        %1093 = vmatmul.mubr.f32.gmra.mrb[0].mxu0 %v630
        %v1094 = vpop.f32.mrb[0].mxu0
        %v1095 = vadd.f32 0.0, %v1094
        %v1096 = vpop.f32.mrb[0].mxu0
        %1097 = vmatprep.mubr.f32.mxu0 0.0
        %1098 = vmatmul.mubr.f32.gmra.mrb[0].mxu0 %v633
        %v1099 = vpop.f32.mrb[0].mxu0
        %v1100 = vadd.f32 0.0, %v1099
        %v1101 = vpop.f32.mrb[0].mxu0
        %1102 = vmatprep.mubr.f32.mxu0 0.0
        %1103 = vmatmul.mubr.f32.gmra.mrb[0].mxu0 %v636
        %v1104 = vpop.f32.mrb[0].mxu0
        %v1105 = vadd.f32 0.0, %v1104
        %v1106 = vpop.f32.mrb[0].mxu0
        %1107 = vmatprep.mubr.f32.mxu0 0.0
        %1108 = vmatmul.mubr.f32.gmra.mrb[0].mxu0 %v639
        %v1109 = vpop.f32.mrb[0].mxu0
        %v1110 = vadd.f32 0.0, %v1109
        %v1111 = vpop.f32.mrb[0].mxu0
        %1112 = vmatprep.mubr.f32.mxu0 0.0
        %1113 = vmatmul.mubr.f32.gmra.mrb[0].mxu0 %v642
        %v1114 = vpop.f32.mrb[0].mxu0
        %v1115 = vadd.f32 0.0, %v1114
        %v1116 = vpop.f32.mrb[0].mxu0
        %1117 = vmatprep.mubr.f32.mxu0 0.0
        %1118 = vmatmul.mubr.f32.gmra.mrb[0].mxu0 %v645
        %v1119 = vpop.f32.mrb[0].mxu0
        %v1120 = vadd.f32 0.0, %v1119
        %v1121 = vpop.f32.mrb[0].mxu0
        %1122 = vmatprep.mubr.f32.mxu0 0.0
        %1123 = vmatmul.mubr.f32.gmra.mrb[0].mxu0 %v648
        %v1124 = vpop.f32.mrb[0].mxu0
        %v1125 = vadd.f32 0.0, %v1124
        %v1126 = vpop.f32.mrb[0].mxu0
        %1127 = vmatprep.mubr.f32.mxu0 0.0
        %1128 = vmatmul.mubr.f32.gmra.mrb[0].mxu0 %v651
        %v1129 = vpop.f32.mrb[0].mxu0
        %v1130 = vadd.f32 0.0, %v1129
        %v1131 = vpop.f32.mrb[0].mxu0
        %1132 = vmatprep.mubr.f32.mxu0 0.0
        %1133 = vmatmul.mubr.f32.gmra.mrb[0].mxu0 %v654
        %v1134 = vpop.f32.mrb[0].mxu0
        %v1135 = vadd.f32 0.0, %v1134
        %v1136 = vpop.f32.mrb[0].mxu0
        %1137 = vmatprep.mubr.f32.mxu0 0.0
        %1138 = vmatmul.mubr.f32.gmra.mrb[0].mxu0 %v657
        %v1139 = vpop.f32.mrb[0].mxu0
        %v1140 = vadd.f32 0.0, %v1139
        %v1141 = vpop.f32.mrb[0].mxu0
        %1142 = vmatprep.mubr.f32.mxu0 0.0
        %1143 = vmatmul.mubr.f32.gmra.mrb[0].mxu0 %v660
        %v1144 = vpop.f32.mrb[0].mxu0
        %v1145 = vadd.f32 0.0, %v1144
        %v1146 = vpop.f32.mrb[0].mxu0
        %1147 = vmatprep.mubr.f32.mxu0 0.0
        %1148 = vmatmul.mubr.f32.gmra.mrb[0].mxu0 %v663
        %v1149 = vpop.f32.mrb[0].mxu0
        %v1150 = vadd.f32 0.0, %v1149
        %v1151 = vpop.f32.mrb[0].mxu0
        %1152 = vmatprep.mubr.f32.mxu0 0.0
        %1153 = vmatmul.mubr.f32.gmra.mrb[0].mxu0 %v666
        %v1154 = vpop.f32.mrb[0].mxu0
        %v1155 = vadd.f32 0.0, %v1154
        %v1156 = vpop.f32.mrb[0].mxu0
        %1157 = vmatprep.mubr.f32.mxu0 0.0
        %1158 = vmatmul.mubr.f32.gmra.mrb[0].mxu0 %v669
        %v1159 = vpop.f32.mrb[0].mxu0
        %v1160 = vadd.f32 0.0, %v1159
        %v1161 = vpop.f32.mrb[0].mxu0
        %1162 = vmatprep.mubr.f32.mxu0 0.0
        %1163 = vmatmul.mubr.f32.gmra.mrb[0].mxu0 %v672
        %v1164 = vpop.f32.mrb[0].mxu0
        %v1165 = vadd.f32 0.0, %v1164
        %v1166 = vpop.f32.mrb[0].mxu0
        %1167 = vmatprep.mubr.f32.mxu0 0.0
        %1168 = vmatmul.mubr.f32.gmra.mrb[0].mxu0 %v675
        %v1169 = vpop.f32.mrb[0].mxu0
        %v1170 = vadd.f32 0.0, %v1169
        %v1171 = vpop.f32.mrb[0].mxu0
        %1172 = vmatprep.mubr.f32.mxu0 0.0
        %1173 = vmatmul.mubr.f32.gmra.mrb[0].mxu0 %v678
        %v1174 = vpop.f32.mrb[0].mxu0
        %v1175 = vadd.f32 0.0, %v1174
        %v1176 = vpop.f32.mrb[0].mxu0
        %1177 = vmatprep.mubr.f32.mxu0 0.0
        %1178 = vmatmul.mubr.f32.gmra.mrb[0].mxu0 %v681
        %v1179 = vpop.f32.mrb[0].mxu0
        %v1180 = vadd.f32 0.0, %v1179
        %v1181 = vpop.f32.mrb[0].mxu0
        %1182 = vmatprep.mubr.f32.mxu0 0.0
        %1183 = vmatmul.mubr.f32.gmra.mrb[0].mxu0 %v684
        %v1184 = vpop.f32.mrb[0].mxu0
        %v1185 = vadd.f32 0.0, %v1184
        %v1186 = vpop.f32.mrb[0].mxu0
        %1187 = vmatprep.mubr.f32.mxu0 0.0
        %1188 = vmatmul.mubr.f32.gmra.mrb[0].mxu0 %v687
        %v1189 = vpop.f32.mrb[0].mxu0
        %v1190 = vadd.f32 0.0, %v1189
        %v1191 = vpop.f32.mrb[0].mxu0
        %1192 = vmatprep.mubr.f32.mxu0 0.0
        %1193 = vmatmul.mubr.f32.gmra.mrb[0].mxu0 %v690
        %v1194 = vpop.f32.mrb[0].mxu0
        %v1195 = vadd.f32 0.0, %v1194
        %v1196 = vpop.f32.mrb[0].mxu0
        %1197 = vmatprep.mubr.f32.mxu0 0.0
        %1198 = vmatmul.mubr.f32.gmra.mrb[0].mxu0 %v693
        %v1199 = vpop.f32.mrb[0].mxu0
        %v1200 = vadd.f32 0.0, %v1199
        %v1201 = vpop.f32.mrb[0].mxu0
        %1202 = vmatprep.mubr.f32.mxu0 0.0
        %1203 = vmatmul.mubr.f32.gmra.mrb[0].mxu0 %v696
        %v1204 = vpop.f32.mrb[0].mxu0
        %v1205 = vadd.f32 0.0, %v1204
        %v1206 = vpop.f32.mrb[0].mxu0
        %1207 = vmatprep.mubr.f32.mxu0 0.0
        %1208 = vmatmul.mubr.f32.gmra.mrb[0].mxu0 %v699
        %v1209 = vpop.f32.mrb[0].mxu0
        %v1210 = vadd.f32 0.0, %v1209
        %v1211 = vpop.f32.mrb[0].mxu0
        %1212 = vmatprep.mubr.f32.mxu0 0.0
        %1213 = vmatmul.mubr.f32.gmra.mrb[0].mxu0 %v702
        %v1214 = vpop.f32.mrb[0].mxu0
        %v1215 = vadd.f32 0.0, %v1214
        %v1216 = vpop.f32.mrb[0].mxu0
        %1217 = vmatprep.mubr.f32.mxu0 0.0
        %1218 = vmatmul.mubr.f32.gmra.mrb[0].mxu0 %v705
        %v1219 = vpop.f32.mrb[0].mxu0
        %v1220 = vadd.f32 0.0, %v1219
        %v1221 = vpop.f32.mrb[0].mxu0
        %1222 = vmatprep.mubr.f32.mxu0 0.0
        %1223 = vmatmul.mubr.f32.gmra.mrb[0].mxu0 %v708
        %v1224 = vpop.f32.mrb[0].mxu0
        %v1225 = vadd.f32 0.0, %v1224
        %v1226 = vpop.f32.mrb[0].mxu0
        %1227 = vmatprep.mubr.f32.mxu0 0.0
        %1228 = vmatmul.mubr.f32.gmra.mrb[0].mxu0 %v711
        %v1229 = vpop.f32.mrb[0].mxu0
        %v1230 = vadd.f32 0.0, %v1229
        %v1231 = vpop.f32.mrb[0].mxu0
        %1232 = vmatprep.mubr.f32.mxu0 0.0
        %1233 = vmatmul.mubr.f32.gmra.mrb[0].mxu0 %v714
        %v1234 = vpop.f32.mrb[0].mxu0
        %v1235 = vadd.f32 0.0, %v1234
        %v1236 = vpop.f32.mrb[0].mxu0
        %1237 = vmatprep.mubr.f32.mxu0 0.0
        %1238 = vmatmul.mubr.f32.gmra.mrb[0].mxu0 %v717
        %v1239 = vpop.f32.mrb[0].mxu0
        %v1240 = vadd.f32 0.0, %v1239
        %v1241 = vpop.f32.mrb[0].mxu0
        %1242 = vmatprep.mubr.f32.mxu0 0.0
        %1243 = vmatmul.mubr.f32.gmra.mrb[0].mxu0 %v720
        %v1244 = vpop.f32.mrb[0].mxu0
        %v1245 = vadd.f32 0.0, %v1244
        %v1246 = vpop.f32.mrb[0].mxu0
        %1247 = vmatprep.mubr.f32.mxu0 0.0
        %1248 = vmatmul.mubr.f32.gmra.mrb[0].mxu0 %v723
        %v1249 = vpop.f32.mrb[0].mxu0
        %v1250 = vadd.f32 0.0, %v1249
        %v1251 = vpop.f32.mrb[0].mxu0
        %1252 = vmatprep.mubr.f32.mxu0 0.0
        %1253 = vmatmul.mubr.f32.gmra.mrb[0].mxu0 %v726
        %v1254 = vpop.f32.mrb[0].mxu0
        %v1255 = vadd.f32 0.0, %v1254
        %v1256 = vpop.f32.mrb[0].mxu0
        %1257 = vmatprep.mubr.f32.mxu0 0.0
        %1258 = vmatmul.mubr.f32.gmra.mrb[0].mxu0 %v729
        %v1259 = vpop.f32.mrb[0].mxu0
        %v1260 = vadd.f32 0.0, %v1259
        %v1261 = vpop.f32.mrb[0].mxu0
        %1262 = vmatprep.mubr.f32.mxu0 0.0
        %1263 = vmatmul.mubr.f32.gmra.mrb[0].mxu0 %v732
        %v1264 = vpop.f32.mrb[0].mxu0
        %v1265 = vadd.f32 0.0, %v1264
        %v1266 = vpop.f32.mrb[0].mxu0
        %1267 = vmatprep.mubr.f32.mxu0 0.0
        %1268 = vmatmul.mubr.f32.gmra.mrb[0].mxu0 %v735
        %v1269 = vpop.f32.mrb[0].mxu0
        %v1270 = vadd.f32 0.0, %v1269
        %v1271 = vpop.f32.mrb[0].mxu0
        %1272 = vmatprep.mubr.f32.mxu0 0.0
        %1273 = vmatmul.mubr.f32.gmra.mrb[0].mxu0 %v738
        %v1274 = vpop.f32.mrb[0].mxu0
        %v1275 = vadd.f32 0.0, %v1274
        %v1276 = vpop.f32.mrb[0].mxu0
        %1277 = vmatprep.mubr.f32.mxu0 0.0
        %1278 = vmatmul.mubr.f32.gmra.mrb[0].mxu0 %v741
        %v1279 = vpop.f32.mrb[0].mxu0
        %v1280 = vadd.f32 0.0, %v1279
        %v1281 = vpop.f32.mrb[0].mxu0
        %1282 = vmatprep.mubr.f32.mxu0 0.0
        %1283 = vmatmul.mubr.f32.gmra.mrb[0].mxu0 %v744
        %v1284 = vpop.f32.mrb[0].mxu0
        %v1285 = vadd.f32 0.0, %v1284
        %v1286 = vpop.f32.mrb[0].mxu0
        %1287 = vmatprep.mubr.f32.mxu0 0.0
        %1288 = vmatmul.mubr.f32.gmra.mrb[0].mxu0 %v747
        %v1289 = vpop.f32.mrb[0].mxu0
        %v1290 = vadd.f32 0.0, %v1289
        %v1291 = vpop.f32.mrb[0].mxu0
        %1292 = vmatprep.mubr.f32.mxu0 0.0
        %1293 = vmatmul.mubr.f32.gmra.mrb[0].mxu0 %v750
        %v1294 = vpop.f32.mrb[0].mxu0
        %v1295 = vadd.f32 0.0, %v1294
        %v1296 = vpop.f32.mrb[0].mxu0
        %1297 = vmatprep.mubr.f32.mxu0 0.0
        %1298 = vmatmul.mubr.f32.gmra.mrb[0].mxu0 %v753
        %v1299 = vpop.f32.mrb[0].mxu0
        %v1300 = vadd.f32 0.0, %v1299
        %v1301 = vpop.f32.mrb[0].mxu0
        %1302 = vmatprep.mubr.f32.mxu0 0.0
        %1303 = vmatmul.mubr.f32.gmra.mrb[0].mxu0 %v756
        %v1304 = vpop.f32.mrb[0].mxu0
        %v1305 = vadd.f32 0.0, %v1304
        %v1306 = vpop.f32.mrb[0].mxu0
        %1307 = vmatprep.mubr.f32.mxu0 0.0
        %1308 = vmatmul.mubr.f32.gmra.mrb[0].mxu0 %v759
        %v1309 = vpop.f32.mrb[0].mxu0
        %v1310 = vadd.f32 0.0, %v1309
        %v1311 = vpop.f32.mrb[0].mxu0
        %1312 = vmatprep.mubr.f32.mxu0 0.0
        %1313 = vmatmul.mubr.f32.gmra.mrb[0].mxu0 %v762
        %v1314 = vpop.f32.mrb[0].mxu0
        %v1315 = vadd.f32 0.0, %v1314
        %v1316 = vpop.f32.mrb[0].mxu0
        %1317 = vmatprep.mubr.f32.mxu0 0.0
        %1318 = vmatmul.mubr.f32.gmra.mrb[0].mxu0 %v765
        %v1319 = vpop.f32.mrb[0].mxu0
        %v1320 = vadd.f32 0.0, %v1319
        %v1321 = vpop.f32.mrb[0].mxu0
        %1322 = vmatprep.mubr.f32.mxu0 0.0
        %1323 = vmatmul.mubr.f32.gmra.mrb[0].mxu0 %v768
        %v1324 = vpop.f32.mrb[0].mxu0
        %v1325 = vadd.f32 0.0, %v1324
        %v1326 = vpop.f32.mrb[0].mxu0
        %1327 = vmatprep.mubr.f32.mxu0 0.0
        %1328 = vmatmul.mubr.f32.gmra.mrb[0].mxu0 %v771
        %v1329 = vpop.f32.mrb[0].mxu0
        %v1330 = vadd.f32 0.0, %v1329
        %v1331 = vpop.f32.mrb[0].mxu0
        %1332 = vmatprep.mubr.f32.mxu0 0.0
        %1333 = vmatmul.mubr.f32.gmra.mrb[0].mxu0 %v774
        %v1334 = vpop.f32.mrb[0].mxu0
        %v1335 = vadd.f32 0.0, %v1334
        %v1336 = vpop.f32.mrb[0].mxu0
        %1337 = vmatprep.mubr.f32.mxu0 0.0
        %1338 = vmatmul.mubr.f32.gmra.mrb[0].mxu0 %v777
        %v1339 = vpop.f32.mrb[0].mxu0
        %v1340 = vadd.f32 0.0, %v1339
        %v1341 = vpop.f32.mrb[0].mxu0
        %1342 = vmatprep.mubr.f32.mxu0 0.0
        %1343 = vmatmul.mubr.f32.gmra.mrb[0].mxu0 %v780
        %v1344 = vpop.f32.mrb[0].mxu0
        %v1345 = vadd.f32 0.0, %v1344
        %v1346 = vpop.f32.mrb[0].mxu0
        %1347 = vmatprep.mubr.f32.mxu0 0.0
        %1348 = vmatmul.mubr.f32.gmra.mrb[0].mxu0 %v783
        %v1349 = vpop.f32.mrb[0].mxu0
        %v1350 = vadd.f32 0.0, %v1349
        %v1351 = vpop.f32.mrb[0].mxu0
        %1352 = vmatprep.mubr.f32.mxu0 0.0
        %1353 = vmatmul.mubr.f32.gmra.mrb[0].mxu0 %v786
        %v1354 = vpop.f32.mrb[0].mxu0
        %v1355 = vadd.f32 0.0, %v1354
        %v1356 = vpop.f32.mrb[0].mxu0
        %1357 = vmatprep.mubr.f32.mxu0 0.0
        %1358 = vmatmul.mubr.f32.gmra.mrb[0].mxu0 %v789
        %v1359 = vpop.f32.mrb[0].mxu0
        %v1360 = vadd.f32 0.0, %v1359
        %v1361 = vpop.f32.mrb[0].mxu0
        %1362 = vmatprep.mubr.f32.mxu0 0.0
        %1363 = vmatmul.mubr.f32.gmra.mrb[0].mxu0 %v792
        %v1364 = vpop.f32.mrb[0].mxu0
        %v1365 = vadd.f32 0.0, %v1364
        %v1366 = vpop.f32.mrb[0].mxu0
        %1367 = vmatprep.mubr.f32.mxu0 0.0
        %1368 = vmatmul.mubr.f32.gmra.mrb[0].mxu0 %v795
        %v1369 = vpop.f32.mrb[0].mxu0
        %v1370 = vadd.f32 0.0, %v1369
        %v1371 = vpop.f32.mrb[0].mxu0
        %1372 = vmatprep.mubr.f32.mxu0 0.0
        %1373 = vmatmul.mubr.f32.gmra.mrb[0].mxu0 %v798
        %v1374 = vpop.f32.mrb[0].mxu0
        %v1375 = vadd.f32 0.0, %v1374
        %v1376 = vpop.f32.mrb[0].mxu0
        %1377 = vmatprep.mubr.f32.mxu0 0.0
        %1378 = vmatmul.mubr.f32.gmra.mrb[0].mxu0 %v801
        %v1379 = vpop.f32.mrb[0].mxu0
        %v1380 = vadd.f32 0.0, %v1379
        %v1381 = vpop.f32.mrb[0].mxu0
        %1382 = vmatprep.mubr.f32.mxu0 0.0
        %1383 = vmatmul.mubr.f32.gmra.mrb[0].mxu0 %v804
        %v1384 = vpop.f32.mrb[0].mxu0
        %v1385 = vadd.f32 0.0, %v1384
        %v1386 = vpop.f32.mrb[0].mxu0
        %1387 = vmatprep.mubr.f32.mxu0 0.0
        %1388 = vmatmul.mubr.f32.gmra.mrb[0].mxu0 %v807
        %v1389 = vpop.f32.mrb[0].mxu0
        %v1390 = vadd.f32 0.0, %v1389
        %v1391 = vpop.f32.mrb[0].mxu0
        %1392 = vmatprep.mubr.f32.mxu0 0.0
        %1393 = vmatmul.mubr.f32.gmra.mrb[0].mxu0 %v810
        %v1394 = vpop.f32.mrb[0].mxu0
        %v1395 = vadd.f32 0.0, %v1394
        %v1396 = vpop.f32.mrb[0].mxu0
        %1397 = vmatprep.mubr.f32.mxu0 0.0
        %1398 = vmatmul.mubr.f32.gmra.mrb[0].mxu0 %v813
        %v1399 = vpop.f32.mrb[0].mxu0
        %v1400 = vadd.f32 0.0, %v1399
        %v1401 = vpop.f32.mrb[0].mxu0
        %1402 = vmatprep.mubr.f32.mxu0 0.0
        %1403 = vmatmul.mubr.f32.gmra.mrb[0].mxu0 %v816
        %v1404 = vpop.f32.mrb[0].mxu0
        %v1405 = vadd.f32 0.0, %v1404
        %v1406 = vpop.f32.mrb[0].mxu0
        %1407 = vmatprep.mubr.f32.mxu0 0.0
        %1408 = vmatmul.mubr.f32.gmra.mrb[0].mxu0 %v819
        %v1409 = vpop.f32.mrb[0].mxu0
        %v1410 = vadd.f32 0.0, %v1409
        %v1411 = vpop.f32.mrb[0].mxu0
        %1412 = vmatprep.mubr.f32.mxu0 0.0
        %1413 = vmatmul.mubr.f32.gmra.mrb[0].mxu0 %v822
        %v1414 = vpop.f32.mrb[0].mxu0
        %v1415 = vadd.f32 0.0, %v1414
        %v1416 = vpop.f32.mrb[0].mxu0
        %1417 = vmatprep.mubr.f32.mxu0 0.0
        %1418 = vmatmul.mubr.f32.gmra.mrb[0].mxu0 %v825
        %v1419 = vpop.f32.mrb[0].mxu0
        %v1420 = vadd.f32 0.0, %v1419
        %v1421 = vpop.f32.mrb[0].mxu0
        %1422 = vmatprep.mubr.f32.mxu0 0.0
        %1423 = vmatmul.mubr.f32.gmra.mrb[0].mxu0 %v828
        %v1424 = vpop.f32.mrb[0].mxu0
        %v1425 = vadd.f32 0.0, %v1424
        %v1426 = vpop.f32.mrb[0].mxu0
        %1427 = vmatprep.mubr.f32.mxu0 0.0
        %1428 = vmatmul.mubr.f32.gmra.mrb[0].mxu0 %v831
        %v1429 = vpop.f32.mrb[0].mxu0
        %v1430 = vadd.f32 0.0, %v1429
        %v1431 = vpop.f32.mrb[0].mxu0
        %1432 = vmatprep.mubr.f32.mxu0 0.0
        %1433 = vmatmul.mubr.f32.gmra.mrb[0].mxu0 %v834
        %v1434 = vpop.f32.mrb[0].mxu0
        %v1435 = vadd.f32 0.0, %v1434
        %v1436 = vpop.f32.mrb[0].mxu0
        %1437 = vmatprep.mubr.f32.mxu0 0.0
        %1438 = vmatmul.mubr.f32.gmra.mrb[0].mxu0 %v837
        %v1439 = vpop.f32.mrb[0].mxu0
        %v1440 = vadd.f32 0.0, %v1439
        %v1441 = vpop.f32.mrb[0].mxu0
        %1442 = vmatprep.mubr.f32.mxu0 0.0
        %1443 = vmatmul.mubr.f32.gmra.mrb[0].mxu0 %v840
        %v1444 = vpop.f32.mrb[0].mxu0
        %v1445 = vadd.f32 0.0, %v1444
        %v1446 = vpop.f32.mrb[0].mxu0
        %1447 = vmatprep.mubr.f32.mxu0 0.0
        %1448 = vmatmul.mubr.f32.gmra.mrb[0].mxu0 %v843
        %v1449 = vpop.f32.mrb[0].mxu0
        %v1450 = vadd.f32 0.0, %v1449
        %v1451 = vpop.f32.mrb[0].mxu0
        %1452 = vmatprep.mubr.f32.mxu0 0.0
        %1453 = vmatmul.mubr.f32.gmra.mrb[0].mxu0 %v846
        %v1454 = vpop.f32.mrb[0].mxu0
        %v1455 = vadd.f32 0.0, %v1454
        %v1456 = vpop.f32.mrb[0].mxu0
        %1457 = vmatprep.mubr.f32.mxu0 0.0
        %1458 = vmatmul.mubr.f32.gmra.mrb[0].mxu0 %v849
        %v1459 = vpop.f32.mrb[0].mxu0
        %v1460 = vadd.f32 0.0, %v1459
        %v1461 = vpop.f32.mrb[0].mxu0
        %1462 = vmatprep.mubr.f32.mxu0 0.0
        %1463 = vmatmul.mubr.f32.gmra.mrb[0].mxu0 %v852
        %v1464 = vpop.f32.mrb[0].mxu0
        %v1465 = vadd.f32 0.0, %v1464
        %v1466 = vpop.f32.mrb[0].mxu0
        %1467 = vmatprep.mubr.f32.mxu0 0.0
        %1468 = vmatmul.mubr.f32.gmra.mrb[0].mxu0 %v855
        %v1469 = vpop.f32.mrb[0].mxu0
        %v1470 = vadd.f32 0.0, %v1469
        %v1471 = vpop.f32.mrb[0].mxu0
        %1472 = vmatprep.mubr.f32.mxu0 0.0
        %1473 = vmatmul.mubr.f32.gmra.mrb[0].mxu0 %v858
        %v1474 = vpop.f32.mrb[0].mxu0
        %v1475 = vadd.f32 0.0, %v1474
        %v1476 = vpop.f32.mrb[0].mxu0
        %1477 = vmatprep.mubr.f32.mxu0 0.0
        %1478 = vmatmul.mubr.f32.gmra.mrb[0].mxu0 %v861
        %v1479 = vpop.f32.mrb[0].mxu0
        %v1480 = vadd.f32 0.0, %v1479
        %v1481 = vpop.f32.mrb[0].mxu0
        %1482 = vmatprep.mubr.f32.mxu0 0.0
        %1483 = vmatmul.mubr.f32.gmra.mrb[0].mxu0 %v864
        %v1484 = vpop.f32.mrb[0].mxu0
        %v1485 = vadd.f32 0.0, %v1484
        %v1486 = vpop.f32.mrb[0].mxu0
        %1487 = vmatprep.mubr.f32.mxu0 0.0
        %1488 = vmatmul.mubr.f32.gmra.mrb[0].mxu0 %v867
        %v1489 = vpop.f32.mrb[0].mxu0
        %v1490 = vadd.f32 0.0, %v1489
        %v1491 = vpop.f32.mrb[0].mxu0
        %1492 = vmatprep.mubr.f32.mxu0 0.0
        %1493 = vmatmul.mubr.f32.gmra.mrb[0].mxu0 %v870
        %v1494 = vpop.f32.mrb[0].mxu0
        %v1495 = vadd.f32 0.0, %v1494
        %v1496 = vpop.f32.mrb[0].mxu0
        %1497 = vmatprep.mubr.f32.mxu0 0.0
        %1498 = vmatmul.mubr.f32.gmra.mrb[0].mxu0 %v873
        %v1499 = vpop.f32.mrb[0].mxu0
        %v1500 = vadd.f32 0.0, %v1499
        %v1501 = vpop.f32.mrb[0].mxu0
        %1502 = vmatprep.mubr.f32.mxu0 0.0
        %1503 = vmatmul.mubr.f32.gmra.mrb[0].mxu0 %v876
        %v1504 = vpop.f32.mrb[0].mxu0
        %v1505 = vadd.f32 0.0, %v1504
        %v1506 = vpop.f32.mrb[0].mxu0
        %1507 = vmatprep.mubr.f32.mxu0 0.0
        %1508 = vmatmul.mubr.f32.gmra.mrb[0].mxu0 %v879
        %v1509 = vpop.f32.mrb[0].mxu0
        %v1510 = vadd.f32 0.0, %v1509
        %v1511 = vpop.f32.mrb[0].mxu0
        %1512 = vmatprep.mubr.f32.mxu0 0.0
        %1513 = vmatmul.mubr.f32.gmra.mrb[0].mxu0 %v882
        %v1514 = vpop.f32.mrb[0].mxu0
        %v1515 = vadd.f32 0.0, %v1514
        %v1516 = vpop.f32.mrb[0].mxu0
        %1517 = vmatprep.mubr.f32.mxu0 0.0
        %1518 = vmatmul.mubr.f32.gmra.mrb[0].mxu0 %v885
        %v1519 = vpop.f32.mrb[0].mxu0
        %v1520 = vadd.f32 0.0, %v1519
        %v1521 = vpop.f32.mrb[0].mxu0
        %1522 = vmatprep.mubr.f32.mxu0 0.0
        %1523 = vmatmul.mubr.f32.gmra.mrb[0].mxu0 %v888
        %v1524 = vpop.f32.mrb[0].mxu0
        %v1525 = vadd.f32 0.0, %v1524
        %v1526 = vpop.f32.mrb[0].mxu0
        %1527 = vmatprep.mubr.f32.mxu0 0.0
        %1528 = vmatmul.mubr.f32.gmra.mrb[0].mxu0 %v891
        %v1529 = vpop.f32.mrb[0].mxu0
        %v1530 = vadd.f32 0.0, %v1529
        %v1531 = vpop.f32.mrb[0].mxu0
        %1532 = vmatprep.mubr.f32.mxu0 0.0
        %1533 = vmatmul.mubr.f32.gmra.mrb[0].mxu0 %v894
        %v1534 = vpop.f32.mrb[0].mxu0
        %v1535 = vadd.f32 0.0, %v1534
        %v1536 = vpop.f32.mrb[0].mxu0
        %1537 = vmatprep.mubr.f32.mxu0 0.0
        %1538 = vmatmul.mubr.f32.gmra.mrb[0].mxu0 %v897
        %v1539 = vpop.f32.mrb[0].mxu0
        %v1540 = vadd.f32 0.0, %v1539
        %v1541 = vpop.f32.mrb[0].mxu0
        %1542 = vmatprep.mubr.f32.mxu0 0.0
        %1543 = vmatmul.mubr.f32.gmra.mrb[0].mxu0 %v900
        %v1544 = vpop.f32.mrb[0].mxu0
        %v1545 = vadd.f32 0.0, %v1544
        %v1546 = vpop.f32.mrb[0].mxu0
        %1547 = vmatprep.mubr.f32.mxu0 0.0
        %1548 = vmatmul.mubr.f32.gmra.mrb[0].mxu0 %v903
        %v1549 = vpop.f32.mrb[0].mxu0
        %v1550 = vadd.f32 0.0, %v1549
        %v1551 = vpop.f32.mrb[0].mxu0
        %1552 = vmatprep.mubr.f32.mxu0 0.0
        %1553 = vmatmul.mubr.f32.gmra.mrb[0].mxu0 %v906
        %v1554 = vpop.f32.mrb[0].mxu0
        %v1555 = vadd.f32 0.0, %v1554
        %v1556 = vpop.f32.mrb[0].mxu0
        %1557 = vmatprep.mubr.f32.mxu0 0.0
        %1558 = vmatmul.mubr.f32.gmra.mrb[0].mxu0 %v909
        %v1559 = vpop.f32.mrb[0].mxu0
        %v1560 = vadd.f32 0.0, %v1559
        %v1561 = vpop.f32.mrb[0].mxu0
        %1562 = vmatprep.mubr.f32.mxu0 0.0
        %1563 = vmatmul.mubr.f32.gmra.mrb[0].mxu0 %v912
        %v1564 = vpop.f32.mrb[0].mxu0
        %v1565 = vadd.f32 0.0, %v1564
        %v1566 = vpop.f32.mrb[0].mxu0
        %1567 = vmatprep.mubr.f32.mxu0 0.0
        %1568 = vmatmul.mubr.f32.gmra.mrb[0].mxu0 %v915
        %v1569 = vpop.f32.mrb[0].mxu0
        %v1570 = vadd.f32 0.0, %v1569
        %v1571 = vpop.f32.mrb[0].mxu0
        %1572 = vmatprep.mubr.f32.mxu0 0.0
        %1573 = vmatmul.mubr.f32.gmra.mrb[0].mxu0 %v918
        %v1574 = vpop.f32.mrb[0].mxu0
        %v1575 = vadd.f32 0.0, %v1574
        %v1576 = vpop.f32.mrb[0].mxu0
        %1577 = vmatprep.mubr.f32.mxu0 0.0
        %1578 = vmatmul.mubr.f32.gmra.mrb[0].mxu0 %v921
        %v1579 = vpop.f32.mrb[0].mxu0
        %v1580 = vadd.f32 0.0, %v1579
        %v1581 = vpop.f32.mrb[0].mxu0
        %1582 = vmatprep.mubr.f32.mxu0 0.0
        %1583 = vmatmul.mubr.f32.gmra.mrb[0].mxu0 %v924
        %v1584 = vpop.f32.mrb[0].mxu0
        %v1585 = vadd.f32 0.0, %v1584
        %v1586 = vpop.f32.mrb[0].mxu0
        %1587 = vmatprep.mubr.f32.mxu0 0.0
        %1588 = vmatmul.mubr.f32.gmra.mrb[0].mxu0 %v927
        %v1589 = vpop.f32.mrb[0].mxu0
        %v1590 = vadd.f32 0.0, %v1589
        %v1591 = vpop.f32.mrb[0].mxu0
        %1592 = vmatprep.mubr.f32.mxu0 0.0
        %1593 = vmatmul.mubr.f32.gmra.mrb[0].mxu0 %v930
        %v1594 = vpop.f32.mrb[0].mxu0
        %v1595 = vadd.f32 0.0, %v1594
        %v1596 = vpop.f32.mrb[0].mxu0
        %1597 = vmatprep.mubr.f32.mxu0 0.0
        %1598 = vmatmul.mubr.f32.gmra.mrb[0].mxu0 %v933
        %v1599 = vpop.f32.mrb[0].mxu0
        %v1600 = vadd.f32 0.0, %v1599
        %v1601 = vpop.f32.mrb[0].mxu0
        %1602 = vmatprep.mubr.f32.mxu0 0.0
        %1603 = vmatmul.mubr.f32.gmra.mrb[0].mxu0 %v936
        %v1604 = vpop.f32.mrb[0].mxu0
        %v1605 = vadd.f32 0.0, %v1604
        %v1606 = vpop.f32.mrb[0].mxu0
        %1607 = vmatprep.mubr.f32.mxu0 0.0
        %1608 = vmatmul.mubr.f32.gmra.mrb[0].mxu0 %v939
        %v1609 = vpop.f32.mrb[0].mxu0
        %v1610 = vadd.f32 0.0, %v1609
        %v1611 = vpop.f32.mrb[0].mxu0
        %1612 = vmatprep.mubr.f32.mxu0 0.0
        %1613 = vmatmul.mubr.f32.gmra.mrb[0].mxu0 %v942
        %v1614 = vpop.f32.mrb[0].mxu0
        %v1615 = vadd.f32 0.0, %v1614
        %v1616 = vpop.f32.mrb[0].mxu0
        %1617 = vmatprep.mubr.f32.mxu0 0.0
        %1618 = vmatmul.mubr.f32.gmra.mrb[0].mxu0 %v945
        %v1619 = vpop.f32.mrb[0].mxu0
        %v1620 = vadd.f32 0.0, %v1619
        %v1621 = vpop.f32.mrb[0].mxu0
        %1622 = vmatprep.mubr.f32.mxu0 0.0
        %1623 = vmatmul.mubr.f32.gmra.mrb[0].mxu0 %v948
        %v1624 = vpop.f32.mrb[0].mxu0
        %v1625 = vadd.f32 0.0, %v1624
        %v1626 = vpop.f32.mrb[0].mxu0
        %1627 = vmatprep.mubr.f32.mxu0 0.0
        %1628 = vmatmul.mubr.f32.gmra.mrb[0].mxu0 %v951
        %v1629 = vpop.f32.mrb[0].mxu0
        %v1630 = vadd.f32 0.0, %v1629
        %v1631 = vpop.f32.mrb[0].mxu0
        %1632 = vmatprep.mubr.f32.mxu0 0.0
        %1633 = vmatmul.mubr.f32.gmra.mrb[0].mxu0 %v954
        %v1634 = vpop.f32.mrb[0].mxu0
        %v1635 = vadd.f32 0.0, %v1634
        %v1636 = vpop.f32.mrb[0].mxu0
        %1637 = vmatprep.mubr.f32.mxu0 0.0
        %1638 = vmatmul.mubr.f32.gmra.mrb[0].mxu0 %v957
        %v1639 = vpop.f32.mrb[0].mxu0
        %v1640 = vadd.f32 0.0, %v1639
        %v1641 = vpop.f32.mrb[0].mxu0
        %1642 = vmatprep.mubr.f32.mxu0 0.0
        %1643 = vmatmul.mubr.f32.gmra.mrb[0].mxu0 %v960
        %v1644 = vpop.f32.mrb[0].mxu0
        %v1645 = vadd.f32 0.0, %v1644
        %v1646 = vpop.f32.mrb[0].mxu0
        %1647 = vmatprep.mubr.f32.mxu0 0.0
        %1648 = vmatmul.mubr.f32.gmra.mrb[0].mxu0 %v963
        %v1649 = vpop.f32.mrb[0].mxu0
        %v1650 = vadd.f32 0.0, %v1649
        %v1651 = vpop.f32.mrb[0].mxu0
        %1652 = vmatprep.mubr.f32.mxu0 0.0
        %1653 = vmatmul.mubr.f32.gmra.mrb[0].mxu0 %v966
        %v1654 = vpop.f32.mrb[0].mxu0
        %v1655 = vadd.f32 0.0, %v1654
        %v1656 = vpop.f32.mrb[0].mxu0
        %1657 = vmatprep.mubr.f32.mxu0 0.0
        %1658 = vmatmul.mubr.f32.gmra.mrb[0].mxu0 %v969
        %v1659 = vpop.f32.mrb[0].mxu0
        %v1660 = vadd.f32 0.0, %v1659
        %v1661 = vpop.f32.mrb[0].mxu0
        %1662 = vmatprep.mubr.f32.mxu0 0.0
        %1663 = vmatmul.mubr.f32.gmra.mrb[0].mxu0 %v972
        %v1664 = vpop.f32.mrb[0].mxu0
        %v1665 = vadd.f32 0.0, %v1664
        %v1666 = vpop.f32.mrb[0].mxu0
        %1667 = vmatprep.mubr.f32.mxu0 0.0
        %1668 = vmatmul.mubr.f32.gmra.mrb[0].mxu0 %v975
        %v1669 = vpop.f32.mrb[0].mxu0
        %v1670 = vadd.f32 0.0, %v1669
        %v1671 = vpop.f32.mrb[0].mxu0
        %1672 = vmatprep.mubr.f32.mxu0 0.0
        %1673 = vmatmul.mubr.f32.gmra.mrb[0].mxu0 %v978
        %v1674 = vpop.f32.mrb[0].mxu0
        %v1675 = vadd.f32 0.0, %v1674
        %v1676 = vpop.f32.mrb[0].mxu0
        %1677 = vmatprep.mubr.f32.mxu0 0.0
        %1678 = vmatmul.mubr.f32.gmra.mrb[0].mxu0 %v981
        %v1679 = vpop.f32.mrb[0].mxu0
        %v1680 = vadd.f32 0.0, %v1679
        %v1681 = vpop.f32.mrb[0].mxu0
        %1682 = vmatprep.mubr.f32.mxu0 0.0
        %1683 = vmatmul.mubr.f32.gmra.mrb[0].mxu0 %v984
        %v1684 = vpop.f32.mrb[0].mxu0
        %v1685 = vadd.f32 0.0, %v1684
        %v1686 = vpop.f32.mrb[0].mxu0
        %1687 = vmatprep.mubr.f32.mxu0 0.0
        %1688 = vmatmul.mubr.f32.gmra.mrb[0].mxu0 %v987
        %v1689 = vpop.f32.mrb[0].mxu0
        %v1690 = vadd.f32 0.0, %v1689
        %v1691 = vpop.f32.mrb[0].mxu0
        %1692 = vmatprep.mubr.f32.mxu0 0.0
        %1693 = vmatmul.mubr.f32.gmra.mrb[0].mxu0 %v990
        %v1694 = vpop.f32.mrb[0].mxu0
        %v1695 = vadd.f32 0.0, %v1694
        %v1696 = vpop.f32.mrb[0].mxu0
        %1697 = vmatprep.mubr.f32.mxu0 0.0
        %1698 = vmatmul.mubr.f32.gmra.mrb[0].mxu0 %v993
        %v1699 = vpop.f32.mrb[0].mxu0
        %v1700 = vadd.f32 0.0, %v1699
        %v1701 = vpop.f32.mrb[0].mxu0
        %1702 = vmatprep.mubr.f32.mxu0 0.0
        %1703 = vmatmul.mubr.f32.gmra.mrb[0].mxu0 %v996
        %v1704 = vpop.f32.mrb[0].mxu0
        %v1705 = vadd.f32 0.0, %v1704
        %v1706 = vpop.f32.mrb[0].mxu0
        %1707 = vmatprep.mubr.f32.mxu0 0.0
        %1708 = vmatmul.mubr.f32.gmra.mrb[0].mxu0 %v999
        %v1709 = vpop.f32.mrb[0].mxu0
        %v1710 = vadd.f32 0.0, %v1709
        %v1711 = vpop.f32.mrb[0].mxu0
        %1712 = vmatprep.mubr.f32.mxu0 0.0
        %1713 = vmatmul.mubr.f32.gmra.mrb[0].mxu0 %v1002
        %v1714 = vpop.f32.mrb[0].mxu0
        %v1715 = vadd.f32 0.0, %v1714
        %v1716 = vpop.f32.mrb[0].mxu0
        %1717 = vmatprep.mubr.f32.mxu0 0.0
        %1718 = vmatmul.mubr.f32.gmra.mrb[0].mxu0 %v1005
        %v1719 = vpop.f32.mrb[0].mxu0
        %v1720 = vadd.f32 0.0, %v1719
        %v1721 = vpop.f32.mrb[0].mxu0
        %1722 = vmatprep.mubr.f32.mxu0 0.0
        %1723 = vmatmul.mubr.f32.gmra.mrb[0].mxu0 %v1008
        %v1724 = vpop.f32.mrb[0].mxu0
        %v1725 = vadd.f32 0.0, %v1724
        %v1726 = vpop.f32.mrb[0].mxu0
        %1727 = vmatprep.mubr.f32.mxu0 0.0
        %1728 = vmatmul.mubr.f32.gmra.mrb[0].mxu0 %v1011
        %v1729 = vpop.f32.mrb[0].mxu0
        %v1730 = vadd.f32 0.0, %v1729
        %v1731 = vpop.f32.mrb[0].mxu0
        %1732 = vmatprep.mubr.f32.mxu0 0.0
        %1733 = vmatmul.mubr.f32.gmra.mrb[0].mxu0 %v1014
        %v1734 = vpop.f32.mrb[0].mxu0
        %v1735 = vadd.f32 0.0, %v1734
        %v1736 = vpop.f32.mrb[0].mxu0
        %1737 = vmatprep.mubr.f32.mxu0 0.0
        %1738 = vmatmul.mubr.f32.gmra.mrb[0].mxu0 %v1017
        %v1739 = vpop.f32.mrb[0].mxu0
        %v1740 = vadd.f32 0.0, %v1739
        %v1741 = vpop.f32.mrb[0].mxu0
        %1742 = vdwg.mxu0
        %v1743 = vld [vmem:[%s2] sm:$0x1]
        %v1745 = vlaneseq
        %v1746 = vshrl.u32 %v1745, 7
        %v1747 = vsub.s32 0, %v1746
        %v1748 = vrot.slane %v1743, %v1747
        %v1750 = vmul.f32 %v1090, %v1748
        %v1751 = vmul.f32 %v1095, %v1748
        %v1752 = vmul.f32 %v1100, %v1748
        %v1753 = vmul.f32 %v1105, %v1748
        %v1754 = vmul.f32 %v1110, %v1748
        %v1755 = vmul.f32 %v1115, %v1748
        %v1756 = vmul.f32 %v1120, %v1748
        %v1757 = vmul.f32 %v1125, %v1748
        %v1758 = vmul.f32 %v1130, %v1748
        %v1759 = vmul.f32 %v1135, %v1748
        %v1760 = vmul.f32 %v1140, %v1748
        %v1761 = vmul.f32 %v1145, %v1748
        %v1762 = vmul.f32 %v1150, %v1748
        %v1763 = vmul.f32 %v1155, %v1748
        %v1764 = vmul.f32 %v1160, %v1748
        %v1765 = vmul.f32 %v1165, %v1748
        %v1766 = vmul.f32 %v1170, %v1748
        %v1767 = vmul.f32 %v1175, %v1748
        %v1768 = vmul.f32 %v1180, %v1748
        %v1769 = vmul.f32 %v1185, %v1748
        %v1770 = vmul.f32 %v1190, %v1748
        %v1771 = vmul.f32 %v1195, %v1748
        %v1772 = vmul.f32 %v1200, %v1748
        %v1773 = vmul.f32 %v1205, %v1748
        %v1774 = vmul.f32 %v1210, %v1748
        %v1775 = vmul.f32 %v1215, %v1748
        %v1776 = vmul.f32 %v1220, %v1748
        %v1777 = vmul.f32 %v1225, %v1748
        %v1778 = vmul.f32 %v1230, %v1748
        %v1779 = vmul.f32 %v1235, %v1748
        %v1780 = vmul.f32 %v1240, %v1748
        %v1781 = vmul.f32 %v1245, %v1748
        %v1782 = vmul.f32 %v1250, %v1748
        %v1783 = vmul.f32 %v1255, %v1748
        %v1784 = vmul.f32 %v1260, %v1748
        %v1785 = vmul.f32 %v1265, %v1748
        %v1786 = vmul.f32 %v1270, %v1748
        %v1787 = vmul.f32 %v1275, %v1748
        %v1788 = vmul.f32 %v1280, %v1748
        %v1789 = vmul.f32 %v1285, %v1748
        %v1790 = vmul.f32 %v1290, %v1748
        %v1791 = vmul.f32 %v1295, %v1748
        %v1792 = vmul.f32 %v1300, %v1748
        %v1793 = vmul.f32 %v1305, %v1748
        %v1794 = vmul.f32 %v1310, %v1748
        %v1795 = vmul.f32 %v1315, %v1748
        %v1796 = vmul.f32 %v1320, %v1748
        %v1797 = vmul.f32 %v1325, %v1748
        %v1798 = vmul.f32 %v1330, %v1748
        %v1799 = vmul.f32 %v1335, %v1748
        %v1800 = vmul.f32 %v1340, %v1748
        %v1801 = vmul.f32 %v1345, %v1748
        %v1802 = vmul.f32 %v1350, %v1748
        %v1803 = vmul.f32 %v1355, %v1748
        %v1804 = vmul.f32 %v1360, %v1748
        %v1805 = vmul.f32 %v1365, %v1748
        %v1806 = vmul.f32 %v1370, %v1748
        %v1807 = vmul.f32 %v1375, %v1748
        %v1808 = vmul.f32 %v1380, %v1748
        %v1809 = vmul.f32 %v1385, %v1748
        %v1810 = vmul.f32 %v1390, %v1748
        %v1811 = vmul.f32 %v1395, %v1748
        %v1812 = vmul.f32 %v1400, %v1748
        %v1813 = vmul.f32 %v1405, %v1748
        %v1814 = vmul.f32 %v1410, %v1748
        %v1815 = vmul.f32 %v1415, %v1748
        %v1816 = vmul.f32 %v1420, %v1748
        %v1817 = vmul.f32 %v1425, %v1748
        %v1818 = vmul.f32 %v1430, %v1748
        %v1819 = vmul.f32 %v1435, %v1748
        %v1820 = vmul.f32 %v1440, %v1748
        %v1821 = vmul.f32 %v1445, %v1748
        %v1822 = vmul.f32 %v1450, %v1748
        %v1823 = vmul.f32 %v1455, %v1748
        %v1824 = vmul.f32 %v1460, %v1748
        %v1825 = vmul.f32 %v1465, %v1748
        %v1826 = vmul.f32 %v1470, %v1748
        %v1827 = vmul.f32 %v1475, %v1748
        %v1828 = vmul.f32 %v1480, %v1748
        %v1829 = vmul.f32 %v1485, %v1748
        %v1830 = vmul.f32 %v1490, %v1748
        %v1831 = vmul.f32 %v1495, %v1748
        %v1832 = vmul.f32 %v1500, %v1748
        %v1833 = vmul.f32 %v1505, %v1748
        %v1834 = vmul.f32 %v1510, %v1748
        %v1835 = vmul.f32 %v1515, %v1748
        %v1836 = vmul.f32 %v1520, %v1748
        %v1837 = vmul.f32 %v1525, %v1748
        %v1838 = vmul.f32 %v1530, %v1748
        %v1839 = vmul.f32 %v1535, %v1748
        %v1840 = vmul.f32 %v1540, %v1748
        %v1841 = vmul.f32 %v1545, %v1748
        %v1842 = vmul.f32 %v1550, %v1748
        %v1843 = vmul.f32 %v1555, %v1748
        %v1844 = vmul.f32 %v1560, %v1748
        %v1845 = vmul.f32 %v1565, %v1748
        %v1846 = vmul.f32 %v1570, %v1748
        %v1847 = vmul.f32 %v1575, %v1748
        %v1848 = vmul.f32 %v1580, %v1748
        %v1849 = vmul.f32 %v1585, %v1748
        %v1850 = vmul.f32 %v1590, %v1748
        %v1851 = vmul.f32 %v1595, %v1748
        %v1852 = vmul.f32 %v1600, %v1748
        %v1853 = vmul.f32 %v1605, %v1748
        %v1854 = vmul.f32 %v1610, %v1748
        %v1855 = vmul.f32 %v1615, %v1748
        %v1856 = vmul.f32 %v1620, %v1748
        %v1857 = vmul.f32 %v1625, %v1748
        %v1858 = vmul.f32 %v1630, %v1748
        %v1859 = vmul.f32 %v1635, %v1748
        %v1860 = vmul.f32 %v1640, %v1748
        %v1861 = vmul.f32 %v1645, %v1748
        %v1862 = vmul.f32 %v1650, %v1748
        %v1863 = vmul.f32 %v1655, %v1748
        %v1864 = vmul.f32 %v1660, %v1748
        %v1865 = vmul.f32 %v1665, %v1748
        %v1866 = vmul.f32 %v1670, %v1748
        %v1867 = vmul.f32 %v1675, %v1748
        %v1868 = vmul.f32 %v1680, %v1748
        %v1869 = vmul.f32 %v1685, %v1748
        %v1870 = vmul.f32 %v1690, %v1748
        %v1871 = vmul.f32 %v1695, %v1748
        %v1872 = vmul.f32 %v1700, %v1748
        %v1873 = vmul.f32 %v1705, %v1748
        %v1874 = vmul.f32 %v1710, %v1748
        %v1875 = vmul.f32 %v1715, %v1748
        %v1876 = vmul.f32 %v1720, %v1748
        %v1877 = vmul.f32 %v1725, %v1748
        %v1878 = vmul.f32 %v1730, %v1748
        %v1879 = vmul.f32 %v1735, %v1748
        %v1880 = vmul.f32 %v1740, %v1748
        %v1881 = vld [vmem:[%s3] sm:$0x1]
        %v1883 = vlaneseq
        %v1884 = vshrl.u32 %v1883, 7
        %v1885 = vsub.s32 0, %v1884
        %v1886 = vrot.slane %v1881, %v1885
        %v1888 = vadd.f32 %v1750, %v1886
        %v1889 = vadd.f32 %v1751, %v1886
        %v1890 = vadd.f32 %v1752, %v1886
        %v1891 = vadd.f32 %v1753, %v1886
        %v1892 = vadd.f32 %v1754, %v1886
        %v1893 = vadd.f32 %v1755, %v1886
        %v1894 = vadd.f32 %v1756, %v1886
        %v1895 = vadd.f32 %v1757, %v1886
        %v1896 = vadd.f32 %v1758, %v1886
        %v1897 = vadd.f32 %v1759, %v1886
        %v1898 = vadd.f32 %v1760, %v1886
        %v1899 = vadd.f32 %v1761, %v1886
        %v1900 = vadd.f32 %v1762, %v1886
        %v1901 = vadd.f32 %v1763, %v1886
        %v1902 = vadd.f32 %v1764, %v1886
        %v1903 = vadd.f32 %v1765, %v1886
        %v1904 = vadd.f32 %v1766, %v1886
        %v1905 = vadd.f32 %v1767, %v1886
        %v1906 = vadd.f32 %v1768, %v1886
        %v1907 = vadd.f32 %v1769, %v1886
        %v1908 = vadd.f32 %v1770, %v1886
        %v1909 = vadd.f32 %v1771, %v1886
        %v1910 = vadd.f32 %v1772, %v1886
        %v1911 = vadd.f32 %v1773, %v1886
        %v1912 = vadd.f32 %v1774, %v1886
        %v1913 = vadd.f32 %v1775, %v1886
        %v1914 = vadd.f32 %v1776, %v1886
        %v1915 = vadd.f32 %v1777, %v1886
        %v1916 = vadd.f32 %v1778, %v1886
        %v1917 = vadd.f32 %v1779, %v1886
        %v1918 = vadd.f32 %v1780, %v1886
        %v1919 = vadd.f32 %v1781, %v1886
        %v1920 = vadd.f32 %v1782, %v1886
        %v1921 = vadd.f32 %v1783, %v1886
        %v1922 = vadd.f32 %v1784, %v1886
        %v1923 = vadd.f32 %v1785, %v1886
        %v1924 = vadd.f32 %v1786, %v1886
        %v1925 = vadd.f32 %v1787, %v1886
        %v1926 = vadd.f32 %v1788, %v1886
        %v1927 = vadd.f32 %v1789, %v1886
        %v1928 = vadd.f32 %v1790, %v1886
        %v1929 = vadd.f32 %v1791, %v1886
        %v1930 = vadd.f32 %v1792, %v1886
        %v1931 = vadd.f32 %v1793, %v1886
        %v1932 = vadd.f32 %v1794, %v1886
        %v1933 = vadd.f32 %v1795, %v1886
        %v1934 = vadd.f32 %v1796, %v1886
        %v1935 = vadd.f32 %v1797, %v1886
        %v1936 = vadd.f32 %v1798, %v1886
        %v1937 = vadd.f32 %v1799, %v1886
        %v1938 = vadd.f32 %v1800, %v1886
        %v1939 = vadd.f32 %v1801, %v1886
        %v1940 = vadd.f32 %v1802, %v1886
        %v1941 = vadd.f32 %v1803, %v1886
        %v1942 = vadd.f32 %v1804, %v1886
        %v1943 = vadd.f32 %v1805, %v1886
        %v1944 = vadd.f32 %v1806, %v1886
        %v1945 = vadd.f32 %v1807, %v1886
        %v1946 = vadd.f32 %v1808, %v1886
        %v1947 = vadd.f32 %v1809, %v1886
        %v1948 = vadd.f32 %v1810, %v1886
        %v1949 = vadd.f32 %v1811, %v1886
        %v1950 = vadd.f32 %v1812, %v1886
        %v1951 = vadd.f32 %v1813, %v1886
        %v1952 = vadd.f32 %v1814, %v1886
        %v1953 = vadd.f32 %v1815, %v1886
        %v1954 = vadd.f32 %v1816, %v1886
        %v1955 = vadd.f32 %v1817, %v1886
        %v1956 = vadd.f32 %v1818, %v1886
        %v1957 = vadd.f32 %v1819, %v1886
        %v1958 = vadd.f32 %v1820, %v1886
        %v1959 = vadd.f32 %v1821, %v1886
        %v1960 = vadd.f32 %v1822, %v1886
        %v1961 = vadd.f32 %v1823, %v1886
        %v1962 = vadd.f32 %v1824, %v1886
        %v1963 = vadd.f32 %v1825, %v1886
        %v1964 = vadd.f32 %v1826, %v1886
        %v1965 = vadd.f32 %v1827, %v1886
        %v1966 = vadd.f32 %v1828, %v1886
        %v1967 = vadd.f32 %v1829, %v1886
        %v1968 = vadd.f32 %v1830, %v1886
        %v1969 = vadd.f32 %v1831, %v1886
        %v1970 = vadd.f32 %v1832, %v1886
        %v1971 = vadd.f32 %v1833, %v1886
        %v1972 = vadd.f32 %v1834, %v1886
        %v1973 = vadd.f32 %v1835, %v1886
        %v1974 = vadd.f32 %v1836, %v1886
        %v1975 = vadd.f32 %v1837, %v1886
        %v1976 = vadd.f32 %v1838, %v1886
        %v1977 = vadd.f32 %v1839, %v1886
        %v1978 = vadd.f32 %v1840, %v1886
        %v1979 = vadd.f32 %v1841, %v1886
        %v1980 = vadd.f32 %v1842, %v1886
        %v1981 = vadd.f32 %v1843, %v1886
        %v1982 = vadd.f32 %v1844, %v1886
        %v1983 = vadd.f32 %v1845, %v1886
        %v1984 = vadd.f32 %v1846, %v1886
        %v1985 = vadd.f32 %v1847, %v1886
        %v1986 = vadd.f32 %v1848, %v1886
        %v1987 = vadd.f32 %v1849, %v1886
        %v1988 = vadd.f32 %v1850, %v1886
        %v1989 = vadd.f32 %v1851, %v1886
        %v1990 = vadd.f32 %v1852, %v1886
        %v1991 = vadd.f32 %v1853, %v1886
        %v1992 = vadd.f32 %v1854, %v1886
        %v1993 = vadd.f32 %v1855, %v1886
        %v1994 = vadd.f32 %v1856, %v1886
        %v1995 = vadd.f32 %v1857, %v1886
        %v1996 = vadd.f32 %v1858, %v1886
        %v1997 = vadd.f32 %v1859, %v1886
        %v1998 = vadd.f32 %v1860, %v1886
        %v1999 = vadd.f32 %v1861, %v1886
        %v2000 = vadd.f32 %v1862, %v1886
        %v2001 = vadd.f32 %v1863, %v1886
        %v2002 = vadd.f32 %v1864, %v1886
        %v2003 = vadd.f32 %v1865, %v1886
        %v2004 = vadd.f32 %v1866, %v1886
        %v2005 = vadd.f32 %v1867, %v1886
        %v2006 = vadd.f32 %v1868, %v1886
        %v2007 = vadd.f32 %v1869, %v1886
        %v2008 = vadd.f32 %v1870, %v1886
        %v2009 = vadd.f32 %v1871, %v1886
        %v2010 = vadd.f32 %v1872, %v1886
        %v2011 = vadd.f32 %v1873, %v1886
        %v2012 = vadd.f32 %v1874, %v1886
        %v2013 = vadd.f32 %v1875, %v1886
        %v2014 = vadd.f32 %v1876, %v1886
        %v2015 = vadd.f32 %v1877, %v1886
        %v2016 = vadd.f32 %v1878, %v1886
        %v2017 = vadd.f32 %v1879, %v1886
        %v2018 = vadd.f32 %v1880, %v1886
        %v2019 = vmax.f32 %v1888, 0.0
        %v2020 = vmax.f32 %v1889, 0.0
        %v2021 = vmax.f32 %v1890, 0.0
        %v2022 = vmax.f32 %v1891, 0.0
        %v2023 = vmax.f32 %v1892, 0.0
        %v2024 = vmax.f32 %v1893, 0.0
        %v2025 = vmax.f32 %v1894, 0.0
        %v2026 = vmax.f32 %v1895, 0.0
        %v2027 = vmax.f32 %v1896, 0.0
        %v2028 = vmax.f32 %v1897, 0.0
        %v2029 = vmax.f32 %v1898, 0.0
        %v2030 = vmax.f32 %v1899, 0.0
        %v2031 = vmax.f32 %v1900, 0.0
        %v2032 = vmax.f32 %v1901, 0.0
        %v2033 = vmax.f32 %v1902, 0.0
        %v2034 = vmax.f32 %v1903, 0.0
        %v2035 = vmax.f32 %v1904, 0.0
        %v2036 = vmax.f32 %v1905, 0.0
        %v2037 = vmax.f32 %v1906, 0.0
        %v2038 = vmax.f32 %v1907, 0.0
        %v2039 = vmax.f32 %v1908, 0.0
        %v2040 = vmax.f32 %v1909, 0.0
        %v2041 = vmax.f32 %v1910, 0.0
        %v2042 = vmax.f32 %v1911, 0.0
        %v2043 = vmax.f32 %v1912, 0.0
        %v2044 = vmax.f32 %v1913, 0.0
        %v2045 = vmax.f32 %v1914, 0.0
        %v2046 = vmax.f32 %v1915, 0.0
        %v2047 = vmax.f32 %v1916, 0.0
        %v2048 = vmax.f32 %v1917, 0.0
        %v2049 = vmax.f32 %v1918, 0.0
        %v2050 = vmax.f32 %v1919, 0.0
        %v2051 = vmax.f32 %v1920, 0.0
        %v2052 = vmax.f32 %v1921, 0.0
        %v2053 = vmax.f32 %v1922, 0.0
        %v2054 = vmax.f32 %v1923, 0.0
        %v2055 = vmax.f32 %v1924, 0.0
        %v2056 = vmax.f32 %v1925, 0.0
        %v2057 = vmax.f32 %v1926, 0.0
        %v2058 = vmax.f32 %v1927, 0.0
        %v2059 = vmax.f32 %v1928, 0.0
        %v2060 = vmax.f32 %v1929, 0.0
        %v2061 = vmax.f32 %v1930, 0.0
        %v2062 = vmax.f32 %v1931, 0.0
        %v2063 = vmax.f32 %v1932, 0.0
        %v2064 = vmax.f32 %v1933, 0.0
        %v2065 = vmax.f32 %v1934, 0.0
        %v2066 = vmax.f32 %v1935, 0.0
        %v2067 = vmax.f32 %v1936, 0.0
        %v2068 = vmax.f32 %v1937, 0.0
        %v2069 = vmax.f32 %v1938, 0.0
        %v2070 = vmax.f32 %v1939, 0.0
        %v2071 = vmax.f32 %v1940, 0.0
        %v2072 = vmax.f32 %v1941, 0.0
        %v2073 = vmax.f32 %v1942, 0.0
        %v2074 = vmax.f32 %v1943, 0.0
        %v2075 = vmax.f32 %v1944, 0.0
        %v2076 = vmax.f32 %v1945, 0.0
        %v2077 = vmax.f32 %v1946, 0.0
        %v2078 = vmax.f32 %v1947, 0.0
        %v2079 = vmax.f32 %v1948, 0.0
        %v2080 = vmax.f32 %v1949, 0.0
        %v2081 = vmax.f32 %v1950, 0.0
        %v2082 = vmax.f32 %v1951, 0.0
        %v2083 = vmax.f32 %v1952, 0.0
        %v2084 = vmax.f32 %v1953, 0.0
        %v2085 = vmax.f32 %v1954, 0.0
        %v2086 = vmax.f32 %v1955, 0.0
        %v2087 = vmax.f32 %v1956, 0.0
        %v2088 = vmax.f32 %v1957, 0.0
        %v2089 = vmax.f32 %v1958, 0.0
        %v2090 = vmax.f32 %v1959, 0.0
        %v2091 = vmax.f32 %v1960, 0.0
        %v2092 = vmax.f32 %v1961, 0.0
        %v2093 = vmax.f32 %v1962, 0.0
        %v2094 = vmax.f32 %v1963, 0.0
        %v2095 = vmax.f32 %v1964, 0.0
        %v2096 = vmax.f32 %v1965, 0.0
        %v2097 = vmax.f32 %v1966, 0.0
        %v2098 = vmax.f32 %v1967, 0.0
        %v2099 = vmax.f32 %v1968, 0.0
        %v2100 = vmax.f32 %v1969, 0.0
        %v2101 = vmax.f32 %v1970, 0.0
        %v2102 = vmax.f32 %v1971, 0.0
        %v2103 = vmax.f32 %v1972, 0.0
        %v2104 = vmax.f32 %v1973, 0.0
        %v2105 = vmax.f32 %v1974, 0.0
        %v2106 = vmax.f32 %v1975, 0.0
        %v2107 = vmax.f32 %v1976, 0.0
        %v2108 = vmax.f32 %v1977, 0.0
        %v2109 = vmax.f32 %v1978, 0.0
        %v2110 = vmax.f32 %v1979, 0.0
        %v2111 = vmax.f32 %v1980, 0.0
        %v2112 = vmax.f32 %v1981, 0.0
        %v2113 = vmax.f32 %v1982, 0.0
        %v2114 = vmax.f32 %v1983, 0.0
        %v2115 = vmax.f32 %v1984, 0.0
        %v2116 = vmax.f32 %v1985, 0.0
        %v2117 = vmax.f32 %v1986, 0.0
        %v2118 = vmax.f32 %v1987, 0.0
        %v2119 = vmax.f32 %v1988, 0.0
        %v2120 = vmax.f32 %v1989, 0.0
        %v2121 = vmax.f32 %v1990, 0.0
        %v2122 = vmax.f32 %v1991, 0.0
        %v2123 = vmax.f32 %v1992, 0.0
        %v2124 = vmax.f32 %v1993, 0.0
        %v2125 = vmax.f32 %v1994, 0.0
        %v2126 = vmax.f32 %v1995, 0.0
        %v2127 = vmax.f32 %v1996, 0.0
        %v2128 = vmax.f32 %v1997, 0.0
        %v2129 = vmax.f32 %v1998, 0.0
        %v2130 = vmax.f32 %v1999, 0.0
        %v2131 = vmax.f32 %v2000, 0.0
        %v2132 = vmax.f32 %v2001, 0.0
        %v2133 = vmax.f32 %v2002, 0.0
        %v2134 = vmax.f32 %v2003, 0.0
        %v2135 = vmax.f32 %v2004, 0.0
        %v2136 = vmax.f32 %v2005, 0.0
        %v2137 = vmax.f32 %v2006, 0.0
        %v2138 = vmax.f32 %v2007, 0.0
        %v2139 = vmax.f32 %v2008, 0.0
        %v2140 = vmax.f32 %v2009, 0.0
        %v2141 = vmax.f32 %v2010, 0.0
        %v2142 = vmax.f32 %v2011, 0.0
        %v2143 = vmax.f32 %v2012, 0.0
        %v2144 = vmax.f32 %v2013, 0.0
        %v2145 = vmax.f32 %v2014, 0.0
        %v2146 = vmax.f32 %v2015, 0.0
        %v2147 = vmax.f32 %v2016, 0.0
        %v2148 = vmax.f32 %v2017, 0.0
        %v2149 = vmax.f32 %v2018, 0.0
        %2150 = vst.msk [vmem:[#allocation2] sm:$0xff] %vm625, %v2019
        %2151 = vst.msk [vmem:[#allocation2 + $0x8] sm:$0xff] %vm625, %v2020
        %2152 = vst.msk [vmem:[#allocation2 + $0x10] sm:$0xff] %vm625, %v2021
        %2153 = vst.msk [vmem:[#allocation2 + $0x18] sm:$0xff] %vm625, %v2022
        %2154 = vst.msk [vmem:[#allocation2 + $0x20] sm:$0xff] %vm625, %v2023
        %2155 = vst.msk [vmem:[#allocation2 + $0x28] sm:$0xff] %vm625, %v2024
        %2156 = vst.msk [vmem:[#allocation2 + $0x30] sm:$0xff] %vm625, %v2025
        %2157 = vst.msk [vmem:[#allocation2 + $0x38] sm:$0xff] %vm625, %v2026
        %2158 = vst.msk [vmem:[#allocation2 + $0x40] sm:$0xff] %vm625, %v2027
        %2159 = vst.msk [vmem:[#allocation2 + $0x48] sm:$0xff] %vm625, %v2028
        %2160 = vst.msk [vmem:[#allocation2 + $0x50] sm:$0xff] %vm625, %v2029
        %2161 = vst.msk [vmem:[#allocation2 + $0x58] sm:$0xff] %vm625, %v2030
        %2162 = vst.msk [vmem:[#allocation2 + $0x60] sm:$0xff] %vm625, %v2031
        %2163 = vst.msk [vmem:[#allocation2 + $0x68] sm:$0xff] %vm625, %v2032
        %2164 = vst.msk [vmem:[#allocation2 + $0x70] sm:$0xff] %vm625, %v2033
        %2165 = vst.msk [vmem:[#allocation2 + $0x78] sm:$0xff] %vm625, %v2034
        %2166 = vst.msk [vmem:[#allocation2 + $0x80] sm:$0xff] %vm625, %v2035
        %2167 = vst.msk [vmem:[#allocation2 + $0x88] sm:$0xff] %vm625, %v2036
        %2168 = vst.msk [vmem:[#allocation2 + $0x90] sm:$0xff] %vm625, %v2037
        %2169 = vst.msk [vmem:[#allocation2 + $0x98] sm:$0xff] %vm625, %v2038
        %2170 = vst.msk [vmem:[#allocation2 + $0xa0] sm:$0xff] %vm625, %v2039
        %2171 = vst.msk [vmem:[#allocation2 + $0xa8] sm:$0xff] %vm625, %v2040
        %2172 = vst.msk [vmem:[#allocation2 + $0xb0] sm:$0xff] %vm625, %v2041
        %2173 = vst.msk [vmem:[#allocation2 + $0xb8] sm:$0xff] %vm625, %v2042
        %2174 = vst.msk [vmem:[#allocation2 + $0xc0] sm:$0xff] %vm625, %v2043
        %2175 = vst.msk [vmem:[#allocation2 + $0xc8] sm:$0xff] %vm625, %v2044
        %2176 = vst.msk [vmem:[#allocation2 + $0xd0] sm:$0xff] %vm625, %v2045
        %2177 = vst.msk [vmem:[#allocation2 + $0xd8] sm:$0xff] %vm625, %v2046
        %2178 = vst.msk [vmem:[#allocation2 + $0xe0] sm:$0xff] %vm625, %v2047
        %2179 = vst.msk [vmem:[#allocation2 + $0xe8] sm:$0xff] %vm625, %v2048
        %2180 = vst.msk [vmem:[#allocation2 + $0xf0] sm:$0xff] %vm625, %v2049
        %2181 = vst.msk [vmem:[#allocation2 + $0xf8] sm:$0xff] %vm625, %v2050
        %2182 = vst.msk [vmem:[#allocation2 + $0x100] sm:$0xff] %vm625, %v2051
        %2183 = vst.msk [vmem:[#allocation2 + $0x108] sm:$0xff] %vm625, %v2052
        %2184 = vst.msk [vmem:[#allocation2 + $0x110] sm:$0xff] %vm625, %v2053
        %2185 = vst.msk [vmem:[#allocation2 + $0x118] sm:$0xff] %vm625, %v2054
        %2186 = vst.msk [vmem:[#allocation2 + $0x120] sm:$0xff] %vm625, %v2055
        %2187 = vst.msk [vmem:[#allocation2 + $0x128] sm:$0xff] %vm625, %v2056
        %2188 = vst.msk [vmem:[#allocation2 + $0x130] sm:$0xff] %vm625, %v2057
        %2189 = vst.msk [vmem:[#allocation2 + $0x138] sm:$0xff] %vm625, %v2058
        %2190 = vst.msk [vmem:[#allocation2 + $0x140] sm:$0xff] %vm625, %v2059
        %2191 = vst.msk [vmem:[#allocation2 + $0x148] sm:$0xff] %vm625, %v2060
        %2192 = vst.msk [vmem:[#allocation2 + $0x150] sm:$0xff] %vm625, %v2061
        %2193 = vst.msk [vmem:[#allocation2 + $0x158] sm:$0xff] %vm625, %v2062
        %2194 = vst.msk [vmem:[#allocation2 + $0x160] sm:$0xff] %vm625, %v2063
        %2195 = vst.msk [vmem:[#allocation2 + $0x168] sm:$0xff] %vm625, %v2064
        %2196 = vst.msk [vmem:[#allocation2 + $0x170] sm:$0xff] %vm625, %v2065
        %2197 = vst.msk [vmem:[#allocation2 + $0x178] sm:$0xff] %vm625, %v2066
        %2198 = vst.msk [vmem:[#allocation2 + $0x180] sm:$0xff] %vm625, %v2067
        %2199 = vst.msk [vmem:[#allocation2 + $0x188] sm:$0xff] %vm625, %v2068
        %2200 = vst.msk [vmem:[#allocation2 + $0x190] sm:$0xff] %vm625, %v2069
        %2201 = vst.msk [vmem:[#allocation2 + $0x198] sm:$0xff] %vm625, %v2070
        %2202 = vst.msk [vmem:[#allocation2 + $0x1a0] sm:$0xff] %vm625, %v2071
        %2203 = vst.msk [vmem:[#allocation2 + $0x1a8] sm:$0xff] %vm625, %v2072
        %2204 = vst.msk [vmem:[#allocation2 + $0x1b0] sm:$0xff] %vm625, %v2073
        %2205 = vst.msk [vmem:[#allocation2 + $0x1b8] sm:$0xff] %vm625, %v2074
        %2206 = vst.msk [vmem:[#allocation2 + $0x1c0] sm:$0xff] %vm625, %v2075
        %2207 = vst.msk [vmem:[#allocation2 + $0x1c8] sm:$0xff] %vm625, %v2076
        %2208 = vst.msk [vmem:[#allocation2 + $0x1d0] sm:$0xff] %vm625, %v2077
        %2209 = vst.msk [vmem:[#allocation2 + $0x1d8] sm:$0xff] %vm625, %v2078
        %2210 = vst.msk [vmem:[#allocation2 + $0x1e0] sm:$0xff] %vm625, %v2079
        %2211 = vst.msk [vmem:[#allocation2 + $0x1e8] sm:$0xff] %vm625, %v2080
        %2212 = vst.msk [vmem:[#allocation2 + $0x1f0] sm:$0xff] %vm625, %v2081
        %2213 = vst.msk [vmem:[#allocation2 + $0x1f8] sm:$0xff] %vm625, %v2082
        %2214 = vst.msk [vmem:[#allocation2 + $0x200] sm:$0xff] %vm625, %v2083
        %2215 = vst.msk [vmem:[#allocation2 + $0x208] sm:$0xff] %vm625, %v2084
        %2216 = vst.msk [vmem:[#allocation2 + $0x210] sm:$0xff] %vm625, %v2085
        %2217 = vst.msk [vmem:[#allocation2 + $0x218] sm:$0xff] %vm625, %v2086
        %2218 = vst.msk [vmem:[#allocation2 + $0x220] sm:$0xff] %vm625, %v2087
        %2219 = vst.msk [vmem:[#allocation2 + $0x228] sm:$0xff] %vm625, %v2088
        %2220 = vst.msk [vmem:[#allocation2 + $0x230] sm:$0xff] %vm625, %v2089
        %2221 = vst.msk [vmem:[#allocation2 + $0x238] sm:$0xff] %vm625, %v2090
        %2222 = vst.msk [vmem:[#allocation2 + $0x240] sm:$0xff] %vm625, %v2091
        %2223 = vst.msk [vmem:[#allocation2 + $0x248] sm:$0xff] %vm625, %v2092
        %2224 = vst.msk [vmem:[#allocation2 + $0x250] sm:$0xff] %vm625, %v2093
        %2225 = vst.msk [vmem:[#allocation2 + $0x258] sm:$0xff] %vm625, %v2094
        %2226 = vst.msk [vmem:[#allocation2 + $0x260] sm:$0xff] %vm625, %v2095
        %2227 = vst.msk [vmem:[#allocation2 + $0x268] sm:$0xff] %vm625, %v2096
        %2228 = vst.msk [vmem:[#allocation2 + $0x270] sm:$0xff] %vm625, %v2097
        %2229 = vst.msk [vmem:[#allocation2 + $0x278] sm:$0xff] %vm625, %v2098
        %2230 = vst.msk [vmem:[#allocation2 + $0x280] sm:$0xff] %vm625, %v2099
        %2231 = vst.msk [vmem:[#allocation2 + $0x288] sm:$0xff] %vm625, %v2100
        %2232 = vst.msk [vmem:[#allocation2 + $0x290] sm:$0xff] %vm625, %v2101
        %2233 = vst.msk [vmem:[#allocation2 + $0x298] sm:$0xff] %vm625, %v2102
        %2234 = vst.msk [vmem:[#allocation2 + $0x2a0] sm:$0xff] %vm625, %v2103
        %2235 = vst.msk [vmem:[#allocation2 + $0x2a8] sm:$0xff] %vm625, %v2104
        %2236 = vst.msk [vmem:[#allocation2 + $0x2b0] sm:$0xff] %vm625, %v2105
        %2237 = vst.msk [vmem:[#allocation2 + $0x2b8] sm:$0xff] %vm625, %v2106
        %2238 = vst.msk [vmem:[#allocation2 + $0x2c0] sm:$0xff] %vm625, %v2107
        %2239 = vst.msk [vmem:[#allocation2 + $0x2c8] sm:$0xff] %vm625, %v2108
        %2240 = vst.msk [vmem:[#allocation2 + $0x2d0] sm:$0xff] %vm625, %v2109
        %2241 = vst.msk [vmem:[#allocation2 + $0x2d8] sm:$0xff] %vm625, %v2110
        %2242 = vst.msk [vmem:[#allocation2 + $0x2e0] sm:$0xff] %vm625, %v2111
        %2243 = vst.msk [vmem:[#allocation2 + $0x2e8] sm:$0xff] %vm625, %v2112
        %2244 = vst.msk [vmem:[#allocation2 + $0x2f0] sm:$0xff] %vm625, %v2113
        %2245 = vst.msk [vmem:[#allocation2 + $0x2f8] sm:$0xff] %vm625, %v2114
        %2246 = vst.msk [vmem:[#allocation2 + $0x300] sm:$0xff] %vm625, %v2115
        %2247 = vst.msk [vmem:[#allocation2 + $0x308] sm:$0xff] %vm625, %v2116
        %2248 = vst.msk [vmem:[#allocation2 + $0x310] sm:$0xff] %vm625, %v2117
        %2249 = vst.msk [vmem:[#allocation2 + $0x318] sm:$0xff] %vm625, %v2118
        %2250 = vst.msk [vmem:[#allocation2 + $0x320] sm:$0xff] %vm625, %v2119
        %2251 = vst.msk [vmem:[#allocation2 + $0x328] sm:$0xff] %vm625, %v2120
        %2252 = vst.msk [vmem:[#allocation2 + $0x330] sm:$0xff] %vm625, %v2121
        %2253 = vst.msk [vmem:[#allocation2 + $0x338] sm:$0xff] %vm625, %v2122
        %2254 = vst.msk [vmem:[#allocation2 + $0x340] sm:$0xff] %vm625, %v2123
        %2255 = vst.msk [vmem:[#allocation2 + $0x348] sm:$0xff] %vm625, %v2124
        %2256 = vst.msk [vmem:[#allocation2 + $0x350] sm:$0xff] %vm625, %v2125
        %2257 = vst.msk [vmem:[#allocation2 + $0x358] sm:$0xff] %vm625, %v2126
        %2258 = vst.msk [vmem:[#allocation2 + $0x360] sm:$0xff] %vm625, %v2127
        %2259 = vst.msk [vmem:[#allocation2 + $0x368] sm:$0xff] %vm625, %v2128
        %2260 = vst.msk [vmem:[#allocation2 + $0x370] sm:$0xff] %vm625, %v2129
        %2261 = vst.msk [vmem:[#allocation2 + $0x378] sm:$0xff] %vm625, %v2130
        %2262 = vst.msk [vmem:[#allocation2 + $0x380] sm:$0xff] %vm625, %v2131
        %2263 = vst.msk [vmem:[#allocation2 + $0x388] sm:$0xff] %vm625, %v2132
        %2264 = vst.msk [vmem:[#allocation2 + $0x390] sm:$0xff] %vm625, %v2133
        %2265 = vst.msk [vmem:[#allocation2 + $0x398] sm:$0xff] %vm625, %v2134
        %2266 = vst.msk [vmem:[#allocation2 + $0x3a0] sm:$0xff] %vm625, %v2135
        %2267 = vst.msk [vmem:[#allocation2 + $0x3a8] sm:$0xff] %vm625, %v2136
        %2268 = vst.msk [vmem:[#allocation2 + $0x3b0] sm:$0xff] %vm625, %v2137
        %2269 = vst.msk [vmem:[#allocation2 + $0x3b8] sm:$0xff] %vm625, %v2138
        %2270 = vst.msk [vmem:[#allocation2 + $0x3c0] sm:$0xff] %vm625, %v2139
        %2271 = vst.msk [vmem:[#allocation2 + $0x3c8] sm:$0xff] %vm625, %v2140
        %2272 = vst.msk [vmem:[#allocation2 + $0x3d0] sm:$0xff] %vm625, %v2141
        %2273 = vst.msk [vmem:[#allocation2 + $0x3d8] sm:$0xff] %vm625, %v2142
        %2274 = vst.msk [vmem:[#allocation2 + $0x3e0] sm:$0xff] %vm625, %v2143
        %2275 = vst.msk [vmem:[#allocation2 + $0x3e8] sm:$0xff] %vm625, %v2144
        %2276 = vst.msk [vmem:[#allocation2 + $0x3f0] sm:$0xff] %vm625, %v2145
        %2277 = vst.msk [vmem:[#allocation2 + $0x3f8] sm:$0xff] %vm625, %v2146
        %2278 = vst.msk [vmem:[#allocation2 + $0x400] sm:$0xff] %vm625, %v2147
        %2279 = vst.msk [vmem:[#allocation2 + $0x408] sm:$0xff] %vm625, %v2148
        %vm2280 = vcmask 79872
        %2281 = vst.msk [vmem:[#allocation2 + $0x410] sm:$0x7f] %vm2280, %v2149
        %v2282 = vld [vmem:[#allocation2] ss:$3 sm:$0xff]
        %s2283 = scalar_lea.vmem [#allocation2], 24
        %v2284 = vld [vmem:[%s2283] ss:$3 sm:$0xff]
        %s2285 = scalar_lea.vmem [#allocation2], 48
        %v2286 = vld [vmem:[%s2285] ss:$3 sm:$0xff]
        %s2287 = scalar_lea.vmem [#allocation2], 72
        %v2288 = vld [vmem:[%s2287] ss:$3 sm:$0xff]
        %s2289 = scalar_lea.vmem [#allocation2], 96
        %v2290 = vld [vmem:[%s2289] ss:$3 sm:$0xff]
        %s2291 = scalar_lea.vmem [#allocation2], 120
        %v2292 = vld [vmem:[%s2291] ss:$3 sm:$0xff]
        %s2293 = scalar_lea.vmem [#allocation2], 144
        %v2294 = vld [vmem:[%s2293] ss:$3 sm:$0xff]
        %s2295 = scalar_lea.vmem [#allocation2], 168
        %v2296 = vld [vmem:[%s2295] ss:$3 sm:$0xff]
        %s2297 = scalar_lea.vmem [#allocation2], 192
        %v2298 = vld [vmem:[%s2297] ss:$3 sm:$0xff]
        %s2299 = scalar_lea.vmem [#allocation2], 216
        %v2300 = vld [vmem:[%s2299] ss:$3 sm:$0xff]
        %s2301 = scalar_lea.vmem [#allocation2], 240
        %v2302 = vld [vmem:[%s2301] ss:$3 sm:$0xff]
        %s2303 = scalar_lea.vmem [#allocation2], 264
        %v2304 = vld [vmem:[%s2303] ss:$3 sm:$0xff]
        %s2305 = scalar_lea.vmem [#allocation2], 288
        %v2306 = vld [vmem:[%s2305] ss:$3 sm:$0xff]
        %s2307 = scalar_lea.vmem [#allocation2], 312
        %v2308 = vld [vmem:[%s2307] ss:$3 sm:$0xff]
        %s2309 = scalar_lea.vmem [#allocation2], 336
        %v2310 = vld [vmem:[%s2309] ss:$3 sm:$0xff]
        %s2311 = scalar_lea.vmem [#allocation2], 360
        %v2312 = vld [vmem:[%s2311] ss:$3 sm:$0xff]
        %s2313 = scalar_lea.vmem [#allocation2], 384
        %v2314 = vld [vmem:[%s2313] ss:$3 sm:$0xff]
        %s2315 = scalar_lea.vmem [#allocation2], 408
        %v2316 = vld [vmem:[%s2315] ss:$3 sm:$0xff]
        %s2317 = scalar_lea.vmem [#allocation2], 432
        %v2318 = vld [vmem:[%s2317] ss:$3 sm:$0xff]
        %s2319 = scalar_lea.vmem [#allocation2], 456
        %v2320 = vld [vmem:[%s2319] ss:$3 sm:$0xff]
        %s2321 = scalar_lea.vmem [#allocation2], 480
        %v2322 = vld [vmem:[%s2321] ss:$3 sm:$0xff]
        %s2323 = scalar_lea.vmem [#allocation2], 504
        %v2324 = vld [vmem:[%s2323] ss:$3 sm:$0xff]
        %s2325 = scalar_lea.vmem [#allocation2], 528
        %v2326 = vld [vmem:[%s2325] ss:$3 sm:$0xff]
        %s2327 = scalar_lea.vmem [#allocation2], 552
        %v2328 = vld [vmem:[%s2327] ss:$3 sm:$0xff]
        %s2329 = scalar_lea.vmem [#allocation2], 576
        %v2330 = vld [vmem:[%s2329] ss:$3 sm:$0xff]
        %s2331 = scalar_lea.vmem [#allocation2], 600
        %v2332 = vld [vmem:[%s2331] ss:$3 sm:$0xff]
        %s2333 = scalar_lea.vmem [#allocation2], 624
        %v2334 = vld [vmem:[%s2333] ss:$3 sm:$0xff]
        %s2335 = scalar_lea.vmem [#allocation2], 648
        %v2336 = vld [vmem:[%s2335] ss:$3 sm:$0xff]
        %s2337 = scalar_lea.vmem [#allocation2], 672
        %v2338 = vld [vmem:[%s2337] ss:$3 sm:$0xff]
        %s2339 = scalar_lea.vmem [#allocation2], 696
        %v2340 = vld [vmem:[%s2339] ss:$3 sm:$0xff]
        %s2341 = scalar_lea.vmem [#allocation2], 720
        %v2342 = vld [vmem:[%s2341] ss:$3 sm:$0xff]
        %s2343 = scalar_lea.vmem [#allocation2], 744
        %v2344 = vld [vmem:[%s2343] ss:$3 sm:$0xff]
        %s2345 = scalar_lea.vmem [#allocation2], 768
        %v2346 = vld [vmem:[%s2345] ss:$3 sm:$0xff]
        %s2347 = scalar_lea.vmem [#allocation2], 792
        %v2348 = vld [vmem:[%s2347] ss:$3 sm:$0xff]
        %s2349 = scalar_lea.vmem [#allocation2], 816
        %v2350 = vld [vmem:[%s2349] ss:$3 sm:$0xff]
        %s2351 = scalar_lea.vmem [#allocation2], 840
        %v2352 = vld [vmem:[%s2351] ss:$3 sm:$0xff]
        %s2353 = scalar_lea.vmem [#allocation2], 864
        %v2354 = vld [vmem:[%s2353] ss:$3 sm:$0xff]
        %s2355 = scalar_lea.vmem [#allocation2], 888
        %v2356 = vld [vmem:[%s2355] ss:$3 sm:$0xff]
        %s2357 = scalar_lea.vmem [#allocation2], 912
        %v2358 = vld [vmem:[%s2357] ss:$3 sm:$0xff]
        %s2359 = scalar_lea.vmem [#allocation2], 936
        %v2360 = vld [vmem:[%s2359] ss:$3 sm:$0xff]
        %s2361 = scalar_lea.vmem [#allocation2], 960
        %v2362 = vld [vmem:[%s2361] ss:$3 sm:$0xff]
        %s2363 = scalar_lea.vmem [#allocation2], 984
        %v2364 = vld [vmem:[%s2363] ss:$3 sm:$0xff]
        %s2365 = scalar_lea.vmem [#allocation2], 1008
        %v2366 = vld [vmem:[%s2365] ss:$3 sm:$0xff]
        %s2367 = scalar_lea.vmem [#allocation2], 1032
        %v2368 = vld [vmem:[%s2367] ss:$3 sm:$0x1f]
        %s2369 = scalar_lea.vmem [#allocation2], 1
        %v2370 = vld [vmem:[%s2369] ss:$3 sm:$0xff]
        %s2371 = scalar_lea.vmem [#allocation2], 25
        %v2372 = vld [vmem:[%s2371] ss:$3 sm:$0xff]
        %s2373 = scalar_lea.vmem [#allocation2], 49
        %v2374 = vld [vmem:[%s2373] ss:$3 sm:$0xff]
        %s2375 = scalar_lea.vmem [#allocation2], 73
        %v2376 = vld [vmem:[%s2375] ss:$3 sm:$0xff]
        %s2377 = scalar_lea.vmem [#allocation2], 97
        %v2378 = vld [vmem:[%s2377] ss:$3 sm:$0xff]
        %s2379 = scalar_lea.vmem [#allocation2], 121
        %v2380 = vld [vmem:[%s2379] ss:$3 sm:$0xff]
        %s2381 = scalar_lea.vmem [#allocation2], 145
        %v2382 = vld [vmem:[%s2381] ss:$3 sm:$0xff]
        %s2383 = scalar_lea.vmem [#allocation2], 169
        %v2384 = vld [vmem:[%s2383] ss:$3 sm:$0xff]
        %s2385 = scalar_lea.vmem [#allocation2], 193
        %v2386 = vld [vmem:[%s2385] ss:$3 sm:$0xff]
        %s2387 = scalar_lea.vmem [#allocation2], 217
        %v2388 = vld [vmem:[%s2387] ss:$3 sm:$0xff]
        %s2389 = scalar_lea.vmem [#allocation2], 241
        %v2390 = vld [vmem:[%s2389] ss:$3 sm:$0xff]
        %s2391 = scalar_lea.vmem [#allocation2], 265
        %v2392 = vld [vmem:[%s2391] ss:$3 sm:$0xff]
        %s2393 = scalar_lea.vmem [#allocation2], 289
        %v2394 = vld [vmem:[%s2393] ss:$3 sm:$0xff]
        %s2395 = scalar_lea.vmem [#allocation2], 313
        %v2396 = vld [vmem:[%s2395] ss:$3 sm:$0xff]
        %s2397 = scalar_lea.vmem [#allocation2], 337
        %v2398 = vld [vmem:[%s2397] ss:$3 sm:$0xff]
        %s2399 = scalar_lea.vmem [#allocation2], 361
        %v2400 = vld [vmem:[%s2399] ss:$3 sm:$0xff]
        %s2401 = scalar_lea.vmem [#allocation2], 385
        %v2402 = vld [vmem:[%s2401] ss:$3 sm:$0xff]
        %s2403 = scalar_lea.vmem [#allocation2], 409
        %v2404 = vld [vmem:[%s2403] ss:$3 sm:$0xff]
        %s2405 = scalar_lea.vmem [#allocation2], 433
        %v2406 = vld [vmem:[%s2405] ss:$3 sm:$0xff]
        %s2407 = scalar_lea.vmem [#allocation2], 457
        %v2408 = vld [vmem:[%s2407] ss:$3 sm:$0xff]
        %s2409 = scalar_lea.vmem [#allocation2], 481
        %v2410 = vld [vmem:[%s2409] ss:$3 sm:$0xff]
        %s2411 = scalar_lea.vmem [#allocation2], 505
        %v2412 = vld [vmem:[%s2411] ss:$3 sm:$0xff]
        %s2413 = scalar_lea.vmem [#allocation2], 529
        %v2414 = vld [vmem:[%s2413] ss:$3 sm:$0xff]
        %s2415 = scalar_lea.vmem [#allocation2], 553
        %v2416 = vld [vmem:[%s2415] ss:$3 sm:$0xff]
        %s2417 = scalar_lea.vmem [#allocation2], 577
        %v2418 = vld [vmem:[%s2417] ss:$3 sm:$0xff]
        %s2419 = scalar_lea.vmem [#allocation2], 601
        %v2420 = vld [vmem:[%s2419] ss:$3 sm:$0xff]
        %s2421 = scalar_lea.vmem [#allocation2], 625
        %v2422 = vld [vmem:[%s2421] ss:$3 sm:$0xff]
        %s2423 = scalar_lea.vmem [#allocation2], 649
        %v2424 = vld [vmem:[%s2423] ss:$3 sm:$0xff]
        %s2425 = scalar_lea.vmem [#allocation2], 673
        %v2426 = vld [vmem:[%s2425] ss:$3 sm:$0xff]
        %s2427 = scalar_lea.vmem [#allocation2], 697
        %v2428 = vld [vmem:[%s2427] ss:$3 sm:$0xff]
        %s2429 = scalar_lea.vmem [#allocation2], 721
        %v2430 = vld [vmem:[%s2429] ss:$3 sm:$0xff]
        %s2431 = scalar_lea.vmem [#allocation2], 745
        %v2432 = vld [vmem:[%s2431] ss:$3 sm:$0xff]
        %s2433 = scalar_lea.vmem [#allocation2], 769
        %v2434 = vld [vmem:[%s2433] ss:$3 sm:$0xff]
        %s2435 = scalar_lea.vmem [#allocation2], 793
        %v2436 = vld [vmem:[%s2435] ss:$3 sm:$0xff]
        %s2437 = scalar_lea.vmem [#allocation2], 817
        %v2438 = vld [vmem:[%s2437] ss:$3 sm:$0xff]
        %s2439 = scalar_lea.vmem [#allocation2], 841
        %v2440 = vld [vmem:[%s2439] ss:$3 sm:$0xff]
        %s2441 = scalar_lea.vmem [#allocation2], 865
        %v2442 = vld [vmem:[%s2441] ss:$3 sm:$0xff]
        %s2443 = scalar_lea.vmem [#allocation2], 889
        %v2444 = vld [vmem:[%s2443] ss:$3 sm:$0xff]
        %s2445 = scalar_lea.vmem [#allocation2], 913
        %v2446 = vld [vmem:[%s2445] ss:$3 sm:$0xff]
        %s2447 = scalar_lea.vmem [#allocation2], 937
        %v2448 = vld [vmem:[%s2447] ss:$3 sm:$0xff]
        %s2449 = scalar_lea.vmem [#allocation2], 961
        %v2450 = vld [vmem:[%s2449] ss:$3 sm:$0xff]
        %s2451 = scalar_lea.vmem [#allocation2], 985
        %v2452 = vld [vmem:[%s2451] ss:$3 sm:$0xff]
        %s2453 = scalar_lea.vmem [#allocation2], 1009
        %v2454 = vld [vmem:[%s2453] ss:$3 sm:$0xff]
        %s2455 = scalar_lea.vmem [#allocation2], 1033
        %v2456 = vld [vmem:[%s2455] ss:$3 sm:$0x1f]
        %v2457 = vmax.f32 %v2282, %v2370
        %v2458 = vmax.f32 %v2284, %v2372
        %v2459 = vmax.f32 %v2286, %v2374
        %v2460 = vmax.f32 %v2288, %v2376
        %v2461 = vmax.f32 %v2290, %v2378
        %v2462 = vmax.f32 %v2292, %v2380
        %v2463 = vmax.f32 %v2294, %v2382
        %v2464 = vmax.f32 %v2296, %v2384
        %v2465 = vmax.f32 %v2298, %v2386
        %v2466 = vmax.f32 %v2300, %v2388
        %v2467 = vmax.f32 %v2302, %v2390
        %v2468 = vmax.f32 %v2304, %v2392
        %v2469 = vmax.f32 %v2306, %v2394
        %v2470 = vmax.f32 %v2308, %v2396
        %v2471 = vmax.f32 %v2310, %v2398
        %v2472 = vmax.f32 %v2312, %v2400
        %v2473 = vmax.f32 %v2314, %v2402
        %v2474 = vmax.f32 %v2316, %v2404
        %v2475 = vmax.f32 %v2318, %v2406
        %v2476 = vmax.f32 %v2320, %v2408
        %v2477 = vmax.f32 %v2322, %v2410
        %v2478 = vmax.f32 %v2324, %v2412
        %v2479 = vmax.f32 %v2326, %v2414
        %v2480 = vmax.f32 %v2328, %v2416
        %v2481 = vmax.f32 %v2330, %v2418
        %v2482 = vmax.f32 %v2332, %v2420
        %v2483 = vmax.f32 %v2334, %v2422
        %v2484 = vmax.f32 %v2336, %v2424
        %v2485 = vmax.f32 %v2338, %v2426
        %v2486 = vmax.f32 %v2340, %v2428
        %v2487 = vmax.f32 %v2342, %v2430
        %v2488 = vmax.f32 %v2344, %v2432
        %v2489 = vmax.f32 %v2346, %v2434
        %v2490 = vmax.f32 %v2348, %v2436
        %v2491 = vmax.f32 %v2350, %v2438
        %v2492 = vmax.f32 %v2352, %v2440
        %v2493 = vmax.f32 %v2354, %v2442
        %v2494 = vmax.f32 %v2356, %v2444
        %v2495 = vmax.f32 %v2358, %v2446
        %v2496 = vmax.f32 %v2360, %v2448
        %v2497 = vmax.f32 %v2362, %v2450
        %v2498 = vmax.f32 %v2364, %v2452
        %v2499 = vmax.f32 %v2366, %v2454
        %v2500 = vmax.f32 %v2368, %v2456
        %s2501 = scalar_lea.vmem [#allocation2], 2
        %v2502 = vld [vmem:[%s2501] ss:$3 sm:$0xff]
        %s2503 = scalar_lea.vmem [#allocation2], 26
        %v2504 = vld [vmem:[%s2503] ss:$3 sm:$0xff]
        %s2505 = scalar_lea.vmem [#allocation2], 50
        %v2506 = vld [vmem:[%s2505] ss:$3 sm:$0xff]
        %s2507 = scalar_lea.vmem [#allocation2], 74
        %v2508 = vld [vmem:[%s2507] ss:$3 sm:$0xff]
        %s2509 = scalar_lea.vmem [#allocation2], 98
        %v2510 = vld [vmem:[%s2509] ss:$3 sm:$0xff]
        %s2511 = scalar_lea.vmem [#allocation2], 122
        %v2512 = vld [vmem:[%s2511] ss:$3 sm:$0xff]
        %s2513 = scalar_lea.vmem [#allocation2], 146
        %v2514 = vld [vmem:[%s2513] ss:$3 sm:$0xff]
        %s2515 = scalar_lea.vmem [#allocation2], 170
        %v2516 = vld [vmem:[%s2515] ss:$3 sm:$0xff]
        %s2517 = scalar_lea.vmem [#allocation2], 194
        %v2518 = vld [vmem:[%s2517] ss:$3 sm:$0xff]
        %s2519 = scalar_lea.vmem [#allocation2], 218
        %v2520 = vld [vmem:[%s2519] ss:$3 sm:$0xff]
        %s2521 = scalar_lea.vmem [#allocation2], 242
        %v2522 = vld [vmem:[%s2521] ss:$3 sm:$0xff]
        %s2523 = scalar_lea.vmem [#allocation2], 266
        %v2524 = vld [vmem:[%s2523] ss:$3 sm:$0xff]
        %s2525 = scalar_lea.vmem [#allocation2], 290
        %v2526 = vld [vmem:[%s2525] ss:$3 sm:$0xff]
        %s2527 = scalar_lea.vmem [#allocation2], 314
        %v2528 = vld [vmem:[%s2527] ss:$3 sm:$0xff]
        %s2529 = scalar_lea.vmem [#allocation2], 338
        %v2530 = vld [vmem:[%s2529] ss:$3 sm:$0xff]
        %s2531 = scalar_lea.vmem [#allocation2], 362
        %v2532 = vld [vmem:[%s2531] ss:$3 sm:$0xff]
        %s2533 = scalar_lea.vmem [#allocation2], 386
        %v2534 = vld [vmem:[%s2533] ss:$3 sm:$0xff]
        %s2535 = scalar_lea.vmem [#allocation2], 410
        %v2536 = vld [vmem:[%s2535] ss:$3 sm:$0xff]
        %s2537 = scalar_lea.vmem [#allocation2], 434
        %v2538 = vld [vmem:[%s2537] ss:$3 sm:$0xff]
        %s2539 = scalar_lea.vmem [#allocation2], 458
        %v2540 = vld [vmem:[%s2539] ss:$3 sm:$0xff]
        %s2541 = scalar_lea.vmem [#allocation2], 482
        %v2542 = vld [vmem:[%s2541] ss:$3 sm:$0xff]
        %s2543 = scalar_lea.vmem [#allocation2], 506
        %v2544 = vld [vmem:[%s2543] ss:$3 sm:$0xff]
        %s2545 = scalar_lea.vmem [#allocation2], 530
        %v2546 = vld [vmem:[%s2545] ss:$3 sm:$0xff]
        %s2547 = scalar_lea.vmem [#allocation2], 554
        %v2548 = vld [vmem:[%s2547] ss:$3 sm:$0xff]
        %s2549 = scalar_lea.vmem [#allocation2], 578
        %v2550 = vld [vmem:[%s2549] ss:$3 sm:$0xff]
        %s2551 = scalar_lea.vmem [#allocation2], 602
        %v2552 = vld [vmem:[%s2551] ss:$3 sm:$0xff]
        %s2553 = scalar_lea.vmem [#allocation2], 626
        %v2554 = vld [vmem:[%s2553] ss:$3 sm:$0xff]
        %s2555 = scalar_lea.vmem [#allocation2], 650
        %v2556 = vld [vmem:[%s2555] ss:$3 sm:$0xff]
        %s2557 = scalar_lea.vmem [#allocation2], 674
        %v2558 = vld [vmem:[%s2557] ss:$3 sm:$0xff]
        %s2559 = scalar_lea.vmem [#allocation2], 698
        %v2560 = vld [vmem:[%s2559] ss:$3 sm:$0xff]
        %s2561 = scalar_lea.vmem [#allocation2], 722
        %v2562 = vld [vmem:[%s2561] ss:$3 sm:$0xff]
        %s2563 = scalar_lea.vmem [#allocation2], 746
        %v2564 = vld [vmem:[%s2563] ss:$3 sm:$0xff]
        %s2565 = scalar_lea.vmem [#allocation2], 770
        %v2566 = vld [vmem:[%s2565] ss:$3 sm:$0xff]
        %s2567 = scalar_lea.vmem [#allocation2], 794
        %v2568 = vld [vmem:[%s2567] ss:$3 sm:$0xff]
        %s2569 = scalar_lea.vmem [#allocation2], 818
        %v2570 = vld [vmem:[%s2569] ss:$3 sm:$0xff]
        %s2571 = scalar_lea.vmem [#allocation2], 842
        %v2572 = vld [vmem:[%s2571] ss:$3 sm:$0xff]
        %s2573 = scalar_lea.vmem [#allocation2], 866
        %v2574 = vld [vmem:[%s2573] ss:$3 sm:$0xff]
        %s2575 = scalar_lea.vmem [#allocation2], 890
        %v2576 = vld [vmem:[%s2575] ss:$3 sm:$0xff]
        %s2577 = scalar_lea.vmem [#allocation2], 914
        %v2578 = vld [vmem:[%s2577] ss:$3 sm:$0xff]
        %s2579 = scalar_lea.vmem [#allocation2], 938
        %v2580 = vld [vmem:[%s2579] ss:$3 sm:$0xff]
        %s2581 = scalar_lea.vmem [#allocation2], 962
        %v2582 = vld [vmem:[%s2581] ss:$3 sm:$0xff]
        %s2583 = scalar_lea.vmem [#allocation2], 986
        %v2584 = vld [vmem:[%s2583] ss:$3 sm:$0xff]
        %s2585 = scalar_lea.vmem [#allocation2], 1010
        %v2586 = vld [vmem:[%s2585] ss:$3 sm:$0xff]
        %s2587 = scalar_lea.vmem [#allocation2], 1034
        %v2588 = vld [vmem:[%s2587] ss:$3 sm:$0x1f]
        %v2589 = vmax.f32 %v2457, %v2502
        %v2590 = vmax.f32 %v2458, %v2504
        %v2591 = vmax.f32 %v2459, %v2506
        %v2592 = vmax.f32 %v2460, %v2508
        %v2593 = vmax.f32 %v2461, %v2510
        %v2594 = vmax.f32 %v2462, %v2512
        %v2595 = vmax.f32 %v2463, %v2514
        %v2596 = vmax.f32 %v2464, %v2516
        %v2597 = vmax.f32 %v2465, %v2518
        %v2598 = vmax.f32 %v2466, %v2520
        %v2599 = vmax.f32 %v2467, %v2522
        %v2600 = vmax.f32 %v2468, %v2524
        %v2601 = vmax.f32 %v2469, %v2526
        %v2602 = vmax.f32 %v2470, %v2528
        %v2603 = vmax.f32 %v2471, %v2530
        %v2604 = vmax.f32 %v2472, %v2532
        %v2605 = vmax.f32 %v2473, %v2534
        %v2606 = vmax.f32 %v2474, %v2536
        %v2607 = vmax.f32 %v2475, %v2538
        %v2608 = vmax.f32 %v2476, %v2540
        %v2609 = vmax.f32 %v2477, %v2542
        %v2610 = vmax.f32 %v2478, %v2544
        %v2611 = vmax.f32 %v2479, %v2546
        %v2612 = vmax.f32 %v2480, %v2548
        %v2613 = vmax.f32 %v2481, %v2550
        %v2614 = vmax.f32 %v2482, %v2552
        %v2615 = vmax.f32 %v2483, %v2554
        %v2616 = vmax.f32 %v2484, %v2556
        %v2617 = vmax.f32 %v2485, %v2558
        %v2618 = vmax.f32 %v2486, %v2560
        %v2619 = vmax.f32 %v2487, %v2562
        %v2620 = vmax.f32 %v2488, %v2564
        %v2621 = vmax.f32 %v2489, %v2566
        %v2622 = vmax.f32 %v2490, %v2568
        %v2623 = vmax.f32 %v2491, %v2570
        %v2624 = vmax.f32 %v2492, %v2572
        %v2625 = vmax.f32 %v2493, %v2574
        %v2626 = vmax.f32 %v2494, %v2576
        %v2627 = vmax.f32 %v2495, %v2578
        %v2628 = vmax.f32 %v2496, %v2580
        %v2629 = vmax.f32 %v2497, %v2582
        %v2630 = vmax.f32 %v2498, %v2584
        %v2631 = vmax.f32 %v2499, %v2586
        %v2632 = vmax.f32 %v2500, %v2588
        %2633 = vst.msk [vmem:[#allocation3] sm:$0xff] %vm625, %v2589
        %2634 = vst.msk [vmem:[#allocation3 + $0x8] sm:$0xff] %vm625, %v2590
        %2635 = vst.msk [vmem:[#allocation3 + $0x10] sm:$0xff] %vm625, %v2591
        %2636 = vst.msk [vmem:[#allocation3 + $0x18] sm:$0xff] %vm625, %v2592
        %2637 = vst.msk [vmem:[#allocation3 + $0x20] sm:$0xff] %vm625, %v2593
        %2638 = vst.msk [vmem:[#allocation3 + $0x28] sm:$0xff] %vm625, %v2594
        %2639 = vst.msk [vmem:[#allocation3 + $0x30] sm:$0xff] %vm625, %v2595
        %2640 = vst.msk [vmem:[#allocation3 + $0x38] sm:$0xff] %vm625, %v2596
        %2641 = vst.msk [vmem:[#allocation3 + $0x40] sm:$0xff] %vm625, %v2597
        %2642 = vst.msk [vmem:[#allocation3 + $0x48] sm:$0xff] %vm625, %v2598
        %2643 = vst.msk [vmem:[#allocation3 + $0x50] sm:$0xff] %vm625, %v2599
        %2644 = vst.msk [vmem:[#allocation3 + $0x58] sm:$0xff] %vm625, %v2600
        %2645 = vst.msk [vmem:[#allocation3 + $0x60] sm:$0xff] %vm625, %v2601
        %2646 = vst.msk [vmem:[#allocation3 + $0x68] sm:$0xff] %vm625, %v2602
        %2647 = vst.msk [vmem:[#allocation3 + $0x70] sm:$0xff] %vm625, %v2603
        %2648 = vst.msk [vmem:[#allocation3 + $0x78] sm:$0xff] %vm625, %v2604
        %2649 = vst.msk [vmem:[#allocation3 + $0x80] sm:$0xff] %vm625, %v2605
        %2650 = vst.msk [vmem:[#allocation3 + $0x88] sm:$0xff] %vm625, %v2606
        %2651 = vst.msk [vmem:[#allocation3 + $0x90] sm:$0xff] %vm625, %v2607
        %2652 = vst.msk [vmem:[#allocation3 + $0x98] sm:$0xff] %vm625, %v2608
        %2653 = vst.msk [vmem:[#allocation3 + $0xa0] sm:$0xff] %vm625, %v2609
        %2654 = vst.msk [vmem:[#allocation3 + $0xa8] sm:$0xff] %vm625, %v2610
        %2655 = vst.msk [vmem:[#allocation3 + $0xb0] sm:$0xff] %vm625, %v2611
        %2656 = vst.msk [vmem:[#allocation3 + $0xb8] sm:$0xff] %vm625, %v2612
        %2657 = vst.msk [vmem:[#allocation3 + $0xc0] sm:$0xff] %vm625, %v2613
        %2658 = vst.msk [vmem:[#allocation3 + $0xc8] sm:$0xff] %vm625, %v2614
        %2659 = vst.msk [vmem:[#allocation3 + $0xd0] sm:$0xff] %vm625, %v2615
        %2660 = vst.msk [vmem:[#allocation3 + $0xd8] sm:$0xff] %vm625, %v2616
        %2661 = vst.msk [vmem:[#allocation3 + $0xe0] sm:$0xff] %vm625, %v2617
        %2662 = vst.msk [vmem:[#allocation3 + $0xe8] sm:$0xff] %vm625, %v2618
        %2663 = vst.msk [vmem:[#allocation3 + $0xf0] sm:$0xff] %vm625, %v2619
        %2664 = vst.msk [vmem:[#allocation3 + $0xf8] sm:$0xff] %vm625, %v2620
        %2665 = vst.msk [vmem:[#allocation3 + $0x100] sm:$0xff] %vm625, %v2621
        %2666 = vst.msk [vmem:[#allocation3 + $0x108] sm:$0xff] %vm625, %v2622
        %2667 = vst.msk [vmem:[#allocation3 + $0x110] sm:$0xff] %vm625, %v2623
        %2668 = vst.msk [vmem:[#allocation3 + $0x118] sm:$0xff] %vm625, %v2624
        %2669 = vst.msk [vmem:[#allocation3 + $0x120] sm:$0xff] %vm625, %v2625
        %2670 = vst.msk [vmem:[#allocation3 + $0x128] sm:$0xff] %vm625, %v2626
        %2671 = vst.msk [vmem:[#allocation3 + $0x130] sm:$0xff] %vm625, %v2627
        %2672 = vst.msk [vmem:[#allocation3 + $0x138] sm:$0xff] %vm625, %v2628
        %2673 = vst.msk [vmem:[#allocation3 + $0x140] sm:$0xff] %vm625, %v2629
        %2674 = vst.msk [vmem:[#allocation3 + $0x148] sm:$0xff] %vm625, %v2630
        %2675 = vst.msk [vmem:[#allocation3 + $0x150] sm:$0xff] %vm625, %v2631
        %vm2676 = vcmask 77824
        %2677 = vst.msk [vmem:[#allocation3 + $0x158] sm:$0x1f] %vm2676, %v2632
        %v2678 = vld [vmem:[#allocation3] sm:$0xff]
        %v2679 = vld [vmem:[#allocation3 + $0x8] sm:$0xff]
        %v2680 = vld [vmem:[#allocation3 + $0x10] sm:$0xff]
        %v2681 = vld [vmem:[#allocation3 + $0x18] sm:$0xff]
        %v2682 = vld [vmem:[#allocation3 + $0x20] sm:$0xff]
        %v2683 = vld [vmem:[#allocation3 + $0x28] sm:$0xff]
        %v2684 = vld [vmem:[#allocation3 + $0x30] sm:$0xff]
        %v2685 = vld [vmem:[#allocation3 + $0x38] sm:$0xff]
        %v2686 = vld [vmem:[#allocation3 + $0x40] sm:$0xff]
        %v2687 = vld [vmem:[#allocation3 + $0x48] sm:$0xff]
        %v2688 = vld [vmem:[#allocation3 + $0x50] sm:$0xff]
        %v2689 = vld [vmem:[#allocation3 + $0x58] sm:$0xff]
        %v2690 = vld [vmem:[#allocation3 + $0x60] sm:$0xff]
        %v2691 = vld [vmem:[#allocation3 + $0x68] sm:$0xff]
        %v2692 = vld [vmem:[#allocation3 + $0x70] sm:$0xff]
        %v2693 = vld [vmem:[#allocation3 + $0x78] sm:$0xff]
        %v2694 = vld [vmem:[#allocation3 + $0x80] sm:$0xff]
        %v2695 = vld [vmem:[#allocation3 + $0x88] sm:$0xff]
        %v2696 = vld [vmem:[#allocation3 + $0x90] sm:$0xff]
        %v2697 = vld [vmem:[#allocation3 + $0x98] sm:$0xff]
        %v2698 = vld [vmem:[#allocation3 + $0xa0] sm:$0xff]
        %v2699 = vld [vmem:[#allocation3 + $0xa8] sm:$0xff]
        %v2700 = vld [vmem:[#allocation3 + $0xb0] sm:$0xff]
        %v2701 = vld [vmem:[#allocation3 + $0xb8] sm:$0xff]
        %v2702 = vld [vmem:[#allocation3 + $0xc0] sm:$0xff]
        %v2703 = vld [vmem:[#allocation3 + $0xc8] sm:$0xff]
        %v2704 = vld [vmem:[#allocation3 + $0xd0] sm:$0xff]
        %v2705 = vld [vmem:[#allocation3 + $0xd8] sm:$0xff]
        %v2706 = vld [vmem:[#allocation3 + $0xe0] sm:$0xff]
        %v2707 = vld [vmem:[#allocation3 + $0xe8] sm:$0xff]
        %v2708 = vld [vmem:[#allocation3 + $0xf0] sm:$0xff]
        %v2709 = vld [vmem:[#allocation3 + $0xf8] sm:$0xff]
        %v2710 = vld [vmem:[#allocation3 + $0x100] sm:$0xff]
        %v2711 = vld [vmem:[#allocation3 + $0x108] sm:$0xff]
        %v2712 = vld [vmem:[#allocation3 + $0x110] sm:$0xff]
        %v2713 = vld [vmem:[#allocation3 + $0x118] sm:$0xff]
        %v2714 = vld [vmem:[#allocation3 + $0x120] sm:$0xff]
        %v2715 = vld [vmem:[#allocation3 + $0x128] sm:$0xff]
        %v2716 = vld [vmem:[#allocation3 + $0x130] sm:$0xff]
        %v2717 = vld [vmem:[#allocation3 + $0x138] sm:$0xff]
        %v2718 = vld [vmem:[#allocation3 + $0x140] sm:$0xff]
        %v2719 = vld [vmem:[#allocation3 + $0x148] sm:$0xff]
        %v2720 = vld [vmem:[#allocation3 + $0x150] sm:$0xff]
        %v2721 = vld [vmem:[#allocation3 + $0x158] sm:$0x1]
        %v2722 = vld [vmem:[%s4] sm:$0xff]
        %v2723 = vld [vmem:[%s4 + $0x8] sm:$0x3]
        %v2724 = vld [vmem:[#allocation3 + $0x1] sm:$0xff]
        %v2725 = vld [vmem:[#allocation3 + $0x9] sm:$0xff]
        %v2726 = vld [vmem:[#allocation3 + $0x11] sm:$0xff]
        %v2727 = vld [vmem:[#allocation3 + $0x19] sm:$0xff]
        %v2728 = vld [vmem:[#allocation3 + $0x21] sm:$0xff]
        %v2729 = vld [vmem:[#allocation3 + $0x29] sm:$0xff]
        %v2730 = vld [vmem:[#allocation3 + $0x31] sm:$0xff]
        %v2731 = vld [vmem:[#allocation3 + $0x39] sm:$0xff]
        %v2732 = vld [vmem:[#allocation3 + $0x41] sm:$0xff]
        %v2733 = vld [vmem:[#allocation3 + $0x49] sm:$0xff]
        %v2734 = vld [vmem:[#allocation3 + $0x51] sm:$0xff]
        %v2735 = vld [vmem:[#allocation3 + $0x59] sm:$0xff]
        %v2736 = vld [vmem:[#allocation3 + $0x61] sm:$0xff]
        %v2737 = vld [vmem:[#allocation3 + $0x69] sm:$0xff]
        %v2738 = vld [vmem:[#allocation3 + $0x71] sm:$0xff]
        %v2739 = vld [vmem:[#allocation3 + $0x79] sm:$0xff]
        %v2740 = vld [vmem:[#allocation3 + $0x81] sm:$0xff]
        %v2741 = vld [vmem:[#allocation3 + $0x89] sm:$0xff]
        %v2742 = vld [vmem:[#allocation3 + $0x91] sm:$0xff]
        %v2743 = vld [vmem:[#allocation3 + $0x99] sm:$0xff]
        %v2744 = vld [vmem:[#allocation3 + $0xa1] sm:$0xff]
        %v2745 = vld [vmem:[#allocation3 + $0xa9] sm:$0xff]
        %v2746 = vld [vmem:[#allocation3 + $0xb1] sm:$0xff]
        %v2747 = vld [vmem:[#allocation3 + $0xb9] sm:$0xff]
        %v2748 = vld [vmem:[#allocation3 + $0xc1] sm:$0xff]
        %v2749 = vld [vmem:[#allocation3 + $0xc9] sm:$0xff]
        %v2750 = vld [vmem:[#allocation3 + $0xd1] sm:$0xff]
        %v2751 = vld [vmem:[#allocation3 + $0xd9] sm:$0xff]
        %v2752 = vld [vmem:[#allocation3 + $0xe1] sm:$0xff]
        %v2753 = vld [vmem:[#allocation3 + $0xe9] sm:$0xff]
        %v2754 = vld [vmem:[#allocation3 + $0xf1] sm:$0xff]
        %v2755 = vld [vmem:[#allocation3 + $0xf9] sm:$0xff]
        %v2756 = vld [vmem:[#allocation3 + $0x101] sm:$0xff]
        %v2757 = vld [vmem:[#allocation3 + $0x109] sm:$0xff]
        %v2758 = vld [vmem:[#allocation3 + $0x111] sm:$0xff]
        %v2759 = vld [vmem:[#allocation3 + $0x119] sm:$0xff]
        %v2760 = vld [vmem:[#allocation3 + $0x121] sm:$0xff]
        %v2761 = vld [vmem:[#allocation3 + $0x129] sm:$0xff]
        %v2762 = vld [vmem:[#allocation3 + $0x131] sm:$0xff]
        %v2763 = vld [vmem:[#allocation3 + $0x139] sm:$0xff]
        %v2764 = vld [vmem:[#allocation3 + $0x141] sm:$0xff]
        %v2765 = vld [vmem:[#allocation3 + $0x149] sm:$0xff]
        %v2766 = vld [vmem:[#allocation3 + $0x151] sm:$0xff]
        %v2767 = vld [vmem:[#allocation3 + $0x159] sm:$0x1]
        %s2768 = scalar_lea.vmem %s4, 16
        %v2769 = vld [vmem:[%s2768] sm:$0xff]
        %v2770 = vld [vmem:[%s2768 + $0x8] sm:$0x3]
        %v2772 = vsel %vm625, %v2724, 0
        %v2775 = vsel %vm625, %v2725, 0
        %v2778 = vsel %vm625, %v2726, 0
        %v2781 = vsel %vm625, %v2727, 0
        %v2784 = vsel %vm625, %v2728, 0
        %v2787 = vsel %vm625, %v2729, 0
        %v2790 = vsel %vm625, %v2730, 0
        %v2793 = vsel %vm625, %v2731, 0
        %v2796 = vsel %vm625, %v2732, 0
        %v2799 = vsel %vm625, %v2733, 0
        %v2802 = vsel %vm625, %v2734, 0
        %v2805 = vsel %vm625, %v2735, 0
        %v2808 = vsel %vm625, %v2736, 0
        %v2811 = vsel %vm625, %v2737, 0
        %v2814 = vsel %vm625, %v2738, 0
        %v2817 = vsel %vm625, %v2739, 0
        %v2820 = vsel %vm625, %v2740, 0
        %v2823 = vsel %vm625, %v2741, 0
        %v2826 = vsel %vm625, %v2742, 0
        %v2829 = vsel %vm625, %v2743, 0
        %v2832 = vsel %vm625, %v2744, 0
        %v2835 = vsel %vm625, %v2745, 0
        %v2838 = vsel %vm625, %v2746, 0
        %v2841 = vsel %vm625, %v2747, 0
        %v2844 = vsel %vm625, %v2748, 0
        %v2847 = vsel %vm625, %v2749, 0
        %v2850 = vsel %vm625, %v2750, 0
        %v2853 = vsel %vm625, %v2751, 0
        %v2856 = vsel %vm625, %v2752, 0
        %v2859 = vsel %vm625, %v2753, 0
        %v2862 = vsel %vm625, %v2754, 0
        %v2865 = vsel %vm625, %v2755, 0
        %v2868 = vsel %vm625, %v2756, 0
        %v2871 = vsel %vm625, %v2757, 0
        %v2874 = vsel %vm625, %v2758, 0
        %v2877 = vsel %vm625, %v2759, 0
        %v2880 = vsel %vm625, %v2760, 0
        %v2883 = vsel %vm625, %v2761, 0
        %v2886 = vsel %vm625, %v2762, 0
        %v2889 = vsel %vm625, %v2763, 0
        %v2892 = vsel %vm625, %v2764, 0
        %v2895 = vsel %vm625, %v2765, 0
        %v2898 = vsel %vm625, %v2766, 0
        %v2901 = vsel %vm625, %v2767, 0
        %v2904 = vsel %vm1019, %v2770, 0
        %2906 = vmatprep.subr.mxu0 0.0
        %2907 = vmatpush1.msra.mxu0 %v2769
        %2908 = vmatprep.subr.mxu0 0.0
        %2909 = vmatpush1.msra.mxu0 %v2904
        %2910 = vmatprep.subr.mxu0 0.0
        %2911 = vmatpush1.msra.mxu0 0.0
        %2912 = vmatprep.subr.mxu0 0.0
        %2913 = vmatpush1.msra.mxu0 0.0
        %2914 = vmatprep.subr.mxu0 0.0
        %2915 = vmatpush1.msra.mxu0 0.0
        %2916 = vmatprep.subr.mxu0 0.0
        %2917 = vmatpush1.msra.mxu0 0.0
        %2918 = vmatprep.subr.mxu0 0.0
        %2919 = vmatpush1.msra.mxu0 0.0
        %2920 = vmatprep.subr.mxu0 0.0
        %2921 = vmatpush1.msra.mxu0 0.0
        %2922 = vmatprep.subr.mxu0 0.0
        %2923 = vmatpush1.msra.mxu0 0.0
        %2924 = vmatprep.subr.mxu0 0.0
        %2925 = vmatpush1.msra.mxu0 0.0
        %2926 = vmatprep.subr.mxu0 0.0
        %2927 = vmatpush1.msra.mxu0 0.0
        %2928 = vmatprep.subr.mxu0 0.0
        %2929 = vmatpush1.msra.mxu0 0.0
        %2930 = vmatprep.subr.mxu0 0.0
        %2931 = vmatpush1.msra.mxu0 0.0
        %2932 = vmatprep.subr.mxu0 0.0
        %2933 = vmatpush1.msra.mxu0 0.0
        %2934 = vmatprep.subr.mxu0 0.0
        %2935 = vmatpush1.msra.mxu0 0.0
        %2936 = vmatprep.subr.mxu0 0.0
        %2937 = vmatpush1.msra.mxu0 0.0
        %2938 = vmatprep.subr.mxu0 0.0
        %2939 = vmatpush1.msra.mxu0 0.0
        %2940 = vmatprep.subr.mxu0 0.0
        %2941 = vmatpush1.msra.mxu0 0.0
        %2942 = vmatprep.subr.mxu0 0.0
        %2943 = vmatpush1.msra.mxu0 0.0
        %2944 = vmatprep.subr.mxu0 0.0
        %2945 = vmatpush1.msra.mxu0 0.0
        %2946 = vmatprep.subr.mxu0 0.0
        %2947 = vmatpush1.msra.mxu0 0.0
        %2948 = vmatprep.subr.mxu0 0.0
        %2949 = vmatpush1.msra.mxu0 0.0
        %2950 = vmatprep.subr.mxu0 0.0
        %2951 = vmatpush1.msra.mxu0 0.0
        %2952 = vmatprep.subr.mxu0 0.0
        %2953 = vmatpush1.msra.mxu0 0.0
        %2954 = vmatprep.subr.mxu0 0.0
        %2955 = vmatpush1.msra.mxu0 0.0
        %2956 = vmatprep.subr.mxu0 0.0
        %2957 = vmatpush1.msra.mxu0 0.0
        %2958 = vmatprep.subr.mxu0 0.0
        %2959 = vmatpush1.msra.mxu0 0.0
        %2960 = vmatprep.subr.mxu0 0.0
        %2961 = vmatpush1.msra.mxu0 0.0
        %2962 = vmatprep.subr.mxu0 0.0
        %2963 = vmatpush1.msra.mxu0 0.0
        %2964 = vmatprep.subr.mxu0 0.0
        %2965 = vmatpush1.msra.mxu0 0.0
        %2966 = vmatprep.subr.mxu0 0.0
        %2967 = vmatpush1.msra.mxu0 0.0
        %2968 = vmatprep.subr.mxu0 0.0
        %2969 = vmatpush1.msra.mxu0 0.0
        %2970 = vmatprep.mubr.f32.mxu0 0.0
        %2971 = vmatmul.mubr.f32.gmra.mrb[0].mxu0 %v2772
        %v2972 = vpop.f32.mrb[0].mxu0
        %v2973 = vadd.f32 0.0, %v2972
        %v2974 = vpop.f32.mrb[0].mxu0
        %2975 = vmatprep.mubr.f32.mxu0 0.0
        %2976 = vmatmul.mubr.f32.gmra.mrb[0].mxu0 %v2775
        %v2977 = vpop.f32.mrb[0].mxu0
        %v2978 = vadd.f32 0.0, %v2977
        %v2979 = vpop.f32.mrb[0].mxu0
        %2980 = vmatprep.mubr.f32.mxu0 0.0
        %2981 = vmatmul.mubr.f32.gmra.mrb[0].mxu0 %v2778
        %v2982 = vpop.f32.mrb[0].mxu0
        %v2983 = vadd.f32 0.0, %v2982
        %v2984 = vpop.f32.mrb[0].mxu0
        %2985 = vmatprep.mubr.f32.mxu0 0.0
        %2986 = vmatmul.mubr.f32.gmra.mrb[0].mxu0 %v2781
        %v2987 = vpop.f32.mrb[0].mxu0
        %v2988 = vadd.f32 0.0, %v2987
        %v2989 = vpop.f32.mrb[0].mxu0
        %2990 = vmatprep.mubr.f32.mxu0 0.0
        %2991 = vmatmul.mubr.f32.gmra.mrb[0].mxu0 %v2784
        %v2992 = vpop.f32.mrb[0].mxu0
        %v2993 = vadd.f32 0.0, %v2992
        %v2994 = vpop.f32.mrb[0].mxu0
        %2995 = vmatprep.mubr.f32.mxu0 0.0
        %2996 = vmatmul.mubr.f32.gmra.mrb[0].mxu0 %v2787
        %v2997 = vpop.f32.mrb[0].mxu0
        %v2998 = vadd.f32 0.0, %v2997
        %v2999 = vpop.f32.mrb[0].mxu0
        %3000 = vmatprep.mubr.f32.mxu0 0.0
        %3001 = vmatmul.mubr.f32.gmra.mrb[0].mxu0 %v2790
        %v3002 = vpop.f32.mrb[0].mxu0
        %v3003 = vadd.f32 0.0, %v3002
        %v3004 = vpop.f32.mrb[0].mxu0
        %3005 = vmatprep.mubr.f32.mxu0 0.0
        %3006 = vmatmul.mubr.f32.gmra.mrb[0].mxu0 %v2793
        %v3007 = vpop.f32.mrb[0].mxu0
        %v3008 = vadd.f32 0.0, %v3007
        %v3009 = vpop.f32.mrb[0].mxu0
        %3010 = vmatprep.mubr.f32.mxu0 0.0
        %3011 = vmatmul.mubr.f32.gmra.mrb[0].mxu0 %v2796
        %v3012 = vpop.f32.mrb[0].mxu0
        %v3013 = vadd.f32 0.0, %v3012
        %v3014 = vpop.f32.mrb[0].mxu0
        %3015 = vmatprep.mubr.f32.mxu0 0.0
        %3016 = vmatmul.mubr.f32.gmra.mrb[0].mxu0 %v2799
        %v3017 = vpop.f32.mrb[0].mxu0
        %v3018 = vadd.f32 0.0, %v3017
        %v3019 = vpop.f32.mrb[0].mxu0
        %3020 = vmatprep.mubr.f32.mxu0 0.0
        %3021 = vmatmul.mubr.f32.gmra.mrb[0].mxu0 %v2802
        %v3022 = vpop.f32.mrb[0].mxu0
        %v3023 = vadd.f32 0.0, %v3022
        %v3024 = vpop.f32.mrb[0].mxu0
        %3025 = vmatprep.mubr.f32.mxu0 0.0
        %3026 = vmatmul.mubr.f32.gmra.mrb[0].mxu0 %v2805
        %v3027 = vpop.f32.mrb[0].mxu0
        %v3028 = vadd.f32 0.0, %v3027
        %v3029 = vpop.f32.mrb[0].mxu0
        %3030 = vmatprep.mubr.f32.mxu0 0.0
        %3031 = vmatmul.mubr.f32.gmra.mrb[0].mxu0 %v2808
        %v3032 = vpop.f32.mrb[0].mxu0
        %v3033 = vadd.f32 0.0, %v3032
        %v3034 = vpop.f32.mrb[0].mxu0
        %3035 = vmatprep.mubr.f32.mxu0 0.0
        %3036 = vmatmul.mubr.f32.gmra.mrb[0].mxu0 %v2811
        %v3037 = vpop.f32.mrb[0].mxu0
        %v3038 = vadd.f32 0.0, %v3037
        %v3039 = vpop.f32.mrb[0].mxu0
        %3040 = vmatprep.mubr.f32.mxu0 0.0
        %3041 = vmatmul.mubr.f32.gmra.mrb[0].mxu0 %v2814
        %v3042 = vpop.f32.mrb[0].mxu0
        %v3043 = vadd.f32 0.0, %v3042
        %v3044 = vpop.f32.mrb[0].mxu0
        %3045 = vmatprep.mubr.f32.mxu0 0.0
        %3046 = vmatmul.mubr.f32.gmra.mrb[0].mxu0 %v2817
        %v3047 = vpop.f32.mrb[0].mxu0
        %v3048 = vadd.f32 0.0, %v3047
        %v3049 = vpop.f32.mrb[0].mxu0
        %3050 = vmatprep.mubr.f32.mxu0 0.0
        %3051 = vmatmul.mubr.f32.gmra.mrb[0].mxu0 %v2820
        %v3052 = vpop.f32.mrb[0].mxu0
        %v3053 = vadd.f32 0.0, %v3052
        %v3054 = vpop.f32.mrb[0].mxu0
        %3055 = vmatprep.mubr.f32.mxu0 0.0
        %3056 = vmatmul.mubr.f32.gmra.mrb[0].mxu0 %v2823
        %v3057 = vpop.f32.mrb[0].mxu0
        %v3058 = vadd.f32 0.0, %v3057
        %v3059 = vpop.f32.mrb[0].mxu0
        %3060 = vmatprep.mubr.f32.mxu0 0.0
        %3061 = vmatmul.mubr.f32.gmra.mrb[0].mxu0 %v2826
        %v3062 = vpop.f32.mrb[0].mxu0
        %v3063 = vadd.f32 0.0, %v3062
        %v3064 = vpop.f32.mrb[0].mxu0
        %3065 = vmatprep.mubr.f32.mxu0 0.0
        %3066 = vmatmul.mubr.f32.gmra.mrb[0].mxu0 %v2829
        %v3067 = vpop.f32.mrb[0].mxu0
        %v3068 = vadd.f32 0.0, %v3067
        %v3069 = vpop.f32.mrb[0].mxu0
        %3070 = vmatprep.mubr.f32.mxu0 0.0
        %3071 = vmatmul.mubr.f32.gmra.mrb[0].mxu0 %v2832
        %v3072 = vpop.f32.mrb[0].mxu0
        %v3073 = vadd.f32 0.0, %v3072
        %v3074 = vpop.f32.mrb[0].mxu0
        %3075 = vmatprep.mubr.f32.mxu0 0.0
        %3076 = vmatmul.mubr.f32.gmra.mrb[0].mxu0 %v2835
        %v3077 = vpop.f32.mrb[0].mxu0
        %v3078 = vadd.f32 0.0, %v3077
        %v3079 = vpop.f32.mrb[0].mxu0
        %3080 = vmatprep.mubr.f32.mxu0 0.0
        %3081 = vmatmul.mubr.f32.gmra.mrb[0].mxu0 %v2838
        %v3082 = vpop.f32.mrb[0].mxu0
        %v3083 = vadd.f32 0.0, %v3082
        %v3084 = vpop.f32.mrb[0].mxu0
        %3085 = vmatprep.mubr.f32.mxu0 0.0
        %3086 = vmatmul.mubr.f32.gmra.mrb[0].mxu0 %v2841
        %v3087 = vpop.f32.mrb[0].mxu0
        %v3088 = vadd.f32 0.0, %v3087
        %v3089 = vpop.f32.mrb[0].mxu0
        %3090 = vmatprep.mubr.f32.mxu0 0.0
        %3091 = vmatmul.mubr.f32.gmra.mrb[0].mxu0 %v2844
        %v3092 = vpop.f32.mrb[0].mxu0
        %v3093 = vadd.f32 0.0, %v3092
        %v3094 = vpop.f32.mrb[0].mxu0
        %3095 = vmatprep.mubr.f32.mxu0 0.0
        %3096 = vmatmul.mubr.f32.gmra.mrb[0].mxu0 %v2847
        %v3097 = vpop.f32.mrb[0].mxu0
        %v3098 = vadd.f32 0.0, %v3097
        %v3099 = vpop.f32.mrb[0].mxu0
        %3100 = vmatprep.mubr.f32.mxu0 0.0
        %3101 = vmatmul.mubr.f32.gmra.mrb[0].mxu0 %v2850
        %v3102 = vpop.f32.mrb[0].mxu0
        %v3103 = vadd.f32 0.0, %v3102
        %v3104 = vpop.f32.mrb[0].mxu0
        %3105 = vmatprep.mubr.f32.mxu0 0.0
        %3106 = vmatmul.mubr.f32.gmra.mrb[0].mxu0 %v2853
        %v3107 = vpop.f32.mrb[0].mxu0
        %v3108 = vadd.f32 0.0, %v3107
        %v3109 = vpop.f32.mrb[0].mxu0
        %3110 = vmatprep.mubr.f32.mxu0 0.0
        %3111 = vmatmul.mubr.f32.gmra.mrb[0].mxu0 %v2856
        %v3112 = vpop.f32.mrb[0].mxu0
        %v3113 = vadd.f32 0.0, %v3112
        %v3114 = vpop.f32.mrb[0].mxu0
        %3115 = vmatprep.mubr.f32.mxu0 0.0
        %3116 = vmatmul.mubr.f32.gmra.mrb[0].mxu0 %v2859
        %v3117 = vpop.f32.mrb[0].mxu0
        %v3118 = vadd.f32 0.0, %v3117
        %v3119 = vpop.f32.mrb[0].mxu0
        %3120 = vmatprep.mubr.f32.mxu0 0.0
        %3121 = vmatmul.mubr.f32.gmra.mrb[0].mxu0 %v2862
        %v3122 = vpop.f32.mrb[0].mxu0
        %v3123 = vadd.f32 0.0, %v3122
        %v3124 = vpop.f32.mrb[0].mxu0
        %3125 = vmatprep.mubr.f32.mxu0 0.0
        %3126 = vmatmul.mubr.f32.gmra.mrb[0].mxu0 %v2865
        %v3127 = vpop.f32.mrb[0].mxu0
        %v3128 = vadd.f32 0.0, %v3127
        %v3129 = vpop.f32.mrb[0].mxu0
        %3130 = vmatprep.mubr.f32.mxu0 0.0
        %3131 = vmatmul.mubr.f32.gmra.mrb[0].mxu0 %v2868
        %v3132 = vpop.f32.mrb[0].mxu0
        %v3133 = vadd.f32 0.0, %v3132
        %v3134 = vpop.f32.mrb[0].mxu0
        %3135 = vmatprep.mubr.f32.mxu0 0.0
        %3136 = vmatmul.mubr.f32.gmra.mrb[0].mxu0 %v2871
        %v3137 = vpop.f32.mrb[0].mxu0
        %v3138 = vadd.f32 0.0, %v3137
        %v3139 = vpop.f32.mrb[0].mxu0
        %3140 = vmatprep.mubr.f32.mxu0 0.0
        %3141 = vmatmul.mubr.f32.gmra.mrb[0].mxu0 %v2874
        %v3142 = vpop.f32.mrb[0].mxu0
        %v3143 = vadd.f32 0.0, %v3142
        %v3144 = vpop.f32.mrb[0].mxu0
        %3145 = vmatprep.mubr.f32.mxu0 0.0
        %3146 = vmatmul.mubr.f32.gmra.mrb[0].mxu0 %v2877
        %v3147 = vpop.f32.mrb[0].mxu0
        %v3148 = vadd.f32 0.0, %v3147
        %v3149 = vpop.f32.mrb[0].mxu0
        %3150 = vmatprep.mubr.f32.mxu0 0.0
        %3151 = vmatmul.mubr.f32.gmra.mrb[0].mxu0 %v2880
        %v3152 = vpop.f32.mrb[0].mxu0
        %v3153 = vadd.f32 0.0, %v3152
        %v3154 = vpop.f32.mrb[0].mxu0
        %3155 = vmatprep.mubr.f32.mxu0 0.0
        %3156 = vmatmul.mubr.f32.gmra.mrb[0].mxu0 %v2883
        %v3157 = vpop.f32.mrb[0].mxu0
        %v3158 = vadd.f32 0.0, %v3157
        %v3159 = vpop.f32.mrb[0].mxu0
        %3160 = vmatprep.mubr.f32.mxu0 0.0
        %3161 = vmatmul.mubr.f32.gmra.mrb[0].mxu0 %v2886
        %v3162 = vpop.f32.mrb[0].mxu0
        %v3163 = vadd.f32 0.0, %v3162
        %v3164 = vpop.f32.mrb[0].mxu0
        %3165 = vmatprep.mubr.f32.mxu0 0.0
        %3166 = vmatmul.mubr.f32.gmra.mrb[0].mxu0 %v2889
        %v3167 = vpop.f32.mrb[0].mxu0
        %v3168 = vadd.f32 0.0, %v3167
        %v3169 = vpop.f32.mrb[0].mxu0
        %3170 = vmatprep.mubr.f32.mxu0 0.0
        %3171 = vmatmul.mubr.f32.gmra.mrb[0].mxu0 %v2892
        %v3172 = vpop.f32.mrb[0].mxu0
        %v3173 = vadd.f32 0.0, %v3172
        %v3174 = vpop.f32.mrb[0].mxu0
        %3175 = vmatprep.mubr.f32.mxu0 0.0
        %3176 = vmatmul.mubr.f32.gmra.mrb[0].mxu0 %v2895
        %v3177 = vpop.f32.mrb[0].mxu0
        %v3178 = vadd.f32 0.0, %v3177
        %v3179 = vpop.f32.mrb[0].mxu0
        %3180 = vmatprep.mubr.f32.mxu0 0.0
        %3181 = vmatmul.mubr.f32.gmra.mrb[0].mxu0 %v2898
        %v3182 = vpop.f32.mrb[0].mxu0
        %v3183 = vadd.f32 0.0, %v3182
        %v3184 = vpop.f32.mrb[0].mxu0
        %3185 = vmatprep.mubr.f32.mxu0 0.0
        %3186 = vmatmul.mubr.f32.gmra.mrb[0].mxu0 %v2901
        %v3187 = vpop.f32.mrb[0].mxu0
        %v3188 = vadd.f32 0.0, %v3187
        %v3189 = vpop.f32.mrb[0].mxu0
        %3190 = vdwg.mxu0
        %v3192 = vsel %vm625, %v2678, 0
        %v3195 = vsel %vm625, %v2679, 0
        %v3198 = vsel %vm625, %v2680, 0
        %v3201 = vsel %vm625, %v2681, 0
        %v3204 = vsel %vm625, %v2682, 0
        %v3207 = vsel %vm625, %v2683, 0
        %v3210 = vsel %vm625, %v2684, 0
        %v3213 = vsel %vm625, %v2685, 0
        %v3216 = vsel %vm625, %v2686, 0
        %v3219 = vsel %vm625, %v2687, 0
        %v3222 = vsel %vm625, %v2688, 0
        %v3225 = vsel %vm625, %v2689, 0
        %v3228 = vsel %vm625, %v2690, 0
        %v3231 = vsel %vm625, %v2691, 0
        %v3234 = vsel %vm625, %v2692, 0
        %v3237 = vsel %vm625, %v2693, 0
        %v3240 = vsel %vm625, %v2694, 0
        %v3243 = vsel %vm625, %v2695, 0
        %v3246 = vsel %vm625, %v2696, 0
        %v3249 = vsel %vm625, %v2697, 0
        %v3252 = vsel %vm625, %v2698, 0
        %v3255 = vsel %vm625, %v2699, 0
        %v3258 = vsel %vm625, %v2700, 0
        %v3261 = vsel %vm625, %v2701, 0
        %v3264 = vsel %vm625, %v2702, 0
        %v3267 = vsel %vm625, %v2703, 0
        %v3270 = vsel %vm625, %v2704, 0
        %v3273 = vsel %vm625, %v2705, 0
        %v3276 = vsel %vm625, %v2706, 0
        %v3279 = vsel %vm625, %v2707, 0
        %v3282 = vsel %vm625, %v2708, 0
        %v3285 = vsel %vm625, %v2709, 0
        %v3288 = vsel %vm625, %v2710, 0
        %v3291 = vsel %vm625, %v2711, 0
        %v3294 = vsel %vm625, %v2712, 0
        %v3297 = vsel %vm625, %v2713, 0
        %v3300 = vsel %vm625, %v2714, 0
        %v3303 = vsel %vm625, %v2715, 0
        %v3306 = vsel %vm625, %v2716, 0
        %v3309 = vsel %vm625, %v2717, 0
        %v3312 = vsel %vm625, %v2718, 0
        %v3315 = vsel %vm625, %v2719, 0
        %v3318 = vsel %vm625, %v2720, 0
        %v3321 = vsel %vm625, %v2721, 0
        %v3324 = vsel %vm1019, %v2723, 0
        %3326 = vmatprep.subr.mxu0 0.0
        %3327 = vmatpush1.msra.mxu0 %v2722
        %3328 = vmatprep.subr.mxu0 0.0
        %3329 = vmatpush1.msra.mxu0 %v3324
        %3330 = vmatprep.subr.mxu0 0.0
        %3331 = vmatpush1.msra.mxu0 0.0
        %3332 = vmatprep.subr.mxu0 0.0
        %3333 = vmatpush1.msra.mxu0 0.0
        %3334 = vmatprep.subr.mxu0 0.0
        %3335 = vmatpush1.msra.mxu0 0.0
        %3336 = vmatprep.subr.mxu0 0.0
        %3337 = vmatpush1.msra.mxu0 0.0
        %3338 = vmatprep.subr.mxu0 0.0
        %3339 = vmatpush1.msra.mxu0 0.0
        %3340 = vmatprep.subr.mxu0 0.0
        %3341 = vmatpush1.msra.mxu0 0.0
        %3342 = vmatprep.subr.mxu0 0.0
        %3343 = vmatpush1.msra.mxu0 0.0
        %3344 = vmatprep.subr.mxu0 0.0
        %3345 = vmatpush1.msra.mxu0 0.0
        %3346 = vmatprep.subr.mxu0 0.0
        %3347 = vmatpush1.msra.mxu0 0.0
        %3348 = vmatprep.subr.mxu0 0.0
        %3349 = vmatpush1.msra.mxu0 0.0
        %3350 = vmatprep.subr.mxu0 0.0
        %3351 = vmatpush1.msra.mxu0 0.0
        %3352 = vmatprep.subr.mxu0 0.0
        %3353 = vmatpush1.msra.mxu0 0.0
        %3354 = vmatprep.subr.mxu0 0.0
        %3355 = vmatpush1.msra.mxu0 0.0
        %3356 = vmatprep.subr.mxu0 0.0
        %3357 = vmatpush1.msra.mxu0 0.0
        %3358 = vmatprep.subr.mxu0 0.0
        %3359 = vmatpush1.msra.mxu0 0.0
        %3360 = vmatprep.subr.mxu0 0.0
        %3361 = vmatpush1.msra.mxu0 0.0
        %3362 = vmatprep.subr.mxu0 0.0
        %3363 = vmatpush1.msra.mxu0 0.0
        %3364 = vmatprep.subr.mxu0 0.0
        %3365 = vmatpush1.msra.mxu0 0.0
        %3366 = vmatprep.subr.mxu0 0.0
        %3367 = vmatpush1.msra.mxu0 0.0
        %3368 = vmatprep.subr.mxu0 0.0
        %3369 = vmatpush1.msra.mxu0 0.0
        %3370 = vmatprep.subr.mxu0 0.0
        %3371 = vmatpush1.msra.mxu0 0.0
        %3372 = vmatprep.subr.mxu0 0.0
        %3373 = vmatpush1.msra.mxu0 0.0
        %3374 = vmatprep.subr.mxu0 0.0
        %3375 = vmatpush1.msra.mxu0 0.0
        %3376 = vmatprep.subr.mxu0 0.0
        %3377 = vmatpush1.msra.mxu0 0.0
        %3378 = vmatprep.subr.mxu0 0.0
        %3379 = vmatpush1.msra.mxu0 0.0
        %3380 = vmatprep.subr.mxu0 0.0
        %3381 = vmatpush1.msra.mxu0 0.0
        %3382 = vmatprep.subr.mxu0 0.0
        %3383 = vmatpush1.msra.mxu0 0.0
        %3384 = vmatprep.subr.mxu0 0.0
        %3385 = vmatpush1.msra.mxu0 0.0
        %3386 = vmatprep.subr.mxu0 0.0
        %3387 = vmatpush1.msra.mxu0 0.0
        %3388 = vmatprep.subr.mxu0 0.0
        %3389 = vmatpush1.msra.mxu0 0.0
        %3390 = vmatprep.mubr.f32.mxu0 0.0
        %3391 = vmatmul.mubr.f32.gmra.mrb[0].mxu0 %v3192
        %v3392 = vpop.f32.mrb[0].mxu0
        %v3393 = vadd.f32 %v2973, %v3392
        %v3394 = vpop.f32.mrb[0].mxu0
        %3395 = vmatprep.mubr.f32.mxu0 0.0
        %3396 = vmatmul.mubr.f32.gmra.mrb[0].mxu0 %v3195
        %v3397 = vpop.f32.mrb[0].mxu0
        %v3398 = vadd.f32 %v2978, %v3397
        %v3399 = vpop.f32.mrb[0].mxu0
        %3400 = vmatprep.mubr.f32.mxu0 0.0
        %3401 = vmatmul.mubr.f32.gmra.mrb[0].mxu0 %v3198
        %v3402 = vpop.f32.mrb[0].mxu0
        %v3403 = vadd.f32 %v2983, %v3402
        %v3404 = vpop.f32.mrb[0].mxu0
        %3405 = vmatprep.mubr.f32.mxu0 0.0
        %3406 = vmatmul.mubr.f32.gmra.mrb[0].mxu0 %v3201
        %v3407 = vpop.f32.mrb[0].mxu0
        %v3408 = vadd.f32 %v2988, %v3407
        %v3409 = vpop.f32.mrb[0].mxu0
        %3410 = vmatprep.mubr.f32.mxu0 0.0
        %3411 = vmatmul.mubr.f32.gmra.mrb[0].mxu0 %v3204
        %v3412 = vpop.f32.mrb[0].mxu0
        %v3413 = vadd.f32 %v2993, %v3412
        %v3414 = vpop.f32.mrb[0].mxu0
        %3415 = vmatprep.mubr.f32.mxu0 0.0
        %3416 = vmatmul.mubr.f32.gmra.mrb[0].mxu0 %v3207
        %v3417 = vpop.f32.mrb[0].mxu0
        %v3418 = vadd.f32 %v2998, %v3417
        %v3419 = vpop.f32.mrb[0].mxu0
        %3420 = vmatprep.mubr.f32.mxu0 0.0
        %3421 = vmatmul.mubr.f32.gmra.mrb[0].mxu0 %v3210
        %v3422 = vpop.f32.mrb[0].mxu0
        %v3423 = vadd.f32 %v3003, %v3422
        %v3424 = vpop.f32.mrb[0].mxu0
        %3425 = vmatprep.mubr.f32.mxu0 0.0
        %3426 = vmatmul.mubr.f32.gmra.mrb[0].mxu0 %v3213
        %v3427 = vpop.f32.mrb[0].mxu0
        %v3428 = vadd.f32 %v3008, %v3427
        %v3429 = vpop.f32.mrb[0].mxu0
        %3430 = vmatprep.mubr.f32.mxu0 0.0
        %3431 = vmatmul.mubr.f32.gmra.mrb[0].mxu0 %v3216
        %v3432 = vpop.f32.mrb[0].mxu0
        %v3433 = vadd.f32 %v3013, %v3432
        %v3434 = vpop.f32.mrb[0].mxu0
        %3435 = vmatprep.mubr.f32.mxu0 0.0
        %3436 = vmatmul.mubr.f32.gmra.mrb[0].mxu0 %v3219
        %v3437 = vpop.f32.mrb[0].mxu0
        %v3438 = vadd.f32 %v3018, %v3437
        %v3439 = vpop.f32.mrb[0].mxu0
        %3440 = vmatprep.mubr.f32.mxu0 0.0
        %3441 = vmatmul.mubr.f32.gmra.mrb[0].mxu0 %v3222
        %v3442 = vpop.f32.mrb[0].mxu0
        %v3443 = vadd.f32 %v3023, %v3442
        %v3444 = vpop.f32.mrb[0].mxu0
        %3445 = vmatprep.mubr.f32.mxu0 0.0
        %3446 = vmatmul.mubr.f32.gmra.mrb[0].mxu0 %v3225
        %v3447 = vpop.f32.mrb[0].mxu0
        %v3448 = vadd.f32 %v3028, %v3447
        %v3449 = vpop.f32.mrb[0].mxu0
        %3450 = vmatprep.mubr.f32.mxu0 0.0
        %3451 = vmatmul.mubr.f32.gmra.mrb[0].mxu0 %v3228
        %v3452 = vpop.f32.mrb[0].mxu0
        %v3453 = vadd.f32 %v3033, %v3452
        %v3454 = vpop.f32.mrb[0].mxu0
        %3455 = vmatprep.mubr.f32.mxu0 0.0
        %3456 = vmatmul.mubr.f32.gmra.mrb[0].mxu0 %v3231
        %v3457 = vpop.f32.mrb[0].mxu0
        %v3458 = vadd.f32 %v3038, %v3457
        %v3459 = vpop.f32.mrb[0].mxu0
        %3460 = vmatprep.mubr.f32.mxu0 0.0
        %3461 = vmatmul.mubr.f32.gmra.mrb[0].mxu0 %v3234
        %v3462 = vpop.f32.mrb[0].mxu0
        %v3463 = vadd.f32 %v3043, %v3462
        %v3464 = vpop.f32.mrb[0].mxu0
        %3465 = vmatprep.mubr.f32.mxu0 0.0
        %3466 = vmatmul.mubr.f32.gmra.mrb[0].mxu0 %v3237
        %v3467 = vpop.f32.mrb[0].mxu0
        %v3468 = vadd.f32 %v3048, %v3467
        %v3469 = vpop.f32.mrb[0].mxu0
        %3470 = vmatprep.mubr.f32.mxu0 0.0
        %3471 = vmatmul.mubr.f32.gmra.mrb[0].mxu0 %v3240
        %v3472 = vpop.f32.mrb[0].mxu0
        %v3473 = vadd.f32 %v3053, %v3472
        %v3474 = vpop.f32.mrb[0].mxu0
        %3475 = vmatprep.mubr.f32.mxu0 0.0
        %3476 = vmatmul.mubr.f32.gmra.mrb[0].mxu0 %v3243
        %v3477 = vpop.f32.mrb[0].mxu0
        %v3478 = vadd.f32 %v3058, %v3477
        %v3479 = vpop.f32.mrb[0].mxu0
        %3480 = vmatprep.mubr.f32.mxu0 0.0
        %3481 = vmatmul.mubr.f32.gmra.mrb[0].mxu0 %v3246
        %v3482 = vpop.f32.mrb[0].mxu0
        %v3483 = vadd.f32 %v3063, %v3482
        %v3484 = vpop.f32.mrb[0].mxu0
        %3485 = vmatprep.mubr.f32.mxu0 0.0
        %3486 = vmatmul.mubr.f32.gmra.mrb[0].mxu0 %v3249
        %v3487 = vpop.f32.mrb[0].mxu0
        %v3488 = vadd.f32 %v3068, %v3487
        %v3489 = vpop.f32.mrb[0].mxu0
        %3490 = vmatprep.mubr.f32.mxu0 0.0
        %3491 = vmatmul.mubr.f32.gmra.mrb[0].mxu0 %v3252
        %v3492 = vpop.f32.mrb[0].mxu0
        %v3493 = vadd.f32 %v3073, %v3492
        %v3494 = vpop.f32.mrb[0].mxu0
        %3495 = vmatprep.mubr.f32.mxu0 0.0
        %3496 = vmatmul.mubr.f32.gmra.mrb[0].mxu0 %v3255
        %v3497 = vpop.f32.mrb[0].mxu0
        %v3498 = vadd.f32 %v3078, %v3497
        %v3499 = vpop.f32.mrb[0].mxu0
        %3500 = vmatprep.mubr.f32.mxu0 0.0
        %3501 = vmatmul.mubr.f32.gmra.mrb[0].mxu0 %v3258
        %v3502 = vpop.f32.mrb[0].mxu0
        %v3503 = vadd.f32 %v3083, %v3502
        %v3504 = vpop.f32.mrb[0].mxu0
        %3505 = vmatprep.mubr.f32.mxu0 0.0
        %3506 = vmatmul.mubr.f32.gmra.mrb[0].mxu0 %v3261
        %v3507 = vpop.f32.mrb[0].mxu0
        %v3508 = vadd.f32 %v3088, %v3507
        %v3509 = vpop.f32.mrb[0].mxu0
        %3510 = vmatprep.mubr.f32.mxu0 0.0
        %3511 = vmatmul.mubr.f32.gmra.mrb[0].mxu0 %v3264
        %v3512 = vpop.f32.mrb[0].mxu0
        %v3513 = vadd.f32 %v3093, %v3512
        %v3514 = vpop.f32.mrb[0].mxu0
        %3515 = vmatprep.mubr.f32.mxu0 0.0
        %3516 = vmatmul.mubr.f32.gmra.mrb[0].mxu0 %v3267
        %v3517 = vpop.f32.mrb[0].mxu0
        %v3518 = vadd.f32 %v3098, %v3517
        %v3519 = vpop.f32.mrb[0].mxu0
        %3520 = vmatprep.mubr.f32.mxu0 0.0
        %3521 = vmatmul.mubr.f32.gmra.mrb[0].mxu0 %v3270
        %v3522 = vpop.f32.mrb[0].mxu0
        %v3523 = vadd.f32 %v3103, %v3522
        %v3524 = vpop.f32.mrb[0].mxu0
        %3525 = vmatprep.mubr.f32.mxu0 0.0
        %3526 = vmatmul.mubr.f32.gmra.mrb[0].mxu0 %v3273
        %v3527 = vpop.f32.mrb[0].mxu0
        %v3528 = vadd.f32 %v3108, %v3527
        %v3529 = vpop.f32.mrb[0].mxu0
        %3530 = vmatprep.mubr.f32.mxu0 0.0
        %3531 = vmatmul.mubr.f32.gmra.mrb[0].mxu0 %v3276
        %v3532 = vpop.f32.mrb[0].mxu0
        %v3533 = vadd.f32 %v3113, %v3532
        %v3534 = vpop.f32.mrb[0].mxu0
        %3535 = vmatprep.mubr.f32.mxu0 0.0
        %3536 = vmatmul.mubr.f32.gmra.mrb[0].mxu0 %v3279
        %v3537 = vpop.f32.mrb[0].mxu0
        %v3538 = vadd.f32 %v3118, %v3537
        %v3539 = vpop.f32.mrb[0].mxu0
        %3540 = vmatprep.mubr.f32.mxu0 0.0
        %3541 = vmatmul.mubr.f32.gmra.mrb[0].mxu0 %v3282
        %v3542 = vpop.f32.mrb[0].mxu0
        %v3543 = vadd.f32 %v3123, %v3542
        %v3544 = vpop.f32.mrb[0].mxu0
        %3545 = vmatprep.mubr.f32.mxu0 0.0
        %3546 = vmatmul.mubr.f32.gmra.mrb[0].mxu0 %v3285
        %v3547 = vpop.f32.mrb[0].mxu0
        %v3548 = vadd.f32 %v3128, %v3547
        %v3549 = vpop.f32.mrb[0].mxu0
        %3550 = vmatprep.mubr.f32.mxu0 0.0
        %3551 = vmatmul.mubr.f32.gmra.mrb[0].mxu0 %v3288
        %v3552 = vpop.f32.mrb[0].mxu0
        %v3553 = vadd.f32 %v3133, %v3552
        %v3554 = vpop.f32.mrb[0].mxu0
        %3555 = vmatprep.mubr.f32.mxu0 0.0
        %3556 = vmatmul.mubr.f32.gmra.mrb[0].mxu0 %v3291
        %v3557 = vpop.f32.mrb[0].mxu0
        %v3558 = vadd.f32 %v3138, %v3557
        %v3559 = vpop.f32.mrb[0].mxu0
        %3560 = vmatprep.mubr.f32.mxu0 0.0
        %3561 = vmatmul.mubr.f32.gmra.mrb[0].mxu0 %v3294
        %v3562 = vpop.f32.mrb[0].mxu0
        %v3563 = vadd.f32 %v3143, %v3562
        %v3564 = vpop.f32.mrb[0].mxu0
        %3565 = vmatprep.mubr.f32.mxu0 0.0
        %3566 = vmatmul.mubr.f32.gmra.mrb[0].mxu0 %v3297
        %v3567 = vpop.f32.mrb[0].mxu0
        %v3568 = vadd.f32 %v3148, %v3567
        %v3569 = vpop.f32.mrb[0].mxu0
        %3570 = vmatprep.mubr.f32.mxu0 0.0
        %3571 = vmatmul.mubr.f32.gmra.mrb[0].mxu0 %v3300
        %v3572 = vpop.f32.mrb[0].mxu0
        %v3573 = vadd.f32 %v3153, %v3572
        %v3574 = vpop.f32.mrb[0].mxu0
        %3575 = vmatprep.mubr.f32.mxu0 0.0
        %3576 = vmatmul.mubr.f32.gmra.mrb[0].mxu0 %v3303
        %v3577 = vpop.f32.mrb[0].mxu0
        %v3578 = vadd.f32 %v3158, %v3577
        %v3579 = vpop.f32.mrb[0].mxu0
        %3580 = vmatprep.mubr.f32.mxu0 0.0
        %3581 = vmatmul.mubr.f32.gmra.mrb[0].mxu0 %v3306
        %v3582 = vpop.f32.mrb[0].mxu0
        %v3583 = vadd.f32 %v3163, %v3582
        %v3584 = vpop.f32.mrb[0].mxu0
        %3585 = vmatprep.mubr.f32.mxu0 0.0
        %3586 = vmatmul.mubr.f32.gmra.mrb[0].mxu0 %v3309
        %v3587 = vpop.f32.mrb[0].mxu0
        %v3588 = vadd.f32 %v3168, %v3587
        %v3589 = vpop.f32.mrb[0].mxu0
        %3590 = vmatprep.mubr.f32.mxu0 0.0
        %3591 = vmatmul.mubr.f32.gmra.mrb[0].mxu0 %v3312
        %v3592 = vpop.f32.mrb[0].mxu0
        %v3593 = vadd.f32 %v3173, %v3592
        %v3594 = vpop.f32.mrb[0].mxu0
        %3595 = vmatprep.mubr.f32.mxu0 0.0
        %3596 = vmatmul.mubr.f32.gmra.mrb[0].mxu0 %v3315
        %v3597 = vpop.f32.mrb[0].mxu0
        %v3598 = vadd.f32 %v3178, %v3597
        %v3599 = vpop.f32.mrb[0].mxu0
        %3600 = vmatprep.mubr.f32.mxu0 0.0
        %3601 = vmatmul.mubr.f32.gmra.mrb[0].mxu0 %v3318
        %v3602 = vpop.f32.mrb[0].mxu0
        %v3603 = vadd.f32 %v3183, %v3602
        %v3604 = vpop.f32.mrb[0].mxu0
        %3605 = vmatprep.mubr.f32.mxu0 0.0
        %3606 = vmatmul.mubr.f32.gmra.mrb[0].mxu0 %v3321
        %v3607 = vpop.f32.mrb[0].mxu0
        %v3608 = vadd.f32 %v3188, %v3607
        %v3609 = vpop.f32.mrb[0].mxu0
        %3610 = vdwg.mxu0
        %v3611 = vld [vmem:[#allocation3 + $0x2] sm:$0xff]
        %v3612 = vld [vmem:[#allocation3 + $0xa] sm:$0xff]
        %v3613 = vld [vmem:[#allocation3 + $0x12] sm:$0xff]
        %v3614 = vld [vmem:[#allocation3 + $0x1a] sm:$0xff]
        %v3615 = vld [vmem:[#allocation3 + $0x22] sm:$0xff]
        %v3616 = vld [vmem:[#allocation3 + $0x2a] sm:$0xff]
        %v3617 = vld [vmem:[#allocation3 + $0x32] sm:$0xff]
        %v3618 = vld [vmem:[#allocation3 + $0x3a] sm:$0xff]
        %v3619 = vld [vmem:[#allocation3 + $0x42] sm:$0xff]
        %v3620 = vld [vmem:[#allocation3 + $0x4a] sm:$0xff]
        %v3621 = vld [vmem:[#allocation3 + $0x52] sm:$0xff]
        %v3622 = vld [vmem:[#allocation3 + $0x5a] sm:$0xff]
        %v3623 = vld [vmem:[#allocation3 + $0x62] sm:$0xff]
        %v3624 = vld [vmem:[#allocation3 + $0x6a] sm:$0xff]
        %v3625 = vld [vmem:[#allocation3 + $0x72] sm:$0xff]
        %v3626 = vld [vmem:[#allocation3 + $0x7a] sm:$0xff]
        %v3627 = vld [vmem:[#allocation3 + $0x82] sm:$0xff]
        %v3628 = vld [vmem:[#allocation3 + $0x8a] sm:$0xff]
        %v3629 = vld [vmem:[#allocation3 + $0x92] sm:$0xff]
        %v3630 = vld [vmem:[#allocation3 + $0x9a] sm:$0xff]
        %v3631 = vld [vmem:[#allocation3 + $0xa2] sm:$0xff]
        %v3632 = vld [vmem:[#allocation3 + $0xaa] sm:$0xff]
        %v3633 = vld [vmem:[#allocation3 + $0xb2] sm:$0xff]
        %v3634 = vld [vmem:[#allocation3 + $0xba] sm:$0xff]
        %v3635 = vld [vmem:[#allocation3 + $0xc2] sm:$0xff]
        %v3636 = vld [vmem:[#allocation3 + $0xca] sm:$0xff]
        %v3637 = vld [vmem:[#allocation3 + $0xd2] sm:$0xff]
        %v3638 = vld [vmem:[#allocation3 + $0xda] sm:$0xff]
        %v3639 = vld [vmem:[#allocation3 + $0xe2] sm:$0xff]
        %v3640 = vld [vmem:[#allocation3 + $0xea] sm:$0xff]
        %v3641 = vld [vmem:[#allocation3 + $0xf2] sm:$0xff]
        %v3642 = vld [vmem:[#allocation3 + $0xfa] sm:$0xff]
        %v3643 = vld [vmem:[#allocation3 + $0x102] sm:$0xff]
        %v3644 = vld [vmem:[#allocation3 + $0x10a] sm:$0xff]
        %v3645 = vld [vmem:[#allocation3 + $0x112] sm:$0xff]
        %v3646 = vld [vmem:[#allocation3 + $0x11a] sm:$0xff]
        %v3647 = vld [vmem:[#allocation3 + $0x122] sm:$0xff]
        %v3648 = vld [vmem:[#allocation3 + $0x12a] sm:$0xff]
        %v3649 = vld [vmem:[#allocation3 + $0x132] sm:$0xff]
        %v3650 = vld [vmem:[#allocation3 + $0x13a] sm:$0xff]
        %v3651 = vld [vmem:[#allocation3 + $0x142] sm:$0xff]
        %v3652 = vld [vmem:[#allocation3 + $0x14a] sm:$0xff]
        %v3653 = vld [vmem:[#allocation3 + $0x152] sm:$0xff]
        %v3654 = vld [vmem:[#allocation3 + $0x15a] sm:$0x1]
        %s3655 = scalar_lea.vmem %s4, 32
        %v3656 = vld [vmem:[%s3655] sm:$0xff]
        %v3657 = vld [vmem:[%s3655 + $0x8] sm:$0x3]
        %v3659 = vsel %vm625, %v3611, 0
        %v3662 = vsel %vm625, %v3612, 0
        %v3665 = vsel %vm625, %v3613, 0
        %v3668 = vsel %vm625, %v3614, 0
        %v3671 = vsel %vm625, %v3615, 0
        %v3674 = vsel %vm625, %v3616, 0
        %v3677 = vsel %vm625, %v3617, 0
        %v3680 = vsel %vm625, %v3618, 0
        %v3683 = vsel %vm625, %v3619, 0
        %v3686 = vsel %vm625, %v3620, 0
        %v3689 = vsel %vm625, %v3621, 0
        %v3692 = vsel %vm625, %v3622, 0
        %v3695 = vsel %vm625, %v3623, 0
        %v3698 = vsel %vm625, %v3624, 0
        %v3701 = vsel %vm625, %v3625, 0
        %v3704 = vsel %vm625, %v3626, 0
        %v3707 = vsel %vm625, %v3627, 0
        %v3710 = vsel %vm625, %v3628, 0
        %v3713 = vsel %vm625, %v3629, 0
        %v3716 = vsel %vm625, %v3630, 0
        %v3719 = vsel %vm625, %v3631, 0
        %v3722 = vsel %vm625, %v3632, 0
        %v3725 = vsel %vm625, %v3633, 0
        %v3728 = vsel %vm625, %v3634, 0
        %v3731 = vsel %vm625, %v3635, 0
        %v3734 = vsel %vm625, %v3636, 0
        %v3737 = vsel %vm625, %v3637, 0
        %v3740 = vsel %vm625, %v3638, 0
        %v3743 = vsel %vm625, %v3639, 0
        %v3746 = vsel %vm625, %v3640, 0
        %v3749 = vsel %vm625, %v3641, 0
        %v3752 = vsel %vm625, %v3642, 0
        %v3755 = vsel %vm625, %v3643, 0
        %v3758 = vsel %vm625, %v3644, 0
        %v3761 = vsel %vm625, %v3645, 0
        %v3764 = vsel %vm625, %v3646, 0
        %v3767 = vsel %vm625, %v3647, 0
        %v3770 = vsel %vm625, %v3648, 0
        %v3773 = vsel %vm625, %v3649, 0
        %v3776 = vsel %vm625, %v3650, 0
        %v3779 = vsel %vm625, %v3651, 0
        %v3782 = vsel %vm625, %v3652, 0
        %v3785 = vsel %vm625, %v3653, 0
        %v3788 = vsel %vm625, %v3654, 0
        %v3791 = vsel %vm1019, %v3657, 0
        %3793 = vmatprep.subr.mxu0 0.0
        %3794 = vmatpush1.msra.mxu0 %v3656
        %3795 = vmatprep.subr.mxu0 0.0
        %3796 = vmatpush1.msra.mxu0 %v3791
        %3797 = vmatprep.subr.mxu0 0.0
        %3798 = vmatpush1.msra.mxu0 0.0
        %3799 = vmatprep.subr.mxu0 0.0
        %3800 = vmatpush1.msra.mxu0 0.0
        %3801 = vmatprep.subr.mxu0 0.0
        %3802 = vmatpush1.msra.mxu0 0.0
        %3803 = vmatprep.subr.mxu0 0.0
        %3804 = vmatpush1.msra.mxu0 0.0
        %3805 = vmatprep.subr.mxu0 0.0
        %3806 = vmatpush1.msra.mxu0 0.0
        %3807 = vmatprep.subr.mxu0 0.0
        %3808 = vmatpush1.msra.mxu0 0.0
        %3809 = vmatprep.subr.mxu0 0.0
        %3810 = vmatpush1.msra.mxu0 0.0
        %3811 = vmatprep.subr.mxu0 0.0
        %3812 = vmatpush1.msra.mxu0 0.0
        %3813 = vmatprep.subr.mxu0 0.0
        %3814 = vmatpush1.msra.mxu0 0.0
        %3815 = vmatprep.subr.mxu0 0.0
        %3816 = vmatpush1.msra.mxu0 0.0
        %3817 = vmatprep.subr.mxu0 0.0
        %3818 = vmatpush1.msra.mxu0 0.0
        %3819 = vmatprep.subr.mxu0 0.0
        %3820 = vmatpush1.msra.mxu0 0.0
        %3821 = vmatprep.subr.mxu0 0.0
        %3822 = vmatpush1.msra.mxu0 0.0
        %3823 = vmatprep.subr.mxu0 0.0
        %3824 = vmatpush1.msra.mxu0 0.0
        %3825 = vmatprep.subr.mxu0 0.0
        %3826 = vmatpush1.msra.mxu0 0.0
        %3827 = vmatprep.subr.mxu0 0.0
        %3828 = vmatpush1.msra.mxu0 0.0
        %3829 = vmatprep.subr.mxu0 0.0
        %3830 = vmatpush1.msra.mxu0 0.0
        %3831 = vmatprep.subr.mxu0 0.0
        %3832 = vmatpush1.msra.mxu0 0.0
        %3833 = vmatprep.subr.mxu0 0.0
        %3834 = vmatpush1.msra.mxu0 0.0
        %3835 = vmatprep.subr.mxu0 0.0
        %3836 = vmatpush1.msra.mxu0 0.0
        %3837 = vmatprep.subr.mxu0 0.0
        %3838 = vmatpush1.msra.mxu0 0.0
        %3839 = vmatprep.subr.mxu0 0.0
        %3840 = vmatpush1.msra.mxu0 0.0
        %3841 = vmatprep.subr.mxu0 0.0
        %3842 = vmatpush1.msra.mxu0 0.0
        %3843 = vmatprep.subr.mxu0 0.0
        %3844 = vmatpush1.msra.mxu0 0.0
        %3845 = vmatprep.subr.mxu0 0.0
        %3846 = vmatpush1.msra.mxu0 0.0
        %3847 = vmatprep.subr.mxu0 0.0
        %3848 = vmatpush1.msra.mxu0 0.0
        %3849 = vmatprep.subr.mxu0 0.0
        %3850 = vmatpush1.msra.mxu0 0.0
        %3851 = vmatprep.subr.mxu0 0.0
        %3852 = vmatpush1.msra.mxu0 0.0
        %3853 = vmatprep.subr.mxu0 0.0
        %3854 = vmatpush1.msra.mxu0 0.0
        %3855 = vmatprep.subr.mxu0 0.0
        %3856 = vmatpush1.msra.mxu0 0.0
        %3857 = vmatprep.mubr.f32.mxu0 0.0
        %3858 = vmatmul.mubr.f32.gmra.mrb[0].mxu0 %v3659
        %v3859 = vpop.f32.mrb[0].mxu0
        %v3860 = vadd.f32 0.0, %v3859
        %v3861 = vpop.f32.mrb[0].mxu0
        %3862 = vmatprep.mubr.f32.mxu0 0.0
        %3863 = vmatmul.mubr.f32.gmra.mrb[0].mxu0 %v3662
        %v3864 = vpop.f32.mrb[0].mxu0
        %v3865 = vadd.f32 0.0, %v3864
        %v3866 = vpop.f32.mrb[0].mxu0
        %3867 = vmatprep.mubr.f32.mxu0 0.0
        %3868 = vmatmul.mubr.f32.gmra.mrb[0].mxu0 %v3665
        %v3869 = vpop.f32.mrb[0].mxu0
        %v3870 = vadd.f32 0.0, %v3869
        %v3871 = vpop.f32.mrb[0].mxu0
        %3872 = vmatprep.mubr.f32.mxu0 0.0
        %3873 = vmatmul.mubr.f32.gmra.mrb[0].mxu0 %v3668
        %v3874 = vpop.f32.mrb[0].mxu0
        %v3875 = vadd.f32 0.0, %v3874
        %v3876 = vpop.f32.mrb[0].mxu0
        %3877 = vmatprep.mubr.f32.mxu0 0.0
        %3878 = vmatmul.mubr.f32.gmra.mrb[0].mxu0 %v3671
        %v3879 = vpop.f32.mrb[0].mxu0
        %v3880 = vadd.f32 0.0, %v3879
        %v3881 = vpop.f32.mrb[0].mxu0
        %3882 = vmatprep.mubr.f32.mxu0 0.0
        %3883 = vmatmul.mubr.f32.gmra.mrb[0].mxu0 %v3674
        %v3884 = vpop.f32.mrb[0].mxu0
        %v3885 = vadd.f32 0.0, %v3884
        %v3886 = vpop.f32.mrb[0].mxu0
        %3887 = vmatprep.mubr.f32.mxu0 0.0
        %3888 = vmatmul.mubr.f32.gmra.mrb[0].mxu0 %v3677
        %v3889 = vpop.f32.mrb[0].mxu0
        %v3890 = vadd.f32 0.0, %v3889
        %v3891 = vpop.f32.mrb[0].mxu0
        %3892 = vmatprep.mubr.f32.mxu0 0.0
        %3893 = vmatmul.mubr.f32.gmra.mrb[0].mxu0 %v3680
        %v3894 = vpop.f32.mrb[0].mxu0
        %v3895 = vadd.f32 0.0, %v3894
        %v3896 = vpop.f32.mrb[0].mxu0
        %3897 = vmatprep.mubr.f32.mxu0 0.0
        %3898 = vmatmul.mubr.f32.gmra.mrb[0].mxu0 %v3683
        %v3899 = vpop.f32.mrb[0].mxu0
        %v3900 = vadd.f32 0.0, %v3899
        %v3901 = vpop.f32.mrb[0].mxu0
        %3902 = vmatprep.mubr.f32.mxu0 0.0
        %3903 = vmatmul.mubr.f32.gmra.mrb[0].mxu0 %v3686
        %v3904 = vpop.f32.mrb[0].mxu0
        %v3905 = vadd.f32 0.0, %v3904
        %v3906 = vpop.f32.mrb[0].mxu0
        %3907 = vmatprep.mubr.f32.mxu0 0.0
        %3908 = vmatmul.mubr.f32.gmra.mrb[0].mxu0 %v3689
        %v3909 = vpop.f32.mrb[0].mxu0
        %v3910 = vadd.f32 0.0, %v3909
        %v3911 = vpop.f32.mrb[0].mxu0
        %3912 = vmatprep.mubr.f32.mxu0 0.0
        %3913 = vmatmul.mubr.f32.gmra.mrb[0].mxu0 %v3692
        %v3914 = vpop.f32.mrb[0].mxu0
        %v3915 = vadd.f32 0.0, %v3914
        %v3916 = vpop.f32.mrb[0].mxu0
        %3917 = vmatprep.mubr.f32.mxu0 0.0
        %3918 = vmatmul.mubr.f32.gmra.mrb[0].mxu0 %v3695
        %v3919 = vpop.f32.mrb[0].mxu0
        %v3920 = vadd.f32 0.0, %v3919
        %v3921 = vpop.f32.mrb[0].mxu0
        %3922 = vmatprep.mubr.f32.mxu0 0.0
        %3923 = vmatmul.mubr.f32.gmra.mrb[0].mxu0 %v3698
        %v3924 = vpop.f32.mrb[0].mxu0
        %v3925 = vadd.f32 0.0, %v3924
        %v3926 = vpop.f32.mrb[0].mxu0
        %3927 = vmatprep.mubr.f32.mxu0 0.0
        %3928 = vmatmul.mubr.f32.gmra.mrb[0].mxu0 %v3701
        %v3929 = vpop.f32.mrb[0].mxu0
        %v3930 = vadd.f32 0.0, %v3929
        %v3931 = vpop.f32.mrb[0].mxu0
        %3932 = vmatprep.mubr.f32.mxu0 0.0
        %3933 = vmatmul.mubr.f32.gmra.mrb[0].mxu0 %v3704
        %v3934 = vpop.f32.mrb[0].mxu0
        %v3935 = vadd.f32 0.0, %v3934
        %v3936 = vpop.f32.mrb[0].mxu0
        %3937 = vmatprep.mubr.f32.mxu0 0.0
        %3938 = vmatmul.mubr.f32.gmra.mrb[0].mxu0 %v3707
        %v3939 = vpop.f32.mrb[0].mxu0
        %v3940 = vadd.f32 0.0, %v3939
        %v3941 = vpop.f32.mrb[0].mxu0
        %3942 = vmatprep.mubr.f32.mxu0 0.0
        %3943 = vmatmul.mubr.f32.gmra.mrb[0].mxu0 %v3710
        %v3944 = vpop.f32.mrb[0].mxu0
        %v3945 = vadd.f32 0.0, %v3944
        %v3946 = vpop.f32.mrb[0].mxu0
        %3947 = vmatprep.mubr.f32.mxu0 0.0
        %3948 = vmatmul.mubr.f32.gmra.mrb[0].mxu0 %v3713
        %v3949 = vpop.f32.mrb[0].mxu0
        %v3950 = vadd.f32 0.0, %v3949
        %v3951 = vpop.f32.mrb[0].mxu0
        %3952 = vmatprep.mubr.f32.mxu0 0.0
        %3953 = vmatmul.mubr.f32.gmra.mrb[0].mxu0 %v3716
        %v3954 = vpop.f32.mrb[0].mxu0
        %v3955 = vadd.f32 0.0, %v3954
        %v3956 = vpop.f32.mrb[0].mxu0
        %3957 = vmatprep.mubr.f32.mxu0 0.0
        %3958 = vmatmul.mubr.f32.gmra.mrb[0].mxu0 %v3719
        %v3959 = vpop.f32.mrb[0].mxu0
        %v3960 = vadd.f32 0.0, %v3959
        %v3961 = vpop.f32.mrb[0].mxu0
        %3962 = vmatprep.mubr.f32.mxu0 0.0
        %3963 = vmatmul.mubr.f32.gmra.mrb[0].mxu0 %v3722
        %v3964 = vpop.f32.mrb[0].mxu0
        %v3965 = vadd.f32 0.0, %v3964
        %v3966 = vpop.f32.mrb[0].mxu0
        %3967 = vmatprep.mubr.f32.mxu0 0.0
        %3968 = vmatmul.mubr.f32.gmra.mrb[0].mxu0 %v3725
        %v3969 = vpop.f32.mrb[0].mxu0
        %v3970 = vadd.f32 0.0, %v3969
        %v3971 = vpop.f32.mrb[0].mxu0
        %3972 = vmatprep.mubr.f32.mxu0 0.0
        %3973 = vmatmul.mubr.f32.gmra.mrb[0].mxu0 %v3728
        %v3974 = vpop.f32.mrb[0].mxu0
        %v3975 = vadd.f32 0.0, %v3974
        %v3976 = vpop.f32.mrb[0].mxu0
        %3977 = vmatprep.mubr.f32.mxu0 0.0
        %3978 = vmatmul.mubr.f32.gmra.mrb[0].mxu0 %v3731
        %v3979 = vpop.f32.mrb[0].mxu0
        %v3980 = vadd.f32 0.0, %v3979
        %v3981 = vpop.f32.mrb[0].mxu0
        %3982 = vmatprep.mubr.f32.mxu0 0.0
        %3983 = vmatmul.mubr.f32.gmra.mrb[0].mxu0 %v3734
        %v3984 = vpop.f32.mrb[0].mxu0
        %v3985 = vadd.f32 0.0, %v3984
        %v3986 = vpop.f32.mrb[0].mxu0
        %3987 = vmatprep.mubr.f32.mxu0 0.0
        %3988 = vmatmul.mubr.f32.gmra.mrb[0].mxu0 %v3737
        %v3989 = vpop.f32.mrb[0].mxu0
        %v3990 = vadd.f32 0.0, %v3989
        %v3991 = vpop.f32.mrb[0].mxu0
        %3992 = vmatprep.mubr.f32.mxu0 0.0
        %3993 = vmatmul.mubr.f32.gmra.mrb[0].mxu0 %v3740
        %v3994 = vpop.f32.mrb[0].mxu0
        %v3995 = vadd.f32 0.0, %v3994
        %v3996 = vpop.f32.mrb[0].mxu0
        %3997 = vmatprep.mubr.f32.mxu0 0.0
        %3998 = vmatmul.mubr.f32.gmra.mrb[0].mxu0 %v3743
        %v3999 = vpop.f32.mrb[0].mxu0
        %v4000 = vadd.f32 0.0, %v3999
        %v4001 = vpop.f32.mrb[0].mxu0
        %4002 = vmatprep.mubr.f32.mxu0 0.0
        %4003 = vmatmul.mubr.f32.gmra.mrb[0].mxu0 %v3746
        %v4004 = vpop.f32.mrb[0].mxu0
        %v4005 = vadd.f32 0.0, %v4004
        %v4006 = vpop.f32.mrb[0].mxu0
        %4007 = vmatprep.mubr.f32.mxu0 0.0
        %4008 = vmatmul.mubr.f32.gmra.mrb[0].mxu0 %v3749
        %v4009 = vpop.f32.mrb[0].mxu0
        %v4010 = vadd.f32 0.0, %v4009
        %v4011 = vpop.f32.mrb[0].mxu0
        %4012 = vmatprep.mubr.f32.mxu0 0.0
        %4013 = vmatmul.mubr.f32.gmra.mrb[0].mxu0 %v3752
        %v4014 = vpop.f32.mrb[0].mxu0
        %v4015 = vadd.f32 0.0, %v4014
        %v4016 = vpop.f32.mrb[0].mxu0
        %4017 = vmatprep.mubr.f32.mxu0 0.0
        %4018 = vmatmul.mubr.f32.gmra.mrb[0].mxu0 %v3755
        %v4019 = vpop.f32.mrb[0].mxu0
        %v4020 = vadd.f32 0.0, %v4019
        %v4021 = vpop.f32.mrb[0].mxu0
        %4022 = vmatprep.mubr.f32.mxu0 0.0
        %4023 = vmatmul.mubr.f32.gmra.mrb[0].mxu0 %v3758
        %v4024 = vpop.f32.mrb[0].mxu0
        %v4025 = vadd.f32 0.0, %v4024
        %v4026 = vpop.f32.mrb[0].mxu0
        %4027 = vmatprep.mubr.f32.mxu0 0.0
        %4028 = vmatmul.mubr.f32.gmra.mrb[0].mxu0 %v3761
        %v4029 = vpop.f32.mrb[0].mxu0
        %v4030 = vadd.f32 0.0, %v4029
        %v4031 = vpop.f32.mrb[0].mxu0
        %4032 = vmatprep.mubr.f32.mxu0 0.0
        %4033 = vmatmul.mubr.f32.gmra.mrb[0].mxu0 %v3764
        %v4034 = vpop.f32.mrb[0].mxu0
        %v4035 = vadd.f32 0.0, %v4034
        %v4036 = vpop.f32.mrb[0].mxu0
        %4037 = vmatprep.mubr.f32.mxu0 0.0
        %4038 = vmatmul.mubr.f32.gmra.mrb[0].mxu0 %v3767
        %v4039 = vpop.f32.mrb[0].mxu0
        %v4040 = vadd.f32 0.0, %v4039
        %v4041 = vpop.f32.mrb[0].mxu0
        %4042 = vmatprep.mubr.f32.mxu0 0.0
        %4043 = vmatmul.mubr.f32.gmra.mrb[0].mxu0 %v3770
        %v4044 = vpop.f32.mrb[0].mxu0
        %v4045 = vadd.f32 0.0, %v4044
        %v4046 = vpop.f32.mrb[0].mxu0
        %4047 = vmatprep.mubr.f32.mxu0 0.0
        %4048 = vmatmul.mubr.f32.gmra.mrb[0].mxu0 %v3773
        %v4049 = vpop.f32.mrb[0].mxu0
        %v4050 = vadd.f32 0.0, %v4049
        %v4051 = vpop.f32.mrb[0].mxu0
        %4052 = vmatprep.mubr.f32.mxu0 0.0
        %4053 = vmatmul.mubr.f32.gmra.mrb[0].mxu0 %v3776
        %v4054 = vpop.f32.mrb[0].mxu0
        %v4055 = vadd.f32 0.0, %v4054
        %v4056 = vpop.f32.mrb[0].mxu0
        %4057 = vmatprep.mubr.f32.mxu0 0.0
        %4058 = vmatmul.mubr.f32.gmra.mrb[0].mxu0 %v3779
        %v4059 = vpop.f32.mrb[0].mxu0
        %v4060 = vadd.f32 0.0, %v4059
        %v4061 = vpop.f32.mrb[0].mxu0
        %4062 = vmatprep.mubr.f32.mxu0 0.0
        %4063 = vmatmul.mubr.f32.gmra.mrb[0].mxu0 %v3782
        %v4064 = vpop.f32.mrb[0].mxu0
        %v4065 = vadd.f32 0.0, %v4064
        %v4066 = vpop.f32.mrb[0].mxu0
        %4067 = vmatprep.mubr.f32.mxu0 0.0
        %4068 = vmatmul.mubr.f32.gmra.mrb[0].mxu0 %v3785
        %v4069 = vpop.f32.mrb[0].mxu0
        %v4070 = vadd.f32 0.0, %v4069
        %v4071 = vpop.f32.mrb[0].mxu0
        %4072 = vmatprep.mubr.f32.mxu0 0.0
        %4073 = vmatmul.mubr.f32.gmra.mrb[0].mxu0 %v3788
        %v4074 = vpop.f32.mrb[0].mxu0
        %v4075 = vadd.f32 0.0, %v4074
        %v4076 = vpop.f32.mrb[0].mxu0
        %4077 = vdwg.mxu0
        %v4078 = vadd.f32 %v3393, %v3860
        %v4079 = vadd.f32 %v3398, %v3865
        %v4080 = vadd.f32 %v3403, %v3870
        %v4081 = vadd.f32 %v3408, %v3875
        %v4082 = vadd.f32 %v3413, %v3880
        %v4083 = vadd.f32 %v3418, %v3885
        %v4084 = vadd.f32 %v3423, %v3890
        %v4085 = vadd.f32 %v3428, %v3895
        %v4086 = vadd.f32 %v3433, %v3900
        %v4087 = vadd.f32 %v3438, %v3905
        %v4088 = vadd.f32 %v3443, %v3910
        %v4089 = vadd.f32 %v3448, %v3915
        %v4090 = vadd.f32 %v3453, %v3920
        %v4091 = vadd.f32 %v3458, %v3925
        %v4092 = vadd.f32 %v3463, %v3930
        %v4093 = vadd.f32 %v3468, %v3935
        %v4094 = vadd.f32 %v3473, %v3940
        %v4095 = vadd.f32 %v3478, %v3945
        %v4096 = vadd.f32 %v3483, %v3950
        %v4097 = vadd.f32 %v3488, %v3955
        %v4098 = vadd.f32 %v3493, %v3960
        %v4099 = vadd.f32 %v3498, %v3965
        %v4100 = vadd.f32 %v3503, %v3970
        %v4101 = vadd.f32 %v3508, %v3975
        %v4102 = vadd.f32 %v3513, %v3980
        %v4103 = vadd.f32 %v3518, %v3985
        %v4104 = vadd.f32 %v3523, %v3990
        %v4105 = vadd.f32 %v3528, %v3995
        %v4106 = vadd.f32 %v3533, %v4000
        %v4107 = vadd.f32 %v3538, %v4005
        %v4108 = vadd.f32 %v3543, %v4010
        %v4109 = vadd.f32 %v3548, %v4015
        %v4110 = vadd.f32 %v3553, %v4020
        %v4111 = vadd.f32 %v3558, %v4025
        %v4112 = vadd.f32 %v3563, %v4030
        %v4113 = vadd.f32 %v3568, %v4035
        %v4114 = vadd.f32 %v3573, %v4040
        %v4115 = vadd.f32 %v3578, %v4045
        %v4116 = vadd.f32 %v3583, %v4050
        %v4117 = vadd.f32 %v3588, %v4055
        %v4118 = vadd.f32 %v3593, %v4060
        %v4119 = vadd.f32 %v3598, %v4065
        %v4120 = vadd.f32 %v3603, %v4070
        %v4121 = vadd.f32 %v3608, %v4075
        %v4122 = vld [vmem:[#allocation3 + $0x3] sm:$0xff]
        %v4123 = vld [vmem:[#allocation3 + $0xb] sm:$0xff]
        %v4124 = vld [vmem:[#allocation3 + $0x13] sm:$0xff]
        %v4125 = vld [vmem:[#allocation3 + $0x1b] sm:$0xff]
        %v4126 = vld [vmem:[#allocation3 + $0x23] sm:$0xff]
        %v4127 = vld [vmem:[#allocation3 + $0x2b] sm:$0xff]
        %v4128 = vld [vmem:[#allocation3 + $0x33] sm:$0xff]
        %v4129 = vld [vmem:[#allocation3 + $0x3b] sm:$0xff]
        %v4130 = vld [vmem:[#allocation3 + $0x43] sm:$0xff]
        %v4131 = vld [vmem:[#allocation3 + $0x4b] sm:$0xff]
        %v4132 = vld [vmem:[#allocation3 + $0x53] sm:$0xff]
        %v4133 = vld [vmem:[#allocation3 + $0x5b] sm:$0xff]
        %v4134 = vld [vmem:[#allocation3 + $0x63] sm:$0xff]
        %v4135 = vld [vmem:[#allocation3 + $0x6b] sm:$0xff]
        %v4136 = vld [vmem:[#allocation3 + $0x73] sm:$0xff]
        %v4137 = vld [vmem:[#allocation3 + $0x7b] sm:$0xff]
        %v4138 = vld [vmem:[#allocation3 + $0x83] sm:$0xff]
        %v4139 = vld [vmem:[#allocation3 + $0x8b] sm:$0xff]
        %v4140 = vld [vmem:[#allocation3 + $0x93] sm:$0xff]
        %v4141 = vld [vmem:[#allocation3 + $0x9b] sm:$0xff]
        %v4142 = vld [vmem:[#allocation3 + $0xa3] sm:$0xff]
        %v4143 = vld [vmem:[#allocation3 + $0xab] sm:$0xff]
        %v4144 = vld [vmem:[#allocation3 + $0xb3] sm:$0xff]
        %v4145 = vld [vmem:[#allocation3 + $0xbb] sm:$0xff]
        %v4146 = vld [vmem:[#allocation3 + $0xc3] sm:$0xff]
        %v4147 = vld [vmem:[#allocation3 + $0xcb] sm:$0xff]
        %v4148 = vld [vmem:[#allocation3 + $0xd3] sm:$0xff]
        %v4149 = vld [vmem:[#allocation3 + $0xdb] sm:$0xff]
        %v4150 = vld [vmem:[#allocation3 + $0xe3] sm:$0xff]
        %v4151 = vld [vmem:[#allocation3 + $0xeb] sm:$0xff]
        %v4152 = vld [vmem:[#allocation3 + $0xf3] sm:$0xff]
        %v4153 = vld [vmem:[#allocation3 + $0xfb] sm:$0xff]
        %v4154 = vld [vmem:[#allocation3 + $0x103] sm:$0xff]
        %v4155 = vld [vmem:[#allocation3 + $0x10b] sm:$0xff]
        %v4156 = vld [vmem:[#allocation3 + $0x113] sm:$0xff]
        %v4157 = vld [vmem:[#allocation3 + $0x11b] sm:$0xff]
        %v4158 = vld [vmem:[#allocation3 + $0x123] sm:$0xff]
        %v4159 = vld [vmem:[#allocation3 + $0x12b] sm:$0xff]
        %v4160 = vld [vmem:[#allocation3 + $0x133] sm:$0xff]
        %v4161 = vld [vmem:[#allocation3 + $0x13b] sm:$0xff]
        %v4162 = vld [vmem:[#allocation3 + $0x143] sm:$0xff]
        %v4163 = vld [vmem:[#allocation3 + $0x14b] sm:$0xff]
        %v4164 = vld [vmem:[#allocation3 + $0x153] sm:$0xff]
        %v4165 = vld [vmem:[#allocation3 + $0x15b] sm:$0x1]
        %s4166 = scalar_lea.vmem %s4, 48
        %v4167 = vld [vmem:[%s4166] sm:$0xff]
        %v4168 = vld [vmem:[%s4166 + $0x8] sm:$0x3]
        %v4170 = vsel %vm625, %v4122, 0
        %v4173 = vsel %vm625, %v4123, 0
        %v4176 = vsel %vm625, %v4124, 0
        %v4179 = vsel %vm625, %v4125, 0
        %v4182 = vsel %vm625, %v4126, 0
        %v4185 = vsel %vm625, %v4127, 0
        %v4188 = vsel %vm625, %v4128, 0
        %v4191 = vsel %vm625, %v4129, 0
        %v4194 = vsel %vm625, %v4130, 0
        %v4197 = vsel %vm625, %v4131, 0
        %v4200 = vsel %vm625, %v4132, 0
        %v4203 = vsel %vm625, %v4133, 0
        %v4206 = vsel %vm625, %v4134, 0
        %v4209 = vsel %vm625, %v4135, 0
        %v4212 = vsel %vm625, %v4136, 0
        %v4215 = vsel %vm625, %v4137, 0
        %v4218 = vsel %vm625, %v4138, 0
        %v4221 = vsel %vm625, %v4139, 0
        %v4224 = vsel %vm625, %v4140, 0
        %v4227 = vsel %vm625, %v4141, 0
        %v4230 = vsel %vm625, %v4142, 0
        %v4233 = vsel %vm625, %v4143, 0
        %v4236 = vsel %vm625, %v4144, 0
        %v4239 = vsel %vm625, %v4145, 0
        %v4242 = vsel %vm625, %v4146, 0
        %v4245 = vsel %vm625, %v4147, 0
        %v4248 = vsel %vm625, %v4148, 0
        %v4251 = vsel %vm625, %v4149, 0
        %v4254 = vsel %vm625, %v4150, 0
        %v4257 = vsel %vm625, %v4151, 0
        %v4260 = vsel %vm625, %v4152, 0
        %v4263 = vsel %vm625, %v4153, 0
        %v4266 = vsel %vm625, %v4154, 0
        %v4269 = vsel %vm625, %v4155, 0
        %v4272 = vsel %vm625, %v4156, 0
        %v4275 = vsel %vm625, %v4157, 0
        %v4278 = vsel %vm625, %v4158, 0
        %v4281 = vsel %vm625, %v4159, 0
        %v4284 = vsel %vm625, %v4160, 0
        %v4287 = vsel %vm625, %v4161, 0
        %v4290 = vsel %vm625, %v4162, 0
        %v4293 = vsel %vm625, %v4163, 0
        %v4296 = vsel %vm625, %v4164, 0
        %v4299 = vsel %vm625, %v4165, 0
        %v4302 = vsel %vm1019, %v4168, 0
        %4304 = vmatprep.subr.mxu0 0.0
        %4305 = vmatpush1.msra.mxu0 %v4167
        %4306 = vmatprep.subr.mxu0 0.0
        %4307 = vmatpush1.msra.mxu0 %v4302
        %4308 = vmatprep.subr.mxu0 0.0
        %4309 = vmatpush1.msra.mxu0 0.0
        %4310 = vmatprep.subr.mxu0 0.0
        %4311 = vmatpush1.msra.mxu0 0.0
        %4312 = vmatprep.subr.mxu0 0.0
        %4313 = vmatpush1.msra.mxu0 0.0
        %4314 = vmatprep.subr.mxu0 0.0
        %4315 = vmatpush1.msra.mxu0 0.0
        %4316 = vmatprep.subr.mxu0 0.0
        %4317 = vmatpush1.msra.mxu0 0.0
        %4318 = vmatprep.subr.mxu0 0.0
        %4319 = vmatpush1.msra.mxu0 0.0
        %4320 = vmatprep.subr.mxu0 0.0
        %4321 = vmatpush1.msra.mxu0 0.0
        %4322 = vmatprep.subr.mxu0 0.0
        %4323 = vmatpush1.msra.mxu0 0.0
        %4324 = vmatprep.subr.mxu0 0.0
        %4325 = vmatpush1.msra.mxu0 0.0
        %4326 = vmatprep.subr.mxu0 0.0
        %4327 = vmatpush1.msra.mxu0 0.0
        %4328 = vmatprep.subr.mxu0 0.0
        %4329 = vmatpush1.msra.mxu0 0.0
        %4330 = vmatprep.subr.mxu0 0.0
        %4331 = vmatpush1.msra.mxu0 0.0
        %4332 = vmatprep.subr.mxu0 0.0
        %4333 = vmatpush1.msra.mxu0 0.0
        %4334 = vmatprep.subr.mxu0 0.0
        %4335 = vmatpush1.msra.mxu0 0.0
        %4336 = vmatprep.subr.mxu0 0.0
        %4337 = vmatpush1.msra.mxu0 0.0
        %4338 = vmatprep.subr.mxu0 0.0
        %4339 = vmatpush1.msra.mxu0 0.0
        %4340 = vmatprep.subr.mxu0 0.0
        %4341 = vmatpush1.msra.mxu0 0.0
        %4342 = vmatprep.subr.mxu0 0.0
        %4343 = vmatpush1.msra.mxu0 0.0
        %4344 = vmatprep.subr.mxu0 0.0
        %4345 = vmatpush1.msra.mxu0 0.0
        %4346 = vmatprep.subr.mxu0 0.0
        %4347 = vmatpush1.msra.mxu0 0.0
        %4348 = vmatprep.subr.mxu0 0.0
        %4349 = vmatpush1.msra.mxu0 0.0
        %4350 = vmatprep.subr.mxu0 0.0
        %4351 = vmatpush1.msra.mxu0 0.0
        %4352 = vmatprep.subr.mxu0 0.0
        %4353 = vmatpush1.msra.mxu0 0.0
        %4354 = vmatprep.subr.mxu0 0.0
        %4355 = vmatpush1.msra.mxu0 0.0
        %4356 = vmatprep.subr.mxu0 0.0
        %4357 = vmatpush1.msra.mxu0 0.0
        %4358 = vmatprep.subr.mxu0 0.0
        %4359 = vmatpush1.msra.mxu0 0.0
        %4360 = vmatprep.subr.mxu0 0.0
        %4361 = vmatpush1.msra.mxu0 0.0
        %4362 = vmatprep.subr.mxu0 0.0
        %4363 = vmatpush1.msra.mxu0 0.0
        %4364 = vmatprep.subr.mxu0 0.0
        %4365 = vmatpush1.msra.mxu0 0.0
        %4366 = vmatprep.subr.mxu0 0.0
        %4367 = vmatpush1.msra.mxu0 0.0
        %4368 = vmatprep.mubr.f32.mxu0 0.0
        %4369 = vmatmul.mubr.f32.gmra.mrb[0].mxu0 %v4170
        %v4370 = vpop.f32.mrb[0].mxu0
        %v4371 = vadd.f32 0.0, %v4370
        %v4372 = vpop.f32.mrb[0].mxu0
        %4373 = vmatprep.mubr.f32.mxu0 0.0
        %4374 = vmatmul.mubr.f32.gmra.mrb[0].mxu0 %v4173
        %v4375 = vpop.f32.mrb[0].mxu0
        %v4376 = vadd.f32 0.0, %v4375
        %v4377 = vpop.f32.mrb[0].mxu0
        %4378 = vmatprep.mubr.f32.mxu0 0.0
        %4379 = vmatmul.mubr.f32.gmra.mrb[0].mxu0 %v4176
        %v4380 = vpop.f32.mrb[0].mxu0
        %v4381 = vadd.f32 0.0, %v4380
        %v4382 = vpop.f32.mrb[0].mxu0
        %4383 = vmatprep.mubr.f32.mxu0 0.0
        %4384 = vmatmul.mubr.f32.gmra.mrb[0].mxu0 %v4179
        %v4385 = vpop.f32.mrb[0].mxu0
        %v4386 = vadd.f32 0.0, %v4385
        %v4387 = vpop.f32.mrb[0].mxu0
        %4388 = vmatprep.mubr.f32.mxu0 0.0
        %4389 = vmatmul.mubr.f32.gmra.mrb[0].mxu0 %v4182
        %v4390 = vpop.f32.mrb[0].mxu0
        %v4391 = vadd.f32 0.0, %v4390
        %v4392 = vpop.f32.mrb[0].mxu0
        %4393 = vmatprep.mubr.f32.mxu0 0.0
        %4394 = vmatmul.mubr.f32.gmra.mrb[0].mxu0 %v4185
        %v4395 = vpop.f32.mrb[0].mxu0
        %v4396 = vadd.f32 0.0, %v4395
        %v4397 = vpop.f32.mrb[0].mxu0
        %4398 = vmatprep.mubr.f32.mxu0 0.0
        %4399 = vmatmul.mubr.f32.gmra.mrb[0].mxu0 %v4188
        %v4400 = vpop.f32.mrb[0].mxu0
        %v4401 = vadd.f32 0.0, %v4400
        %v4402 = vpop.f32.mrb[0].mxu0
        %4403 = vmatprep.mubr.f32.mxu0 0.0
        %4404 = vmatmul.mubr.f32.gmra.mrb[0].mxu0 %v4191
        %v4405 = vpop.f32.mrb[0].mxu0
        %v4406 = vadd.f32 0.0, %v4405
        %v4407 = vpop.f32.mrb[0].mxu0
        %4408 = vmatprep.mubr.f32.mxu0 0.0
        %4409 = vmatmul.mubr.f32.gmra.mrb[0].mxu0 %v4194
        %v4410 = vpop.f32.mrb[0].mxu0
        %v4411 = vadd.f32 0.0, %v4410
        %v4412 = vpop.f32.mrb[0].mxu0
        %4413 = vmatprep.mubr.f32.mxu0 0.0
        %4414 = vmatmul.mubr.f32.gmra.mrb[0].mxu0 %v4197
        %v4415 = vpop.f32.mrb[0].mxu0
        %v4416 = vadd.f32 0.0, %v4415
        %v4417 = vpop.f32.mrb[0].mxu0
        %4418 = vmatprep.mubr.f32.mxu0 0.0
        %4419 = vmatmul.mubr.f32.gmra.mrb[0].mxu0 %v4200
        %v4420 = vpop.f32.mrb[0].mxu0
        %v4421 = vadd.f32 0.0, %v4420
        %v4422 = vpop.f32.mrb[0].mxu0
        %4423 = vmatprep.mubr.f32.mxu0 0.0
        %4424 = vmatmul.mubr.f32.gmra.mrb[0].mxu0 %v4203
        %v4425 = vpop.f32.mrb[0].mxu0
        %v4426 = vadd.f32 0.0, %v4425
        %v4427 = vpop.f32.mrb[0].mxu0
        %4428 = vmatprep.mubr.f32.mxu0 0.0
        %4429 = vmatmul.mubr.f32.gmra.mrb[0].mxu0 %v4206
        %v4430 = vpop.f32.mrb[0].mxu0
        %v4431 = vadd.f32 0.0, %v4430
        %v4432 = vpop.f32.mrb[0].mxu0
        %4433 = vmatprep.mubr.f32.mxu0 0.0
        %4434 = vmatmul.mubr.f32.gmra.mrb[0].mxu0 %v4209
        %v4435 = vpop.f32.mrb[0].mxu0
        %v4436 = vadd.f32 0.0, %v4435
        %v4437 = vpop.f32.mrb[0].mxu0
        %4438 = vmatprep.mubr.f32.mxu0 0.0
        %4439 = vmatmul.mubr.f32.gmra.mrb[0].mxu0 %v4212
        %v4440 = vpop.f32.mrb[0].mxu0
        %v4441 = vadd.f32 0.0, %v4440
        %v4442 = vpop.f32.mrb[0].mxu0
        %4443 = vmatprep.mubr.f32.mxu0 0.0
        %4444 = vmatmul.mubr.f32.gmra.mrb[0].mxu0 %v4215
        %v4445 = vpop.f32.mrb[0].mxu0
        %v4446 = vadd.f32 0.0, %v4445
        %v4447 = vpop.f32.mrb[0].mxu0
        %4448 = vmatprep.mubr.f32.mxu0 0.0
        %4449 = vmatmul.mubr.f32.gmra.mrb[0].mxu0 %v4218
        %v4450 = vpop.f32.mrb[0].mxu0
        %v4451 = vadd.f32 0.0, %v4450
        %v4452 = vpop.f32.mrb[0].mxu0
        %4453 = vmatprep.mubr.f32.mxu0 0.0
        %4454 = vmatmul.mubr.f32.gmra.mrb[0].mxu0 %v4221
        %v4455 = vpop.f32.mrb[0].mxu0
        %v4456 = vadd.f32 0.0, %v4455
        %v4457 = vpop.f32.mrb[0].mxu0
        %4458 = vmatprep.mubr.f32.mxu0 0.0
        %4459 = vmatmul.mubr.f32.gmra.mrb[0].mxu0 %v4224
        %v4460 = vpop.f32.mrb[0].mxu0
        %v4461 = vadd.f32 0.0, %v4460
        %v4462 = vpop.f32.mrb[0].mxu0
        %4463 = vmatprep.mubr.f32.mxu0 0.0
        %4464 = vmatmul.mubr.f32.gmra.mrb[0].mxu0 %v4227
        %v4465 = vpop.f32.mrb[0].mxu0
        %v4466 = vadd.f32 0.0, %v4465
        %v4467 = vpop.f32.mrb[0].mxu0
        %4468 = vmatprep.mubr.f32.mxu0 0.0
        %4469 = vmatmul.mubr.f32.gmra.mrb[0].mxu0 %v4230
        %v4470 = vpop.f32.mrb[0].mxu0
        %v4471 = vadd.f32 0.0, %v4470
        %v4472 = vpop.f32.mrb[0].mxu0
        %4473 = vmatprep.mubr.f32.mxu0 0.0
        %4474 = vmatmul.mubr.f32.gmra.mrb[0].mxu0 %v4233
        %v4475 = vpop.f32.mrb[0].mxu0
        %v4476 = vadd.f32 0.0, %v4475
        %v4477 = vpop.f32.mrb[0].mxu0
        %4478 = vmatprep.mubr.f32.mxu0 0.0
        %4479 = vmatmul.mubr.f32.gmra.mrb[0].mxu0 %v4236
        %v4480 = vpop.f32.mrb[0].mxu0
        %v4481 = vadd.f32 0.0, %v4480
        %v4482 = vpop.f32.mrb[0].mxu0
        %4483 = vmatprep.mubr.f32.mxu0 0.0
        %4484 = vmatmul.mubr.f32.gmra.mrb[0].mxu0 %v4239
        %v4485 = vpop.f32.mrb[0].mxu0
        %v4486 = vadd.f32 0.0, %v4485
        %v4487 = vpop.f32.mrb[0].mxu0
        %4488 = vmatprep.mubr.f32.mxu0 0.0
        %4489 = vmatmul.mubr.f32.gmra.mrb[0].mxu0 %v4242
        %v4490 = vpop.f32.mrb[0].mxu0
        %v4491 = vadd.f32 0.0, %v4490
        %v4492 = vpop.f32.mrb[0].mxu0
        %4493 = vmatprep.mubr.f32.mxu0 0.0
        %4494 = vmatmul.mubr.f32.gmra.mrb[0].mxu0 %v4245
        %v4495 = vpop.f32.mrb[0].mxu0
        %v4496 = vadd.f32 0.0, %v4495
        %v4497 = vpop.f32.mrb[0].mxu0
        %4498 = vmatprep.mubr.f32.mxu0 0.0
        %4499 = vmatmul.mubr.f32.gmra.mrb[0].mxu0 %v4248
        %v4500 = vpop.f32.mrb[0].mxu0
        %v4501 = vadd.f32 0.0, %v4500
        %v4502 = vpop.f32.mrb[0].mxu0
        %4503 = vmatprep.mubr.f32.mxu0 0.0
        %4504 = vmatmul.mubr.f32.gmra.mrb[0].mxu0 %v4251
        %v4505 = vpop.f32.mrb[0].mxu0
        %v4506 = vadd.f32 0.0, %v4505
        %v4507 = vpop.f32.mrb[0].mxu0
        %4508 = vmatprep.mubr.f32.mxu0 0.0
        %4509 = vmatmul.mubr.f32.gmra.mrb[0].mxu0 %v4254
        %v4510 = vpop.f32.mrb[0].mxu0
        %v4511 = vadd.f32 0.0, %v4510
        %v4512 = vpop.f32.mrb[0].mxu0
        %4513 = vmatprep.mubr.f32.mxu0 0.0
        %4514 = vmatmul.mubr.f32.gmra.mrb[0].mxu0 %v4257
        %v4515 = vpop.f32.mrb[0].mxu0
        %v4516 = vadd.f32 0.0, %v4515
        %v4517 = vpop.f32.mrb[0].mxu0
        %4518 = vmatprep.mubr.f32.mxu0 0.0
        %4519 = vmatmul.mubr.f32.gmra.mrb[0].mxu0 %v4260
        %v4520 = vpop.f32.mrb[0].mxu0
        %v4521 = vadd.f32 0.0, %v4520
        %v4522 = vpop.f32.mrb[0].mxu0
        %4523 = vmatprep.mubr.f32.mxu0 0.0
        %4524 = vmatmul.mubr.f32.gmra.mrb[0].mxu0 %v4263
        %v4525 = vpop.f32.mrb[0].mxu0
        %v4526 = vadd.f32 0.0, %v4525
        %v4527 = vpop.f32.mrb[0].mxu0
        %4528 = vmatprep.mubr.f32.mxu0 0.0
        %4529 = vmatmul.mubr.f32.gmra.mrb[0].mxu0 %v4266
        %v4530 = vpop.f32.mrb[0].mxu0
        %v4531 = vadd.f32 0.0, %v4530
        %v4532 = vpop.f32.mrb[0].mxu0
        %4533 = vmatprep.mubr.f32.mxu0 0.0
        %4534 = vmatmul.mubr.f32.gmra.mrb[0].mxu0 %v4269
        %v4535 = vpop.f32.mrb[0].mxu0
        %v4536 = vadd.f32 0.0, %v4535
        %v4537 = vpop.f32.mrb[0].mxu0
        %4538 = vmatprep.mubr.f32.mxu0 0.0
        %4539 = vmatmul.mubr.f32.gmra.mrb[0].mxu0 %v4272
        %v4540 = vpop.f32.mrb[0].mxu0
        %v4541 = vadd.f32 0.0, %v4540
        %v4542 = vpop.f32.mrb[0].mxu0
        %4543 = vmatprep.mubr.f32.mxu0 0.0
        %4544 = vmatmul.mubr.f32.gmra.mrb[0].mxu0 %v4275
        %v4545 = vpop.f32.mrb[0].mxu0
        %v4546 = vadd.f32 0.0, %v4545
        %v4547 = vpop.f32.mrb[0].mxu0
        %4548 = vmatprep.mubr.f32.mxu0 0.0
        %4549 = vmatmul.mubr.f32.gmra.mrb[0].mxu0 %v4278
        %v4550 = vpop.f32.mrb[0].mxu0
        %v4551 = vadd.f32 0.0, %v4550
        %v4552 = vpop.f32.mrb[0].mxu0
        %4553 = vmatprep.mubr.f32.mxu0 0.0
        %4554 = vmatmul.mubr.f32.gmra.mrb[0].mxu0 %v4281
        %v4555 = vpop.f32.mrb[0].mxu0
        %v4556 = vadd.f32 0.0, %v4555
        %v4557 = vpop.f32.mrb[0].mxu0
        %4558 = vmatprep.mubr.f32.mxu0 0.0
        %4559 = vmatmul.mubr.f32.gmra.mrb[0].mxu0 %v4284
        %v4560 = vpop.f32.mrb[0].mxu0
        %v4561 = vadd.f32 0.0, %v4560
        %v4562 = vpop.f32.mrb[0].mxu0
        %4563 = vmatprep.mubr.f32.mxu0 0.0
        %4564 = vmatmul.mubr.f32.gmra.mrb[0].mxu0 %v4287
        %v4565 = vpop.f32.mrb[0].mxu0
        %v4566 = vadd.f32 0.0, %v4565
        %v4567 = vpop.f32.mrb[0].mxu0
        %4568 = vmatprep.mubr.f32.mxu0 0.0
        %4569 = vmatmul.mubr.f32.gmra.mrb[0].mxu0 %v4290
        %v4570 = vpop.f32.mrb[0].mxu0
        %v4571 = vadd.f32 0.0, %v4570
        %v4572 = vpop.f32.mrb[0].mxu0
        %4573 = vmatprep.mubr.f32.mxu0 0.0
        %4574 = vmatmul.mubr.f32.gmra.mrb[0].mxu0 %v4293
        %v4575 = vpop.f32.mrb[0].mxu0
        %v4576 = vadd.f32 0.0, %v4575
        %v4577 = vpop.f32.mrb[0].mxu0
        %4578 = vmatprep.mubr.f32.mxu0 0.0
        %4579 = vmatmul.mubr.f32.gmra.mrb[0].mxu0 %v4296
        %v4580 = vpop.f32.mrb[0].mxu0
        %v4581 = vadd.f32 0.0, %v4580
        %v4582 = vpop.f32.mrb[0].mxu0
        %4583 = vmatprep.mubr.f32.mxu0 0.0
        %4584 = vmatmul.mubr.f32.gmra.mrb[0].mxu0 %v4299
        %v4585 = vpop.f32.mrb[0].mxu0
        %v4586 = vadd.f32 0.0, %v4585
        %v4587 = vpop.f32.mrb[0].mxu0
        %4588 = vdwg.mxu0
        %v4589 = vadd.f32 %v4078, %v4371
        %v4590 = vadd.f32 %v4079, %v4376
        %v4591 = vadd.f32 %v4080, %v4381
        %v4592 = vadd.f32 %v4081, %v4386
        %v4593 = vadd.f32 %v4082, %v4391
        %v4594 = vadd.f32 %v4083, %v4396
        %v4595 = vadd.f32 %v4084, %v4401
        %v4596 = vadd.f32 %v4085, %v4406
        %v4597 = vadd.f32 %v4086, %v4411
        %v4598 = vadd.f32 %v4087, %v4416
        %v4599 = vadd.f32 %v4088, %v4421
        %v4600 = vadd.f32 %v4089, %v4426
        %v4601 = vadd.f32 %v4090, %v4431
        %v4602 = vadd.f32 %v4091, %v4436
        %v4603 = vadd.f32 %v4092, %v4441
        %v4604 = vadd.f32 %v4093, %v4446
        %v4605 = vadd.f32 %v4094, %v4451
        %v4606 = vadd.f32 %v4095, %v4456
        %v4607 = vadd.f32 %v4096, %v4461
        %v4608 = vadd.f32 %v4097, %v4466
        %v4609 = vadd.f32 %v4098, %v4471
        %v4610 = vadd.f32 %v4099, %v4476
        %v4611 = vadd.f32 %v4100, %v4481
        %v4612 = vadd.f32 %v4101, %v4486
        %v4613 = vadd.f32 %v4102, %v4491
        %v4614 = vadd.f32 %v4103, %v4496
        %v4615 = vadd.f32 %v4104, %v4501
        %v4616 = vadd.f32 %v4105, %v4506
        %v4617 = vadd.f32 %v4106, %v4511
        %v4618 = vadd.f32 %v4107, %v4516
        %v4619 = vadd.f32 %v4108, %v4521
        %v4620 = vadd.f32 %v4109, %v4526
        %v4621 = vadd.f32 %v4110, %v4531
        %v4622 = vadd.f32 %v4111, %v4536
        %v4623 = vadd.f32 %v4112, %v4541
        %v4624 = vadd.f32 %v4113, %v4546
        %v4625 = vadd.f32 %v4114, %v4551
        %v4626 = vadd.f32 %v4115, %v4556
        %v4627 = vadd.f32 %v4116, %v4561
        %v4628 = vadd.f32 %v4117, %v4566
        %v4629 = vadd.f32 %v4118, %v4571
        %v4630 = vadd.f32 %v4119, %v4576
        %v4631 = vadd.f32 %v4120, %v4581
        %v4632 = vadd.f32 %v4121, %v4586
        %v4633 = vld [vmem:[#allocation3 + $0x4] sm:$0xff]
        %v4634 = vld [vmem:[#allocation3 + $0xc] sm:$0xff]
        %v4635 = vld [vmem:[#allocation3 + $0x14] sm:$0xff]
        %v4636 = vld [vmem:[#allocation3 + $0x1c] sm:$0xff]
        %v4637 = vld [vmem:[#allocation3 + $0x24] sm:$0xff]
        %v4638 = vld [vmem:[#allocation3 + $0x2c] sm:$0xff]
        %v4639 = vld [vmem:[#allocation3 + $0x34] sm:$0xff]
        %v4640 = vld [vmem:[#allocation3 + $0x3c] sm:$0xff]
        %v4641 = vld [vmem:[#allocation3 + $0x44] sm:$0xff]
        %v4642 = vld [vmem:[#allocation3 + $0x4c] sm:$0xff]
        %v4643 = vld [vmem:[#allocation3 + $0x54] sm:$0xff]
        %v4644 = vld [vmem:[#allocation3 + $0x5c] sm:$0xff]
        %v4645 = vld [vmem:[#allocation3 + $0x64] sm:$0xff]
        %v4646 = vld [vmem:[#allocation3 + $0x6c] sm:$0xff]
        %v4647 = vld [vmem:[#allocation3 + $0x74] sm:$0xff]
        %v4648 = vld [vmem:[#allocation3 + $0x7c] sm:$0xff]
        %v4649 = vld [vmem:[#allocation3 + $0x84] sm:$0xff]
        %v4650 = vld [vmem:[#allocation3 + $0x8c] sm:$0xff]
        %v4651 = vld [vmem:[#allocation3 + $0x94] sm:$0xff]
        %v4652 = vld [vmem:[#allocation3 + $0x9c] sm:$0xff]
        %v4653 = vld [vmem:[#allocation3 + $0xa4] sm:$0xff]
        %v4654 = vld [vmem:[#allocation3 + $0xac] sm:$0xff]
        %v4655 = vld [vmem:[#allocation3 + $0xb4] sm:$0xff]
        %v4656 = vld [vmem:[#allocation3 + $0xbc] sm:$0xff]
        %v4657 = vld [vmem:[#allocation3 + $0xc4] sm:$0xff]
        %v4658 = vld [vmem:[#allocation3 + $0xcc] sm:$0xff]
        %v4659 = vld [vmem:[#allocation3 + $0xd4] sm:$0xff]
        %v4660 = vld [vmem:[#allocation3 + $0xdc] sm:$0xff]
        %v4661 = vld [vmem:[#allocation3 + $0xe4] sm:$0xff]
        %v4662 = vld [vmem:[#allocation3 + $0xec] sm:$0xff]
        %v4663 = vld [vmem:[#allocation3 + $0xf4] sm:$0xff]
        %v4664 = vld [vmem:[#allocation3 + $0xfc] sm:$0xff]
        %v4665 = vld [vmem:[#allocation3 + $0x104] sm:$0xff]
        %v4666 = vld [vmem:[#allocation3 + $0x10c] sm:$0xff]
        %v4667 = vld [vmem:[#allocation3 + $0x114] sm:$0xff]
        %v4668 = vld [vmem:[#allocation3 + $0x11c] sm:$0xff]
        %v4669 = vld [vmem:[#allocation3 + $0x124] sm:$0xff]
        %v4670 = vld [vmem:[#allocation3 + $0x12c] sm:$0xff]
        %v4671 = vld [vmem:[#allocation3 + $0x134] sm:$0xff]
        %v4672 = vld [vmem:[#allocation3 + $0x13c] sm:$0xff]
        %v4673 = vld [vmem:[#allocation3 + $0x144] sm:$0xff]
        %v4674 = vld [vmem:[#allocation3 + $0x14c] sm:$0xff]
        %v4675 = vld [vmem:[#allocation3 + $0x154] sm:$0xff]
        %v4676 = vld [vmem:[#allocation3 + $0x15c] sm:$0x1]
        %s4677 = scalar_lea.vmem %s4, 64
        %v4678 = vld [vmem:[%s4677] sm:$0xff]
        %v4679 = vld [vmem:[%s4677 + $0x8] sm:$0x3]
        %v4681 = vsel %vm625, %v4633, 0
        %v4684 = vsel %vm625, %v4634, 0
        %v4687 = vsel %vm625, %v4635, 0
        %v4690 = vsel %vm625, %v4636, 0
        %v4693 = vsel %vm625, %v4637, 0
        %v4696 = vsel %vm625, %v4638, 0
        %v4699 = vsel %vm625, %v4639, 0
        %v4702 = vsel %vm625, %v4640, 0
        %v4705 = vsel %vm625, %v4641, 0
        %v4708 = vsel %vm625, %v4642, 0
        %v4711 = vsel %vm625, %v4643, 0
        %v4714 = vsel %vm625, %v4644, 0
        %v4717 = vsel %vm625, %v4645, 0
        %v4720 = vsel %vm625, %v4646, 0
        %v4723 = vsel %vm625, %v4647, 0
        %v4726 = vsel %vm625, %v4648, 0
        %v4729 = vsel %vm625, %v4649, 0
        %v4732 = vsel %vm625, %v4650, 0
        %v4735 = vsel %vm625, %v4651, 0
        %v4738 = vsel %vm625, %v4652, 0
        %v4741 = vsel %vm625, %v4653, 0
        %v4744 = vsel %vm625, %v4654, 0
        %v4747 = vsel %vm625, %v4655, 0
        %v4750 = vsel %vm625, %v4656, 0
        %v4753 = vsel %vm625, %v4657, 0
        %v4756 = vsel %vm625, %v4658, 0
        %v4759 = vsel %vm625, %v4659, 0
        %v4762 = vsel %vm625, %v4660, 0
        %v4765 = vsel %vm625, %v4661, 0
        %v4768 = vsel %vm625, %v4662, 0
        %v4771 = vsel %vm625, %v4663, 0
        %v4774 = vsel %vm625, %v4664, 0
        %v4777 = vsel %vm625, %v4665, 0
        %v4780 = vsel %vm625, %v4666, 0
        %v4783 = vsel %vm625, %v4667, 0
        %v4786 = vsel %vm625, %v4668, 0
        %v4789 = vsel %vm625, %v4669, 0
        %v4792 = vsel %vm625, %v4670, 0
        %v4795 = vsel %vm625, %v4671, 0
        %v4798 = vsel %vm625, %v4672, 0
        %v4801 = vsel %vm625, %v4673, 0
        %v4804 = vsel %vm625, %v4674, 0
        %v4807 = vsel %vm625, %v4675, 0
        %v4810 = vsel %vm625, %v4676, 0
        %v4813 = vsel %vm1019, %v4679, 0
        %4815 = vmatprep.subr.mxu0 0.0
        %4816 = vmatpush1.msra.mxu0 %v4678
        %4817 = vmatprep.subr.mxu0 0.0
        %4818 = vmatpush1.msra.mxu0 %v4813
        %4819 = vmatprep.subr.mxu0 0.0
        %4820 = vmatpush1.msra.mxu0 0.0
        %4821 = vmatprep.subr.mxu0 0.0
        %4822 = vmatpush1.msra.mxu0 0.0
        %4823 = vmatprep.subr.mxu0 0.0
        %4824 = vmatpush1.msra.mxu0 0.0
        %4825 = vmatprep.subr.mxu0 0.0
        %4826 = vmatpush1.msra.mxu0 0.0
        %4827 = vmatprep.subr.mxu0 0.0
        %4828 = vmatpush1.msra.mxu0 0.0
        %4829 = vmatprep.subr.mxu0 0.0
        %4830 = vmatpush1.msra.mxu0 0.0
        %4831 = vmatprep.subr.mxu0 0.0
        %4832 = vmatpush1.msra.mxu0 0.0
        %4833 = vmatprep.subr.mxu0 0.0
        %4834 = vmatpush1.msra.mxu0 0.0
        %4835 = vmatprep.subr.mxu0 0.0
        %4836 = vmatpush1.msra.mxu0 0.0
        %4837 = vmatprep.subr.mxu0 0.0
        %4838 = vmatpush1.msra.mxu0 0.0
        %4839 = vmatprep.subr.mxu0 0.0
        %4840 = vmatpush1.msra.mxu0 0.0
        %4841 = vmatprep.subr.mxu0 0.0
        %4842 = vmatpush1.msra.mxu0 0.0
        %4843 = vmatprep.subr.mxu0 0.0
        %4844 = vmatpush1.msra.mxu0 0.0
        %4845 = vmatprep.subr.mxu0 0.0
        %4846 = vmatpush1.msra.mxu0 0.0
        %4847 = vmatprep.subr.mxu0 0.0
        %4848 = vmatpush1.msra.mxu0 0.0
        %4849 = vmatprep.subr.mxu0 0.0
        %4850 = vmatpush1.msra.mxu0 0.0
        %4851 = vmatprep.subr.mxu0 0.0
        %4852 = vmatpush1.msra.mxu0 0.0
        %4853 = vmatprep.subr.mxu0 0.0
        %4854 = vmatpush1.msra.mxu0 0.0
        %4855 = vmatprep.subr.mxu0 0.0
        %4856 = vmatpush1.msra.mxu0 0.0
        %4857 = vmatprep.subr.mxu0 0.0
        %4858 = vmatpush1.msra.mxu0 0.0
        %4859 = vmatprep.subr.mxu0 0.0
        %4860 = vmatpush1.msra.mxu0 0.0
        %4861 = vmatprep.subr.mxu0 0.0
        %4862 = vmatpush1.msra.mxu0 0.0
        %4863 = vmatprep.subr.mxu0 0.0
        %4864 = vmatpush1.msra.mxu0 0.0
        %4865 = vmatprep.subr.mxu0 0.0
        %4866 = vmatpush1.msra.mxu0 0.0
        %4867 = vmatprep.subr.mxu0 0.0
        %4868 = vmatpush1.msra.mxu0 0.0
        %4869 = vmatprep.subr.mxu0 0.0
        %4870 = vmatpush1.msra.mxu0 0.0
        %4871 = vmatprep.subr.mxu0 0.0
        %4872 = vmatpush1.msra.mxu0 0.0
        %4873 = vmatprep.subr.mxu0 0.0
        %4874 = vmatpush1.msra.mxu0 0.0
        %4875 = vmatprep.subr.mxu0 0.0
        %4876 = vmatpush1.msra.mxu0 0.0
        %4877 = vmatprep.subr.mxu0 0.0
        %4878 = vmatpush1.msra.mxu0 0.0
        %4879 = vmatprep.mubr.f32.mxu0 0.0
        %4880 = vmatmul.mubr.f32.gmra.mrb[0].mxu0 %v4681
        %v4881 = vpop.f32.mrb[0].mxu0
        %v4882 = vadd.f32 0.0, %v4881
        %v4883 = vpop.f32.mrb[0].mxu0
        %4884 = vmatprep.mubr.f32.mxu0 0.0
        %4885 = vmatmul.mubr.f32.gmra.mrb[0].mxu0 %v4684
        %v4886 = vpop.f32.mrb[0].mxu0
        %v4887 = vadd.f32 0.0, %v4886
        %v4888 = vpop.f32.mrb[0].mxu0
        %4889 = vmatprep.mubr.f32.mxu0 0.0
        %4890 = vmatmul.mubr.f32.gmra.mrb[0].mxu0 %v4687
        %v4891 = vpop.f32.mrb[0].mxu0
        %v4892 = vadd.f32 0.0, %v4891
        %v4893 = vpop.f32.mrb[0].mxu0
        %4894 = vmatprep.mubr.f32.mxu0 0.0
        %4895 = vmatmul.mubr.f32.gmra.mrb[0].mxu0 %v4690
        %v4896 = vpop.f32.mrb[0].mxu0
        %v4897 = vadd.f32 0.0, %v4896
        %v4898 = vpop.f32.mrb[0].mxu0
        %4899 = vmatprep.mubr.f32.mxu0 0.0
        %4900 = vmatmul.mubr.f32.gmra.mrb[0].mxu0 %v4693
        %v4901 = vpop.f32.mrb[0].mxu0
        %v4902 = vadd.f32 0.0, %v4901
        %v4903 = vpop.f32.mrb[0].mxu0
        %4904 = vmatprep.mubr.f32.mxu0 0.0
        %4905 = vmatmul.mubr.f32.gmra.mrb[0].mxu0 %v4696
        %v4906 = vpop.f32.mrb[0].mxu0
        %v4907 = vadd.f32 0.0, %v4906
        %v4908 = vpop.f32.mrb[0].mxu0
        %4909 = vmatprep.mubr.f32.mxu0 0.0
        %4910 = vmatmul.mubr.f32.gmra.mrb[0].mxu0 %v4699
        %v4911 = vpop.f32.mrb[0].mxu0
        %v4912 = vadd.f32 0.0, %v4911
        %v4913 = vpop.f32.mrb[0].mxu0
        %4914 = vmatprep.mubr.f32.mxu0 0.0
        %4915 = vmatmul.mubr.f32.gmra.mrb[0].mxu0 %v4702
        %v4916 = vpop.f32.mrb[0].mxu0
        %v4917 = vadd.f32 0.0, %v4916
        %v4918 = vpop.f32.mrb[0].mxu0
        %4919 = vmatprep.mubr.f32.mxu0 0.0
        %4920 = vmatmul.mubr.f32.gmra.mrb[0].mxu0 %v4705
        %v4921 = vpop.f32.mrb[0].mxu0
        %v4922 = vadd.f32 0.0, %v4921
        %v4923 = vpop.f32.mrb[0].mxu0
        %4924 = vmatprep.mubr.f32.mxu0 0.0
        %4925 = vmatmul.mubr.f32.gmra.mrb[0].mxu0 %v4708
        %v4926 = vpop.f32.mrb[0].mxu0
        %v4927 = vadd.f32 0.0, %v4926
        %v4928 = vpop.f32.mrb[0].mxu0
        %4929 = vmatprep.mubr.f32.mxu0 0.0
        %4930 = vmatmul.mubr.f32.gmra.mrb[0].mxu0 %v4711
        %v4931 = vpop.f32.mrb[0].mxu0
        %v4932 = vadd.f32 0.0, %v4931
        %v4933 = vpop.f32.mrb[0].mxu0
        %4934 = vmatprep.mubr.f32.mxu0 0.0
        %4935 = vmatmul.mubr.f32.gmra.mrb[0].mxu0 %v4714
        %v4936 = vpop.f32.mrb[0].mxu0
        %v4937 = vadd.f32 0.0, %v4936
        %v4938 = vpop.f32.mrb[0].mxu0
        %4939 = vmatprep.mubr.f32.mxu0 0.0
        %4940 = vmatmul.mubr.f32.gmra.mrb[0].mxu0 %v4717
        %v4941 = vpop.f32.mrb[0].mxu0
        %v4942 = vadd.f32 0.0, %v4941
        %v4943 = vpop.f32.mrb[0].mxu0
        %4944 = vmatprep.mubr.f32.mxu0 0.0
        %4945 = vmatmul.mubr.f32.gmra.mrb[0].mxu0 %v4720
        %v4946 = vpop.f32.mrb[0].mxu0
        %v4947 = vadd.f32 0.0, %v4946
        %v4948 = vpop.f32.mrb[0].mxu0
        %4949 = vmatprep.mubr.f32.mxu0 0.0
        %4950 = vmatmul.mubr.f32.gmra.mrb[0].mxu0 %v4723
        %v4951 = vpop.f32.mrb[0].mxu0
        %v4952 = vadd.f32 0.0, %v4951
        %v4953 = vpop.f32.mrb[0].mxu0
        %4954 = vmatprep.mubr.f32.mxu0 0.0
        %4955 = vmatmul.mubr.f32.gmra.mrb[0].mxu0 %v4726
        %v4956 = vpop.f32.mrb[0].mxu0
        %v4957 = vadd.f32 0.0, %v4956
        %v4958 = vpop.f32.mrb[0].mxu0
        %4959 = vmatprep.mubr.f32.mxu0 0.0
        %4960 = vmatmul.mubr.f32.gmra.mrb[0].mxu0 %v4729
        %v4961 = vpop.f32.mrb[0].mxu0
        %v4962 = vadd.f32 0.0, %v4961
        %v4963 = vpop.f32.mrb[0].mxu0
        %4964 = vmatprep.mubr.f32.mxu0 0.0
        %4965 = vmatmul.mubr.f32.gmra.mrb[0].mxu0 %v4732
        %v4966 = vpop.f32.mrb[0].mxu0
        %v4967 = vadd.f32 0.0, %v4966
        %v4968 = vpop.f32.mrb[0].mxu0
        %4969 = vmatprep.mubr.f32.mxu0 0.0
        %4970 = vmatmul.mubr.f32.gmra.mrb[0].mxu0 %v4735
        %v4971 = vpop.f32.mrb[0].mxu0
        %v4972 = vadd.f32 0.0, %v4971
        %v4973 = vpop.f32.mrb[0].mxu0
        %4974 = vmatprep.mubr.f32.mxu0 0.0
        %4975 = vmatmul.mubr.f32.gmra.mrb[0].mxu0 %v4738
        %v4976 = vpop.f32.mrb[0].mxu0
        %v4977 = vadd.f32 0.0, %v4976
        %v4978 = vpop.f32.mrb[0].mxu0
        %4979 = vmatprep.mubr.f32.mxu0 0.0
        %4980 = vmatmul.mubr.f32.gmra.mrb[0].mxu0 %v4741
        %v4981 = vpop.f32.mrb[0].mxu0
        %v4982 = vadd.f32 0.0, %v4981
        %v4983 = vpop.f32.mrb[0].mxu0
        %4984 = vmatprep.mubr.f32.mxu0 0.0
        %4985 = vmatmul.mubr.f32.gmra.mrb[0].mxu0 %v4744
        %v4986 = vpop.f32.mrb[0].mxu0
        %v4987 = vadd.f32 0.0, %v4986
        %v4988 = vpop.f32.mrb[0].mxu0
        %4989 = vmatprep.mubr.f32.mxu0 0.0
        %4990 = vmatmul.mubr.f32.gmra.mrb[0].mxu0 %v4747
        %v4991 = vpop.f32.mrb[0].mxu0
        %v4992 = vadd.f32 0.0, %v4991
        %v4993 = vpop.f32.mrb[0].mxu0
        %4994 = vmatprep.mubr.f32.mxu0 0.0
        %4995 = vmatmul.mubr.f32.gmra.mrb[0].mxu0 %v4750
        %v4996 = vpop.f32.mrb[0].mxu0
        %v4997 = vadd.f32 0.0, %v4996
        %v4998 = vpop.f32.mrb[0].mxu0
        %4999 = vmatprep.mubr.f32.mxu0 0.0
        %5000 = vmatmul.mubr.f32.gmra.mrb[0].mxu0 %v4753
        %v5001 = vpop.f32.mrb[0].mxu0
        %v5002 = vadd.f32 0.0, %v5001
        %v5003 = vpop.f32.mrb[0].mxu0
        %5004 = vmatprep.mubr.f32.mxu0 0.0
        %5005 = vmatmul.mubr.f32.gmra.mrb[0].mxu0 %v4756
        %v5006 = vpop.f32.mrb[0].mxu0
        %v5007 = vadd.f32 0.0, %v5006
        %v5008 = vpop.f32.mrb[0].mxu0
        %5009 = vmatprep.mubr.f32.mxu0 0.0
        %5010 = vmatmul.mubr.f32.gmra.mrb[0].mxu0 %v4759
        %v5011 = vpop.f32.mrb[0].mxu0
        %v5012 = vadd.f32 0.0, %v5011
        %v5013 = vpop.f32.mrb[0].mxu0
        %5014 = vmatprep.mubr.f32.mxu0 0.0
        %5015 = vmatmul.mubr.f32.gmra.mrb[0].mxu0 %v4762
        %v5016 = vpop.f32.mrb[0].mxu0
        %v5017 = vadd.f32 0.0, %v5016
        %v5018 = vpop.f32.mrb[0].mxu0
        %5019 = vmatprep.mubr.f32.mxu0 0.0
        %5020 = vmatmul.mubr.f32.gmra.mrb[0].mxu0 %v4765
        %v5021 = vpop.f32.mrb[0].mxu0
        %v5022 = vadd.f32 0.0, %v5021
        %v5023 = vpop.f32.mrb[0].mxu0
        %5024 = vmatprep.mubr.f32.mxu0 0.0
        %5025 = vmatmul.mubr.f32.gmra.mrb[0].mxu0 %v4768
        %v5026 = vpop.f32.mrb[0].mxu0
        %v5027 = vadd.f32 0.0, %v5026
        %v5028 = vpop.f32.mrb[0].mxu0
        %5029 = vmatprep.mubr.f32.mxu0 0.0
        %5030 = vmatmul.mubr.f32.gmra.mrb[0].mxu0 %v4771
        %v5031 = vpop.f32.mrb[0].mxu0
        %v5032 = vadd.f32 0.0, %v5031
        %v5033 = vpop.f32.mrb[0].mxu0
        %5034 = vmatprep.mubr.f32.mxu0 0.0
        %5035 = vmatmul.mubr.f32.gmra.mrb[0].mxu0 %v4774
        %v5036 = vpop.f32.mrb[0].mxu0
        %v5037 = vadd.f32 0.0, %v5036
        %v5038 = vpop.f32.mrb[0].mxu0
        %5039 = vmatprep.mubr.f32.mxu0 0.0
        %5040 = vmatmul.mubr.f32.gmra.mrb[0].mxu0 %v4777
        %v5041 = vpop.f32.mrb[0].mxu0
        %v5042 = vadd.f32 0.0, %v5041
        %v5043 = vpop.f32.mrb[0].mxu0
        %5044 = vmatprep.mubr.f32.mxu0 0.0
        %5045 = vmatmul.mubr.f32.gmra.mrb[0].mxu0 %v4780
        %v5046 = vpop.f32.mrb[0].mxu0
        %v5047 = vadd.f32 0.0, %v5046
        %v5048 = vpop.f32.mrb[0].mxu0
        %5049 = vmatprep.mubr.f32.mxu0 0.0
        %5050 = vmatmul.mubr.f32.gmra.mrb[0].mxu0 %v4783
        %v5051 = vpop.f32.mrb[0].mxu0
        %v5052 = vadd.f32 0.0, %v5051
        %v5053 = vpop.f32.mrb[0].mxu0
        %5054 = vmatprep.mubr.f32.mxu0 0.0
        %5055 = vmatmul.mubr.f32.gmra.mrb[0].mxu0 %v4786
        %v5056 = vpop.f32.mrb[0].mxu0
        %v5057 = vadd.f32 0.0, %v5056
        %v5058 = vpop.f32.mrb[0].mxu0
        %5059 = vmatprep.mubr.f32.mxu0 0.0
        %5060 = vmatmul.mubr.f32.gmra.mrb[0].mxu0 %v4789
        %v5061 = vpop.f32.mrb[0].mxu0
        %v5062 = vadd.f32 0.0, %v5061
        %v5063 = vpop.f32.mrb[0].mxu0
        %5064 = vmatprep.mubr.f32.mxu0 0.0
        %5065 = vmatmul.mubr.f32.gmra.mrb[0].mxu0 %v4792
        %v5066 = vpop.f32.mrb[0].mxu0
        %v5067 = vadd.f32 0.0, %v5066
        %v5068 = vpop.f32.mrb[0].mxu0
        %5069 = vmatprep.mubr.f32.mxu0 0.0
        %5070 = vmatmul.mubr.f32.gmra.mrb[0].mxu0 %v4795
        %v5071 = vpop.f32.mrb[0].mxu0
        %v5072 = vadd.f32 0.0, %v5071
        %v5073 = vpop.f32.mrb[0].mxu0
        %5074 = vmatprep.mubr.f32.mxu0 0.0
        %5075 = vmatmul.mubr.f32.gmra.mrb[0].mxu0 %v4798
        %v5076 = vpop.f32.mrb[0].mxu0
        %v5077 = vadd.f32 0.0, %v5076
        %v5078 = vpop.f32.mrb[0].mxu0
        %5079 = vmatprep.mubr.f32.mxu0 0.0
        %5080 = vmatmul.mubr.f32.gmra.mrb[0].mxu0 %v4801
        %v5081 = vpop.f32.mrb[0].mxu0
        %v5082 = vadd.f32 0.0, %v5081
        %v5083 = vpop.f32.mrb[0].mxu0
        %5084 = vmatprep.mubr.f32.mxu0 0.0
        %5085 = vmatmul.mubr.f32.gmra.mrb[0].mxu0 %v4804
        %v5086 = vpop.f32.mrb[0].mxu0
        %v5087 = vadd.f32 0.0, %v5086
        %v5088 = vpop.f32.mrb[0].mxu0
        %5089 = vmatprep.mubr.f32.mxu0 0.0
        %5090 = vmatmul.mubr.f32.gmra.mrb[0].mxu0 %v4807
        %v5091 = vpop.f32.mrb[0].mxu0
        %v5092 = vadd.f32 0.0, %v5091
        %v5093 = vpop.f32.mrb[0].mxu0
        %5094 = vmatprep.mubr.f32.mxu0 0.0
        %5095 = vmatmul.mubr.f32.gmra.mrb[0].mxu0 %v4810
        %v5096 = vpop.f32.mrb[0].mxu0
        %v5097 = vadd.f32 0.0, %v5096
        %v5098 = vpop.f32.mrb[0].mxu0
        %5099 = vdwg.mxu0
        %v5100 = vadd.f32 %v4589, %v4882
        %v5101 = vadd.f32 %v4590, %v4887
        %v5102 = vadd.f32 %v4591, %v4892
        %v5103 = vadd.f32 %v4592, %v4897
        %v5104 = vadd.f32 %v4593, %v4902
        %v5105 = vadd.f32 %v4594, %v4907
        %v5106 = vadd.f32 %v4595, %v4912
        %v5107 = vadd.f32 %v4596, %v4917
        %v5108 = vadd.f32 %v4597, %v4922
        %v5109 = vadd.f32 %v4598, %v4927
        %v5110 = vadd.f32 %v4599, %v4932
        %v5111 = vadd.f32 %v4600, %v4937
        %v5112 = vadd.f32 %v4601, %v4942
        %v5113 = vadd.f32 %v4602, %v4947
        %v5114 = vadd.f32 %v4603, %v4952
        %v5115 = vadd.f32 %v4604, %v4957
        %v5116 = vadd.f32 %v4605, %v4962
        %v5117 = vadd.f32 %v4606, %v4967
        %v5118 = vadd.f32 %v4607, %v4972
        %v5119 = vadd.f32 %v4608, %v4977
        %v5120 = vadd.f32 %v4609, %v4982
        %v5121 = vadd.f32 %v4610, %v4987
        %v5122 = vadd.f32 %v4611, %v4992
        %v5123 = vadd.f32 %v4612, %v4997
        %v5124 = vadd.f32 %v4613, %v5002
        %v5125 = vadd.f32 %v4614, %v5007
        %v5126 = vadd.f32 %v4615, %v5012
        %v5127 = vadd.f32 %v4616, %v5017
        %v5128 = vadd.f32 %v4617, %v5022
        %v5129 = vadd.f32 %v4618, %v5027
        %v5130 = vadd.f32 %v4619, %v5032
        %v5131 = vadd.f32 %v4620, %v5037
        %v5132 = vadd.f32 %v4621, %v5042
        %v5133 = vadd.f32 %v4622, %v5047
        %v5134 = vadd.f32 %v4623, %v5052
        %v5135 = vadd.f32 %v4624, %v5057
        %v5136 = vadd.f32 %v4625, %v5062
        %v5137 = vadd.f32 %v4626, %v5067
        %v5138 = vadd.f32 %v4627, %v5072
        %v5139 = vadd.f32 %v4628, %v5077
        %v5140 = vadd.f32 %v4629, %v5082
        %v5141 = vadd.f32 %v4630, %v5087
        %v5142 = vadd.f32 %v4631, %v5092
        %v5143 = vadd.f32 %v4632, %v5097
        %v5144 = vld [vmem:[%s5] sm:$0x1]
        %v5146 = vlaneseq
        %v5147 = vshrl.u32 %v5146, 7
        %v5148 = vsub.s32 0, %v5147
        %v5149 = vrot.slane %v5144, %v5148
        %v5151 = vmul.f32 %v5100, %v5149
        %v5152 = vmul.f32 %v5101, %v5149
        %v5153 = vmul.f32 %v5102, %v5149
        %v5154 = vmul.f32 %v5103, %v5149
        %v5155 = vmul.f32 %v5104, %v5149
        %v5156 = vmul.f32 %v5105, %v5149
        %v5157 = vmul.f32 %v5106, %v5149
        %v5158 = vmul.f32 %v5107, %v5149
        %v5159 = vmul.f32 %v5108, %v5149
        %v5160 = vmul.f32 %v5109, %v5149
        %v5161 = vmul.f32 %v5110, %v5149
        %v5162 = vmul.f32 %v5111, %v5149
        %v5163 = vmul.f32 %v5112, %v5149
        %v5164 = vmul.f32 %v5113, %v5149
        %v5165 = vmul.f32 %v5114, %v5149
        %v5166 = vmul.f32 %v5115, %v5149
        %v5167 = vmul.f32 %v5116, %v5149
        %v5168 = vmul.f32 %v5117, %v5149
        %v5169 = vmul.f32 %v5118, %v5149
        %v5170 = vmul.f32 %v5119, %v5149
        %v5171 = vmul.f32 %v5120, %v5149
        %v5172 = vmul.f32 %v5121, %v5149
        %v5173 = vmul.f32 %v5122, %v5149
        %v5174 = vmul.f32 %v5123, %v5149
        %v5175 = vmul.f32 %v5124, %v5149
        %v5176 = vmul.f32 %v5125, %v5149
        %v5177 = vmul.f32 %v5126, %v5149
        %v5178 = vmul.f32 %v5127, %v5149
        %v5179 = vmul.f32 %v5128, %v5149
        %v5180 = vmul.f32 %v5129, %v5149
        %v5181 = vmul.f32 %v5130, %v5149
        %v5182 = vmul.f32 %v5131, %v5149
        %v5183 = vmul.f32 %v5132, %v5149
        %v5184 = vmul.f32 %v5133, %v5149
        %v5185 = vmul.f32 %v5134, %v5149
        %v5186 = vmul.f32 %v5135, %v5149
        %v5187 = vmul.f32 %v5136, %v5149
        %v5188 = vmul.f32 %v5137, %v5149
        %v5189 = vmul.f32 %v5138, %v5149
        %v5190 = vmul.f32 %v5139, %v5149
        %v5191 = vmul.f32 %v5140, %v5149
        %v5192 = vmul.f32 %v5141, %v5149
        %v5193 = vmul.f32 %v5142, %v5149
        %v5194 = vmul.f32 %v5143, %v5149
        %v5195 = vld [vmem:[%s6] sm:$0x1]
        %v5197 = vlaneseq
        %v5198 = vshrl.u32 %v5197, 7
        %v5199 = vsub.s32 0, %v5198
        %v5200 = vrot.slane %v5195, %v5199
        %v5202 = vadd.f32 %v5151, %v5200
        %v5203 = vadd.f32 %v5152, %v5200
        %v5204 = vadd.f32 %v5153, %v5200
        %v5205 = vadd.f32 %v5154, %v5200
        %v5206 = vadd.f32 %v5155, %v5200
        %v5207 = vadd.f32 %v5156, %v5200
        %v5208 = vadd.f32 %v5157, %v5200
        %v5209 = vadd.f32 %v5158, %v5200
        %v5210 = vadd.f32 %v5159, %v5200
        %v5211 = vadd.f32 %v5160, %v5200
        %v5212 = vadd.f32 %v5161, %v5200
        %v5213 = vadd.f32 %v5162, %v5200
        %v5214 = vadd.f32 %v5163, %v5200
        %v5215 = vadd.f32 %v5164, %v5200
        %v5216 = vadd.f32 %v5165, %v5200
        %v5217 = vadd.f32 %v5166, %v5200
        %v5218 = vadd.f32 %v5167, %v5200
        %v5219 = vadd.f32 %v5168, %v5200
        %v5220 = vadd.f32 %v5169, %v5200
        %v5221 = vadd.f32 %v5170, %v5200
        %v5222 = vadd.f32 %v5171, %v5200
        %v5223 = vadd.f32 %v5172, %v5200
        %v5224 = vadd.f32 %v5173, %v5200
        %v5225 = vadd.f32 %v5174, %v5200
        %v5226 = vadd.f32 %v5175, %v5200
        %v5227 = vadd.f32 %v5176, %v5200
        %v5228 = vadd.f32 %v5177, %v5200
        %v5229 = vadd.f32 %v5178, %v5200
        %v5230 = vadd.f32 %v5179, %v5200
        %v5231 = vadd.f32 %v5180, %v5200
        %v5232 = vadd.f32 %v5181, %v5200
        %v5233 = vadd.f32 %v5182, %v5200
        %v5234 = vadd.f32 %v5183, %v5200
        %v5235 = vadd.f32 %v5184, %v5200
        %v5236 = vadd.f32 %v5185, %v5200
        %v5237 = vadd.f32 %v5186, %v5200
        %v5238 = vadd.f32 %v5187, %v5200
        %v5239 = vadd.f32 %v5188, %v5200
        %v5240 = vadd.f32 %v5189, %v5200
        %v5241 = vadd.f32 %v5190, %v5200
        %v5242 = vadd.f32 %v5191, %v5200
        %v5243 = vadd.f32 %v5192, %v5200
        %v5244 = vadd.f32 %v5193, %v5200
        %v5245 = vadd.f32 %v5194, %v5200
        %v5246 = vmax.f32 %v5202, 0.0
        %v5247 = vmax.f32 %v5203, 0.0
        %v5248 = vmax.f32 %v5204, 0.0
        %v5249 = vmax.f32 %v5205, 0.0
        %v5250 = vmax.f32 %v5206, 0.0
        %v5251 = vmax.f32 %v5207, 0.0
        %v5252 = vmax.f32 %v5208, 0.0
        %v5253 = vmax.f32 %v5209, 0.0
        %v5254 = vmax.f32 %v5210, 0.0
        %v5255 = vmax.f32 %v5211, 0.0
        %v5256 = vmax.f32 %v5212, 0.0
        %v5257 = vmax.f32 %v5213, 0.0
        %v5258 = vmax.f32 %v5214, 0.0
        %v5259 = vmax.f32 %v5215, 0.0
        %v5260 = vmax.f32 %v5216, 0.0
        %v5261 = vmax.f32 %v5217, 0.0
        %v5262 = vmax.f32 %v5218, 0.0
        %v5263 = vmax.f32 %v5219, 0.0
        %v5264 = vmax.f32 %v5220, 0.0
        %v5265 = vmax.f32 %v5221, 0.0
        %v5266 = vmax.f32 %v5222, 0.0
        %v5267 = vmax.f32 %v5223, 0.0
        %v5268 = vmax.f32 %v5224, 0.0
        %v5269 = vmax.f32 %v5225, 0.0
        %v5270 = vmax.f32 %v5226, 0.0
        %v5271 = vmax.f32 %v5227, 0.0
        %v5272 = vmax.f32 %v5228, 0.0
        %v5273 = vmax.f32 %v5229, 0.0
        %v5274 = vmax.f32 %v5230, 0.0
        %v5275 = vmax.f32 %v5231, 0.0
        %v5276 = vmax.f32 %v5232, 0.0
        %v5277 = vmax.f32 %v5233, 0.0
        %v5278 = vmax.f32 %v5234, 0.0
        %v5279 = vmax.f32 %v5235, 0.0
        %v5280 = vmax.f32 %v5236, 0.0
        %v5281 = vmax.f32 %v5237, 0.0
        %v5282 = vmax.f32 %v5238, 0.0
        %v5283 = vmax.f32 %v5239, 0.0
        %v5284 = vmax.f32 %v5240, 0.0
        %v5285 = vmax.f32 %v5241, 0.0
        %v5286 = vmax.f32 %v5242, 0.0
        %v5287 = vmax.f32 %v5243, 0.0
        %v5288 = vmax.f32 %v5244, 0.0
        %v5289 = vmax.f32 %v5245, 0.0
        %vm5290 = vcmask 195584
        %5291 = vst.msk [vmem:[#allocation4] sm:$0xff] %vm5290, %v5246
        %5292 = vst.msk [vmem:[#allocation4 + $0x8] sm:$0xff] %vm5290, %v5247
        %5293 = vst.msk [vmem:[#allocation4 + $0x10] sm:$0xff] %vm5290, %v5248
        %5294 = vst.msk [vmem:[#allocation4 + $0x18] sm:$0xff] %vm5290, %v5249
        %5295 = vst.msk [vmem:[#allocation4 + $0x20] sm:$0xff] %vm5290, %v5250
        %5296 = vst.msk [vmem:[#allocation4 + $0x28] sm:$0xff] %vm5290, %v5251
        %5297 = vst.msk [vmem:[#allocation4 + $0x30] sm:$0xff] %vm5290, %v5252
        %5298 = vst.msk [vmem:[#allocation4 + $0x38] sm:$0xff] %vm5290, %v5253
        %5299 = vst.msk [vmem:[#allocation4 + $0x40] sm:$0xff] %vm5290, %v5254
        %5300 = vst.msk [vmem:[#allocation4 + $0x48] sm:$0xff] %vm5290, %v5255
        %5301 = vst.msk [vmem:[#allocation4 + $0x50] sm:$0xff] %vm5290, %v5256
        %5302 = vst.msk [vmem:[#allocation4 + $0x58] sm:$0xff] %vm5290, %v5257
        %5303 = vst.msk [vmem:[#allocation4 + $0x60] sm:$0xff] %vm5290, %v5258
        %5304 = vst.msk [vmem:[#allocation4 + $0x68] sm:$0xff] %vm5290, %v5259
        %5305 = vst.msk [vmem:[#allocation4 + $0x70] sm:$0xff] %vm5290, %v5260
        %5306 = vst.msk [vmem:[#allocation4 + $0x78] sm:$0xff] %vm5290, %v5261
        %5307 = vst.msk [vmem:[#allocation4 + $0x80] sm:$0xff] %vm5290, %v5262
        %5308 = vst.msk [vmem:[#allocation4 + $0x88] sm:$0xff] %vm5290, %v5263
        %5309 = vst.msk [vmem:[#allocation4 + $0x90] sm:$0xff] %vm5290, %v5264
        %5310 = vst.msk [vmem:[#allocation4 + $0x98] sm:$0xff] %vm5290, %v5265
        %5311 = vst.msk [vmem:[#allocation4 + $0xa0] sm:$0xff] %vm5290, %v5266
        %5312 = vst.msk [vmem:[#allocation4 + $0xa8] sm:$0xff] %vm5290, %v5267
        %5313 = vst.msk [vmem:[#allocation4 + $0xb0] sm:$0xff] %vm5290, %v5268
        %5314 = vst.msk [vmem:[#allocation4 + $0xb8] sm:$0xff] %vm5290, %v5269
        %5315 = vst.msk [vmem:[#allocation4 + $0xc0] sm:$0xff] %vm5290, %v5270
        %5316 = vst.msk [vmem:[#allocation4 + $0xc8] sm:$0xff] %vm5290, %v5271
        %5317 = vst.msk [vmem:[#allocation4 + $0xd0] sm:$0xff] %vm5290, %v5272
        %5318 = vst.msk [vmem:[#allocation4 + $0xd8] sm:$0xff] %vm5290, %v5273
        %5319 = vst.msk [vmem:[#allocation4 + $0xe0] sm:$0xff] %vm5290, %v5274
        %5320 = vst.msk [vmem:[#allocation4 + $0xe8] sm:$0xff] %vm5290, %v5275
        %5321 = vst.msk [vmem:[#allocation4 + $0xf0] sm:$0xff] %vm5290, %v5276
        %5322 = vst.msk [vmem:[#allocation4 + $0xf8] sm:$0xff] %vm5290, %v5277
        %5323 = vst.msk [vmem:[#allocation4 + $0x100] sm:$0xff] %vm5290, %v5278
        %5324 = vst.msk [vmem:[#allocation4 + $0x108] sm:$0xff] %vm5290, %v5279
        %5325 = vst.msk [vmem:[#allocation4 + $0x110] sm:$0xff] %vm5290, %v5280
        %5326 = vst.msk [vmem:[#allocation4 + $0x118] sm:$0xff] %vm5290, %v5281
        %5327 = vst.msk [vmem:[#allocation4 + $0x120] sm:$0xff] %vm5290, %v5282
        %5328 = vst.msk [vmem:[#allocation4 + $0x128] sm:$0xff] %vm5290, %v5283
        %5329 = vst.msk [vmem:[#allocation4 + $0x130] sm:$0xff] %vm5290, %v5284
        %5330 = vst.msk [vmem:[#allocation4 + $0x138] sm:$0xff] %vm5290, %v5285
        %5331 = vst.msk [vmem:[#allocation4 + $0x140] sm:$0xff] %vm5290, %v5286
        %5332 = vst.msk [vmem:[#allocation4 + $0x148] sm:$0xff] %vm5290, %v5287
        %5333 = vst.msk [vmem:[#allocation4 + $0x150] sm:$0xff] %vm5290, %v5288
        %vm5334 = vcmask 188416
        %5335 = vst.msk [vmem:[#allocation4 + $0x158] sm:$0x1] %vm5334, %v5289
        %v5336 = vld [vmem:[#allocation4] ss:$3 sm:$0xff]
        %s5337 = scalar_lea.vmem [#allocation4], 24
        %v5338 = vld [vmem:[%s5337] ss:$3 sm:$0xff]
        %s5339 = scalar_lea.vmem [#allocation4], 48
        %v5340 = vld [vmem:[%s5339] ss:$3 sm:$0xff]
        %s5341 = scalar_lea.vmem [#allocation4], 72
        %v5342 = vld [vmem:[%s5341] ss:$3 sm:$0xff]
        %s5343 = scalar_lea.vmem [#allocation4], 96
        %v5344 = vld [vmem:[%s5343] ss:$3 sm:$0xff]
        %s5345 = scalar_lea.vmem [#allocation4], 120
        %v5346 = vld [vmem:[%s5345] ss:$3 sm:$0xff]
        %s5347 = scalar_lea.vmem [#allocation4], 144
        %v5348 = vld [vmem:[%s5347] ss:$3 sm:$0xff]
        %s5349 = scalar_lea.vmem [#allocation4], 168
        %v5350 = vld [vmem:[%s5349] ss:$3 sm:$0xff]
        %s5351 = scalar_lea.vmem [#allocation4], 192
        %v5352 = vld [vmem:[%s5351] ss:$3 sm:$0xff]
        %s5353 = scalar_lea.vmem [#allocation4], 216
        %v5354 = vld [vmem:[%s5353] ss:$3 sm:$0xff]
        %s5355 = scalar_lea.vmem [#allocation4], 240
        %v5356 = vld [vmem:[%s5355] ss:$3 sm:$0xff]
        %s5357 = scalar_lea.vmem [#allocation4], 264
        %v5358 = vld [vmem:[%s5357] ss:$3 sm:$0xff]
        %s5359 = scalar_lea.vmem [#allocation4], 288
        %v5360 = vld [vmem:[%s5359] ss:$3 sm:$0xff]
        %s5361 = scalar_lea.vmem [#allocation4], 312
        %v5362 = vld [vmem:[%s5361] ss:$3 sm:$0xff]
        %s5363 = scalar_lea.vmem [#allocation4], 336
        %v5364 = vld [vmem:[%s5363] ss:$3 sm:$0x7]
        %s5365 = scalar_lea.vmem [#allocation4], 1
        %v5366 = vld [vmem:[%s5365] ss:$3 sm:$0xff]
        %s5367 = scalar_lea.vmem [#allocation4], 25
        %v5368 = vld [vmem:[%s5367] ss:$3 sm:$0xff]
        %s5369 = scalar_lea.vmem [#allocation4], 49
        %v5370 = vld [vmem:[%s5369] ss:$3 sm:$0xff]
        %s5371 = scalar_lea.vmem [#allocation4], 73
        %v5372 = vld [vmem:[%s5371] ss:$3 sm:$0xff]
        %s5373 = scalar_lea.vmem [#allocation4], 97
        %v5374 = vld [vmem:[%s5373] ss:$3 sm:$0xff]
        %s5375 = scalar_lea.vmem [#allocation4], 121
        %v5376 = vld [vmem:[%s5375] ss:$3 sm:$0xff]
        %s5377 = scalar_lea.vmem [#allocation4], 145
        %v5378 = vld [vmem:[%s5377] ss:$3 sm:$0xff]
        %s5379 = scalar_lea.vmem [#allocation4], 169
        %v5380 = vld [vmem:[%s5379] ss:$3 sm:$0xff]
        %s5381 = scalar_lea.vmem [#allocation4], 193
        %v5382 = vld [vmem:[%s5381] ss:$3 sm:$0xff]
        %s5383 = scalar_lea.vmem [#allocation4], 217
        %v5384 = vld [vmem:[%s5383] ss:$3 sm:$0xff]
        %s5385 = scalar_lea.vmem [#allocation4], 241
        %v5386 = vld [vmem:[%s5385] ss:$3 sm:$0xff]
        %s5387 = scalar_lea.vmem [#allocation4], 265
        %v5388 = vld [vmem:[%s5387] ss:$3 sm:$0xff]
        %s5389 = scalar_lea.vmem [#allocation4], 289
        %v5390 = vld [vmem:[%s5389] ss:$3 sm:$0xff]
        %s5391 = scalar_lea.vmem [#allocation4], 313
        %v5392 = vld [vmem:[%s5391] ss:$3 sm:$0xff]
        %s5393 = scalar_lea.vmem [#allocation4], 337
        %v5394 = vld [vmem:[%s5393] ss:$3 sm:$0x7]
        %v5395 = vmax.f32 %v5336, %v5366
        %v5396 = vmax.f32 %v5338, %v5368
        %v5397 = vmax.f32 %v5340, %v5370
        %v5398 = vmax.f32 %v5342, %v5372
        %v5399 = vmax.f32 %v5344, %v5374
        %v5400 = vmax.f32 %v5346, %v5376
        %v5401 = vmax.f32 %v5348, %v5378
        %v5402 = vmax.f32 %v5350, %v5380
        %v5403 = vmax.f32 %v5352, %v5382
        %v5404 = vmax.f32 %v5354, %v5384
        %v5405 = vmax.f32 %v5356, %v5386
        %v5406 = vmax.f32 %v5358, %v5388
        %v5407 = vmax.f32 %v5360, %v5390
        %v5408 = vmax.f32 %v5362, %v5392
        %v5409 = vmax.f32 %v5364, %v5394
        %s5410 = scalar_lea.vmem [#allocation4], 2
        %v5411 = vld [vmem:[%s5410] ss:$3 sm:$0xff]
        %s5412 = scalar_lea.vmem [#allocation4], 26
        %v5413 = vld [vmem:[%s5412] ss:$3 sm:$0xff]
        %s5414 = scalar_lea.vmem [#allocation4], 50
        %v5415 = vld [vmem:[%s5414] ss:$3 sm:$0xff]
        %s5416 = scalar_lea.vmem [#allocation4], 74
        %v5417 = vld [vmem:[%s5416] ss:$3 sm:$0xff]
        %s5418 = scalar_lea.vmem [#allocation4], 98
        %v5419 = vld [vmem:[%s5418] ss:$3 sm:$0xff]
        %s5420 = scalar_lea.vmem [#allocation4], 122
        %v5421 = vld [vmem:[%s5420] ss:$3 sm:$0xff]
        %s5422 = scalar_lea.vmem [#allocation4], 146
        %v5423 = vld [vmem:[%s5422] ss:$3 sm:$0xff]
        %s5424 = scalar_lea.vmem [#allocation4], 170
        %v5425 = vld [vmem:[%s5424] ss:$3 sm:$0xff]
        %s5426 = scalar_lea.vmem [#allocation4], 194
        %v5427 = vld [vmem:[%s5426] ss:$3 sm:$0xff]
        %s5428 = scalar_lea.vmem [#allocation4], 218
        %v5429 = vld [vmem:[%s5428] ss:$3 sm:$0xff]
        %s5430 = scalar_lea.vmem [#allocation4], 242
        %v5431 = vld [vmem:[%s5430] ss:$3 sm:$0xff]
        %s5432 = scalar_lea.vmem [#allocation4], 266
        %v5433 = vld [vmem:[%s5432] ss:$3 sm:$0xff]
        %s5434 = scalar_lea.vmem [#allocation4], 290
        %v5435 = vld [vmem:[%s5434] ss:$3 sm:$0xff]
        %s5436 = scalar_lea.vmem [#allocation4], 314
        %v5437 = vld [vmem:[%s5436] ss:$3 sm:$0xff]
        %s5438 = scalar_lea.vmem [#allocation4], 338
        %v5439 = vld [vmem:[%s5438] ss:$3 sm:$0x7]
        %v5440 = vmax.f32 %v5395, %v5411
        %v5441 = vmax.f32 %v5396, %v5413
        %v5442 = vmax.f32 %v5397, %v5415
        %v5443 = vmax.f32 %v5398, %v5417
        %v5444 = vmax.f32 %v5399, %v5419
        %v5445 = vmax.f32 %v5400, %v5421
        %v5446 = vmax.f32 %v5401, %v5423
        %v5447 = vmax.f32 %v5402, %v5425
        %v5448 = vmax.f32 %v5403, %v5427
        %v5449 = vmax.f32 %v5404, %v5429
        %v5450 = vmax.f32 %v5405, %v5431
        %v5451 = vmax.f32 %v5406, %v5433
        %v5452 = vmax.f32 %v5407, %v5435
        %v5453 = vmax.f32 %v5408, %v5437
        %v5454 = vmax.f32 %v5409, %v5439
        %5455 = vst.msk [vmem:[#allocation5] sm:$0xff] %vm5290, %v5440
        %5456 = vst.msk [vmem:[#allocation5 + $0x8] sm:$0xff] %vm5290, %v5441
        %5457 = vst.msk [vmem:[#allocation5 + $0x10] sm:$0xff] %vm5290, %v5442
        %5458 = vst.msk [vmem:[#allocation5 + $0x18] sm:$0xff] %vm5290, %v5443
        %5459 = vst.msk [vmem:[#allocation5 + $0x20] sm:$0xff] %vm5290, %v5444
        %5460 = vst.msk [vmem:[#allocation5 + $0x28] sm:$0xff] %vm5290, %v5445
        %5461 = vst.msk [vmem:[#allocation5 + $0x30] sm:$0xff] %vm5290, %v5446
        %5462 = vst.msk [vmem:[#allocation5 + $0x38] sm:$0xff] %vm5290, %v5447
        %5463 = vst.msk [vmem:[#allocation5 + $0x40] sm:$0xff] %vm5290, %v5448
        %5464 = vst.msk [vmem:[#allocation5 + $0x48] sm:$0xff] %vm5290, %v5449
        %5465 = vst.msk [vmem:[#allocation5 + $0x50] sm:$0xff] %vm5290, %v5450
        %5466 = vst.msk [vmem:[#allocation5 + $0x58] sm:$0xff] %vm5290, %v5451
        %5467 = vst.msk [vmem:[#allocation5 + $0x60] sm:$0xff] %vm5290, %v5452
        %5468 = vst.msk [vmem:[#allocation5 + $0x68] sm:$0xff] %vm5290, %v5453
        %vm5469 = vcmask 190464
        %5470 = vst.msk [vmem:[#allocation5 + $0x70] sm:$0x7] %vm5469, %v5454
        %v5471 = vld [vmem:[#allocation5] sm:$0xff]
        %v5472 = vld [vmem:[#allocation5 + $0x8] sm:$0xff]
        %v5473 = vld [vmem:[#allocation5 + $0x10] sm:$0xff]
        %v5474 = vld [vmem:[#allocation5 + $0x18] sm:$0xff]
        %v5475 = vld [vmem:[#allocation5 + $0x20] sm:$0xff]
        %v5476 = vld [vmem:[#allocation5 + $0x28] sm:$0xff]
        %v5477 = vld [vmem:[#allocation5 + $0x30] sm:$0xff]
        %v5478 = vld [vmem:[#allocation5 + $0x38] sm:$0xff]
        %v5479 = vld [vmem:[#allocation5 + $0x40] sm:$0xff]
        %v5480 = vld [vmem:[#allocation5 + $0x48] sm:$0xff]
        %v5481 = vld [vmem:[#allocation5 + $0x50] sm:$0xff]
        %v5482 = vld [vmem:[#allocation5 + $0x58] sm:$0xff]
        %v5483 = vld [vmem:[#allocation5 + $0x60] sm:$0xff]
        %v5484 = vld [vmem:[#allocation5 + $0x68] sm:$0x7f]
        %v5485 = vld [vmem:[%s7] sm:$0xff]
        %v5486 = vld [vmem:[%s7 + $0x8] sm:$0xff]
        %v5487 = vld [vmem:[%s7 + $0x10] sm:$0xff]
        %v5488 = vld [vmem:[#allocation5 + $0x1] sm:$0xff]
        %v5489 = vld [vmem:[#allocation5 + $0x9] sm:$0xff]
        %v5490 = vld [vmem:[#allocation5 + $0x11] sm:$0xff]
        %v5491 = vld [vmem:[#allocation5 + $0x19] sm:$0xff]
        %v5492 = vld [vmem:[#allocation5 + $0x21] sm:$0xff]
        %v5493 = vld [vmem:[#allocation5 + $0x29] sm:$0xff]
        %v5494 = vld [vmem:[#allocation5 + $0x31] sm:$0xff]
        %v5495 = vld [vmem:[#allocation5 + $0x39] sm:$0xff]
        %v5496 = vld [vmem:[#allocation5 + $0x41] sm:$0xff]
        %v5497 = vld [vmem:[#allocation5 + $0x49] sm:$0xff]
        %v5498 = vld [vmem:[#allocation5 + $0x51] sm:$0xff]
        %v5499 = vld [vmem:[#allocation5 + $0x59] sm:$0xff]
        %v5500 = vld [vmem:[#allocation5 + $0x61] sm:$0xff]
        %v5501 = vld [vmem:[#allocation5 + $0x69] sm:$0x7f]
        %s5502 = scalar_lea.vmem %s7, 24
        %v5503 = vld [vmem:[%s5502] sm:$0xff]
        %v5504 = vld [vmem:[%s5502 + $0x8] sm:$0xff]
        %v5505 = vld [vmem:[%s5502 + $0x10] sm:$0xff]
        %v5507 = vsel %vm5290, %v5488, 0
        %v5510 = vsel %vm5290, %v5489, 0
        %v5513 = vsel %vm5290, %v5490, 0
        %v5516 = vsel %vm5290, %v5491, 0
        %v5519 = vsel %vm5290, %v5492, 0
        %v5522 = vsel %vm5290, %v5493, 0
        %v5525 = vsel %vm5290, %v5494, 0
        %v5528 = vsel %vm5290, %v5495, 0
        %v5531 = vsel %vm5290, %v5496, 0
        %v5534 = vsel %vm5290, %v5497, 0
        %v5537 = vsel %vm5290, %v5498, 0
        %v5540 = vsel %vm5290, %v5499, 0
        %v5543 = vsel %vm5290, %v5500, 0
        %v5546 = vsel %vm5290, %v5501, 0
        %5548 = vmatprep.subr.mxu0 0.0
        %5549 = vmatpush1.msra.mxu0 %v5503
        %5550 = vmatprep.subr.mxu0 0.0
        %5551 = vmatpush1.msra.mxu0 %v5504
        %5552 = vmatprep.subr.mxu0 0.0
        %5553 = vmatpush1.msra.mxu0 %v5505
        %5554 = vmatprep.subr.mxu0 0.0
        %5555 = vmatpush1.msra.mxu0 0.0
        %5556 = vmatprep.subr.mxu0 0.0
        %5557 = vmatpush1.msra.mxu0 0.0
        %5558 = vmatprep.subr.mxu0 0.0
        %5559 = vmatpush1.msra.mxu0 0.0
        %5560 = vmatprep.subr.mxu0 0.0
        %5561 = vmatpush1.msra.mxu0 0.0
        %5562 = vmatprep.subr.mxu0 0.0
        %5563 = vmatpush1.msra.mxu0 0.0
        %5564 = vmatprep.subr.mxu0 0.0
        %5565 = vmatpush1.msra.mxu0 0.0
        %5566 = vmatprep.subr.mxu0 0.0
        %5567 = vmatpush1.msra.mxu0 0.0
        %5568 = vmatprep.subr.mxu0 0.0
        %5569 = vmatpush1.msra.mxu0 0.0
        %5570 = vmatprep.subr.mxu0 0.0
        %5571 = vmatpush1.msra.mxu0 0.0
        %5572 = vmatprep.subr.mxu0 0.0
        %5573 = vmatpush1.msra.mxu0 0.0
        %5574 = vmatprep.subr.mxu0 0.0
        %5575 = vmatpush1.msra.mxu0 0.0
        %5576 = vmatprep.subr.mxu0 0.0
        %5577 = vmatpush1.msra.mxu0 0.0
        %5578 = vmatprep.subr.mxu0 0.0
        %5579 = vmatpush1.msra.mxu0 0.0
        %5580 = vmatprep.subr.mxu0 0.0
        %5581 = vmatpush1.msra.mxu0 0.0
        %5582 = vmatprep.subr.mxu0 0.0
        %5583 = vmatpush1.msra.mxu0 0.0
        %5584 = vmatprep.subr.mxu0 0.0
        %5585 = vmatpush1.msra.mxu0 0.0
        %5586 = vmatprep.subr.mxu0 0.0
        %5587 = vmatpush1.msra.mxu0 0.0
        %5588 = vmatprep.subr.mxu0 0.0
        %5589 = vmatpush1.msra.mxu0 0.0
        %5590 = vmatprep.subr.mxu0 0.0
        %5591 = vmatpush1.msra.mxu0 0.0
        %5592 = vmatprep.subr.mxu0 0.0
        %5593 = vmatpush1.msra.mxu0 0.0
        %5594 = vmatprep.subr.mxu0 0.0
        %5595 = vmatpush1.msra.mxu0 0.0
        %5596 = vmatprep.subr.mxu0 0.0
        %5597 = vmatpush1.msra.mxu0 0.0
        %5598 = vmatprep.subr.mxu0 0.0
        %5599 = vmatpush1.msra.mxu0 0.0
        %5600 = vmatprep.subr.mxu0 0.0
        %5601 = vmatpush1.msra.mxu0 0.0
        %5602 = vmatprep.subr.mxu0 0.0
        %5603 = vmatpush1.msra.mxu0 0.0
        %5604 = vmatprep.subr.mxu0 0.0
        %5605 = vmatpush1.msra.mxu0 0.0
        %5606 = vmatprep.subr.mxu0 0.0
        %5607 = vmatpush1.msra.mxu0 0.0
        %5608 = vmatprep.subr.mxu0 0.0
        %5609 = vmatpush1.msra.mxu0 0.0
        %5610 = vmatprep.subr.mxu0 0.0
        %5611 = vmatpush1.msra.mxu0 0.0
        %5612 = vmatprep.mubr.f32.mxu0 0.0
        %5613 = vmatmul.mubr.f32.gmra.mrb[0].mxu0 %v5507
        %v5614 = vpop.f32.mrb[0].mxu0
        %v5615 = vadd.f32 0.0, %v5614
        %v5616 = vpop.f32.mrb[0].mxu0
        %5617 = vmatprep.mubr.f32.mxu0 0.0
        %5618 = vmatmul.mubr.f32.gmra.mrb[0].mxu0 %v5510
        %v5619 = vpop.f32.mrb[0].mxu0
        %v5620 = vadd.f32 0.0, %v5619
        %v5621 = vpop.f32.mrb[0].mxu0
        %5622 = vmatprep.mubr.f32.mxu0 0.0
        %5623 = vmatmul.mubr.f32.gmra.mrb[0].mxu0 %v5513
        %v5624 = vpop.f32.mrb[0].mxu0
        %v5625 = vadd.f32 0.0, %v5624
        %v5626 = vpop.f32.mrb[0].mxu0
        %5627 = vmatprep.mubr.f32.mxu0 0.0
        %5628 = vmatmul.mubr.f32.gmra.mrb[0].mxu0 %v5516
        %v5629 = vpop.f32.mrb[0].mxu0
        %v5630 = vadd.f32 0.0, %v5629
        %v5631 = vpop.f32.mrb[0].mxu0
        %5632 = vmatprep.mubr.f32.mxu0 0.0
        %5633 = vmatmul.mubr.f32.gmra.mrb[0].mxu0 %v5519
        %v5634 = vpop.f32.mrb[0].mxu0
        %v5635 = vadd.f32 0.0, %v5634
        %v5636 = vpop.f32.mrb[0].mxu0
        %5637 = vmatprep.mubr.f32.mxu0 0.0
        %5638 = vmatmul.mubr.f32.gmra.mrb[0].mxu0 %v5522
        %v5639 = vpop.f32.mrb[0].mxu0
        %v5640 = vadd.f32 0.0, %v5639
        %v5641 = vpop.f32.mrb[0].mxu0
        %5642 = vmatprep.mubr.f32.mxu0 0.0
        %5643 = vmatmul.mubr.f32.gmra.mrb[0].mxu0 %v5525
        %v5644 = vpop.f32.mrb[0].mxu0
        %v5645 = vadd.f32 0.0, %v5644
        %v5646 = vpop.f32.mrb[0].mxu0
        %5647 = vmatprep.mubr.f32.mxu0 0.0
        %5648 = vmatmul.mubr.f32.gmra.mrb[0].mxu0 %v5528
        %v5649 = vpop.f32.mrb[0].mxu0
        %v5650 = vadd.f32 0.0, %v5649
        %v5651 = vpop.f32.mrb[0].mxu0
        %5652 = vmatprep.mubr.f32.mxu0 0.0
        %5653 = vmatmul.mubr.f32.gmra.mrb[0].mxu0 %v5531
        %v5654 = vpop.f32.mrb[0].mxu0
        %v5655 = vadd.f32 0.0, %v5654
        %v5656 = vpop.f32.mrb[0].mxu0
        %5657 = vmatprep.mubr.f32.mxu0 0.0
        %5658 = vmatmul.mubr.f32.gmra.mrb[0].mxu0 %v5534
        %v5659 = vpop.f32.mrb[0].mxu0
        %v5660 = vadd.f32 0.0, %v5659
        %v5661 = vpop.f32.mrb[0].mxu0
        %5662 = vmatprep.mubr.f32.mxu0 0.0
        %5663 = vmatmul.mubr.f32.gmra.mrb[0].mxu0 %v5537
        %v5664 = vpop.f32.mrb[0].mxu0
        %v5665 = vadd.f32 0.0, %v5664
        %v5666 = vpop.f32.mrb[0].mxu0
        %5667 = vmatprep.mubr.f32.mxu0 0.0
        %5668 = vmatmul.mubr.f32.gmra.mrb[0].mxu0 %v5540
        %v5669 = vpop.f32.mrb[0].mxu0
        %v5670 = vadd.f32 0.0, %v5669
        %v5671 = vpop.f32.mrb[0].mxu0
        %5672 = vmatprep.mubr.f32.mxu0 0.0
        %5673 = vmatmul.mubr.f32.gmra.mrb[0].mxu0 %v5543
        %v5674 = vpop.f32.mrb[0].mxu0
        %v5675 = vadd.f32 0.0, %v5674
        %v5676 = vpop.f32.mrb[0].mxu0
        %5677 = vmatprep.mubr.f32.mxu0 0.0
        %5678 = vmatmul.mubr.f32.gmra.mrb[0].mxu0 %v5546
        %v5679 = vpop.f32.mrb[0].mxu0
        %v5680 = vadd.f32 0.0, %v5679
        %v5681 = vpop.f32.mrb[0].mxu0
        %5682 = vdwg.mxu0
        %v5684 = vsel %vm5290, %v5471, 0
        %v5687 = vsel %vm5290, %v5472, 0
        %v5690 = vsel %vm5290, %v5473, 0
        %v5693 = vsel %vm5290, %v5474, 0
        %v5696 = vsel %vm5290, %v5475, 0
        %v5699 = vsel %vm5290, %v5476, 0
        %v5702 = vsel %vm5290, %v5477, 0
        %v5705 = vsel %vm5290, %v5478, 0
        %v5708 = vsel %vm5290, %v5479, 0
        %v5711 = vsel %vm5290, %v5480, 0
        %v5714 = vsel %vm5290, %v5481, 0
        %v5717 = vsel %vm5290, %v5482, 0
        %v5720 = vsel %vm5290, %v5483, 0
        %v5723 = vsel %vm5290, %v5484, 0
        %5725 = vmatprep.subr.mxu0 0.0
        %5726 = vmatpush1.msra.mxu0 %v5485
        %5727 = vmatprep.subr.mxu0 0.0
        %5728 = vmatpush1.msra.mxu0 %v5486
        %5729 = vmatprep.subr.mxu0 0.0
        %5730 = vmatpush1.msra.mxu0 %v5487
        %5731 = vmatprep.subr.mxu0 0.0
        %5732 = vmatpush1.msra.mxu0 0.0
        %5733 = vmatprep.subr.mxu0 0.0
        %5734 = vmatpush1.msra.mxu0 0.0
        %5735 = vmatprep.subr.mxu0 0.0
        %5736 = vmatpush1.msra.mxu0 0.0
        %5737 = vmatprep.subr.mxu0 0.0
        %5738 = vmatpush1.msra.mxu0 0.0
        %5739 = vmatprep.subr.mxu0 0.0
        %5740 = vmatpush1.msra.mxu0 0.0
        %5741 = vmatprep.subr.mxu0 0.0
        %5742 = vmatpush1.msra.mxu0 0.0
        %5743 = vmatprep.subr.mxu0 0.0
        %5744 = vmatpush1.msra.mxu0 0.0
        %5745 = vmatprep.subr.mxu0 0.0
        %5746 = vmatpush1.msra.mxu0 0.0
        %5747 = vmatprep.subr.mxu0 0.0
        %5748 = vmatpush1.msra.mxu0 0.0
        %5749 = vmatprep.subr.mxu0 0.0
        %5750 = vmatpush1.msra.mxu0 0.0
        %5751 = vmatprep.subr.mxu0 0.0
        %5752 = vmatpush1.msra.mxu0 0.0
        %5753 = vmatprep.subr.mxu0 0.0
        %5754 = vmatpush1.msra.mxu0 0.0
        %5755 = vmatprep.subr.mxu0 0.0
        %5756 = vmatpush1.msra.mxu0 0.0
        %5757 = vmatprep.subr.mxu0 0.0
        %5758 = vmatpush1.msra.mxu0 0.0
        %5759 = vmatprep.subr.mxu0 0.0
        %5760 = vmatpush1.msra.mxu0 0.0
        %5761 = vmatprep.subr.mxu0 0.0
        %5762 = vmatpush1.msra.mxu0 0.0
        %5763 = vmatprep.subr.mxu0 0.0
        %5764 = vmatpush1.msra.mxu0 0.0
        %5765 = vmatprep.subr.mxu0 0.0
        %5766 = vmatpush1.msra.mxu0 0.0
        %5767 = vmatprep.subr.mxu0 0.0
        %5768 = vmatpush1.msra.mxu0 0.0
        %5769 = vmatprep.subr.mxu0 0.0
        %5770 = vmatpush1.msra.mxu0 0.0
        %5771 = vmatprep.subr.mxu0 0.0
        %5772 = vmatpush1.msra.mxu0 0.0
        %5773 = vmatprep.subr.mxu0 0.0
        %5774 = vmatpush1.msra.mxu0 0.0
        %5775 = vmatprep.subr.mxu0 0.0
        %5776 = vmatpush1.msra.mxu0 0.0
        %5777 = vmatprep.subr.mxu0 0.0
        %5778 = vmatpush1.msra.mxu0 0.0
        %5779 = vmatprep.subr.mxu0 0.0
        %5780 = vmatpush1.msra.mxu0 0.0
        %5781 = vmatprep.subr.mxu0 0.0
        %5782 = vmatpush1.msra.mxu0 0.0
        %5783 = vmatprep.subr.mxu0 0.0
        %5784 = vmatpush1.msra.mxu0 0.0
        %5785 = vmatprep.subr.mxu0 0.0
        %5786 = vmatpush1.msra.mxu0 0.0
        %5787 = vmatprep.subr.mxu0 0.0
        %5788 = vmatpush1.msra.mxu0 0.0
        %5789 = vmatprep.mubr.f32.mxu0 0.0
        %5790 = vmatmul.mubr.f32.gmra.mrb[0].mxu0 %v5684
        %v5791 = vpop.f32.mrb[0].mxu0
        %v5792 = vadd.f32 %v5615, %v5791
        %v5793 = vpop.f32.mrb[0].mxu0
        %5794 = vmatprep.mubr.f32.mxu0 0.0
        %5795 = vmatmul.mubr.f32.gmra.mrb[0].mxu0 %v5687
        %v5796 = vpop.f32.mrb[0].mxu0
        %v5797 = vadd.f32 %v5620, %v5796
        %v5798 = vpop.f32.mrb[0].mxu0
        %5799 = vmatprep.mubr.f32.mxu0 0.0
        %5800 = vmatmul.mubr.f32.gmra.mrb[0].mxu0 %v5690
        %v5801 = vpop.f32.mrb[0].mxu0
        %v5802 = vadd.f32 %v5625, %v5801
        %v5803 = vpop.f32.mrb[0].mxu0
        %5804 = vmatprep.mubr.f32.mxu0 0.0
        %5805 = vmatmul.mubr.f32.gmra.mrb[0].mxu0 %v5693
        %v5806 = vpop.f32.mrb[0].mxu0
        %v5807 = vadd.f32 %v5630, %v5806
        %v5808 = vpop.f32.mrb[0].mxu0
        %5809 = vmatprep.mubr.f32.mxu0 0.0
        %5810 = vmatmul.mubr.f32.gmra.mrb[0].mxu0 %v5696
        %v5811 = vpop.f32.mrb[0].mxu0
        %v5812 = vadd.f32 %v5635, %v5811
        %v5813 = vpop.f32.mrb[0].mxu0
        %5814 = vmatprep.mubr.f32.mxu0 0.0
        %5815 = vmatmul.mubr.f32.gmra.mrb[0].mxu0 %v5699
        %v5816 = vpop.f32.mrb[0].mxu0
        %v5817 = vadd.f32 %v5640, %v5816
        %v5818 = vpop.f32.mrb[0].mxu0
        %5819 = vmatprep.mubr.f32.mxu0 0.0
        %5820 = vmatmul.mubr.f32.gmra.mrb[0].mxu0 %v5702
        %v5821 = vpop.f32.mrb[0].mxu0
        %v5822 = vadd.f32 %v5645, %v5821
        %v5823 = vpop.f32.mrb[0].mxu0
        %5824 = vmatprep.mubr.f32.mxu0 0.0
        %5825 = vmatmul.mubr.f32.gmra.mrb[0].mxu0 %v5705
        %v5826 = vpop.f32.mrb[0].mxu0
        %v5827 = vadd.f32 %v5650, %v5826
        %v5828 = vpop.f32.mrb[0].mxu0
        %5829 = vmatprep.mubr.f32.mxu0 0.0
        %5830 = vmatmul.mubr.f32.gmra.mrb[0].mxu0 %v5708
        %v5831 = vpop.f32.mrb[0].mxu0
        %v5832 = vadd.f32 %v5655, %v5831
        %v5833 = vpop.f32.mrb[0].mxu0
        %5834 = vmatprep.mubr.f32.mxu0 0.0
        %5835 = vmatmul.mubr.f32.gmra.mrb[0].mxu0 %v5711
        %v5836 = vpop.f32.mrb[0].mxu0
        %v5837 = vadd.f32 %v5660, %v5836
        %v5838 = vpop.f32.mrb[0].mxu0
        %5839 = vmatprep.mubr.f32.mxu0 0.0
        %5840 = vmatmul.mubr.f32.gmra.mrb[0].mxu0 %v5714
        %v5841 = vpop.f32.mrb[0].mxu0
        %v5842 = vadd.f32 %v5665, %v5841
        %v5843 = vpop.f32.mrb[0].mxu0
        %5844 = vmatprep.mubr.f32.mxu0 0.0
        %5845 = vmatmul.mubr.f32.gmra.mrb[0].mxu0 %v5717
        %v5846 = vpop.f32.mrb[0].mxu0
        %v5847 = vadd.f32 %v5670, %v5846
        %v5848 = vpop.f32.mrb[0].mxu0
        %5849 = vmatprep.mubr.f32.mxu0 0.0
        %5850 = vmatmul.mubr.f32.gmra.mrb[0].mxu0 %v5720
        %v5851 = vpop.f32.mrb[0].mxu0
        %v5852 = vadd.f32 %v5675, %v5851
        %v5853 = vpop.f32.mrb[0].mxu0
        %5854 = vmatprep.mubr.f32.mxu0 0.0
        %5855 = vmatmul.mubr.f32.gmra.mrb[0].mxu0 %v5723
        %v5856 = vpop.f32.mrb[0].mxu0
        %v5857 = vadd.f32 %v5680, %v5856
        %v5858 = vpop.f32.mrb[0].mxu0
        %5859 = vdwg.mxu0
        %v5860 = vld [vmem:[#allocation5 + $0x2] sm:$0xff]
        %v5861 = vld [vmem:[#allocation5 + $0xa] sm:$0xff]
        %v5862 = vld [vmem:[#allocation5 + $0x12] sm:$0xff]
        %v5863 = vld [vmem:[#allocation5 + $0x1a] sm:$0xff]
        %v5864 = vld [vmem:[#allocation5 + $0x22] sm:$0xff]
        %v5865 = vld [vmem:[#allocation5 + $0x2a] sm:$0xff]
        %v5866 = vld [vmem:[#allocation5 + $0x32] sm:$0xff]
        %v5867 = vld [vmem:[#allocation5 + $0x3a] sm:$0xff]
        %v5868 = vld [vmem:[#allocation5 + $0x42] sm:$0xff]
        %v5869 = vld [vmem:[#allocation5 + $0x4a] sm:$0xff]
        %v5870 = vld [vmem:[#allocation5 + $0x52] sm:$0xff]
        %v5871 = vld [vmem:[#allocation5 + $0x5a] sm:$0xff]
        %v5872 = vld [vmem:[#allocation5 + $0x62] sm:$0xff]
        %v5873 = vld [vmem:[#allocation5 + $0x6a] sm:$0x7f]
        %s5874 = scalar_lea.vmem %s7, 48
        %v5875 = vld [vmem:[%s5874] sm:$0xff]
        %v5876 = vld [vmem:[%s5874 + $0x8] sm:$0xff]
        %v5877 = vld [vmem:[%s5874 + $0x10] sm:$0xff]
        %v5879 = vsel %vm5290, %v5860, 0
        %v5882 = vsel %vm5290, %v5861, 0
        %v5885 = vsel %vm5290, %v5862, 0
        %v5888 = vsel %vm5290, %v5863, 0
        %v5891 = vsel %vm5290, %v5864, 0
        %v5894 = vsel %vm5290, %v5865, 0
        %v5897 = vsel %vm5290, %v5866, 0
        %v5900 = vsel %vm5290, %v5867, 0
        %v5903 = vsel %vm5290, %v5868, 0
        %v5906 = vsel %vm5290, %v5869, 0
        %v5909 = vsel %vm5290, %v5870, 0
        %v5912 = vsel %vm5290, %v5871, 0
        %v5915 = vsel %vm5290, %v5872, 0
        %v5918 = vsel %vm5290, %v5873, 0
        %5920 = vmatprep.subr.mxu0 0.0
        %5921 = vmatpush1.msra.mxu0 %v5875
        %5922 = vmatprep.subr.mxu0 0.0
        %5923 = vmatpush1.msra.mxu0 %v5876
        %5924 = vmatprep.subr.mxu0 0.0
        %5925 = vmatpush1.msra.mxu0 %v5877
        %5926 = vmatprep.subr.mxu0 0.0
        %5927 = vmatpush1.msra.mxu0 0.0
        %5928 = vmatprep.subr.mxu0 0.0
        %5929 = vmatpush1.msra.mxu0 0.0
        %5930 = vmatprep.subr.mxu0 0.0
        %5931 = vmatpush1.msra.mxu0 0.0
        %5932 = vmatprep.subr.mxu0 0.0
        %5933 = vmatpush1.msra.mxu0 0.0
        %5934 = vmatprep.subr.mxu0 0.0
        %5935 = vmatpush1.msra.mxu0 0.0
        %5936 = vmatprep.subr.mxu0 0.0
        %5937 = vmatpush1.msra.mxu0 0.0
        %5938 = vmatprep.subr.mxu0 0.0
        %5939 = vmatpush1.msra.mxu0 0.0
        %5940 = vmatprep.subr.mxu0 0.0
        %5941 = vmatpush1.msra.mxu0 0.0
        %5942 = vmatprep.subr.mxu0 0.0
        %5943 = vmatpush1.msra.mxu0 0.0
        %5944 = vmatprep.subr.mxu0 0.0
        %5945 = vmatpush1.msra.mxu0 0.0
        %5946 = vmatprep.subr.mxu0 0.0
        %5947 = vmatpush1.msra.mxu0 0.0
        %5948 = vmatprep.subr.mxu0 0.0
        %5949 = vmatpush1.msra.mxu0 0.0
        %5950 = vmatprep.subr.mxu0 0.0
        %5951 = vmatpush1.msra.mxu0 0.0
        %5952 = vmatprep.subr.mxu0 0.0
        %5953 = vmatpush1.msra.mxu0 0.0
        %5954 = vmatprep.subr.mxu0 0.0
        %5955 = vmatpush1.msra.mxu0 0.0
        %5956 = vmatprep.subr.mxu0 0.0
        %5957 = vmatpush1.msra.mxu0 0.0
        %5958 = vmatprep.subr.mxu0 0.0
        %5959 = vmatpush1.msra.mxu0 0.0
        %5960 = vmatprep.subr.mxu0 0.0
        %5961 = vmatpush1.msra.mxu0 0.0
        %5962 = vmatprep.subr.mxu0 0.0
        %5963 = vmatpush1.msra.mxu0 0.0
        %5964 = vmatprep.subr.mxu0 0.0
        %5965 = vmatpush1.msra.mxu0 0.0
        %5966 = vmatprep.subr.mxu0 0.0
        %5967 = vmatpush1.msra.mxu0 0.0
        %5968 = vmatprep.subr.mxu0 0.0
        %5969 = vmatpush1.msra.mxu0 0.0
        %5970 = vmatprep.subr.mxu0 0.0
        %5971 = vmatpush1.msra.mxu0 0.0
        %5972 = vmatprep.subr.mxu0 0.0
        %5973 = vmatpush1.msra.mxu0 0.0
        %5974 = vmatprep.subr.mxu0 0.0
        %5975 = vmatpush1.msra.mxu0 0.0
        %5976 = vmatprep.subr.mxu0 0.0
        %5977 = vmatpush1.msra.mxu0 0.0
        %5978 = vmatprep.subr.mxu0 0.0
        %5979 = vmatpush1.msra.mxu0 0.0
        %5980 = vmatprep.subr.mxu0 0.0
        %5981 = vmatpush1.msra.mxu0 0.0
        %5982 = vmatprep.subr.mxu0 0.0
        %5983 = vmatpush1.msra.mxu0 0.0
        %5984 = vmatprep.mubr.f32.mxu0 0.0
        %5985 = vmatmul.mubr.f32.gmra.mrb[0].mxu0 %v5879
        %v5986 = vpop.f32.mrb[0].mxu0
        %v5987 = vadd.f32 0.0, %v5986
        %v5988 = vpop.f32.mrb[0].mxu0
        %5989 = vmatprep.mubr.f32.mxu0 0.0
        %5990 = vmatmul.mubr.f32.gmra.mrb[0].mxu0 %v5882
        %v5991 = vpop.f32.mrb[0].mxu0
        %v5992 = vadd.f32 0.0, %v5991
        %v5993 = vpop.f32.mrb[0].mxu0
        %5994 = vmatprep.mubr.f32.mxu0 0.0
        %5995 = vmatmul.mubr.f32.gmra.mrb[0].mxu0 %v5885
        %v5996 = vpop.f32.mrb[0].mxu0
        %v5997 = vadd.f32 0.0, %v5996
        %v5998 = vpop.f32.mrb[0].mxu0
        %5999 = vmatprep.mubr.f32.mxu0 0.0
        %6000 = vmatmul.mubr.f32.gmra.mrb[0].mxu0 %v5888
        %v6001 = vpop.f32.mrb[0].mxu0
        %v6002 = vadd.f32 0.0, %v6001
        %v6003 = vpop.f32.mrb[0].mxu0
        %6004 = vmatprep.mubr.f32.mxu0 0.0
        %6005 = vmatmul.mubr.f32.gmra.mrb[0].mxu0 %v5891
        %v6006 = vpop.f32.mrb[0].mxu0
        %v6007 = vadd.f32 0.0, %v6006
        %v6008 = vpop.f32.mrb[0].mxu0
        %6009 = vmatprep.mubr.f32.mxu0 0.0
        %6010 = vmatmul.mubr.f32.gmra.mrb[0].mxu0 %v5894
        %v6011 = vpop.f32.mrb[0].mxu0
        %v6012 = vadd.f32 0.0, %v6011
        %v6013 = vpop.f32.mrb[0].mxu0
        %6014 = vmatprep.mubr.f32.mxu0 0.0
        %6015 = vmatmul.mubr.f32.gmra.mrb[0].mxu0 %v5897
        %v6016 = vpop.f32.mrb[0].mxu0
        %v6017 = vadd.f32 0.0, %v6016
        %v6018 = vpop.f32.mrb[0].mxu0
        %6019 = vmatprep.mubr.f32.mxu0 0.0
        %6020 = vmatmul.mubr.f32.gmra.mrb[0].mxu0 %v5900
        %v6021 = vpop.f32.mrb[0].mxu0
        %v6022 = vadd.f32 0.0, %v6021
        %v6023 = vpop.f32.mrb[0].mxu0
        %6024 = vmatprep.mubr.f32.mxu0 0.0
        %6025 = vmatmul.mubr.f32.gmra.mrb[0].mxu0 %v5903
        %v6026 = vpop.f32.mrb[0].mxu0
        %v6027 = vadd.f32 0.0, %v6026
        %v6028 = vpop.f32.mrb[0].mxu0
        %6029 = vmatprep.mubr.f32.mxu0 0.0
        %6030 = vmatmul.mubr.f32.gmra.mrb[0].mxu0 %v5906
        %v6031 = vpop.f32.mrb[0].mxu0
        %v6032 = vadd.f32 0.0, %v6031
        %v6033 = vpop.f32.mrb[0].mxu0
        %6034 = vmatprep.mubr.f32.mxu0 0.0
        %6035 = vmatmul.mubr.f32.gmra.mrb[0].mxu0 %v5909
        %v6036 = vpop.f32.mrb[0].mxu0
        %v6037 = vadd.f32 0.0, %v6036
        %v6038 = vpop.f32.mrb[0].mxu0
        %6039 = vmatprep.mubr.f32.mxu0 0.0
        %6040 = vmatmul.mubr.f32.gmra.mrb[0].mxu0 %v5912
        %v6041 = vpop.f32.mrb[0].mxu0
        %v6042 = vadd.f32 0.0, %v6041
        %v6043 = vpop.f32.mrb[0].mxu0
        %6044 = vmatprep.mubr.f32.mxu0 0.0
        %6045 = vmatmul.mubr.f32.gmra.mrb[0].mxu0 %v5915
        %v6046 = vpop.f32.mrb[0].mxu0
        %v6047 = vadd.f32 0.0, %v6046
        %v6048 = vpop.f32.mrb[0].mxu0
        %6049 = vmatprep.mubr.f32.mxu0 0.0
        %6050 = vmatmul.mubr.f32.gmra.mrb[0].mxu0 %v5918
        %v6051 = vpop.f32.mrb[0].mxu0
        %v6052 = vadd.f32 0.0, %v6051
        %v6053 = vpop.f32.mrb[0].mxu0
        %6054 = vdwg.mxu0
        %v6055 = vadd.f32 %v5792, %v5987
        %v6056 = vadd.f32 %v5797, %v5992
        %v6057 = vadd.f32 %v5802, %v5997
        %v6058 = vadd.f32 %v5807, %v6002
        %v6059 = vadd.f32 %v5812, %v6007
        %v6060 = vadd.f32 %v5817, %v6012
        %v6061 = vadd.f32 %v5822, %v6017
        %v6062 = vadd.f32 %v5827, %v6022
        %v6063 = vadd.f32 %v5832, %v6027
        %v6064 = vadd.f32 %v5837, %v6032
        %v6065 = vadd.f32 %v5842, %v6037
        %v6066 = vadd.f32 %v5847, %v6042
        %v6067 = vadd.f32 %v5852, %v6047
        %v6068 = vadd.f32 %v5857, %v6052
        %v6069 = vld [vmem:[#allocation5 + $0x3] sm:$0xff]
        %v6070 = vld [vmem:[#allocation5 + $0xb] sm:$0xff]
        %v6071 = vld [vmem:[#allocation5 + $0x13] sm:$0xff]
        %v6072 = vld [vmem:[#allocation5 + $0x1b] sm:$0xff]
        %v6073 = vld [vmem:[#allocation5 + $0x23] sm:$0xff]
        %v6074 = vld [vmem:[#allocation5 + $0x2b] sm:$0xff]
        %v6075 = vld [vmem:[#allocation5 + $0x33] sm:$0xff]
        %v6076 = vld [vmem:[#allocation5 + $0x3b] sm:$0xff]
        %v6077 = vld [vmem:[#allocation5 + $0x43] sm:$0xff]
        %v6078 = vld [vmem:[#allocation5 + $0x4b] sm:$0xff]
        %v6079 = vld [vmem:[#allocation5 + $0x53] sm:$0xff]
        %v6080 = vld [vmem:[#allocation5 + $0x5b] sm:$0xff]
        %v6081 = vld [vmem:[#allocation5 + $0x63] sm:$0xff]
        %v6082 = vld [vmem:[#allocation5 + $0x6b] sm:$0x7f]
        %s6083 = scalar_lea.vmem %s7, 72
        %v6084 = vld [vmem:[%s6083] sm:$0xff]
        %v6085 = vld [vmem:[%s6083 + $0x8] sm:$0xff]
        %v6086 = vld [vmem:[%s6083 + $0x10] sm:$0xff]
        %v6088 = vsel %vm5290, %v6069, 0
        %v6091 = vsel %vm5290, %v6070, 0
        %v6094 = vsel %vm5290, %v6071, 0
        %v6097 = vsel %vm5290, %v6072, 0
        %v6100 = vsel %vm5290, %v6073, 0
        %v6103 = vsel %vm5290, %v6074, 0
        %v6106 = vsel %vm5290, %v6075, 0
        %v6109 = vsel %vm5290, %v6076, 0
        %v6112 = vsel %vm5290, %v6077, 0
        %v6115 = vsel %vm5290, %v6078, 0
        %v6118 = vsel %vm5290, %v6079, 0
        %v6121 = vsel %vm5290, %v6080, 0
        %v6124 = vsel %vm5290, %v6081, 0
        %v6127 = vsel %vm5290, %v6082, 0
        %6129 = vmatprep.subr.mxu0 0.0
        %6130 = vmatpush1.msra.mxu0 %v6084
        %6131 = vmatprep.subr.mxu0 0.0
        %6132 = vmatpush1.msra.mxu0 %v6085
        %6133 = vmatprep.subr.mxu0 0.0
        %6134 = vmatpush1.msra.mxu0 %v6086
        %6135 = vmatprep.subr.mxu0 0.0
        %6136 = vmatpush1.msra.mxu0 0.0
        %6137 = vmatprep.subr.mxu0 0.0
        %6138 = vmatpush1.msra.mxu0 0.0
        %6139 = vmatprep.subr.mxu0 0.0
        %6140 = vmatpush1.msra.mxu0 0.0
        %6141 = vmatprep.subr.mxu0 0.0
        %6142 = vmatpush1.msra.mxu0 0.0
        %6143 = vmatprep.subr.mxu0 0.0
        %6144 = vmatpush1.msra.mxu0 0.0
        %6145 = vmatprep.subr.mxu0 0.0
        %6146 = vmatpush1.msra.mxu0 0.0
        %6147 = vmatprep.subr.mxu0 0.0
        %6148 = vmatpush1.msra.mxu0 0.0
        %6149 = vmatprep.subr.mxu0 0.0
        %6150 = vmatpush1.msra.mxu0 0.0
        %6151 = vmatprep.subr.mxu0 0.0
        %6152 = vmatpush1.msra.mxu0 0.0
        %6153 = vmatprep.subr.mxu0 0.0
        %6154 = vmatpush1.msra.mxu0 0.0
        %6155 = vmatprep.subr.mxu0 0.0
        %6156 = vmatpush1.msra.mxu0 0.0
        %6157 = vmatprep.subr.mxu0 0.0
        %6158 = vmatpush1.msra.mxu0 0.0
        %6159 = vmatprep.subr.mxu0 0.0
        %6160 = vmatpush1.msra.mxu0 0.0
        %6161 = vmatprep.subr.mxu0 0.0
        %6162 = vmatpush1.msra.mxu0 0.0
        %6163 = vmatprep.subr.mxu0 0.0
        %6164 = vmatpush1.msra.mxu0 0.0
        %6165 = vmatprep.subr.mxu0 0.0
        %6166 = vmatpush1.msra.mxu0 0.0
        %6167 = vmatprep.subr.mxu0 0.0
        %6168 = vmatpush1.msra.mxu0 0.0
        %6169 = vmatprep.subr.mxu0 0.0
        %6170 = vmatpush1.msra.mxu0 0.0
        %6171 = vmatprep.subr.mxu0 0.0
        %6172 = vmatpush1.msra.mxu0 0.0
        %6173 = vmatprep.subr.mxu0 0.0
        %6174 = vmatpush1.msra.mxu0 0.0
        %6175 = vmatprep.subr.mxu0 0.0
        %6176 = vmatpush1.msra.mxu0 0.0
        %6177 = vmatprep.subr.mxu0 0.0
        %6178 = vmatpush1.msra.mxu0 0.0
        %6179 = vmatprep.subr.mxu0 0.0
        %6180 = vmatpush1.msra.mxu0 0.0
        %6181 = vmatprep.subr.mxu0 0.0
        %6182 = vmatpush1.msra.mxu0 0.0
        %6183 = vmatprep.subr.mxu0 0.0
        %6184 = vmatpush1.msra.mxu0 0.0
        %6185 = vmatprep.subr.mxu0 0.0
        %6186 = vmatpush1.msra.mxu0 0.0
        %6187 = vmatprep.subr.mxu0 0.0
        %6188 = vmatpush1.msra.mxu0 0.0
        %6189 = vmatprep.subr.mxu0 0.0
        %6190 = vmatpush1.msra.mxu0 0.0
        %6191 = vmatprep.subr.mxu0 0.0
        %6192 = vmatpush1.msra.mxu0 0.0
        %6193 = vmatprep.mubr.f32.mxu0 0.0
        %6194 = vmatmul.mubr.f32.gmra.mrb[0].mxu0 %v6088
        %v6195 = vpop.f32.mrb[0].mxu0
        %v6196 = vadd.f32 0.0, %v6195
        %v6197 = vpop.f32.mrb[0].mxu0
        %6198 = vmatprep.mubr.f32.mxu0 0.0
        %6199 = vmatmul.mubr.f32.gmra.mrb[0].mxu0 %v6091
        %v6200 = vpop.f32.mrb[0].mxu0
        %v6201 = vadd.f32 0.0, %v6200
        %v6202 = vpop.f32.mrb[0].mxu0
        %6203 = vmatprep.mubr.f32.mxu0 0.0
        %6204 = vmatmul.mubr.f32.gmra.mrb[0].mxu0 %v6094
        %v6205 = vpop.f32.mrb[0].mxu0
        %v6206 = vadd.f32 0.0, %v6205
        %v6207 = vpop.f32.mrb[0].mxu0
        %6208 = vmatprep.mubr.f32.mxu0 0.0
        %6209 = vmatmul.mubr.f32.gmra.mrb[0].mxu0 %v6097
        %v6210 = vpop.f32.mrb[0].mxu0
        %v6211 = vadd.f32 0.0, %v6210
        %v6212 = vpop.f32.mrb[0].mxu0
        %6213 = vmatprep.mubr.f32.mxu0 0.0
        %6214 = vmatmul.mubr.f32.gmra.mrb[0].mxu0 %v6100
        %v6215 = vpop.f32.mrb[0].mxu0
        %v6216 = vadd.f32 0.0, %v6215
        %v6217 = vpop.f32.mrb[0].mxu0
        %6218 = vmatprep.mubr.f32.mxu0 0.0
        %6219 = vmatmul.mubr.f32.gmra.mrb[0].mxu0 %v6103
        %v6220 = vpop.f32.mrb[0].mxu0
        %v6221 = vadd.f32 0.0, %v6220
        %v6222 = vpop.f32.mrb[0].mxu0
        %6223 = vmatprep.mubr.f32.mxu0 0.0
        %6224 = vmatmul.mubr.f32.gmra.mrb[0].mxu0 %v6106
        %v6225 = vpop.f32.mrb[0].mxu0
        %v6226 = vadd.f32 0.0, %v6225
        %v6227 = vpop.f32.mrb[0].mxu0
        %6228 = vmatprep.mubr.f32.mxu0 0.0
        %6229 = vmatmul.mubr.f32.gmra.mrb[0].mxu0 %v6109
        %v6230 = vpop.f32.mrb[0].mxu0
        %v6231 = vadd.f32 0.0, %v6230
        %v6232 = vpop.f32.mrb[0].mxu0
        %6233 = vmatprep.mubr.f32.mxu0 0.0
        %6234 = vmatmul.mubr.f32.gmra.mrb[0].mxu0 %v6112
        %v6235 = vpop.f32.mrb[0].mxu0
        %v6236 = vadd.f32 0.0, %v6235
        %v6237 = vpop.f32.mrb[0].mxu0
        %6238 = vmatprep.mubr.f32.mxu0 0.0
        %6239 = vmatmul.mubr.f32.gmra.mrb[0].mxu0 %v6115
        %v6240 = vpop.f32.mrb[0].mxu0
        %v6241 = vadd.f32 0.0, %v6240
        %v6242 = vpop.f32.mrb[0].mxu0
        %6243 = vmatprep.mubr.f32.mxu0 0.0
        %6244 = vmatmul.mubr.f32.gmra.mrb[0].mxu0 %v6118
        %v6245 = vpop.f32.mrb[0].mxu0
        %v6246 = vadd.f32 0.0, %v6245
        %v6247 = vpop.f32.mrb[0].mxu0
        %6248 = vmatprep.mubr.f32.mxu0 0.0
        %6249 = vmatmul.mubr.f32.gmra.mrb[0].mxu0 %v6121
        %v6250 = vpop.f32.mrb[0].mxu0
        %v6251 = vadd.f32 0.0, %v6250
        %v6252 = vpop.f32.mrb[0].mxu0
        %6253 = vmatprep.mubr.f32.mxu0 0.0
        %6254 = vmatmul.mubr.f32.gmra.mrb[0].mxu0 %v6124
        %v6255 = vpop.f32.mrb[0].mxu0
        %v6256 = vadd.f32 0.0, %v6255
        %v6257 = vpop.f32.mrb[0].mxu0
        %6258 = vmatprep.mubr.f32.mxu0 0.0
        %6259 = vmatmul.mubr.f32.gmra.mrb[0].mxu0 %v6127
        %v6260 = vpop.f32.mrb[0].mxu0
        %v6261 = vadd.f32 0.0, %v6260
        %v6262 = vpop.f32.mrb[0].mxu0
        %6263 = vdwg.mxu0
        %v6264 = vadd.f32 %v6055, %v6196
        %v6265 = vadd.f32 %v6056, %v6201
        %v6266 = vadd.f32 %v6057, %v6206
        %v6267 = vadd.f32 %v6058, %v6211
        %v6268 = vadd.f32 %v6059, %v6216
        %v6269 = vadd.f32 %v6060, %v6221
        %v6270 = vadd.f32 %v6061, %v6226
        %v6271 = vadd.f32 %v6062, %v6231
        %v6272 = vadd.f32 %v6063, %v6236
        %v6273 = vadd.f32 %v6064, %v6241
        %v6274 = vadd.f32 %v6065, %v6246
        %v6275 = vadd.f32 %v6066, %v6251
        %v6276 = vadd.f32 %v6067, %v6256
        %v6277 = vadd.f32 %v6068, %v6261
        %v6278 = vld [vmem:[#allocation5 + $0x4] sm:$0xff]
        %v6279 = vld [vmem:[#allocation5 + $0xc] sm:$0xff]
        %v6280 = vld [vmem:[#allocation5 + $0x14] sm:$0xff]
        %v6281 = vld [vmem:[#allocation5 + $0x1c] sm:$0xff]
        %v6282 = vld [vmem:[#allocation5 + $0x24] sm:$0xff]
        %v6283 = vld [vmem:[#allocation5 + $0x2c] sm:$0xff]
        %v6284 = vld [vmem:[#allocation5 + $0x34] sm:$0xff]
        %v6285 = vld [vmem:[#allocation5 + $0x3c] sm:$0xff]
        %v6286 = vld [vmem:[#allocation5 + $0x44] sm:$0xff]
        %v6287 = vld [vmem:[#allocation5 + $0x4c] sm:$0xff]
        %v6288 = vld [vmem:[#allocation5 + $0x54] sm:$0xff]
        %v6289 = vld [vmem:[#allocation5 + $0x5c] sm:$0xff]
        %v6290 = vld [vmem:[#allocation5 + $0x64] sm:$0xff]
        %v6291 = vld [vmem:[#allocation5 + $0x6c] sm:$0x7f]
        %s6292 = scalar_lea.vmem %s7, 96
        %v6293 = vld [vmem:[%s6292] sm:$0xff]
        %v6294 = vld [vmem:[%s6292 + $0x8] sm:$0xff]
        %v6295 = vld [vmem:[%s6292 + $0x10] sm:$0xff]
        %v6297 = vsel %vm5290, %v6278, 0
        %v6300 = vsel %vm5290, %v6279, 0
        %v6303 = vsel %vm5290, %v6280, 0
        %v6306 = vsel %vm5290, %v6281, 0
        %v6309 = vsel %vm5290, %v6282, 0
        %v6312 = vsel %vm5290, %v6283, 0
        %v6315 = vsel %vm5290, %v6284, 0
        %v6318 = vsel %vm5290, %v6285, 0
        %v6321 = vsel %vm5290, %v6286, 0
        %v6324 = vsel %vm5290, %v6287, 0
        %v6327 = vsel %vm5290, %v6288, 0
        %v6330 = vsel %vm5290, %v6289, 0
        %v6333 = vsel %vm5290, %v6290, 0
        %v6336 = vsel %vm5290, %v6291, 0
        %6338 = vmatprep.subr.mxu0 0.0
        %6339 = vmatpush1.msra.mxu0 %v6293
        %6340 = vmatprep.subr.mxu0 0.0
        %6341 = vmatpush1.msra.mxu0 %v6294
        %6342 = vmatprep.subr.mxu0 0.0
        %6343 = vmatpush1.msra.mxu0 %v6295
        %6344 = vmatprep.subr.mxu0 0.0
        %6345 = vmatpush1.msra.mxu0 0.0
        %6346 = vmatprep.subr.mxu0 0.0
        %6347 = vmatpush1.msra.mxu0 0.0
        %6348 = vmatprep.subr.mxu0 0.0
        %6349 = vmatpush1.msra.mxu0 0.0
        %6350 = vmatprep.subr.mxu0 0.0
        %6351 = vmatpush1.msra.mxu0 0.0
        %6352 = vmatprep.subr.mxu0 0.0
        %6353 = vmatpush1.msra.mxu0 0.0
        %6354 = vmatprep.subr.mxu0 0.0
        %6355 = vmatpush1.msra.mxu0 0.0
        %6356 = vmatprep.subr.mxu0 0.0
        %6357 = vmatpush1.msra.mxu0 0.0
        %6358 = vmatprep.subr.mxu0 0.0
        %6359 = vmatpush1.msra.mxu0 0.0
        %6360 = vmatprep.subr.mxu0 0.0
        %6361 = vmatpush1.msra.mxu0 0.0
        %6362 = vmatprep.subr.mxu0 0.0
        %6363 = vmatpush1.msra.mxu0 0.0
        %6364 = vmatprep.subr.mxu0 0.0
        %6365 = vmatpush1.msra.mxu0 0.0
        %6366 = vmatprep.subr.mxu0 0.0
        %6367 = vmatpush1.msra.mxu0 0.0
        %6368 = vmatprep.subr.mxu0 0.0
        %6369 = vmatpush1.msra.mxu0 0.0
        %6370 = vmatprep.subr.mxu0 0.0
        %6371 = vmatpush1.msra.mxu0 0.0
        %6372 = vmatprep.subr.mxu0 0.0
        %6373 = vmatpush1.msra.mxu0 0.0
        %6374 = vmatprep.subr.mxu0 0.0
        %6375 = vmatpush1.msra.mxu0 0.0
        %6376 = vmatprep.subr.mxu0 0.0
        %6377 = vmatpush1.msra.mxu0 0.0
        %6378 = vmatprep.subr.mxu0 0.0
        %6379 = vmatpush1.msra.mxu0 0.0
        %6380 = vmatprep.subr.mxu0 0.0
        %6381 = vmatpush1.msra.mxu0 0.0
        %6382 = vmatprep.subr.mxu0 0.0
        %6383 = vmatpush1.msra.mxu0 0.0
        %6384 = vmatprep.subr.mxu0 0.0
        %6385 = vmatpush1.msra.mxu0 0.0
        %6386 = vmatprep.subr.mxu0 0.0
        %6387 = vmatpush1.msra.mxu0 0.0
        %6388 = vmatprep.subr.mxu0 0.0
        %6389 = vmatpush1.msra.mxu0 0.0
        %6390 = vmatprep.subr.mxu0 0.0
        %6391 = vmatpush1.msra.mxu0 0.0
        %6392 = vmatprep.subr.mxu0 0.0
        %6393 = vmatpush1.msra.mxu0 0.0
        %6394 = vmatprep.subr.mxu0 0.0
        %6395 = vmatpush1.msra.mxu0 0.0
        %6396 = vmatprep.subr.mxu0 0.0
        %6397 = vmatpush1.msra.mxu0 0.0
        %6398 = vmatprep.subr.mxu0 0.0
        %6399 = vmatpush1.msra.mxu0 0.0
        %6400 = vmatprep.subr.mxu0 0.0
        %6401 = vmatpush1.msra.mxu0 0.0
        %6402 = vmatprep.mubr.f32.mxu0 0.0
        %6403 = vmatmul.mubr.f32.gmra.mrb[0].mxu0 %v6297
        %v6404 = vpop.f32.mrb[0].mxu0
        %v6405 = vadd.f32 0.0, %v6404
        %v6406 = vpop.f32.mrb[0].mxu0
        %6407 = vmatprep.mubr.f32.mxu0 0.0
        %6408 = vmatmul.mubr.f32.gmra.mrb[0].mxu0 %v6300
        %v6409 = vpop.f32.mrb[0].mxu0
        %v6410 = vadd.f32 0.0, %v6409
        %v6411 = vpop.f32.mrb[0].mxu0
        %6412 = vmatprep.mubr.f32.mxu0 0.0
        %6413 = vmatmul.mubr.f32.gmra.mrb[0].mxu0 %v6303
        %v6414 = vpop.f32.mrb[0].mxu0
        %v6415 = vadd.f32 0.0, %v6414
        %v6416 = vpop.f32.mrb[0].mxu0
        %6417 = vmatprep.mubr.f32.mxu0 0.0
        %6418 = vmatmul.mubr.f32.gmra.mrb[0].mxu0 %v6306
        %v6419 = vpop.f32.mrb[0].mxu0
        %v6420 = vadd.f32 0.0, %v6419
        %v6421 = vpop.f32.mrb[0].mxu0
        %6422 = vmatprep.mubr.f32.mxu0 0.0
        %6423 = vmatmul.mubr.f32.gmra.mrb[0].mxu0 %v6309
        %v6424 = vpop.f32.mrb[0].mxu0
        %v6425 = vadd.f32 0.0, %v6424
        %v6426 = vpop.f32.mrb[0].mxu0
        %6427 = vmatprep.mubr.f32.mxu0 0.0
        %6428 = vmatmul.mubr.f32.gmra.mrb[0].mxu0 %v6312
        %v6429 = vpop.f32.mrb[0].mxu0
        %v6430 = vadd.f32 0.0, %v6429
        %v6431 = vpop.f32.mrb[0].mxu0
        %6432 = vmatprep.mubr.f32.mxu0 0.0
        %6433 = vmatmul.mubr.f32.gmra.mrb[0].mxu0 %v6315
        %v6434 = vpop.f32.mrb[0].mxu0
        %v6435 = vadd.f32 0.0, %v6434
        %v6436 = vpop.f32.mrb[0].mxu0
        %6437 = vmatprep.mubr.f32.mxu0 0.0
        %6438 = vmatmul.mubr.f32.gmra.mrb[0].mxu0 %v6318
        %v6439 = vpop.f32.mrb[0].mxu0
        %v6440 = vadd.f32 0.0, %v6439
        %v6441 = vpop.f32.mrb[0].mxu0
        %6442 = vmatprep.mubr.f32.mxu0 0.0
        %6443 = vmatmul.mubr.f32.gmra.mrb[0].mxu0 %v6321
        %v6444 = vpop.f32.mrb[0].mxu0
        %v6445 = vadd.f32 0.0, %v6444
        %v6446 = vpop.f32.mrb[0].mxu0
        %6447 = vmatprep.mubr.f32.mxu0 0.0
        %6448 = vmatmul.mubr.f32.gmra.mrb[0].mxu0 %v6324
        %v6449 = vpop.f32.mrb[0].mxu0
        %v6450 = vadd.f32 0.0, %v6449
        %v6451 = vpop.f32.mrb[0].mxu0
        %6452 = vmatprep.mubr.f32.mxu0 0.0
        %6453 = vmatmul.mubr.f32.gmra.mrb[0].mxu0 %v6327
        %v6454 = vpop.f32.mrb[0].mxu0
        %v6455 = vadd.f32 0.0, %v6454
        %v6456 = vpop.f32.mrb[0].mxu0
        %6457 = vmatprep.mubr.f32.mxu0 0.0
        %6458 = vmatmul.mubr.f32.gmra.mrb[0].mxu0 %v6330
        %v6459 = vpop.f32.mrb[0].mxu0
        %v6460 = vadd.f32 0.0, %v6459
        %v6461 = vpop.f32.mrb[0].mxu0
        %6462 = vmatprep.mubr.f32.mxu0 0.0
        %6463 = vmatmul.mubr.f32.gmra.mrb[0].mxu0 %v6333
        %v6464 = vpop.f32.mrb[0].mxu0
        %v6465 = vadd.f32 0.0, %v6464
        %v6466 = vpop.f32.mrb[0].mxu0
        %6467 = vmatprep.mubr.f32.mxu0 0.0
        %6468 = vmatmul.mubr.f32.gmra.mrb[0].mxu0 %v6336
        %v6469 = vpop.f32.mrb[0].mxu0
        %v6470 = vadd.f32 0.0, %v6469
        %v6471 = vpop.f32.mrb[0].mxu0
        %6472 = vdwg.mxu0
        %v6473 = vadd.f32 %v6264, %v6405
        %v6474 = vadd.f32 %v6265, %v6410
        %v6475 = vadd.f32 %v6266, %v6415
        %v6476 = vadd.f32 %v6267, %v6420
        %v6477 = vadd.f32 %v6268, %v6425
        %v6478 = vadd.f32 %v6269, %v6430
        %v6479 = vadd.f32 %v6270, %v6435
        %v6480 = vadd.f32 %v6271, %v6440
        %v6481 = vadd.f32 %v6272, %v6445
        %v6482 = vadd.f32 %v6273, %v6450
        %v6483 = vadd.f32 %v6274, %v6455
        %v6484 = vadd.f32 %v6275, %v6460
        %v6485 = vadd.f32 %v6276, %v6465
        %v6486 = vadd.f32 %v6277, %v6470
        %v6487 = vld [vmem:[%s8] sm:$0x1]
        %v6489 = vlaneseq
        %v6490 = vshrl.u32 %v6489, 7
        %v6491 = vsub.s32 0, %v6490
        %v6492 = vrot.slane %v6487, %v6491
        %v6494 = vmul.f32 %v6473, %v6492
        %v6495 = vmul.f32 %v6474, %v6492
        %v6496 = vmul.f32 %v6475, %v6492
        %v6497 = vmul.f32 %v6476, %v6492
        %v6498 = vmul.f32 %v6477, %v6492
        %v6499 = vmul.f32 %v6478, %v6492
        %v6500 = vmul.f32 %v6479, %v6492
        %v6501 = vmul.f32 %v6480, %v6492
        %v6502 = vmul.f32 %v6481, %v6492
        %v6503 = vmul.f32 %v6482, %v6492
        %v6504 = vmul.f32 %v6483, %v6492
        %v6505 = vmul.f32 %v6484, %v6492
        %v6506 = vmul.f32 %v6485, %v6492
        %v6507 = vmul.f32 %v6486, %v6492
        %v6508 = vld [vmem:[%s9] sm:$0x1]
        %v6510 = vlaneseq
        %v6511 = vshrl.u32 %v6510, 7
        %v6512 = vsub.s32 0, %v6511
        %v6513 = vrot.slane %v6508, %v6512
        %v6515 = vadd.f32 %v6494, %v6513
        %v6516 = vadd.f32 %v6495, %v6513
        %v6517 = vadd.f32 %v6496, %v6513
        %v6518 = vadd.f32 %v6497, %v6513
        %v6519 = vadd.f32 %v6498, %v6513
        %v6520 = vadd.f32 %v6499, %v6513
        %v6521 = vadd.f32 %v6500, %v6513
        %v6522 = vadd.f32 %v6501, %v6513
        %v6523 = vadd.f32 %v6502, %v6513
        %v6524 = vadd.f32 %v6503, %v6513
        %v6525 = vadd.f32 %v6504, %v6513
        %v6526 = vadd.f32 %v6505, %v6513
        %v6527 = vadd.f32 %v6506, %v6513
        %v6528 = vadd.f32 %v6507, %v6513
        %v6529 = vmax.f32 %v6515, 0.0
        %v6530 = vmax.f32 %v6516, 0.0
        %v6531 = vmax.f32 %v6517, 0.0
        %v6532 = vmax.f32 %v6518, 0.0
        %v6533 = vmax.f32 %v6519, 0.0
        %v6534 = vmax.f32 %v6520, 0.0
        %v6535 = vmax.f32 %v6521, 0.0
        %v6536 = vmax.f32 %v6522, 0.0
        %v6537 = vmax.f32 %v6523, 0.0
        %v6538 = vmax.f32 %v6524, 0.0
        %v6539 = vmax.f32 %v6525, 0.0
        %v6540 = vmax.f32 %v6526, 0.0
        %v6541 = vmax.f32 %v6527, 0.0
        %v6542 = vmax.f32 %v6528, 0.0
        %vm6543 = vcmask 408576
        %6544 = vst.msk [vmem:[#allocation6] sm:$0xff] %vm6543, %v6529
        %6545 = vst.msk [vmem:[#allocation6 + $0x8] sm:$0xff] %vm6543, %v6530
        %6546 = vst.msk [vmem:[#allocation6 + $0x10] sm:$0xff] %vm6543, %v6531
        %6547 = vst.msk [vmem:[#allocation6 + $0x18] sm:$0xff] %vm6543, %v6532
        %6548 = vst.msk [vmem:[#allocation6 + $0x20] sm:$0xff] %vm6543, %v6533
        %6549 = vst.msk [vmem:[#allocation6 + $0x28] sm:$0xff] %vm6543, %v6534
        %6550 = vst.msk [vmem:[#allocation6 + $0x30] sm:$0xff] %vm6543, %v6535
        %6551 = vst.msk [vmem:[#allocation6 + $0x38] sm:$0xff] %vm6543, %v6536
        %6552 = vst.msk [vmem:[#allocation6 + $0x40] sm:$0xff] %vm6543, %v6537
        %6553 = vst.msk [vmem:[#allocation6 + $0x48] sm:$0xff] %vm6543, %v6538
        %6554 = vst.msk [vmem:[#allocation6 + $0x50] sm:$0xff] %vm6543, %v6539
        %6555 = vst.msk [vmem:[#allocation6 + $0x58] sm:$0xff] %vm6543, %v6540
        %6556 = vst.msk [vmem:[#allocation6 + $0x60] sm:$0xff] %vm6543, %v6541
        %vm6557 = vcmask 407552
        %6558 = vst.msk [vmem:[#allocation6 + $0x68] sm:$0x7f] %vm6557, %v6542
        %v6559 = vld [vmem:[#allocation6] ss:$3 sm:$0xff]
        %s6560 = scalar_lea.vmem [#allocation6], 24
        %v6561 = vld [vmem:[%s6560] ss:$3 sm:$0xff]
        %s6562 = scalar_lea.vmem [#allocation6], 48
        %v6563 = vld [vmem:[%s6562] ss:$3 sm:$0xff]
        %s6564 = scalar_lea.vmem [#allocation6], 72
        %v6565 = vld [vmem:[%s6564] ss:$3 sm:$0xff]
        %s6566 = scalar_lea.vmem [#allocation6], 96
        %v6567 = vld [vmem:[%s6566] ss:$3 sm:$0x1f]
        %s6568 = scalar_lea.vmem [#allocation6], 1
        %v6569 = vld [vmem:[%s6568] ss:$3 sm:$0xff]
        %s6570 = scalar_lea.vmem [#allocation6], 25
        %v6571 = vld [vmem:[%s6570] ss:$3 sm:$0xff]
        %s6572 = scalar_lea.vmem [#allocation6], 49
        %v6573 = vld [vmem:[%s6572] ss:$3 sm:$0xff]
        %s6574 = scalar_lea.vmem [#allocation6], 73
        %v6575 = vld [vmem:[%s6574] ss:$3 sm:$0xff]
        %s6576 = scalar_lea.vmem [#allocation6], 97
        %v6577 = vld [vmem:[%s6576] ss:$3 sm:$0x1f]
        %v6578 = vmax.f32 %v6559, %v6569
        %v6579 = vmax.f32 %v6561, %v6571
        %v6580 = vmax.f32 %v6563, %v6573
        %v6581 = vmax.f32 %v6565, %v6575
        %v6582 = vmax.f32 %v6567, %v6577
        %s6583 = scalar_lea.vmem [#allocation6], 2
        %v6584 = vld [vmem:[%s6583] ss:$3 sm:$0xff]
        %s6585 = scalar_lea.vmem [#allocation6], 26
        %v6586 = vld [vmem:[%s6585] ss:$3 sm:$0xff]
        %s6587 = scalar_lea.vmem [#allocation6], 50
        %v6588 = vld [vmem:[%s6587] ss:$3 sm:$0xff]
        %s6589 = scalar_lea.vmem [#allocation6], 74
        %v6590 = vld [vmem:[%s6589] ss:$3 sm:$0xff]
        %s6591 = scalar_lea.vmem [#allocation6], 98
        %v6592 = vld [vmem:[%s6591] ss:$3 sm:$0x1f]
        %v6593 = vmax.f32 %v6578, %v6584
        %v6594 = vmax.f32 %v6579, %v6586
        %v6595 = vmax.f32 %v6580, %v6588
        %v6596 = vmax.f32 %v6581, %v6590
        %v6597 = vmax.f32 %v6582, %v6592
        %6598 = vst.msk [vmem:[#allocation7] sm:$0xff] %vm6543, %v6593
        %6599 = vst.msk [vmem:[#allocation7 + $0x8] sm:$0xff] %vm6543, %v6594
        %6600 = vst.msk [vmem:[#allocation7 + $0x10] sm:$0xff] %vm6543, %v6595
        %6601 = vst.msk [vmem:[#allocation7 + $0x18] sm:$0xff] %vm6543, %v6596
        %vm6602 = vcmask 405504
        %6603 = vst.msk [vmem:[#allocation7 + $0x20] sm:$0x1f] %vm6602, %v6597
        %v6604 = vld [vmem:[#allocation7] sm:$0xff]
        %v6605 = vld [vmem:[#allocation7 + $0x8] sm:$0xff]
        %v6606 = vld [vmem:[#allocation7 + $0x10] sm:$0xff]
        %v6607 = vld [vmem:[#allocation7 + $0x18] sm:$0xff]
        %v6608 = vld [vmem:[#allocation7 + $0x20] sm:$0x1]
        %v6609 = vld [vmem:[%s10] sm:$0xff]
        %v6610 = vld [vmem:[%s10 + $0x8] sm:$0xff]
        %v6611 = vld [vmem:[%s10 + $0x10] sm:$0xff]
        %v6612 = vld [vmem:[%s10 + $0x18] sm:$0xff]
        %v6613 = vld [vmem:[%s10 + $0x20] sm:$0xff]
        %v6614 = vld [vmem:[%s10 + $0x28] sm:$0xff]
        %v6615 = vld [vmem:[%s10 + $0x30] sm:$0x3]
        %v6616 = vld [vmem:[#allocation7 + $0x1] sm:$0xff]
        %v6617 = vld [vmem:[#allocation7 + $0x9] sm:$0xff]
        %v6618 = vld [vmem:[#allocation7 + $0x11] sm:$0xff]
        %v6619 = vld [vmem:[#allocation7 + $0x19] sm:$0xff]
        %v6620 = vld [vmem:[#allocation7 + $0x21] sm:$0x1]
        %s6621 = scalar_lea.vmem %s10, 56
        %v6622 = vld [vmem:[%s6621] sm:$0xff]
        %v6623 = vld [vmem:[%s6621 + $0x8] sm:$0xff]
        %v6624 = vld [vmem:[%s6621 + $0x10] sm:$0xff]
        %v6625 = vld [vmem:[%s6621 + $0x18] sm:$0xff]
        %v6626 = vld [vmem:[%s6621 + $0x20] sm:$0xff]
        %v6627 = vld [vmem:[%s6621 + $0x28] sm:$0xff]
        %v6628 = vld [vmem:[%s6621 + $0x30] sm:$0x3]
        %v6630 = vsel %vm6543, %v6616, 0
        %v6633 = vsel %vm6543, %v6617, 0
        %v6636 = vsel %vm6543, %v6618, 0
        %v6639 = vsel %vm6543, %v6619, 0
        %v6642 = vsel %vm6543, %v6620, 0
        %v6645 = vsel %vm1019, %v6628, 0
        %6647 = vmatprep.subr.mxu0 0.0
        %6648 = vmatpush1.msra.mxu0 %v6622
        %6649 = vmatprep.subr.mxu0 0.0
        %6650 = vmatpush1.msra.mxu0 %v6623
        %6651 = vmatprep.subr.mxu0 0.0
        %6652 = vmatpush1.msra.mxu0 %v6624
        %6653 = vmatprep.subr.mxu0 0.0
        %6654 = vmatpush1.msra.mxu0 %v6625
        %6655 = vmatprep.subr.mxu0 0.0
        %6656 = vmatpush1.msra.mxu0 %v6626
        %6657 = vmatprep.subr.mxu0 0.0
        %6658 = vmatpush1.msra.mxu0 %v6627
        %6659 = vmatprep.subr.mxu0 0.0
        %6660 = vmatpush1.msra.mxu0 %v6645
        %6661 = vmatprep.subr.mxu0 0.0
        %6662 = vmatpush1.msra.mxu0 0.0
        %6663 = vmatprep.subr.mxu0 0.0
        %6664 = vmatpush1.msra.mxu0 0.0
        %6665 = vmatprep.subr.mxu0 0.0
        %6666 = vmatpush1.msra.mxu0 0.0
        %6667 = vmatprep.subr.mxu0 0.0
        %6668 = vmatpush1.msra.mxu0 0.0
        %6669 = vmatprep.subr.mxu0 0.0
        %6670 = vmatpush1.msra.mxu0 0.0
        %6671 = vmatprep.subr.mxu0 0.0
        %6672 = vmatpush1.msra.mxu0 0.0
        %6673 = vmatprep.subr.mxu0 0.0
        %6674 = vmatpush1.msra.mxu0 0.0
        %6675 = vmatprep.subr.mxu0 0.0
        %6676 = vmatpush1.msra.mxu0 0.0
        %6677 = vmatprep.subr.mxu0 0.0
        %6678 = vmatpush1.msra.mxu0 0.0
        %6679 = vmatprep.subr.mxu0 0.0
        %6680 = vmatpush1.msra.mxu0 0.0
        %6681 = vmatprep.subr.mxu0 0.0
        %6682 = vmatpush1.msra.mxu0 0.0
        %6683 = vmatprep.subr.mxu0 0.0
        %6684 = vmatpush1.msra.mxu0 0.0
        %6685 = vmatprep.subr.mxu0 0.0
        %6686 = vmatpush1.msra.mxu0 0.0
        %6687 = vmatprep.subr.mxu0 0.0
        %6688 = vmatpush1.msra.mxu0 0.0
        %6689 = vmatprep.subr.mxu0 0.0
        %6690 = vmatpush1.msra.mxu0 0.0
        %6691 = vmatprep.subr.mxu0 0.0
        %6692 = vmatpush1.msra.mxu0 0.0
        %6693 = vmatprep.subr.mxu0 0.0
        %6694 = vmatpush1.msra.mxu0 0.0
        %6695 = vmatprep.subr.mxu0 0.0
        %6696 = vmatpush1.msra.mxu0 0.0
        %6697 = vmatprep.subr.mxu0 0.0
        %6698 = vmatpush1.msra.mxu0 0.0
        %6699 = vmatprep.subr.mxu0 0.0
        %6700 = vmatpush1.msra.mxu0 0.0
        %6701 = vmatprep.subr.mxu0 0.0
        %6702 = vmatpush1.msra.mxu0 0.0
        %6703 = vmatprep.subr.mxu0 0.0
        %6704 = vmatpush1.msra.mxu0 0.0
        %6705 = vmatprep.subr.mxu0 0.0
        %6706 = vmatpush1.msra.mxu0 0.0
        %6707 = vmatprep.subr.mxu0 0.0
        %6708 = vmatpush1.msra.mxu0 0.0
        %6709 = vmatprep.subr.mxu0 0.0
        %6710 = vmatpush1.msra.mxu0 0.0
        %6711 = vmatprep.mubr.f32.mxu0 0.0
        %6712 = vmatmul.mubr.f32.gmra.mrb[0].mxu0 %v6630
        %v6713 = vpop.f32.mrb[0].mxu0
        %v6714 = vadd.f32 0.0, %v6713
        %v6715 = vpop.f32.mrb[0].mxu0
        %6716 = vmatprep.mubr.f32.mxu0 0.0
        %6717 = vmatmul.mubr.f32.gmra.mrb[0].mxu0 %v6633
        %v6718 = vpop.f32.mrb[0].mxu0
        %v6719 = vadd.f32 0.0, %v6718
        %v6720 = vpop.f32.mrb[0].mxu0
        %6721 = vmatprep.mubr.f32.mxu0 0.0
        %6722 = vmatmul.mubr.f32.gmra.mrb[0].mxu0 %v6636
        %v6723 = vpop.f32.mrb[0].mxu0
        %v6724 = vadd.f32 0.0, %v6723
        %v6725 = vpop.f32.mrb[0].mxu0
        %6726 = vmatprep.mubr.f32.mxu0 0.0
        %6727 = vmatmul.mubr.f32.gmra.mrb[0].mxu0 %v6639
        %v6728 = vpop.f32.mrb[0].mxu0
        %v6729 = vadd.f32 0.0, %v6728
        %v6730 = vpop.f32.mrb[0].mxu0
        %6731 = vmatprep.mubr.f32.mxu0 0.0
        %6732 = vmatmul.mubr.f32.gmra.mrb[0].mxu0 %v6642
        %v6733 = vpop.f32.mrb[0].mxu0
        %v6734 = vadd.f32 0.0, %v6733
        %v6735 = vpop.f32.mrb[0].mxu0
        %6736 = vdwg.mxu0
        %v6738 = vsel %vm6543, %v6604, 0
        %v6741 = vsel %vm6543, %v6605, 0
        %v6744 = vsel %vm6543, %v6606, 0
        %v6747 = vsel %vm6543, %v6607, 0
        %v6750 = vsel %vm6543, %v6608, 0
        %v6753 = vsel %vm1019, %v6615, 0
        %6755 = vmatprep.subr.mxu0 0.0
        %6756 = vmatpush1.msra.mxu0 %v6609
        %6757 = vmatprep.subr.mxu0 0.0
        %6758 = vmatpush1.msra.mxu0 %v6610
        %6759 = vmatprep.subr.mxu0 0.0
        %6760 = vmatpush1.msra.mxu0 %v6611
        %6761 = vmatprep.subr.mxu0 0.0
        %6762 = vmatpush1.msra.mxu0 %v6612
        %6763 = vmatprep.subr.mxu0 0.0
        %6764 = vmatpush1.msra.mxu0 %v6613
        %6765 = vmatprep.subr.mxu0 0.0
        %6766 = vmatpush1.msra.mxu0 %v6614
        %6767 = vmatprep.subr.mxu0 0.0
        %6768 = vmatpush1.msra.mxu0 %v6753
        %6769 = vmatprep.subr.mxu0 0.0
        %6770 = vmatpush1.msra.mxu0 0.0
        %6771 = vmatprep.subr.mxu0 0.0
        %6772 = vmatpush1.msra.mxu0 0.0
        %6773 = vmatprep.subr.mxu0 0.0
        %6774 = vmatpush1.msra.mxu0 0.0
        %6775 = vmatprep.subr.mxu0 0.0
        %6776 = vmatpush1.msra.mxu0 0.0
        %6777 = vmatprep.subr.mxu0 0.0
        %6778 = vmatpush1.msra.mxu0 0.0
        %6779 = vmatprep.subr.mxu0 0.0
        %6780 = vmatpush1.msra.mxu0 0.0
        %6781 = vmatprep.subr.mxu0 0.0
        %6782 = vmatpush1.msra.mxu0 0.0
        %6783 = vmatprep.subr.mxu0 0.0
        %6784 = vmatpush1.msra.mxu0 0.0
        %6785 = vmatprep.subr.mxu0 0.0
        %6786 = vmatpush1.msra.mxu0 0.0
        %6787 = vmatprep.subr.mxu0 0.0
        %6788 = vmatpush1.msra.mxu0 0.0
        %6789 = vmatprep.subr.mxu0 0.0
        %6790 = vmatpush1.msra.mxu0 0.0
        %6791 = vmatprep.subr.mxu0 0.0
        %6792 = vmatpush1.msra.mxu0 0.0
        %6793 = vmatprep.subr.mxu0 0.0
        %6794 = vmatpush1.msra.mxu0 0.0
        %6795 = vmatprep.subr.mxu0 0.0
        %6796 = vmatpush1.msra.mxu0 0.0
        %6797 = vmatprep.subr.mxu0 0.0
        %6798 = vmatpush1.msra.mxu0 0.0
        %6799 = vmatprep.subr.mxu0 0.0
        %6800 = vmatpush1.msra.mxu0 0.0
        %6801 = vmatprep.subr.mxu0 0.0
        %6802 = vmatpush1.msra.mxu0 0.0
        %6803 = vmatprep.subr.mxu0 0.0
        %6804 = vmatpush1.msra.mxu0 0.0
        %6805 = vmatprep.subr.mxu0 0.0
        %6806 = vmatpush1.msra.mxu0 0.0
        %6807 = vmatprep.subr.mxu0 0.0
        %6808 = vmatpush1.msra.mxu0 0.0
        %6809 = vmatprep.subr.mxu0 0.0
        %6810 = vmatpush1.msra.mxu0 0.0
        %6811 = vmatprep.subr.mxu0 0.0
        %6812 = vmatpush1.msra.mxu0 0.0
        %6813 = vmatprep.subr.mxu0 0.0
        %6814 = vmatpush1.msra.mxu0 0.0
        %6815 = vmatprep.subr.mxu0 0.0
        %6816 = vmatpush1.msra.mxu0 0.0
        %6817 = vmatprep.subr.mxu0 0.0
        %6818 = vmatpush1.msra.mxu0 0.0
        %6819 = vmatprep.mubr.f32.mxu0 0.0
        %6820 = vmatmul.mubr.f32.gmra.mrb[0].mxu0 %v6738
        %v6821 = vpop.f32.mrb[0].mxu0
        %v6822 = vadd.f32 %v6714, %v6821
        %v6823 = vpop.f32.mrb[0].mxu0
        %6824 = vmatprep.mubr.f32.mxu0 0.0
        %6825 = vmatmul.mubr.f32.gmra.mrb[0].mxu0 %v6741
        %v6826 = vpop.f32.mrb[0].mxu0
        %v6827 = vadd.f32 %v6719, %v6826
        %v6828 = vpop.f32.mrb[0].mxu0
        %6829 = vmatprep.mubr.f32.mxu0 0.0
        %6830 = vmatmul.mubr.f32.gmra.mrb[0].mxu0 %v6744
        %v6831 = vpop.f32.mrb[0].mxu0
        %v6832 = vadd.f32 %v6724, %v6831
        %v6833 = vpop.f32.mrb[0].mxu0
        %6834 = vmatprep.mubr.f32.mxu0 0.0
        %6835 = vmatmul.mubr.f32.gmra.mrb[0].mxu0 %v6747
        %v6836 = vpop.f32.mrb[0].mxu0
        %v6837 = vadd.f32 %v6729, %v6836
        %v6838 = vpop.f32.mrb[0].mxu0
        %6839 = vmatprep.mubr.f32.mxu0 0.0
        %6840 = vmatmul.mubr.f32.gmra.mrb[0].mxu0 %v6750
        %v6841 = vpop.f32.mrb[0].mxu0
        %v6842 = vadd.f32 %v6734, %v6841
        %v6843 = vpop.f32.mrb[0].mxu0
        %6844 = vdwg.mxu0
        %v6845 = vld [vmem:[#allocation7 + $0x2] sm:$0xff]
        %v6846 = vld [vmem:[#allocation7 + $0xa] sm:$0xff]
        %v6847 = vld [vmem:[#allocation7 + $0x12] sm:$0xff]
        %v6848 = vld [vmem:[#allocation7 + $0x1a] sm:$0xff]
        %v6849 = vld [vmem:[#allocation7 + $0x22] sm:$0x1]
        %s6850 = scalar_lea.vmem %s10, 112
        %v6851 = vld [vmem:[%s6850] sm:$0xff]
        %v6852 = vld [vmem:[%s6850 + $0x8] sm:$0xff]
        %v6853 = vld [vmem:[%s6850 + $0x10] sm:$0xff]
        %v6854 = vld [vmem:[%s6850 + $0x18] sm:$0xff]
        %v6855 = vld [vmem:[%s6850 + $0x20] sm:$0xff]
        %v6856 = vld [vmem:[%s6850 + $0x28] sm:$0xff]
        %v6857 = vld [vmem:[%s6850 + $0x30] sm:$0x3]
        %v6859 = vsel %vm6543, %v6845, 0
        %v6862 = vsel %vm6543, %v6846, 0
        %v6865 = vsel %vm6543, %v6847, 0
        %v6868 = vsel %vm6543, %v6848, 0
        %v6871 = vsel %vm6543, %v6849, 0
        %v6874 = vsel %vm1019, %v6857, 0
        %6876 = vmatprep.subr.mxu0 0.0
        %6877 = vmatpush1.msra.mxu0 %v6851
        %6878 = vmatprep.subr.mxu0 0.0
        %6879 = vmatpush1.msra.mxu0 %v6852
        %6880 = vmatprep.subr.mxu0 0.0
        %6881 = vmatpush1.msra.mxu0 %v6853
        %6882 = vmatprep.subr.mxu0 0.0
        %6883 = vmatpush1.msra.mxu0 %v6854
        %6884 = vmatprep.subr.mxu0 0.0
        %6885 = vmatpush1.msra.mxu0 %v6855
        %6886 = vmatprep.subr.mxu0 0.0
        %6887 = vmatpush1.msra.mxu0 %v6856
        %6888 = vmatprep.subr.mxu0 0.0
        %6889 = vmatpush1.msra.mxu0 %v6874
        %6890 = vmatprep.subr.mxu0 0.0
        %6891 = vmatpush1.msra.mxu0 0.0
        %6892 = vmatprep.subr.mxu0 0.0
        %6893 = vmatpush1.msra.mxu0 0.0
        %6894 = vmatprep.subr.mxu0 0.0
        %6895 = vmatpush1.msra.mxu0 0.0
        %6896 = vmatprep.subr.mxu0 0.0
        %6897 = vmatpush1.msra.mxu0 0.0
        %6898 = vmatprep.subr.mxu0 0.0
        %6899 = vmatpush1.msra.mxu0 0.0
        %6900 = vmatprep.subr.mxu0 0.0
        %6901 = vmatpush1.msra.mxu0 0.0
        %6902 = vmatprep.subr.mxu0 0.0
        %6903 = vmatpush1.msra.mxu0 0.0
        %6904 = vmatprep.subr.mxu0 0.0
        %6905 = vmatpush1.msra.mxu0 0.0
        %6906 = vmatprep.subr.mxu0 0.0
        %6907 = vmatpush1.msra.mxu0 0.0
        %6908 = vmatprep.subr.mxu0 0.0
        %6909 = vmatpush1.msra.mxu0 0.0
        %6910 = vmatprep.subr.mxu0 0.0
        %6911 = vmatpush1.msra.mxu0 0.0
        %6912 = vmatprep.subr.mxu0 0.0
        %6913 = vmatpush1.msra.mxu0 0.0
        %6914 = vmatprep.subr.mxu0 0.0
        %6915 = vmatpush1.msra.mxu0 0.0
        %6916 = vmatprep.subr.mxu0 0.0
        %6917 = vmatpush1.msra.mxu0 0.0
        %6918 = vmatprep.subr.mxu0 0.0
        %6919 = vmatpush1.msra.mxu0 0.0
        %6920 = vmatprep.subr.mxu0 0.0
        %6921 = vmatpush1.msra.mxu0 0.0
        %6922 = vmatprep.subr.mxu0 0.0
        %6923 = vmatpush1.msra.mxu0 0.0
        %6924 = vmatprep.subr.mxu0 0.0
        %6925 = vmatpush1.msra.mxu0 0.0
        %6926 = vmatprep.subr.mxu0 0.0
        %6927 = vmatpush1.msra.mxu0 0.0
        %6928 = vmatprep.subr.mxu0 0.0
        %6929 = vmatpush1.msra.mxu0 0.0
        %6930 = vmatprep.subr.mxu0 0.0
        %6931 = vmatpush1.msra.mxu0 0.0
        %6932 = vmatprep.subr.mxu0 0.0
        %6933 = vmatpush1.msra.mxu0 0.0
        %6934 = vmatprep.subr.mxu0 0.0
        %6935 = vmatpush1.msra.mxu0 0.0
        %6936 = vmatprep.subr.mxu0 0.0
        %6937 = vmatpush1.msra.mxu0 0.0
        %6938 = vmatprep.subr.mxu0 0.0
        %6939 = vmatpush1.msra.mxu0 0.0
        %6940 = vmatprep.mubr.f32.mxu0 0.0
        %6941 = vmatmul.mubr.f32.gmra.mrb[0].mxu0 %v6859
        %v6942 = vpop.f32.mrb[0].mxu0
        %v6943 = vadd.f32 0.0, %v6942
        %v6944 = vpop.f32.mrb[0].mxu0
        %6945 = vmatprep.mubr.f32.mxu0 0.0
        %6946 = vmatmul.mubr.f32.gmra.mrb[0].mxu0 %v6862
        %v6947 = vpop.f32.mrb[0].mxu0
        %v6948 = vadd.f32 0.0, %v6947
        %v6949 = vpop.f32.mrb[0].mxu0
        %6950 = vmatprep.mubr.f32.mxu0 0.0
        %6951 = vmatmul.mubr.f32.gmra.mrb[0].mxu0 %v6865
        %v6952 = vpop.f32.mrb[0].mxu0
        %v6953 = vadd.f32 0.0, %v6952
        %v6954 = vpop.f32.mrb[0].mxu0
        %6955 = vmatprep.mubr.f32.mxu0 0.0
        %6956 = vmatmul.mubr.f32.gmra.mrb[0].mxu0 %v6868
        %v6957 = vpop.f32.mrb[0].mxu0
        %v6958 = vadd.f32 0.0, %v6957
        %v6959 = vpop.f32.mrb[0].mxu0
        %6960 = vmatprep.mubr.f32.mxu0 0.0
        %6961 = vmatmul.mubr.f32.gmra.mrb[0].mxu0 %v6871
        %v6962 = vpop.f32.mrb[0].mxu0
        %v6963 = vadd.f32 0.0, %v6962
        %v6964 = vpop.f32.mrb[0].mxu0
        %6965 = vdwg.mxu0
        %v6966 = vadd.f32 %v6822, %v6943
        %v6967 = vadd.f32 %v6827, %v6948
        %v6968 = vadd.f32 %v6832, %v6953
        %v6969 = vadd.f32 %v6837, %v6958
        %v6970 = vadd.f32 %v6842, %v6963
        %v6971 = vld [vmem:[#allocation7 + $0x3] sm:$0xff]
        %v6972 = vld [vmem:[#allocation7 + $0xb] sm:$0xff]
        %v6973 = vld [vmem:[#allocation7 + $0x13] sm:$0xff]
        %v6974 = vld [vmem:[#allocation7 + $0x1b] sm:$0xff]
        %v6975 = vld [vmem:[#allocation7 + $0x23] sm:$0x1]
        %s6976 = scalar_lea.vmem %s10, 168
        %v6977 = vld [vmem:[%s6976] sm:$0xff]
        %v6978 = vld [vmem:[%s6976 + $0x8] sm:$0xff]
        %v6979 = vld [vmem:[%s6976 + $0x10] sm:$0xff]
        %v6980 = vld [vmem:[%s6976 + $0x18] sm:$0xff]
        %v6981 = vld [vmem:[%s6976 + $0x20] sm:$0xff]
        %v6982 = vld [vmem:[%s6976 + $0x28] sm:$0xff]
        %v6983 = vld [vmem:[%s6976 + $0x30] sm:$0x3]
        %v6985 = vsel %vm6543, %v6971, 0
        %v6988 = vsel %vm6543, %v6972, 0
        %v6991 = vsel %vm6543, %v6973, 0
        %v6994 = vsel %vm6543, %v6974, 0
        %v6997 = vsel %vm6543, %v6975, 0
        %v7000 = vsel %vm1019, %v6983, 0
        %7002 = vmatprep.subr.mxu0 0.0
        %7003 = vmatpush1.msra.mxu0 %v6977
        %7004 = vmatprep.subr.mxu0 0.0
        %7005 = vmatpush1.msra.mxu0 %v6978
        %7006 = vmatprep.subr.mxu0 0.0
        %7007 = vmatpush1.msra.mxu0 %v6979
        %7008 = vmatprep.subr.mxu0 0.0
        %7009 = vmatpush1.msra.mxu0 %v6980
        %7010 = vmatprep.subr.mxu0 0.0
        %7011 = vmatpush1.msra.mxu0 %v6981
        %7012 = vmatprep.subr.mxu0 0.0
        %7013 = vmatpush1.msra.mxu0 %v6982
        %7014 = vmatprep.subr.mxu0 0.0
        %7015 = vmatpush1.msra.mxu0 %v7000
        %7016 = vmatprep.subr.mxu0 0.0
        %7017 = vmatpush1.msra.mxu0 0.0
        %7018 = vmatprep.subr.mxu0 0.0
        %7019 = vmatpush1.msra.mxu0 0.0
        %7020 = vmatprep.subr.mxu0 0.0
        %7021 = vmatpush1.msra.mxu0 0.0
        %7022 = vmatprep.subr.mxu0 0.0
        %7023 = vmatpush1.msra.mxu0 0.0
        %7024 = vmatprep.subr.mxu0 0.0
        %7025 = vmatpush1.msra.mxu0 0.0
        %7026 = vmatprep.subr.mxu0 0.0
        %7027 = vmatpush1.msra.mxu0 0.0
        %7028 = vmatprep.subr.mxu0 0.0
        %7029 = vmatpush1.msra.mxu0 0.0
        %7030 = vmatprep.subr.mxu0 0.0
        %7031 = vmatpush1.msra.mxu0 0.0
        %7032 = vmatprep.subr.mxu0 0.0
        %7033 = vmatpush1.msra.mxu0 0.0
        %7034 = vmatprep.subr.mxu0 0.0
        %7035 = vmatpush1.msra.mxu0 0.0
        %7036 = vmatprep.subr.mxu0 0.0
        %7037 = vmatpush1.msra.mxu0 0.0
        %7038 = vmatprep.subr.mxu0 0.0
        %7039 = vmatpush1.msra.mxu0 0.0
        %7040 = vmatprep.subr.mxu0 0.0
        %7041 = vmatpush1.msra.mxu0 0.0
        %7042 = vmatprep.subr.mxu0 0.0
        %7043 = vmatpush1.msra.mxu0 0.0
        %7044 = vmatprep.subr.mxu0 0.0
        %7045 = vmatpush1.msra.mxu0 0.0
        %7046 = vmatprep.subr.mxu0 0.0
        %7047 = vmatpush1.msra.mxu0 0.0
        %7048 = vmatprep.subr.mxu0 0.0
        %7049 = vmatpush1.msra.mxu0 0.0
        %7050 = vmatprep.subr.mxu0 0.0
        %7051 = vmatpush1.msra.mxu0 0.0
        %7052 = vmatprep.subr.mxu0 0.0
        %7053 = vmatpush1.msra.mxu0 0.0
        %7054 = vmatprep.subr.mxu0 0.0
        %7055 = vmatpush1.msra.mxu0 0.0
        %7056 = vmatprep.subr.mxu0 0.0
        %7057 = vmatpush1.msra.mxu0 0.0
        %7058 = vmatprep.subr.mxu0 0.0
        %7059 = vmatpush1.msra.mxu0 0.0
        %7060 = vmatprep.subr.mxu0 0.0
        %7061 = vmatpush1.msra.mxu0 0.0
        %7062 = vmatprep.subr.mxu0 0.0
        %7063 = vmatpush1.msra.mxu0 0.0
        %7064 = vmatprep.subr.mxu0 0.0
        %7065 = vmatpush1.msra.mxu0 0.0
        %7066 = vmatprep.mubr.f32.mxu0 0.0
        %7067 = vmatmul.mubr.f32.gmra.mrb[0].mxu0 %v6985
        %v7068 = vpop.f32.mrb[0].mxu0
        %v7069 = vadd.f32 0.0, %v7068
        %v7070 = vpop.f32.mrb[0].mxu0
        %7071 = vmatprep.mubr.f32.mxu0 0.0
        %7072 = vmatmul.mubr.f32.gmra.mrb[0].mxu0 %v6988
        %v7073 = vpop.f32.mrb[0].mxu0
        %v7074 = vadd.f32 0.0, %v7073
        %v7075 = vpop.f32.mrb[0].mxu0
        %7076 = vmatprep.mubr.f32.mxu0 0.0
        %7077 = vmatmul.mubr.f32.gmra.mrb[0].mxu0 %v6991
        %v7078 = vpop.f32.mrb[0].mxu0
        %v7079 = vadd.f32 0.0, %v7078
        %v7080 = vpop.f32.mrb[0].mxu0
        %7081 = vmatprep.mubr.f32.mxu0 0.0
        %7082 = vmatmul.mubr.f32.gmra.mrb[0].mxu0 %v6994
        %v7083 = vpop.f32.mrb[0].mxu0
        %v7084 = vadd.f32 0.0, %v7083
        %v7085 = vpop.f32.mrb[0].mxu0
        %7086 = vmatprep.mubr.f32.mxu0 0.0
        %7087 = vmatmul.mubr.f32.gmra.mrb[0].mxu0 %v6997
        %v7088 = vpop.f32.mrb[0].mxu0
        %v7089 = vadd.f32 0.0, %v7088
        %v7090 = vpop.f32.mrb[0].mxu0
        %7091 = vdwg.mxu0
        %v7092 = vadd.f32 %v6966, %v7069
        %v7093 = vadd.f32 %v6967, %v7074
        %v7094 = vadd.f32 %v6968, %v7079
        %v7095 = vadd.f32 %v6969, %v7084
        %v7096 = vadd.f32 %v6970, %v7089
        %v7097 = vld [vmem:[#allocation7 + $0x4] sm:$0xff]
        %v7098 = vld [vmem:[#allocation7 + $0xc] sm:$0xff]
        %v7099 = vld [vmem:[#allocation7 + $0x14] sm:$0xff]
        %v7100 = vld [vmem:[#allocation7 + $0x1c] sm:$0xff]
        %v7101 = vld [vmem:[#allocation7 + $0x24] sm:$0x1]
        %s7102 = scalar_lea.vmem %s10, 224
        %v7103 = vld [vmem:[%s7102] sm:$0xff]
        %v7104 = vld [vmem:[%s7102 + $0x8] sm:$0xff]
        %v7105 = vld [vmem:[%s7102 + $0x10] sm:$0xff]
        %v7106 = vld [vmem:[%s7102 + $0x18] sm:$0xff]
        %v7107 = vld [vmem:[%s7102 + $0x20] sm:$0xff]
        %v7108 = vld [vmem:[%s7102 + $0x28] sm:$0xff]
        %v7109 = vld [vmem:[%s7102 + $0x30] sm:$0x3]
        %v7111 = vsel %vm6543, %v7097, 0
        %v7114 = vsel %vm6543, %v7098, 0
        %v7117 = vsel %vm6543, %v7099, 0
        %v7120 = vsel %vm6543, %v7100, 0
        %v7123 = vsel %vm6543, %v7101, 0
        %v7126 = vsel %vm1019, %v7109, 0
        %7128 = vmatprep.subr.mxu0 0.0
        %7129 = vmatpush1.msra.mxu0 %v7103
        %7130 = vmatprep.subr.mxu0 0.0
        %7131 = vmatpush1.msra.mxu0 %v7104
        %7132 = vmatprep.subr.mxu0 0.0
        %7133 = vmatpush1.msra.mxu0 %v7105
        %7134 = vmatprep.subr.mxu0 0.0
        %7135 = vmatpush1.msra.mxu0 %v7106
        %7136 = vmatprep.subr.mxu0 0.0
        %7137 = vmatpush1.msra.mxu0 %v7107
        %7138 = vmatprep.subr.mxu0 0.0
        %7139 = vmatpush1.msra.mxu0 %v7108
        %7140 = vmatprep.subr.mxu0 0.0
        %7141 = vmatpush1.msra.mxu0 %v7126
        %7142 = vmatprep.subr.mxu0 0.0
        %7143 = vmatpush1.msra.mxu0 0.0
        %7144 = vmatprep.subr.mxu0 0.0
        %7145 = vmatpush1.msra.mxu0 0.0
        %7146 = vmatprep.subr.mxu0 0.0
        %7147 = vmatpush1.msra.mxu0 0.0
        %7148 = vmatprep.subr.mxu0 0.0
        %7149 = vmatpush1.msra.mxu0 0.0
        %7150 = vmatprep.subr.mxu0 0.0
        %7151 = vmatpush1.msra.mxu0 0.0
        %7152 = vmatprep.subr.mxu0 0.0
        %7153 = vmatpush1.msra.mxu0 0.0
        %7154 = vmatprep.subr.mxu0 0.0
        %7155 = vmatpush1.msra.mxu0 0.0
        %7156 = vmatprep.subr.mxu0 0.0
        %7157 = vmatpush1.msra.mxu0 0.0
        %7158 = vmatprep.subr.mxu0 0.0
        %7159 = vmatpush1.msra.mxu0 0.0
        %7160 = vmatprep.subr.mxu0 0.0
        %7161 = vmatpush1.msra.mxu0 0.0
        %7162 = vmatprep.subr.mxu0 0.0
        %7163 = vmatpush1.msra.mxu0 0.0
        %7164 = vmatprep.subr.mxu0 0.0
        %7165 = vmatpush1.msra.mxu0 0.0
        %7166 = vmatprep.subr.mxu0 0.0
        %7167 = vmatpush1.msra.mxu0 0.0
        %7168 = vmatprep.subr.mxu0 0.0
        %7169 = vmatpush1.msra.mxu0 0.0
        %7170 = vmatprep.subr.mxu0 0.0
        %7171 = vmatpush1.msra.mxu0 0.0
        %7172 = vmatprep.subr.mxu0 0.0
        %7173 = vmatpush1.msra.mxu0 0.0
        %7174 = vmatprep.subr.mxu0 0.0
        %7175 = vmatpush1.msra.mxu0 0.0
        %7176 = vmatprep.subr.mxu0 0.0
        %7177 = vmatpush1.msra.mxu0 0.0
        %7178 = vmatprep.subr.mxu0 0.0
        %7179 = vmatpush1.msra.mxu0 0.0
        %7180 = vmatprep.subr.mxu0 0.0
        %7181 = vmatpush1.msra.mxu0 0.0
        %7182 = vmatprep.subr.mxu0 0.0
        %7183 = vmatpush1.msra.mxu0 0.0
        %7184 = vmatprep.subr.mxu0 0.0
        %7185 = vmatpush1.msra.mxu0 0.0
        %7186 = vmatprep.subr.mxu0 0.0
        %7187 = vmatpush1.msra.mxu0 0.0
        %7188 = vmatprep.subr.mxu0 0.0
        %7189 = vmatpush1.msra.mxu0 0.0
        %7190 = vmatprep.subr.mxu0 0.0
        %7191 = vmatpush1.msra.mxu0 0.0
        %7192 = vmatprep.mubr.f32.mxu0 0.0
        %7193 = vmatmul.mubr.f32.gmra.mrb[0].mxu0 %v7111
        %v7194 = vpop.f32.mrb[0].mxu0
        %v7195 = vadd.f32 0.0, %v7194
        %v7196 = vpop.f32.mrb[0].mxu0
        %7197 = vmatprep.mubr.f32.mxu0 0.0
        %7198 = vmatmul.mubr.f32.gmra.mrb[0].mxu0 %v7114
        %v7199 = vpop.f32.mrb[0].mxu0
        %v7200 = vadd.f32 0.0, %v7199
        %v7201 = vpop.f32.mrb[0].mxu0
        %7202 = vmatprep.mubr.f32.mxu0 0.0
        %7203 = vmatmul.mubr.f32.gmra.mrb[0].mxu0 %v7117
        %v7204 = vpop.f32.mrb[0].mxu0
        %v7205 = vadd.f32 0.0, %v7204
        %v7206 = vpop.f32.mrb[0].mxu0
        %7207 = vmatprep.mubr.f32.mxu0 0.0
        %7208 = vmatmul.mubr.f32.gmra.mrb[0].mxu0 %v7120
        %v7209 = vpop.f32.mrb[0].mxu0
        %v7210 = vadd.f32 0.0, %v7209
        %v7211 = vpop.f32.mrb[0].mxu0
        %7212 = vmatprep.mubr.f32.mxu0 0.0
        %7213 = vmatmul.mubr.f32.gmra.mrb[0].mxu0 %v7123
        %v7214 = vpop.f32.mrb[0].mxu0
        %v7215 = vadd.f32 0.0, %v7214
        %v7216 = vpop.f32.mrb[0].mxu0
        %7217 = vdwg.mxu0
        %v7218 = vadd.f32 %v7092, %v7195
        %v7219 = vadd.f32 %v7093, %v7200
        %v7220 = vadd.f32 %v7094, %v7205
        %v7221 = vadd.f32 %v7095, %v7210
        %v7222 = vadd.f32 %v7096, %v7215
        %v7223 = vld [vmem:[%s11] sm:$0x1]
        %v7225 = vlaneseq
        %v7226 = vshrl.u32 %v7225, 7
        %v7227 = vsub.s32 0, %v7226
        %v7228 = vrot.slane %v7223, %v7227
        %v7230 = vmul.f32 %v7218, %v7228
        %v7231 = vmul.f32 %v7219, %v7228
        %v7232 = vmul.f32 %v7220, %v7228
        %v7233 = vmul.f32 %v7221, %v7228
        %v7234 = vmul.f32 %v7222, %v7228
        %v7235 = vld [vmem:[%s12] sm:$0x1]
        %v7237 = vlaneseq
        %v7238 = vshrl.u32 %v7237, 7
        %v7239 = vsub.s32 0, %v7238
        %v7240 = vrot.slane %v7235, %v7239
        %v7242 = vadd.f32 %v7230, %v7240
        %v7243 = vadd.f32 %v7231, %v7240
        %v7244 = vadd.f32 %v7232, %v7240
        %v7245 = vadd.f32 %v7233, %v7240
        %v7246 = vadd.f32 %v7234, %v7240
        %v7247 = vmax.f32 %v7242, 0.0
        %v7248 = vmax.f32 %v7243, 0.0
        %v7249 = vmax.f32 %v7244, 0.0
        %v7250 = vmax.f32 %v7245, 0.0
        %v7251 = vmax.f32 %v7246, 0.0
        %vm7252 = vcmask 572416
        %7253 = vst.msk [vmem:[#allocation8] sm:$0xff] %vm7252, %v7247
        %7254 = vst.msk [vmem:[#allocation8 + $0x8] sm:$0xff] %vm7252, %v7248
        %7255 = vst.msk [vmem:[#allocation8 + $0x10] sm:$0xff] %vm7252, %v7249
        %7256 = vst.msk [vmem:[#allocation8 + $0x18] sm:$0xff] %vm7252, %v7250
        %vm7257 = vcmask 565248
        %7258 = vst.msk [vmem:[#allocation8 + $0x20] sm:$0x1] %vm7257, %v7251
        %v7259 = vld [vmem:[#allocation8] ss:$3 sm:$0xff]
        %s7260 = scalar_lea.vmem [#allocation8], 24
        %v7261 = vld [vmem:[%s7260] ss:$3 sm:$0x7]
        %s7262 = scalar_lea.vmem [#allocation8], 1
        %v7263 = vld [vmem:[%s7262] ss:$3 sm:$0xff]
        %s7264 = scalar_lea.vmem [#allocation8], 25
        %v7265 = vld [vmem:[%s7264] ss:$3 sm:$0x7]
        %v7266 = vmax.f32 %v7259, %v7263
        %v7267 = vmax.f32 %v7261, %v7265
        %s7268 = scalar_lea.vmem [#allocation8], 2
        %v7269 = vld [vmem:[%s7268] ss:$3 sm:$0xff]
        %s7270 = scalar_lea.vmem [#allocation8], 26
        %v7271 = vld [vmem:[%s7270] ss:$3 sm:$0x7]
        %v7272 = vmax.f32 %v7266, %v7269
        %v7273 = vmax.f32 %v7267, %v7271
        %7274 = vst.msk [vmem:[#allocation9] sm:$0xff] %vm7252, %v7272
        %vm7275 = vcmask 567296
        %7276 = vst.msk [vmem:[#allocation9 + $0x8] sm:$0x7] %vm7275, %v7273
        %v7277 = vld [vmem:[#allocation9] sm:$0x1]
        %v7278 = vld [vmem:[%s13] sm:$0xff]
        %v7279 = vld [vmem:[%s13 + $0x8] sm:$0xff]
        %v7280 = vld [vmem:[%s13 + $0x10] sm:$0xff]
        %v7281 = vld [vmem:[%s13 + $0x18] sm:$0xff]
        %v7282 = vld [vmem:[%s13 + $0x20] sm:$0xff]
        %v7283 = vld [vmem:[%s13 + $0x28] sm:$0xff]
        %v7284 = vld [vmem:[%s13 + $0x30] sm:$0xff]
        %v7285 = vld [vmem:[%s13 + $0x38] sm:$0xff]
        %v7286 = vld [vmem:[%s13 + $0x40] sm:$0x3f]
        %v7287 = vld [vmem:[#allocation9 + $0x1] sm:$0x1]
        %s7288 = scalar_lea.vmem %s13, 72
        %v7289 = vld [vmem:[%s7288] sm:$0xff]
        %v7290 = vld [vmem:[%s7288 + $0x8] sm:$0xff]
        %v7291 = vld [vmem:[%s7288 + $0x10] sm:$0xff]
        %v7292 = vld [vmem:[%s7288 + $0x18] sm:$0xff]
        %v7293 = vld [vmem:[%s7288 + $0x20] sm:$0xff]
        %v7294 = vld [vmem:[%s7288 + $0x28] sm:$0xff]
        %v7295 = vld [vmem:[%s7288 + $0x30] sm:$0xff]
        %v7296 = vld [vmem:[%s7288 + $0x38] sm:$0xff]
        %v7297 = vld [vmem:[%s7288 + $0x40] sm:$0x3f]
        %v7299 = vsel %vm7252, %v7287, 0
        %vm7301 = vcmask 1045504
        %v7303 = vsel %vm7301, %v7297, 0
        %7305 = vmatprep.subr.mxu0 0.0
        %7306 = vmatpush1.msra.mxu0 %v7289
        %7307 = vmatprep.subr.mxu0 0.0
        %7308 = vmatpush1.msra.mxu0 %v7290
        %7309 = vmatprep.subr.mxu0 0.0
        %7310 = vmatpush1.msra.mxu0 %v7291
        %7311 = vmatprep.subr.mxu0 0.0
        %7312 = vmatpush1.msra.mxu0 %v7292
        %7313 = vmatprep.subr.mxu0 0.0
        %7314 = vmatpush1.msra.mxu0 %v7293
        %7315 = vmatprep.subr.mxu0 0.0
        %7316 = vmatpush1.msra.mxu0 %v7294
        %7317 = vmatprep.subr.mxu0 0.0
        %7318 = vmatpush1.msra.mxu0 %v7295
        %7319 = vmatprep.subr.mxu0 0.0
        %7320 = vmatpush1.msra.mxu0 %v7296
        %7321 = vmatprep.subr.mxu0 0.0
        %7322 = vmatpush1.msra.mxu0 %v7303
        %7323 = vmatprep.subr.mxu0 0.0
        %7324 = vmatpush1.msra.mxu0 0.0
        %7325 = vmatprep.subr.mxu0 0.0
        %7326 = vmatpush1.msra.mxu0 0.0
        %7327 = vmatprep.subr.mxu0 0.0
        %7328 = vmatpush1.msra.mxu0 0.0
        %7329 = vmatprep.subr.mxu0 0.0
        %7330 = vmatpush1.msra.mxu0 0.0
        %7331 = vmatprep.subr.mxu0 0.0
        %7332 = vmatpush1.msra.mxu0 0.0
        %7333 = vmatprep.subr.mxu0 0.0
        %7334 = vmatpush1.msra.mxu0 0.0
        %7335 = vmatprep.subr.mxu0 0.0
        %7336 = vmatpush1.msra.mxu0 0.0
        %7337 = vmatprep.subr.mxu0 0.0
        %7338 = vmatpush1.msra.mxu0 0.0
        %7339 = vmatprep.subr.mxu0 0.0
        %7340 = vmatpush1.msra.mxu0 0.0
        %7341 = vmatprep.subr.mxu0 0.0
        %7342 = vmatpush1.msra.mxu0 0.0
        %7343 = vmatprep.subr.mxu0 0.0
        %7344 = vmatpush1.msra.mxu0 0.0
        %7345 = vmatprep.subr.mxu0 0.0
        %7346 = vmatpush1.msra.mxu0 0.0
        %7347 = vmatprep.subr.mxu0 0.0
        %7348 = vmatpush1.msra.mxu0 0.0
        %7349 = vmatprep.subr.mxu0 0.0
        %7350 = vmatpush1.msra.mxu0 0.0
        %7351 = vmatprep.subr.mxu0 0.0
        %7352 = vmatpush1.msra.mxu0 0.0
        %7353 = vmatprep.subr.mxu0 0.0
        %7354 = vmatpush1.msra.mxu0 0.0
        %7355 = vmatprep.subr.mxu0 0.0
        %7356 = vmatpush1.msra.mxu0 0.0
        %7357 = vmatprep.subr.mxu0 0.0
        %7358 = vmatpush1.msra.mxu0 0.0
        %7359 = vmatprep.subr.mxu0 0.0
        %7360 = vmatpush1.msra.mxu0 0.0
        %7361 = vmatprep.subr.mxu0 0.0
        %7362 = vmatpush1.msra.mxu0 0.0
        %7363 = vmatprep.subr.mxu0 0.0
        %7364 = vmatpush1.msra.mxu0 0.0
        %7365 = vmatprep.subr.mxu0 0.0
        %7366 = vmatpush1.msra.mxu0 0.0
        %7367 = vmatprep.subr.mxu0 0.0
        %7368 = vmatpush1.msra.mxu0 0.0
        %7369 = vmatprep.mubr.f32.mxu0 0.0
        %7370 = vmatmul.mubr.f32.gmra.mrb[0].mxu0 %v7299
        %v7371 = vpop.f32.mrb[0].mxu0
        %v7372 = vadd.f32 0.0, %v7371
        %v7373 = vpop.f32.mrb[0].mxu0
        %7374 = vdwg.mxu0
        %v7376 = vsel %vm7252, %v7277, 0
        %v7379 = vsel %vm7301, %v7286, 0
        %7381 = vmatprep.subr.mxu0 0.0
        %7382 = vmatpush1.msra.mxu0 %v7278
        %7383 = vmatprep.subr.mxu0 0.0
        %7384 = vmatpush1.msra.mxu0 %v7279
        %7385 = vmatprep.subr.mxu0 0.0
        %7386 = vmatpush1.msra.mxu0 %v7280
        %7387 = vmatprep.subr.mxu0 0.0
        %7388 = vmatpush1.msra.mxu0 %v7281
        %7389 = vmatprep.subr.mxu0 0.0
        %7390 = vmatpush1.msra.mxu0 %v7282
        %7391 = vmatprep.subr.mxu0 0.0
        %7392 = vmatpush1.msra.mxu0 %v7283
        %7393 = vmatprep.subr.mxu0 0.0
        %7394 = vmatpush1.msra.mxu0 %v7284
        %7395 = vmatprep.subr.mxu0 0.0
        %7396 = vmatpush1.msra.mxu0 %v7285
        %7397 = vmatprep.subr.mxu0 0.0
        %7398 = vmatpush1.msra.mxu0 %v7379
        %7399 = vmatprep.subr.mxu0 0.0
        %7400 = vmatpush1.msra.mxu0 0.0
        %7401 = vmatprep.subr.mxu0 0.0
        %7402 = vmatpush1.msra.mxu0 0.0
        %7403 = vmatprep.subr.mxu0 0.0
        %7404 = vmatpush1.msra.mxu0 0.0
        %7405 = vmatprep.subr.mxu0 0.0
        %7406 = vmatpush1.msra.mxu0 0.0
        %7407 = vmatprep.subr.mxu0 0.0
        %7408 = vmatpush1.msra.mxu0 0.0
        %7409 = vmatprep.subr.mxu0 0.0
        %7410 = vmatpush1.msra.mxu0 0.0
        %7411 = vmatprep.subr.mxu0 0.0
        %7412 = vmatpush1.msra.mxu0 0.0
        %7413 = vmatprep.subr.mxu0 0.0
        %7414 = vmatpush1.msra.mxu0 0.0
        %7415 = vmatprep.subr.mxu0 0.0
        %7416 = vmatpush1.msra.mxu0 0.0
        %7417 = vmatprep.subr.mxu0 0.0
        %7418 = vmatpush1.msra.mxu0 0.0
        %7419 = vmatprep.subr.mxu0 0.0
        %7420 = vmatpush1.msra.mxu0 0.0
        %7421 = vmatprep.subr.mxu0 0.0
        %7422 = vmatpush1.msra.mxu0 0.0
        %7423 = vmatprep.subr.mxu0 0.0
        %7424 = vmatpush1.msra.mxu0 0.0
        %7425 = vmatprep.subr.mxu0 0.0
        %7426 = vmatpush1.msra.mxu0 0.0
        %7427 = vmatprep.subr.mxu0 0.0
        %7428 = vmatpush1.msra.mxu0 0.0
        %7429 = vmatprep.subr.mxu0 0.0
        %7430 = vmatpush1.msra.mxu0 0.0
        %7431 = vmatprep.subr.mxu0 0.0
        %7432 = vmatpush1.msra.mxu0 0.0
        %7433 = vmatprep.subr.mxu0 0.0
        %7434 = vmatpush1.msra.mxu0 0.0
        %7435 = vmatprep.subr.mxu0 0.0
        %7436 = vmatpush1.msra.mxu0 0.0
        %7437 = vmatprep.subr.mxu0 0.0
        %7438 = vmatpush1.msra.mxu0 0.0
        %7439 = vmatprep.subr.mxu0 0.0
        %7440 = vmatpush1.msra.mxu0 0.0
        %7441 = vmatprep.subr.mxu0 0.0
        %7442 = vmatpush1.msra.mxu0 0.0
        %7443 = vmatprep.subr.mxu0 0.0
        %7444 = vmatpush1.msra.mxu0 0.0
        %7445 = vmatprep.mubr.f32.mxu0 0.0
        %7446 = vmatmul.mubr.f32.gmra.mrb[0].mxu0 %v7376
        %v7447 = vpop.f32.mrb[0].mxu0
        %v7448 = vadd.f32 %v7372, %v7447
        %v7449 = vpop.f32.mrb[0].mxu0
        %7450 = vdwg.mxu0
        %v7451 = vld [vmem:[#allocation9 + $0x2] sm:$0x1]
        %s7452 = scalar_lea.vmem %s13, 144
        %v7453 = vld [vmem:[%s7452] sm:$0xff]
        %v7454 = vld [vmem:[%s7452 + $0x8] sm:$0xff]
        %v7455 = vld [vmem:[%s7452 + $0x10] sm:$0xff]
        %v7456 = vld [vmem:[%s7452 + $0x18] sm:$0xff]
        %v7457 = vld [vmem:[%s7452 + $0x20] sm:$0xff]
        %v7458 = vld [vmem:[%s7452 + $0x28] sm:$0xff]
        %v7459 = vld [vmem:[%s7452 + $0x30] sm:$0xff]
        %v7460 = vld [vmem:[%s7452 + $0x38] sm:$0xff]
        %v7461 = vld [vmem:[%s7452 + $0x40] sm:$0x3f]
        %v7463 = vsel %vm7252, %v7451, 0
        %v7466 = vsel %vm7301, %v7461, 0
        %7468 = vmatprep.subr.mxu0 0.0
        %7469 = vmatpush1.msra.mxu0 %v7453
        %7470 = vmatprep.subr.mxu0 0.0
        %7471 = vmatpush1.msra.mxu0 %v7454
        %7472 = vmatprep.subr.mxu0 0.0
        %7473 = vmatpush1.msra.mxu0 %v7455
        %7474 = vmatprep.subr.mxu0 0.0
        %7475 = vmatpush1.msra.mxu0 %v7456
        %7476 = vmatprep.subr.mxu0 0.0
        %7477 = vmatpush1.msra.mxu0 %v7457
        %7478 = vmatprep.subr.mxu0 0.0
        %7479 = vmatpush1.msra.mxu0 %v7458
        %7480 = vmatprep.subr.mxu0 0.0
        %7481 = vmatpush1.msra.mxu0 %v7459
        %7482 = vmatprep.subr.mxu0 0.0
        %7483 = vmatpush1.msra.mxu0 %v7460
        %7484 = vmatprep.subr.mxu0 0.0
        %7485 = vmatpush1.msra.mxu0 %v7466
        %7486 = vmatprep.subr.mxu0 0.0
        %7487 = vmatpush1.msra.mxu0 0.0
        %7488 = vmatprep.subr.mxu0 0.0
        %7489 = vmatpush1.msra.mxu0 0.0
        %7490 = vmatprep.subr.mxu0 0.0
        %7491 = vmatpush1.msra.mxu0 0.0
        %7492 = vmatprep.subr.mxu0 0.0
        %7493 = vmatpush1.msra.mxu0 0.0
        %7494 = vmatprep.subr.mxu0 0.0
        %7495 = vmatpush1.msra.mxu0 0.0
        %7496 = vmatprep.subr.mxu0 0.0
        %7497 = vmatpush1.msra.mxu0 0.0
        %7498 = vmatprep.subr.mxu0 0.0
        %7499 = vmatpush1.msra.mxu0 0.0
        %7500 = vmatprep.subr.mxu0 0.0
        %7501 = vmatpush1.msra.mxu0 0.0
        %7502 = vmatprep.subr.mxu0 0.0
        %7503 = vmatpush1.msra.mxu0 0.0
        %7504 = vmatprep.subr.mxu0 0.0
        %7505 = vmatpush1.msra.mxu0 0.0
        %7506 = vmatprep.subr.mxu0 0.0
        %7507 = vmatpush1.msra.mxu0 0.0
        %7508 = vmatprep.subr.mxu0 0.0
        %7509 = vmatpush1.msra.mxu0 0.0
        %7510 = vmatprep.subr.mxu0 0.0
        %7511 = vmatpush1.msra.mxu0 0.0
        %7512 = vmatprep.subr.mxu0 0.0
        %7513 = vmatpush1.msra.mxu0 0.0
        %7514 = vmatprep.subr.mxu0 0.0
        %7515 = vmatpush1.msra.mxu0 0.0
        %7516 = vmatprep.subr.mxu0 0.0
        %7517 = vmatpush1.msra.mxu0 0.0
        %7518 = vmatprep.subr.mxu0 0.0
        %7519 = vmatpush1.msra.mxu0 0.0
        %7520 = vmatprep.subr.mxu0 0.0
        %7521 = vmatpush1.msra.mxu0 0.0
        %7522 = vmatprep.subr.mxu0 0.0
        %7523 = vmatpush1.msra.mxu0 0.0
        %7524 = vmatprep.subr.mxu0 0.0
        %7525 = vmatpush1.msra.mxu0 0.0
        %7526 = vmatprep.subr.mxu0 0.0
        %7527 = vmatpush1.msra.mxu0 0.0
        %7528 = vmatprep.subr.mxu0 0.0
        %7529 = vmatpush1.msra.mxu0 0.0
        %7530 = vmatprep.subr.mxu0 0.0
        %7531 = vmatpush1.msra.mxu0 0.0
        %7532 = vmatprep.mubr.f32.mxu0 0.0
        %7533 = vmatmul.mubr.f32.gmra.mrb[0].mxu0 %v7463
        %v7534 = vpop.f32.mrb[0].mxu0
        %v7535 = vadd.f32 0.0, %v7534
        %v7536 = vpop.f32.mrb[0].mxu0
        %7537 = vdwg.mxu0
        %v7538 = vadd.f32 %v7448, %v7535
        %v7539 = vld [vmem:[#allocation9 + $0x3] sm:$0x1]
        %s7540 = scalar_lea.vmem %s13, 216
        %v7541 = vld [vmem:[%s7540] sm:$0xff]
        %v7542 = vld [vmem:[%s7540 + $0x8] sm:$0xff]
        %v7543 = vld [vmem:[%s7540 + $0x10] sm:$0xff]
        %v7544 = vld [vmem:[%s7540 + $0x18] sm:$0xff]
        %v7545 = vld [vmem:[%s7540 + $0x20] sm:$0xff]
        %v7546 = vld [vmem:[%s7540 + $0x28] sm:$0xff]
        %v7547 = vld [vmem:[%s7540 + $0x30] sm:$0xff]
        %v7548 = vld [vmem:[%s7540 + $0x38] sm:$0xff]
        %v7549 = vld [vmem:[%s7540 + $0x40] sm:$0x3f]
        %v7551 = vsel %vm7252, %v7539, 0
        %v7554 = vsel %vm7301, %v7549, 0
        %7556 = vmatprep.subr.mxu0 0.0
        %7557 = vmatpush1.msra.mxu0 %v7541
        %7558 = vmatprep.subr.mxu0 0.0
        %7559 = vmatpush1.msra.mxu0 %v7542
        %7560 = vmatprep.subr.mxu0 0.0
        %7561 = vmatpush1.msra.mxu0 %v7543
        %7562 = vmatprep.subr.mxu0 0.0
        %7563 = vmatpush1.msra.mxu0 %v7544
        %7564 = vmatprep.subr.mxu0 0.0
        %7565 = vmatpush1.msra.mxu0 %v7545
        %7566 = vmatprep.subr.mxu0 0.0
        %7567 = vmatpush1.msra.mxu0 %v7546
        %7568 = vmatprep.subr.mxu0 0.0
        %7569 = vmatpush1.msra.mxu0 %v7547
        %7570 = vmatprep.subr.mxu0 0.0
        %7571 = vmatpush1.msra.mxu0 %v7548
        %7572 = vmatprep.subr.mxu0 0.0
        %7573 = vmatpush1.msra.mxu0 %v7554
        %7574 = vmatprep.subr.mxu0 0.0
        %7575 = vmatpush1.msra.mxu0 0.0
        %7576 = vmatprep.subr.mxu0 0.0
        %7577 = vmatpush1.msra.mxu0 0.0
        %7578 = vmatprep.subr.mxu0 0.0
        %7579 = vmatpush1.msra.mxu0 0.0
        %7580 = vmatprep.subr.mxu0 0.0
        %7581 = vmatpush1.msra.mxu0 0.0
        %7582 = vmatprep.subr.mxu0 0.0
        %7583 = vmatpush1.msra.mxu0 0.0
        %7584 = vmatprep.subr.mxu0 0.0
        %7585 = vmatpush1.msra.mxu0 0.0
        %7586 = vmatprep.subr.mxu0 0.0
        %7587 = vmatpush1.msra.mxu0 0.0
        %7588 = vmatprep.subr.mxu0 0.0
        %7589 = vmatpush1.msra.mxu0 0.0
        %7590 = vmatprep.subr.mxu0 0.0
        %7591 = vmatpush1.msra.mxu0 0.0
        %7592 = vmatprep.subr.mxu0 0.0
        %7593 = vmatpush1.msra.mxu0 0.0
        %7594 = vmatprep.subr.mxu0 0.0
        %7595 = vmatpush1.msra.mxu0 0.0
        %7596 = vmatprep.subr.mxu0 0.0
        %7597 = vmatpush1.msra.mxu0 0.0
        %7598 = vmatprep.subr.mxu0 0.0
        %7599 = vmatpush1.msra.mxu0 0.0
        %7600 = vmatprep.subr.mxu0 0.0
        %7601 = vmatpush1.msra.mxu0 0.0
        %7602 = vmatprep.subr.mxu0 0.0
        %7603 = vmatpush1.msra.mxu0 0.0
        %7604 = vmatprep.subr.mxu0 0.0
        %7605 = vmatpush1.msra.mxu0 0.0
        %7606 = vmatprep.subr.mxu0 0.0
        %7607 = vmatpush1.msra.mxu0 0.0
        %7608 = vmatprep.subr.mxu0 0.0
        %7609 = vmatpush1.msra.mxu0 0.0
        %7610 = vmatprep.subr.mxu0 0.0
        %7611 = vmatpush1.msra.mxu0 0.0
        %7612 = vmatprep.subr.mxu0 0.0
        %7613 = vmatpush1.msra.mxu0 0.0
        %7614 = vmatprep.subr.mxu0 0.0
        %7615 = vmatpush1.msra.mxu0 0.0
        %7616 = vmatprep.subr.mxu0 0.0
        %7617 = vmatpush1.msra.mxu0 0.0
        %7618 = vmatprep.subr.mxu0 0.0
        %7619 = vmatpush1.msra.mxu0 0.0
        %7620 = vmatprep.mubr.f32.mxu0 0.0
        %7621 = vmatmul.mubr.f32.gmra.mrb[0].mxu0 %v7551
        %v7622 = vpop.f32.mrb[0].mxu0
        %v7623 = vadd.f32 0.0, %v7622
        %v7624 = vpop.f32.mrb[0].mxu0
        %7625 = vdwg.mxu0
        %v7626 = vadd.f32 %v7538, %v7623
        %v7627 = vld [vmem:[#allocation9 + $0x4] sm:$0x1]
        %s7628 = scalar_lea.vmem %s13, 288
        %v7629 = vld [vmem:[%s7628] sm:$0xff]
        %v7630 = vld [vmem:[%s7628 + $0x8] sm:$0xff]
        %v7631 = vld [vmem:[%s7628 + $0x10] sm:$0xff]
        %v7632 = vld [vmem:[%s7628 + $0x18] sm:$0xff]
        %v7633 = vld [vmem:[%s7628 + $0x20] sm:$0xff]
        %v7634 = vld [vmem:[%s7628 + $0x28] sm:$0xff]
        %v7635 = vld [vmem:[%s7628 + $0x30] sm:$0xff]
        %v7636 = vld [vmem:[%s7628 + $0x38] sm:$0xff]
        %v7637 = vld [vmem:[%s7628 + $0x40] sm:$0x3f]
        %v7639 = vsel %vm7252, %v7627, 0
        %v7642 = vsel %vm7301, %v7637, 0
        %7644 = vmatprep.subr.mxu0 0.0
        %7645 = vmatpush1.msra.mxu0 %v7629
        %7646 = vmatprep.subr.mxu0 0.0
        %7647 = vmatpush1.msra.mxu0 %v7630
        %7648 = vmatprep.subr.mxu0 0.0
        %7649 = vmatpush1.msra.mxu0 %v7631
        %7650 = vmatprep.subr.mxu0 0.0
        %7651 = vmatpush1.msra.mxu0 %v7632
        %7652 = vmatprep.subr.mxu0 0.0
        %7653 = vmatpush1.msra.mxu0 %v7633
        %7654 = vmatprep.subr.mxu0 0.0
        %7655 = vmatpush1.msra.mxu0 %v7634
        %7656 = vmatprep.subr.mxu0 0.0
        %7657 = vmatpush1.msra.mxu0 %v7635
        %7658 = vmatprep.subr.mxu0 0.0
        %7659 = vmatpush1.msra.mxu0 %v7636
        %7660 = vmatprep.subr.mxu0 0.0
        %7661 = vmatpush1.msra.mxu0 %v7642
        %7662 = vmatprep.subr.mxu0 0.0
        %7663 = vmatpush1.msra.mxu0 0.0
        %7664 = vmatprep.subr.mxu0 0.0
        %7665 = vmatpush1.msra.mxu0 0.0
        %7666 = vmatprep.subr.mxu0 0.0
        %7667 = vmatpush1.msra.mxu0 0.0
        %7668 = vmatprep.subr.mxu0 0.0
        %7669 = vmatpush1.msra.mxu0 0.0
        %7670 = vmatprep.subr.mxu0 0.0
        %7671 = vmatpush1.msra.mxu0 0.0
        %7672 = vmatprep.subr.mxu0 0.0
        %7673 = vmatpush1.msra.mxu0 0.0
        %7674 = vmatprep.subr.mxu0 0.0
        %7675 = vmatpush1.msra.mxu0 0.0
        %7676 = vmatprep.subr.mxu0 0.0
        %7677 = vmatpush1.msra.mxu0 0.0
        %7678 = vmatprep.subr.mxu0 0.0
        %7679 = vmatpush1.msra.mxu0 0.0
        %7680 = vmatprep.subr.mxu0 0.0
        %7681 = vmatpush1.msra.mxu0 0.0
        %7682 = vmatprep.subr.mxu0 0.0
        %7683 = vmatpush1.msra.mxu0 0.0
        %7684 = vmatprep.subr.mxu0 0.0
        %7685 = vmatpush1.msra.mxu0 0.0
        %7686 = vmatprep.subr.mxu0 0.0
        %7687 = vmatpush1.msra.mxu0 0.0
        %7688 = vmatprep.subr.mxu0 0.0
        %7689 = vmatpush1.msra.mxu0 0.0
        %7690 = vmatprep.subr.mxu0 0.0
        %7691 = vmatpush1.msra.mxu0 0.0
        %7692 = vmatprep.subr.mxu0 0.0
        %7693 = vmatpush1.msra.mxu0 0.0
        %7694 = vmatprep.subr.mxu0 0.0
        %7695 = vmatpush1.msra.mxu0 0.0
        %7696 = vmatprep.subr.mxu0 0.0
        %7697 = vmatpush1.msra.mxu0 0.0
        %7698 = vmatprep.subr.mxu0 0.0
        %7699 = vmatpush1.msra.mxu0 0.0
        %7700 = vmatprep.subr.mxu0 0.0
        %7701 = vmatpush1.msra.mxu0 0.0
        %7702 = vmatprep.subr.mxu0 0.0
        %7703 = vmatpush1.msra.mxu0 0.0
        %7704 = vmatprep.subr.mxu0 0.0
        %7705 = vmatpush1.msra.mxu0 0.0
        %7706 = vmatprep.subr.mxu0 0.0
        %7707 = vmatpush1.msra.mxu0 0.0
        %7708 = vmatprep.mubr.f32.mxu0 0.0
        %7709 = vmatmul.mubr.f32.gmra.mrb[0].mxu0 %v7639
        %v7710 = vpop.f32.mrb[0].mxu0
        %v7711 = vadd.f32 0.0, %v7710
        %v7712 = vpop.f32.mrb[0].mxu0
        %7713 = vdwg.mxu0
        %v7714 = vadd.f32 %v7626, %v7711
        %v7715 = vld [vmem:[#allocation9 + $0x5] sm:$0x1]
        %s7716 = scalar_lea.vmem %s13, 360
        %v7717 = vld [vmem:[%s7716] sm:$0xff]
        %v7718 = vld [vmem:[%s7716 + $0x8] sm:$0xff]
        %v7719 = vld [vmem:[%s7716 + $0x10] sm:$0xff]
        %v7720 = vld [vmem:[%s7716 + $0x18] sm:$0xff]
        %v7721 = vld [vmem:[%s7716 + $0x20] sm:$0xff]
        %v7722 = vld [vmem:[%s7716 + $0x28] sm:$0xff]
        %v7723 = vld [vmem:[%s7716 + $0x30] sm:$0xff]
        %v7724 = vld [vmem:[%s7716 + $0x38] sm:$0xff]
        %v7725 = vld [vmem:[%s7716 + $0x40] sm:$0x3f]
        %v7727 = vsel %vm7252, %v7715, 0
        %v7730 = vsel %vm7301, %v7725, 0
        %7732 = vmatprep.subr.mxu0 0.0
        %7733 = vmatpush1.msra.mxu0 %v7717
        %7734 = vmatprep.subr.mxu0 0.0
        %7735 = vmatpush1.msra.mxu0 %v7718
        %7736 = vmatprep.subr.mxu0 0.0
        %7737 = vmatpush1.msra.mxu0 %v7719
        %7738 = vmatprep.subr.mxu0 0.0
        %7739 = vmatpush1.msra.mxu0 %v7720
        %7740 = vmatprep.subr.mxu0 0.0
        %7741 = vmatpush1.msra.mxu0 %v7721
        %7742 = vmatprep.subr.mxu0 0.0
        %7743 = vmatpush1.msra.mxu0 %v7722
        %7744 = vmatprep.subr.mxu0 0.0
        %7745 = vmatpush1.msra.mxu0 %v7723
        %7746 = vmatprep.subr.mxu0 0.0
        %7747 = vmatpush1.msra.mxu0 %v7724
        %7748 = vmatprep.subr.mxu0 0.0
        %7749 = vmatpush1.msra.mxu0 %v7730
        %7750 = vmatprep.subr.mxu0 0.0
        %7751 = vmatpush1.msra.mxu0 0.0
        %7752 = vmatprep.subr.mxu0 0.0
        %7753 = vmatpush1.msra.mxu0 0.0
        %7754 = vmatprep.subr.mxu0 0.0
        %7755 = vmatpush1.msra.mxu0 0.0
        %7756 = vmatprep.subr.mxu0 0.0
        %7757 = vmatpush1.msra.mxu0 0.0
        %7758 = vmatprep.subr.mxu0 0.0
        %7759 = vmatpush1.msra.mxu0 0.0
        %7760 = vmatprep.subr.mxu0 0.0
        %7761 = vmatpush1.msra.mxu0 0.0
        %7762 = vmatprep.subr.mxu0 0.0
        %7763 = vmatpush1.msra.mxu0 0.0
        %7764 = vmatprep.subr.mxu0 0.0
        %7765 = vmatpush1.msra.mxu0 0.0
        %7766 = vmatprep.subr.mxu0 0.0
        %7767 = vmatpush1.msra.mxu0 0.0
        %7768 = vmatprep.subr.mxu0 0.0
        %7769 = vmatpush1.msra.mxu0 0.0
        %7770 = vmatprep.subr.mxu0 0.0
        %7771 = vmatpush1.msra.mxu0 0.0
        %7772 = vmatprep.subr.mxu0 0.0
        %7773 = vmatpush1.msra.mxu0 0.0
        %7774 = vmatprep.subr.mxu0 0.0
        %7775 = vmatpush1.msra.mxu0 0.0
        %7776 = vmatprep.subr.mxu0 0.0
        %7777 = vmatpush1.msra.mxu0 0.0
        %7778 = vmatprep.subr.mxu0 0.0
        %7779 = vmatpush1.msra.mxu0 0.0
        %7780 = vmatprep.subr.mxu0 0.0
        %7781 = vmatpush1.msra.mxu0 0.0
        %7782 = vmatprep.subr.mxu0 0.0
        %7783 = vmatpush1.msra.mxu0 0.0
        %7784 = vmatprep.subr.mxu0 0.0
        %7785 = vmatpush1.msra.mxu0 0.0
        %7786 = vmatprep.subr.mxu0 0.0
        %7787 = vmatpush1.msra.mxu0 0.0
        %7788 = vmatprep.subr.mxu0 0.0
        %7789 = vmatpush1.msra.mxu0 0.0
        %7790 = vmatprep.subr.mxu0 0.0
        %7791 = vmatpush1.msra.mxu0 0.0
        %7792 = vmatprep.subr.mxu0 0.0
        %7793 = vmatpush1.msra.mxu0 0.0
        %7794 = vmatprep.subr.mxu0 0.0
        %7795 = vmatpush1.msra.mxu0 0.0
        %7796 = vmatprep.mubr.f32.mxu0 0.0
        %7797 = vmatmul.mubr.f32.gmra.mrb[0].mxu0 %v7727
        %v7798 = vpop.f32.mrb[0].mxu0
        %v7799 = vadd.f32 0.0, %v7798
        %v7800 = vpop.f32.mrb[0].mxu0
        %7801 = vdwg.mxu0
        %v7802 = vadd.f32 %v7714, %v7799
        %v7803 = vld [vmem:[#allocation9 + $0x6] sm:$0x1]
        %s7804 = scalar_lea.vmem %s13, 432
        %v7805 = vld [vmem:[%s7804] sm:$0xff]
        %v7806 = vld [vmem:[%s7804 + $0x8] sm:$0xff]
        %v7807 = vld [vmem:[%s7804 + $0x10] sm:$0xff]
        %v7808 = vld [vmem:[%s7804 + $0x18] sm:$0xff]
        %v7809 = vld [vmem:[%s7804 + $0x20] sm:$0xff]
        %v7810 = vld [vmem:[%s7804 + $0x28] sm:$0xff]
        %v7811 = vld [vmem:[%s7804 + $0x30] sm:$0xff]
        %v7812 = vld [vmem:[%s7804 + $0x38] sm:$0xff]
        %v7813 = vld [vmem:[%s7804 + $0x40] sm:$0x3f]
        %v7815 = vsel %vm7252, %v7803, 0
        %v7818 = vsel %vm7301, %v7813, 0
        %7820 = vmatprep.subr.mxu0 0.0
        %7821 = vmatpush1.msra.mxu0 %v7805
        %7822 = vmatprep.subr.mxu0 0.0
        %7823 = vmatpush1.msra.mxu0 %v7806
        %7824 = vmatprep.subr.mxu0 0.0
        %7825 = vmatpush1.msra.mxu0 %v7807
        %7826 = vmatprep.subr.mxu0 0.0
        %7827 = vmatpush1.msra.mxu0 %v7808
        %7828 = vmatprep.subr.mxu0 0.0
        %7829 = vmatpush1.msra.mxu0 %v7809
        %7830 = vmatprep.subr.mxu0 0.0
        %7831 = vmatpush1.msra.mxu0 %v7810
        %7832 = vmatprep.subr.mxu0 0.0
        %7833 = vmatpush1.msra.mxu0 %v7811
        %7834 = vmatprep.subr.mxu0 0.0
        %7835 = vmatpush1.msra.mxu0 %v7812
        %7836 = vmatprep.subr.mxu0 0.0
        %7837 = vmatpush1.msra.mxu0 %v7818
        %7838 = vmatprep.subr.mxu0 0.0
        %7839 = vmatpush1.msra.mxu0 0.0
        %7840 = vmatprep.subr.mxu0 0.0
        %7841 = vmatpush1.msra.mxu0 0.0
        %7842 = vmatprep.subr.mxu0 0.0
        %7843 = vmatpush1.msra.mxu0 0.0
        %7844 = vmatprep.subr.mxu0 0.0
        %7845 = vmatpush1.msra.mxu0 0.0
        %7846 = vmatprep.subr.mxu0 0.0
        %7847 = vmatpush1.msra.mxu0 0.0
        %7848 = vmatprep.subr.mxu0 0.0
        %7849 = vmatpush1.msra.mxu0 0.0
        %7850 = vmatprep.subr.mxu0 0.0
        %7851 = vmatpush1.msra.mxu0 0.0
        %7852 = vmatprep.subr.mxu0 0.0
        %7853 = vmatpush1.msra.mxu0 0.0
        %7854 = vmatprep.subr.mxu0 0.0
        %7855 = vmatpush1.msra.mxu0 0.0
        %7856 = vmatprep.subr.mxu0 0.0
        %7857 = vmatpush1.msra.mxu0 0.0
        %7858 = vmatprep.subr.mxu0 0.0
        %7859 = vmatpush1.msra.mxu0 0.0
        %7860 = vmatprep.subr.mxu0 0.0
        %7861 = vmatpush1.msra.mxu0 0.0
        %7862 = vmatprep.subr.mxu0 0.0
        %7863 = vmatpush1.msra.mxu0 0.0
        %7864 = vmatprep.subr.mxu0 0.0
        %7865 = vmatpush1.msra.mxu0 0.0
        %7866 = vmatprep.subr.mxu0 0.0
        %7867 = vmatpush1.msra.mxu0 0.0
        %7868 = vmatprep.subr.mxu0 0.0
        %7869 = vmatpush1.msra.mxu0 0.0
        %7870 = vmatprep.subr.mxu0 0.0
        %7871 = vmatpush1.msra.mxu0 0.0
        %7872 = vmatprep.subr.mxu0 0.0
        %7873 = vmatpush1.msra.mxu0 0.0
        %7874 = vmatprep.subr.mxu0 0.0
        %7875 = vmatpush1.msra.mxu0 0.0
        %7876 = vmatprep.subr.mxu0 0.0
        %7877 = vmatpush1.msra.mxu0 0.0
        %7878 = vmatprep.subr.mxu0 0.0
        %7879 = vmatpush1.msra.mxu0 0.0
        %7880 = vmatprep.subr.mxu0 0.0
        %7881 = vmatpush1.msra.mxu0 0.0
        %7882 = vmatprep.subr.mxu0 0.0
        %7883 = vmatpush1.msra.mxu0 0.0
        %7884 = vmatprep.mubr.f32.mxu0 0.0
        %7885 = vmatmul.mubr.f32.gmra.mrb[0].mxu0 %v7815
        %v7886 = vpop.f32.mrb[0].mxu0
        %v7887 = vadd.f32 0.0, %v7886
        %v7888 = vpop.f32.mrb[0].mxu0
        %7889 = vdwg.mxu0
        %v7890 = vadd.f32 %v7802, %v7887
        %v7891 = vld [vmem:[#allocation9 + $0x7] sm:$0x1]
        %s7892 = scalar_lea.vmem %s13, 504
        %v7893 = vld [vmem:[%s7892] sm:$0xff]
        %v7894 = vld [vmem:[%s7892 + $0x8] sm:$0xff]
        %v7895 = vld [vmem:[%s7892 + $0x10] sm:$0xff]
        %v7896 = vld [vmem:[%s7892 + $0x18] sm:$0xff]
        %v7897 = vld [vmem:[%s7892 + $0x20] sm:$0xff]
        %v7898 = vld [vmem:[%s7892 + $0x28] sm:$0xff]
        %v7899 = vld [vmem:[%s7892 + $0x30] sm:$0xff]
        %v7900 = vld [vmem:[%s7892 + $0x38] sm:$0xff]
        %v7901 = vld [vmem:[%s7892 + $0x40] sm:$0x3f]
        %v7903 = vsel %vm7252, %v7891, 0
        %v7906 = vsel %vm7301, %v7901, 0
        %7908 = vmatprep.subr.mxu0 0.0
        %7909 = vmatpush1.msra.mxu0 %v7893
        %7910 = vmatprep.subr.mxu0 0.0
        %7911 = vmatpush1.msra.mxu0 %v7894
        %7912 = vmatprep.subr.mxu0 0.0
        %7913 = vmatpush1.msra.mxu0 %v7895
        %7914 = vmatprep.subr.mxu0 0.0
        %7915 = vmatpush1.msra.mxu0 %v7896
        %7916 = vmatprep.subr.mxu0 0.0
        %7917 = vmatpush1.msra.mxu0 %v7897
        %7918 = vmatprep.subr.mxu0 0.0
        %7919 = vmatpush1.msra.mxu0 %v7898
        %7920 = vmatprep.subr.mxu0 0.0
        %7921 = vmatpush1.msra.mxu0 %v7899
        %7922 = vmatprep.subr.mxu0 0.0
        %7923 = vmatpush1.msra.mxu0 %v7900
        %7924 = vmatprep.subr.mxu0 0.0
        %7925 = vmatpush1.msra.mxu0 %v7906
        %7926 = vmatprep.subr.mxu0 0.0
        %7927 = vmatpush1.msra.mxu0 0.0
        %7928 = vmatprep.subr.mxu0 0.0
        %7929 = vmatpush1.msra.mxu0 0.0
        %7930 = vmatprep.subr.mxu0 0.0
        %7931 = vmatpush1.msra.mxu0 0.0
        %7932 = vmatprep.subr.mxu0 0.0
        %7933 = vmatpush1.msra.mxu0 0.0
        %7934 = vmatprep.subr.mxu0 0.0
        %7935 = vmatpush1.msra.mxu0 0.0
        %7936 = vmatprep.subr.mxu0 0.0
        %7937 = vmatpush1.msra.mxu0 0.0
        %7938 = vmatprep.subr.mxu0 0.0
        %7939 = vmatpush1.msra.mxu0 0.0
        %7940 = vmatprep.subr.mxu0 0.0
        %7941 = vmatpush1.msra.mxu0 0.0
        %7942 = vmatprep.subr.mxu0 0.0
        %7943 = vmatpush1.msra.mxu0 0.0
        %7944 = vmatprep.subr.mxu0 0.0
        %7945 = vmatpush1.msra.mxu0 0.0
        %7946 = vmatprep.subr.mxu0 0.0
        %7947 = vmatpush1.msra.mxu0 0.0
        %7948 = vmatprep.subr.mxu0 0.0
        %7949 = vmatpush1.msra.mxu0 0.0
        %7950 = vmatprep.subr.mxu0 0.0
        %7951 = vmatpush1.msra.mxu0 0.0
        %7952 = vmatprep.subr.mxu0 0.0
        %7953 = vmatpush1.msra.mxu0 0.0
        %7954 = vmatprep.subr.mxu0 0.0
        %7955 = vmatpush1.msra.mxu0 0.0
        %7956 = vmatprep.subr.mxu0 0.0
        %7957 = vmatpush1.msra.mxu0 0.0
        %7958 = vmatprep.subr.mxu0 0.0
        %7959 = vmatpush1.msra.mxu0 0.0
        %7960 = vmatprep.subr.mxu0 0.0
        %7961 = vmatpush1.msra.mxu0 0.0
        %7962 = vmatprep.subr.mxu0 0.0
        %7963 = vmatpush1.msra.mxu0 0.0
        %7964 = vmatprep.subr.mxu0 0.0
        %7965 = vmatpush1.msra.mxu0 0.0
        %7966 = vmatprep.subr.mxu0 0.0
        %7967 = vmatpush1.msra.mxu0 0.0
        %7968 = vmatprep.subr.mxu0 0.0
        %7969 = vmatpush1.msra.mxu0 0.0
        %7970 = vmatprep.subr.mxu0 0.0
        %7971 = vmatpush1.msra.mxu0 0.0
        %7972 = vmatprep.mubr.f32.mxu0 0.0
        %7973 = vmatmul.mubr.f32.gmra.mrb[0].mxu0 %v7903
        %v7974 = vpop.f32.mrb[0].mxu0
        %v7975 = vadd.f32 0.0, %v7974
        %v7976 = vpop.f32.mrb[0].mxu0
        %7977 = vdwg.mxu0
        %v7978 = vadd.f32 %v7890, %v7975
        %v7979 = vld [vmem:[#allocation9 + $0x8] sm:$0x1]
        %s7980 = scalar_lea.vmem %s13, 576
        %v7981 = vld [vmem:[%s7980] sm:$0xff]
        %v7982 = vld [vmem:[%s7980 + $0x8] sm:$0xff]
        %v7983 = vld [vmem:[%s7980 + $0x10] sm:$0xff]
        %v7984 = vld [vmem:[%s7980 + $0x18] sm:$0xff]
        %v7985 = vld [vmem:[%s7980 + $0x20] sm:$0xff]
        %v7986 = vld [vmem:[%s7980 + $0x28] sm:$0xff]
        %v7987 = vld [vmem:[%s7980 + $0x30] sm:$0xff]
        %v7988 = vld [vmem:[%s7980 + $0x38] sm:$0xff]
        %v7989 = vld [vmem:[%s7980 + $0x40] sm:$0x3f]
        %v7991 = vsel %vm7252, %v7979, 0
        %v7994 = vsel %vm7301, %v7989, 0
        %7996 = vmatprep.subr.mxu0 0.0
        %7997 = vmatpush1.msra.mxu0 %v7981
        %7998 = vmatprep.subr.mxu0 0.0
        %7999 = vmatpush1.msra.mxu0 %v7982
        %8000 = vmatprep.subr.mxu0 0.0
        %8001 = vmatpush1.msra.mxu0 %v7983
        %8002 = vmatprep.subr.mxu0 0.0
        %8003 = vmatpush1.msra.mxu0 %v7984
        %8004 = vmatprep.subr.mxu0 0.0
        %8005 = vmatpush1.msra.mxu0 %v7985
        %8006 = vmatprep.subr.mxu0 0.0
        %8007 = vmatpush1.msra.mxu0 %v7986
        %8008 = vmatprep.subr.mxu0 0.0
        %8009 = vmatpush1.msra.mxu0 %v7987
        %8010 = vmatprep.subr.mxu0 0.0
        %8011 = vmatpush1.msra.mxu0 %v7988
        %8012 = vmatprep.subr.mxu0 0.0
        %8013 = vmatpush1.msra.mxu0 %v7994
        %8014 = vmatprep.subr.mxu0 0.0
        %8015 = vmatpush1.msra.mxu0 0.0
        %8016 = vmatprep.subr.mxu0 0.0
        %8017 = vmatpush1.msra.mxu0 0.0
        %8018 = vmatprep.subr.mxu0 0.0
        %8019 = vmatpush1.msra.mxu0 0.0
        %8020 = vmatprep.subr.mxu0 0.0
        %8021 = vmatpush1.msra.mxu0 0.0
        %8022 = vmatprep.subr.mxu0 0.0
        %8023 = vmatpush1.msra.mxu0 0.0
        %8024 = vmatprep.subr.mxu0 0.0
        %8025 = vmatpush1.msra.mxu0 0.0
        %8026 = vmatprep.subr.mxu0 0.0
        %8027 = vmatpush1.msra.mxu0 0.0
        %8028 = vmatprep.subr.mxu0 0.0
        %8029 = vmatpush1.msra.mxu0 0.0
        %8030 = vmatprep.subr.mxu0 0.0
        %8031 = vmatpush1.msra.mxu0 0.0
        %8032 = vmatprep.subr.mxu0 0.0
        %8033 = vmatpush1.msra.mxu0 0.0
        %8034 = vmatprep.subr.mxu0 0.0
        %8035 = vmatpush1.msra.mxu0 0.0
        %8036 = vmatprep.subr.mxu0 0.0
        %8037 = vmatpush1.msra.mxu0 0.0
        %8038 = vmatprep.subr.mxu0 0.0
        %8039 = vmatpush1.msra.mxu0 0.0
        %8040 = vmatprep.subr.mxu0 0.0
        %8041 = vmatpush1.msra.mxu0 0.0
        %8042 = vmatprep.subr.mxu0 0.0
        %8043 = vmatpush1.msra.mxu0 0.0
        %8044 = vmatprep.subr.mxu0 0.0
        %8045 = vmatpush1.msra.mxu0 0.0
        %8046 = vmatprep.subr.mxu0 0.0
        %8047 = vmatpush1.msra.mxu0 0.0
        %8048 = vmatprep.subr.mxu0 0.0
        %8049 = vmatpush1.msra.mxu0 0.0
        %8050 = vmatprep.subr.mxu0 0.0
        %8051 = vmatpush1.msra.mxu0 0.0
        %8052 = vmatprep.subr.mxu0 0.0
        %8053 = vmatpush1.msra.mxu0 0.0
        %8054 = vmatprep.subr.mxu0 0.0
        %8055 = vmatpush1.msra.mxu0 0.0
        %8056 = vmatprep.subr.mxu0 0.0
        %8057 = vmatpush1.msra.mxu0 0.0
        %8058 = vmatprep.subr.mxu0 0.0
        %8059 = vmatpush1.msra.mxu0 0.0
        %8060 = vmatprep.mubr.f32.mxu0 0.0
        %8061 = vmatmul.mubr.f32.gmra.mrb[0].mxu0 %v7991
        %v8062 = vpop.f32.mrb[0].mxu0
        %v8063 = vadd.f32 0.0, %v8062
        %v8064 = vpop.f32.mrb[0].mxu0
        %8065 = vdwg.mxu0
        %v8066 = vadd.f32 %v7978, %v8063
        %v8067 = vld [vmem:[#allocation9 + $0x9] sm:$0x1]
        %s8068 = scalar_lea.vmem %s13, 648
        %v8069 = vld [vmem:[%s8068] sm:$0xff]
        %v8070 = vld [vmem:[%s8068 + $0x8] sm:$0xff]
        %v8071 = vld [vmem:[%s8068 + $0x10] sm:$0xff]
        %v8072 = vld [vmem:[%s8068 + $0x18] sm:$0xff]
        %v8073 = vld [vmem:[%s8068 + $0x20] sm:$0xff]
        %v8074 = vld [vmem:[%s8068 + $0x28] sm:$0xff]
        %v8075 = vld [vmem:[%s8068 + $0x30] sm:$0xff]
        %v8076 = vld [vmem:[%s8068 + $0x38] sm:$0xff]
        %v8077 = vld [vmem:[%s8068 + $0x40] sm:$0x3f]
        %v8079 = vsel %vm7252, %v8067, 0
        %v8082 = vsel %vm7301, %v8077, 0
        %8084 = vmatprep.subr.mxu0 0.0
        %8085 = vmatpush1.msra.mxu0 %v8069
        %8086 = vmatprep.subr.mxu0 0.0
        %8087 = vmatpush1.msra.mxu0 %v8070
        %8088 = vmatprep.subr.mxu0 0.0
        %8089 = vmatpush1.msra.mxu0 %v8071
        %8090 = vmatprep.subr.mxu0 0.0
        %8091 = vmatpush1.msra.mxu0 %v8072
        %8092 = vmatprep.subr.mxu0 0.0
        %8093 = vmatpush1.msra.mxu0 %v8073
        %8094 = vmatprep.subr.mxu0 0.0
        %8095 = vmatpush1.msra.mxu0 %v8074
        %8096 = vmatprep.subr.mxu0 0.0
        %8097 = vmatpush1.msra.mxu0 %v8075
        %8098 = vmatprep.subr.mxu0 0.0
        %8099 = vmatpush1.msra.mxu0 %v8076
        %8100 = vmatprep.subr.mxu0 0.0
        %8101 = vmatpush1.msra.mxu0 %v8082
        %8102 = vmatprep.subr.mxu0 0.0
        %8103 = vmatpush1.msra.mxu0 0.0
        %8104 = vmatprep.subr.mxu0 0.0
        %8105 = vmatpush1.msra.mxu0 0.0
        %8106 = vmatprep.subr.mxu0 0.0
        %8107 = vmatpush1.msra.mxu0 0.0
        %8108 = vmatprep.subr.mxu0 0.0
        %8109 = vmatpush1.msra.mxu0 0.0
        %8110 = vmatprep.subr.mxu0 0.0
        %8111 = vmatpush1.msra.mxu0 0.0
        %8112 = vmatprep.subr.mxu0 0.0
        %8113 = vmatpush1.msra.mxu0 0.0
        %8114 = vmatprep.subr.mxu0 0.0
        %8115 = vmatpush1.msra.mxu0 0.0
        %8116 = vmatprep.subr.mxu0 0.0
        %8117 = vmatpush1.msra.mxu0 0.0
        %8118 = vmatprep.subr.mxu0 0.0
        %8119 = vmatpush1.msra.mxu0 0.0
        %8120 = vmatprep.subr.mxu0 0.0
        %8121 = vmatpush1.msra.mxu0 0.0
        %8122 = vmatprep.subr.mxu0 0.0
        %8123 = vmatpush1.msra.mxu0 0.0
        %8124 = vmatprep.subr.mxu0 0.0
        %8125 = vmatpush1.msra.mxu0 0.0
        %8126 = vmatprep.subr.mxu0 0.0
        %8127 = vmatpush1.msra.mxu0 0.0
        %8128 = vmatprep.subr.mxu0 0.0
        %8129 = vmatpush1.msra.mxu0 0.0
        %8130 = vmatprep.subr.mxu0 0.0
        %8131 = vmatpush1.msra.mxu0 0.0
        %8132 = vmatprep.subr.mxu0 0.0
        %8133 = vmatpush1.msra.mxu0 0.0
        %8134 = vmatprep.subr.mxu0 0.0
        %8135 = vmatpush1.msra.mxu0 0.0
        %8136 = vmatprep.subr.mxu0 0.0
        %8137 = vmatpush1.msra.mxu0 0.0
        %8138 = vmatprep.subr.mxu0 0.0
        %8139 = vmatpush1.msra.mxu0 0.0
        %8140 = vmatprep.subr.mxu0 0.0
        %8141 = vmatpush1.msra.mxu0 0.0
        %8142 = vmatprep.subr.mxu0 0.0
        %8143 = vmatpush1.msra.mxu0 0.0
        %8144 = vmatprep.subr.mxu0 0.0
        %8145 = vmatpush1.msra.mxu0 0.0
        %8146 = vmatprep.subr.mxu0 0.0
        %8147 = vmatpush1.msra.mxu0 0.0
        %8148 = vmatprep.mubr.f32.mxu0 0.0
        %8149 = vmatmul.mubr.f32.gmra.mrb[0].mxu0 %v8079
        %v8150 = vpop.f32.mrb[0].mxu0
        %v8151 = vadd.f32 0.0, %v8150
        %v8152 = vpop.f32.mrb[0].mxu0
        %8153 = vdwg.mxu0
        %v8154 = vadd.f32 %v8066, %v8151
        %v8155 = vld [vmem:[#allocation9 + $0xa] sm:$0x1]
        %s8156 = scalar_lea.vmem %s13, 720
        %v8157 = vld [vmem:[%s8156] sm:$0xff]
        %v8158 = vld [vmem:[%s8156 + $0x8] sm:$0xff]
        %v8159 = vld [vmem:[%s8156 + $0x10] sm:$0xff]
        %v8160 = vld [vmem:[%s8156 + $0x18] sm:$0xff]
        %v8161 = vld [vmem:[%s8156 + $0x20] sm:$0xff]
        %v8162 = vld [vmem:[%s8156 + $0x28] sm:$0xff]
        %v8163 = vld [vmem:[%s8156 + $0x30] sm:$0xff]
        %v8164 = vld [vmem:[%s8156 + $0x38] sm:$0xff]
        %v8165 = vld [vmem:[%s8156 + $0x40] sm:$0x3f]
        %v8167 = vsel %vm7252, %v8155, 0
        %v8170 = vsel %vm7301, %v8165, 0
        %8172 = vmatprep.subr.mxu0 0.0
        %8173 = vmatpush1.msra.mxu0 %v8157
        %8174 = vmatprep.subr.mxu0 0.0
        %8175 = vmatpush1.msra.mxu0 %v8158
        %8176 = vmatprep.subr.mxu0 0.0
        %8177 = vmatpush1.msra.mxu0 %v8159
        %8178 = vmatprep.subr.mxu0 0.0
        %8179 = vmatpush1.msra.mxu0 %v8160
        %8180 = vmatprep.subr.mxu0 0.0
        %8181 = vmatpush1.msra.mxu0 %v8161
        %8182 = vmatprep.subr.mxu0 0.0
        %8183 = vmatpush1.msra.mxu0 %v8162
        %8184 = vmatprep.subr.mxu0 0.0
        %8185 = vmatpush1.msra.mxu0 %v8163
        %8186 = vmatprep.subr.mxu0 0.0
        %8187 = vmatpush1.msra.mxu0 %v8164
        %8188 = vmatprep.subr.mxu0 0.0
        %8189 = vmatpush1.msra.mxu0 %v8170
        %8190 = vmatprep.subr.mxu0 0.0
        %8191 = vmatpush1.msra.mxu0 0.0
        %8192 = vmatprep.subr.mxu0 0.0
        %8193 = vmatpush1.msra.mxu0 0.0
        %8194 = vmatprep.subr.mxu0 0.0
        %8195 = vmatpush1.msra.mxu0 0.0
        %8196 = vmatprep.subr.mxu0 0.0
        %8197 = vmatpush1.msra.mxu0 0.0
        %8198 = vmatprep.subr.mxu0 0.0
        %8199 = vmatpush1.msra.mxu0 0.0
        %8200 = vmatprep.subr.mxu0 0.0
        %8201 = vmatpush1.msra.mxu0 0.0
        %8202 = vmatprep.subr.mxu0 0.0
        %8203 = vmatpush1.msra.mxu0 0.0
        %8204 = vmatprep.subr.mxu0 0.0
        %8205 = vmatpush1.msra.mxu0 0.0
        %8206 = vmatprep.subr.mxu0 0.0
        %8207 = vmatpush1.msra.mxu0 0.0
        %8208 = vmatprep.subr.mxu0 0.0
        %8209 = vmatpush1.msra.mxu0 0.0
        %8210 = vmatprep.subr.mxu0 0.0
        %8211 = vmatpush1.msra.mxu0 0.0
        %8212 = vmatprep.subr.mxu0 0.0
        %8213 = vmatpush1.msra.mxu0 0.0
        %8214 = vmatprep.subr.mxu0 0.0
        %8215 = vmatpush1.msra.mxu0 0.0
        %8216 = vmatprep.subr.mxu0 0.0
        %8217 = vmatpush1.msra.mxu0 0.0
        %8218 = vmatprep.subr.mxu0 0.0
        %8219 = vmatpush1.msra.mxu0 0.0
        %8220 = vmatprep.subr.mxu0 0.0
        %8221 = vmatpush1.msra.mxu0 0.0
        %8222 = vmatprep.subr.mxu0 0.0
        %8223 = vmatpush1.msra.mxu0 0.0
        %8224 = vmatprep.subr.mxu0 0.0
        %8225 = vmatpush1.msra.mxu0 0.0
        %8226 = vmatprep.subr.mxu0 0.0
        %8227 = vmatpush1.msra.mxu0 0.0
        %8228 = vmatprep.subr.mxu0 0.0
        %8229 = vmatpush1.msra.mxu0 0.0
        %8230 = vmatprep.subr.mxu0 0.0
        %8231 = vmatpush1.msra.mxu0 0.0
        %8232 = vmatprep.subr.mxu0 0.0
        %8233 = vmatpush1.msra.mxu0 0.0
        %8234 = vmatprep.subr.mxu0 0.0
        %8235 = vmatpush1.msra.mxu0 0.0
        %8236 = vmatprep.mubr.f32.mxu0 0.0
        %8237 = vmatmul.mubr.f32.gmra.mrb[0].mxu0 %v8167
        %v8238 = vpop.f32.mrb[0].mxu0
        %v8239 = vadd.f32 0.0, %v8238
        %v8240 = vpop.f32.mrb[0].mxu0
        %8241 = vdwg.mxu0
        %v8242 = vadd.f32 %v8154, %v8239
        %v8243 = vld [vmem:[%s14] sm:$0x1]
        %v8244 = vadd.f32 %v8242, %v8243
        %vm8245 = vcmask 24576
        %8246 = vst.msk [vmem:[%s486] sm:$0x1] %vm8245, %v8244
        %s8247 = sand.u32 %s357, 1
        %s8248 = scalar_lea.sflag [#allocation11], %s8247
        %s8249 = sand.u32 %s357, 1
        %s8250 = scalar_lea.vmem [#allocation10], %s8249
        // Predicated region
        $region81: #{wvcnn4_forward.1} parent=79 // pred_check
          %p8251 = pneg %p367
        $region82: #{wvcnn4_forward.1} parent=79 // pred_check_branch
          %8253 = sbr.rel (%p8251) target = $region84
        $region83: #{wvcnn4_forward.1} parent=79 // pred_region
          %s8255 = ssub.s32 16, 16
          %8256 = vsyncadd %s8248, %s8255
          %s8257 = smul.addr %s29, 16
          %s8258 = scalar_lea.hbm %s15, %s8257
          %s8260 = sshll.u32 %s8250, 4
          %s8261 = int_to_ptr.vmem [resolvable:$true] %s8260
          %8263 = dma.vmem_to_hbm [thread:$0]  %s8261, 16, %s8258, %s8248
        $region84: #{wvcnn4_forward.1} parent=79 // pred_fallthru
          _
      $region80: #{wvcnn4_forward.1} parent=5 // pred_fallthru
        _
      %p8264 = scmp.le.s32.totalorder 2, %s24
      // Predicated region
      $region85: #{wvcnn4_forward.1} parent=5 // pred_check
        %p8265 = pneg %p8264
      $region86: #{wvcnn4_forward.1} parent=5 // pred_check_branch
        %8267 = sbr.rel (%p8265) target = $region88
      $region87: #{wvcnn4_forward.1} parent=5 // pred_region
        %s8268 = ssub.s32 %s24, 2
        // Predicated region
        $region89: #{wvcnn4_forward.1} parent=87 // pred_check
          %p8269 = pneg %p373
        $region90: #{wvcnn4_forward.1} parent=87 // pred_check_branch
          %8271 = sbr.rel (%p8269) target = $region92
        $region91: #{wvcnn4_forward.1} parent=87 // pred_region
          %s8272 = sand.u32 %s358, 1
          %s8273 = scalar_lea.sflag [#allocation11], %s8272
          %s8274 = sand.u32 %s358, 1
          %s8275 = scalar_lea.vmem [#allocation10], %s8274
          %8276 = dma.done %s8273, 16
        $region92: #{wvcnn4_forward.1} parent=87 // pred_fallthru
          _
      $region88: #{wvcnn4_forward.1} parent=5 // pred_fallthru
        _
    $region6: #{wvcnn4_forward.1} parent=1 // loop_footer
      %s28 = sadd.s32 1, %s24
    $region7: #{wvcnn4_forward.1} parent=1 // loop_footer_branch
      %23 = sbr.rel target = $region3
    $region8: #{wvcnn4_forward.1} parent=1 // loop_exit
      _
    %8277 = vsyncpa [#allocation11], 1
    %s8278 = scalar_lea.sflag [#allocation11], 1
    %8279 = vsyncpa %s8278, 1

</llo_original>
